<compile_context>
chip_gen: v6e
topology: v6e:2x2x1
jax: 0.10.0
libtpu: 0.0.40
codegen_flags: <defaults>
</compile_context>

<pallas_src>
import functools

import jax
import jax.numpy as jnp
from jax import lax
from jax.experimental import pallas as pl
from jax.experimental.pallas import tpu as pltpu

SCALES = (3, 5, 7)
K_EFF = max(SCALES)       # effective (folded) depthwise kernel size
P = K_EFF // 2            # 'same' padding = 3
CL = 8                    # left column halo (sublane-aligned, >= P)
CR = 8                    # right column halo (keeps Wp a multiple of 8, >= P)


# ----------------------------------------------------------------------------
# Fused kernel:
#   pass 1: row-blocked 1x1 conv (MXU, HIGHEST) -> aligned interior of ypad
#   pass 2: row-blocked effective 7x7 depthwise (folded weights) + bias + shortcut
# ----------------------------------------------------------------------------
def _amscm_kernel(x_ref, w1_ref, b1_ref, weff_ref, beff_ref, o_ref,
                  ypad_ref, shift_ref, *, RB, CB):
    # x:     (1, H, W, Cg)       packed input (also the shortcut)
    # w1:    (Cg, Cg)            block-diagonal 1x1 weight
    # b1:    (1, Cg)             tiled 1x1 bias
    # weff:  (K, K, Cg)          effective (scale-weighted, summed) depthwise filter
    # beff:  (1, Cg)             effective depthwise bias
    # ypad:  (H+2P, CL+W+CR, Cg) zero-haloed conv1 output (VMEM scratch)
    # shift: (K, RB+2P, W, Cg)   K column-shifted, sublane-aligned row-block views
    _, H, W, Cg = x_ref.shape
    Hp, Wp, _ = ypad_ref.shape
    K = weff_ref.shape[0]
    RBH = RB + 2 * P
    f32 = jnp.float32

    # --- zero only the halo border of ypad (interior is fully overwritten) -----
    ypad_ref[0:P, :, :] = jnp.zeros((P, Wp, Cg), f32)                 # top rows
    ypad_ref[P + H:Hp, :, :] = jnp.zeros((P, Wp, Cg), f32)            # bottom rows
    ypad_ref[:, 0:CL, :] = jnp.zeros((Hp, CL, Cg), f32)               # left cols
    ypad_ref[:, CL + W:Wp, :] = jnp.zeros((Hp, Wp - CL - W, Cg), f32)  # right cols

    n_blocks = (H + RB - 1) // RB      # clamped last block -> any H >= RB works

    # --- pass 1: 1x1 conv on the MXU, row block by row block -------------------
    def conv1_body(i, carry):
        r0 = jnp.minimum(i * RB, H - RB)
        x_rows = x_ref[0, pl.ds(r0, RB), :, :].reshape(RB * W, Cg)
        y_rows = jnp.dot(x_rows, w1_ref[...],
                         preferred_element_type=jnp.float32,
                         precision=lax.Precision.HIGHEST) + b1_ref[...]
        # column start CL=8, width W (multiple of 8) -> unmasked aligned store
        ypad_ref[pl.ds(P + r0, RB), CL:CL + W, :] = y_rows.reshape(RB, W, Cg)
        return carry

    lax.fori_loop(0, n_blocks, conv1_body, 0)

    # --- pass 2: effective KxK depthwise + bias + residual ---------------------
    w_all = weff_ref[...]        # (K, K, Cg), hoisted out of the loops (~7 vregs)
    beff = beff_ref[0, :]        # (Cg,)

    def dw_body(i, carry):
        r0 = jnp.minimum(i * RB, H - RB)
        # K column-shifted, sublane-ALIGNED copies of the rows this block needs.
        # The unaligned sublane slice happens K times here instead of K*K times
        # inside the tap loop below.
        for kj in range(K):
            cstart = CL - P + kj                       # 5..11 (static)
            shift_ref[kj, :, :, :] = ypad_ref[pl.ds(r0, RBH),
                                              cstart:cstart + W, :]
        for c0 in range(0, W, CB):                     # column blocks bound acc vregs
            acc = jnp.zeros((RB, CB, Cg), f32)
            for ki in range(K):                        # 49 aligned-load taps (VALU)
                for kj in range(K):
                    blk = shift_ref[kj, ki:ki + RB, c0:c0 + CB, :]
                    acc = acc + blk * w_all[ki, kj]
            x_blk = x_ref[0, pl.ds(r0, RB), c0:c0 + CB, :]
            o_ref[0, pl.ds(r0, RB), c0:c0 + CB, :] = (
                acc + x_blk + beff).astype(o_ref.dtype)
        return carry

    lax.fori_loop(0, n_blocks, dw_body, 0)


# ----------------------------------------------------------------------------
# Lane-packing heuristic: pack G images along the channel/lane axis.
# Prefer Cg % 128 == 0 AND at least 2 batch-group grid steps (v7x has 2 TCs).
# ----------------------------------------------------------------------------
def _pack_group(B, C):
    cands = [g for g in range(1, B + 1)
             if B % g == 0 and (g * C) % 128 == 0 and g * C <= 512]
    if cands:
        par = [g for g in cands if B // g >= 2]
        return min(par) if par else min(cands)
    # TODO(synk): pad C to a multiple of 128 (and slice outputs) instead of
    # falling back to G=1 / masked lanes when no divisor of B packs cleanly.
    return 1


def _col_block(W, RB, Cg):
    # Keep the f32 accumulator around <= 16 vregs: RB * CB * Cg <= 16K elements.
    target = max(8, ((16 * 1024) // max(RB * Cg, 1)) // 8 * 8)
    cb = min(W, target)
    while W % cb:          # W % 8 == 0 guarantees termination at cb >= 8
        cb -= 8
    return max(cb, 8)


# ----------------------------------------------------------------------------
# Wrapper (NCHW in / NCHW out, matching the PyTorch module), jitted.
# ----------------------------------------------------------------------------
def _amscm_forward_impl(x_nchw, params):
    B, C, H, W = x_nchw.shape
    assert H >= 1 and W >= 8 and W % 8 == 0, "W must be a multiple of 8"
    # TODO(synk): pad/mask W (and generalize tiny H) for arbitrary spatial sizes.

    G = _pack_group(B, C)
    NG, Cg = B // G, G * C
    K = K_EFF
    Hp, Wp = H + 2 * P, CL + W + CR
    RB = 8 if H >= 8 else H
    RBH = RB + 2 * P
    CB = _col_block(W, RB, Cg)

    # pack G images into the lane axis: (B,C,H,W) -> (NG, H, W, G*C)
    xg = (x_nchw.astype(jnp.float32)
          .reshape(NG, G, C, H, W)
          .transpose(0, 3, 4, 1, 2)
          .reshape(NG, H, W, Cg))

    # block-diagonal 1x1 weight (packed images never mix), bias tiled
    w1_blk = jnp.kron(jnp.eye(G, dtype=jnp.float32), params["w1_mat"])   # (Cg, Cg)
    b1 = jnp.tile(params["b1"], G).reshape(1, Cg)

    # fold the three depthwise filters + scale_weights into one KxK filter/bias
    sw = params["scale_weights"]
    w_eff = jnp.zeros((K, K, C), jnp.float32)
    for i, s in enumerate(SCALES):
        off = (K - s) // 2
        w_eff = w_eff.at[off:off + s, off:off + s, :].add(sw[i] * params["w_dw"][s])
    b_eff = jnp.einsum("s,sc->c", sw, params["b_dw"])
    w_eff = jnp.tile(w_eff, (1, 1, G))                                   # (K, K, Cg)
    b_eff = jnp.tile(b_eff, G).reshape(1, Cg)

    # explicit VMEM budget (v5e scoped default is only 16 MiB; v7x physical 64 MiB)
    f = 4
    x_blk = H * W * Cg * f
    need = (2 * (2 * x_blk + Cg * Cg * f + K * K * Cg * f + 2 * Cg * f)
            + Hp * Wp * Cg * f + K * RBH * W * Cg * f)
    vmem_limit = int(min(max(1.3 * need, 32 << 20), 112 << 20))

    kern = functools.partial(_amscm_kernel, RB=RB, CB=CB)

    out = pl.pallas_call(
        kern,
        out_shape=jax.ShapeDtypeStruct((NG, H, W, Cg), jnp.float32),
        grid=(NG,),
        in_specs=[
            pl.BlockSpec((1, H, W, Cg), lambda b: (b, 0, 0, 0)),
            pl.BlockSpec((Cg, Cg), lambda b: (0, 0)),
            pl.BlockSpec((1, Cg), lambda b: (0, 0)),
            pl.BlockSpec((K, K, Cg), lambda b: (0, 0, 0)),
            pl.BlockSpec((1, Cg), lambda b: (0, 0)),
        ],
        out_specs=pl.BlockSpec((1, H, W, Cg), lambda b: (b, 0, 0, 0)),
        scratch_shapes=[
            pltpu.VMEM((Hp, Wp, Cg), jnp.float32),          # padded conv1 output
            pltpu.VMEM((K, RBH, W, Cg), jnp.float32),       # aligned shifted views
        ],
        compiler_params=pltpu.CompilerParams(
            dimension_semantics=("parallel",),              # batch groups over TCs
            vmem_limit_bytes=vmem_limit,
        ),
    )(xg, w1_blk, b1, w_eff, b_eff)

    # unpack back to NCHW
    return (out.reshape(NG, H, W, G, C)
               .transpose(0, 3, 4, 1, 2)
               .reshape(B, C, H, W))


amscm_forward = jax.jit(_amscm_forward_impl)


# ----------------------------------------------------------------------------
# Deterministic parameter init (shapes follow the PyTorch module's __init__)
# ----------------------------------------------------------------------------
def init_params(key, n_feats):
    C = n_feats
    keys = jax.random.split(key, 2 + 2 * len(SCALES))
    bound1 = 1.0 / (C ** 0.5)
    w1_oihw = jax.random.uniform(keys[0], (C, C, 1, 1), jnp.float32, -bound1, bound1)
    b1 = jax.random.uniform(keys[1], (C,), jnp.float32, -bound1, bound1)

    w_dw_oihw, w_dw_hwc, b_list = {}, {}, []
    for i, s in enumerate(SCALES):
        bound = 1.0 / s  # fan_in = 1 * s * s  ->  1/sqrt(s*s)
        w = jax.random.uniform(keys[2 + 2 * i], (C, 1, s, s), jnp.float32, -bound, bound)
        b = jax.random.uniform(keys[3 + 2 * i], (C,), jnp.float32, -bound, bound)
        w_dw_oihw[s] = w
        w_dw_hwc[s] = jnp.transpose(w[:, 0], (1, 2, 0))   # (k, k, C)
        b_list.append(b)

    return {
        "w1_oihw": w1_oihw,
        "w1_mat": jnp.transpose(w1_oihw[:, :, 0, 0]),     # (C_in, C_out)
        "b1": b1,
        "w_dw_oihw": w_dw_oihw,
        "w_dw": w_dw_hwc,
        "b_dw": jnp.stack(b_list, axis=0),                # (num_scales, C)
        "scale_weights": jnp.ones((len(SCALES),), jnp.float32),
    }


# ----------------------------------------------------------------------------
# Pure-JAX reference (NCHW, lax.conv, HIGHEST precision) for verification
# ----------------------------------------------------------------------------
def amscm_reference(x, p):
    dn = ("NCHW", "OIHW", "NCHW")
    y = lax.conv_general_dilated(
        x, p["w1_oihw"], (1, 1), [(0, 0), (0, 0)],
        dimension_numbers=dn, precision=lax.Precision.HIGHEST,
    ) + p["b1"][None, :, None, None]
    total = jnp.zeros_like(x)
    for i, s in enumerate(SCALES):
        pd = s // 2
        o = lax.conv_general_dilated(
            y, p["w_dw_oihw"][s], (1, 1), [(pd, pd), (pd, pd)],
            dimension_numbers=dn, feature_group_count=x.shape[1],
            precision=lax.Precision.HIGHEST,
        ) + p["b_dw"][i][None, :, None, None]
        total = total + p["scale_weights"][i] * o
    return total + x


if __name__ == "__main__":
    key = jax.random.PRNGKey(0)
    kx, kp = jax.random.split(key)
    B, C, H, W = 8, 32, 16, 16                      # NCHW, n_feats = 32
    x = jax.random.normal(kx, (B, C, H, W), jnp.float32)
    params = init_params(kp, C)

    out = jax.block_until_ready(amscm_forward(x, params))
    ref = jax.block_until_ready(amscm_reference(x, params))

    assert out.shape == x.shape and out.dtype == jnp.float32
    max_err = float(jnp.max(jnp.abs(out - ref)))
    # HIGHEST-precision matmul restored -> tight tolerance again.
    assert jnp.allclose(out, ref, atol=5e-4, rtol=5e-4), f"max abs err = {max_err}"
    print("KERNEL_OK")
</pallas_src>

<mosaic_0001>
module attributes {stable_mosaic.version = 11 : i64} {
  func.func @_amscm_kernel(%arg0: i32, %arg1: memref<1x16x16x128xf32, #tpu.memory_space<vmem>>, %arg2: memref<128x128xf32, #tpu.memory_space<vmem>>, %arg3: memref<1x128xf32, #tpu.memory_space<vmem>>, %arg4: memref<7x7x128xf32, #tpu.memory_space<vmem>>, %arg5: memref<1x128xf32, #tpu.memory_space<vmem>>, %arg6: memref<1x16x16x128xf32, #tpu.memory_space<vmem>>, %arg7: memref<22x32x128xf32, #tpu.memory_space<vmem>>, %arg8: memref<7x14x16x128xf32, #tpu.memory_space<vmem>>) attributes {dimension_semantics = [#tpu.dimension_semantics<parallel>], iteration_bounds = array<i64: 2>, scalar_prefetch = 0 : i64, scratch_operands = 2 : i64, tpu.core_type = #tpu.core_type<tc>, window_params = [{transform_indices = @transform_0, window_bounds = array<i64: 1, 16, 16, 128>}, {pipeline_mode = #tpu.pipeline_mode<synchronous>, transform_indices = @transform_1, window_bounds = array<i64: 128, 128>}, {pipeline_mode = #tpu.pipeline_mode<synchronous>, transform_indices = @transform_2, window_bounds = array<i64: 1, 128>}, {pipeline_mode = #tpu.pipeline_mode<synchronous>, transform_indices = @transform_3, window_bounds = array<i64: 7, 7, 128>}, {pipeline_mode = #tpu.pipeline_mode<synchronous>, transform_indices = @transform_4, window_bounds = array<i64: 1, 128>}, {transform_indices = @transform_5, window_bounds = array<i64: 1, 16, 16, 128>}]} {
    %cst = arith.constant 0.000000e+00 : f32
    %0 = vector.broadcast %cst : f32 to vector<3x32x128xf32>
    %c0 = arith.constant 0 : index
    %c0_0 = arith.constant 0 : index
    %c0_1 = arith.constant 0 : index
    %1 = vector.load %arg7[%c0, %c0_0, %c0_1] : memref<22x32x128xf32, #tpu.memory_space<vmem>>, vector<3x32x128xf32>
    tpu.vector_store %arg7[%c0, %c0_0, %c0_1], %0 {strides = array<i32>} : memref<22x32x128xf32, #tpu.memory_space<vmem>>, vector<3x32x128xf32>,
    %cst_2 = arith.constant 0.000000e+00 : f32
    %2 = vector.broadcast %cst_2 : f32 to vector<3x32x128xf32>
    %c19 = arith.constant 19 : index
    %c0_3 = arith.constant 0 : index
    %c0_4 = arith.constant 0 : index
    %3 = vector.load %arg7[%c19, %c0_3, %c0_4] : memref<22x32x128xf32, #tpu.memory_space<vmem>>, vector<3x32x128xf32>
    tpu.vector_store %arg7[%c19, %c0_3, %c0_4], %2 {strides = array<i32>} : memref<22x32x128xf32, #tpu.memory_space<vmem>>, vector<3x32x128xf32>,
    %cst_5 = arith.constant 0.000000e+00 : f32
    %4 = vector.broadcast %cst_5 : f32 to vector<22x8x128xf32>
    %c0_6 = arith.constant 0 : index
    %c0_7 = arith.constant 0 : index
    %c0_8 = arith.constant 0 : index
    %5 = vector.load %arg7[%c0_6, %c0_7, %c0_8] : memref<22x32x128xf32, #tpu.memory_space<vmem>>, vector<22x8x128xf32>
    tpu.vector_store %arg7[%c0_6, %c0_7, %c0_8], %4 {strides = array<i32>} : memref<22x32x128xf32, #tpu.memory_space<vmem>>, vector<22x8x128xf32>,
    %cst_9 = arith.constant 0.000000e+00 : f32
    %6 = vector.broadcast %cst_9 : f32 to vector<22x8x128xf32>
    %c0_10 = arith.constant 0 : index
    %c24 = arith.constant 24 : index
    %c0_11 = arith.constant 0 : index
    %7 = vector.load %arg7[%c0_10, %c24, %c0_11] : memref<22x32x128xf32, #tpu.memory_space<vmem>>, vector<22x8x128xf32>
    tpu.vector_store %arg7[%c0_10, %c24, %c0_11], %6 {strides = array<i32>} : memref<22x32x128xf32, #tpu.memory_space<vmem>>, vector<22x8x128xf32>,
    %c0_i32 = arith.constant 0 : i32
    %c2_i32 = arith.constant 2 : i32
    %8 = arith.addi %c0_i32, %c2_i32 : i32
    %c1_i32 = arith.constant 1 : i32
    scf.for %arg9 = %c0_i32 to %8 step %c1_i32  : i32 {
      %c8_i32 = arith.constant 8 : i32
      %13 = arith.muli %arg9, %c8_i32 : i32
      %c8_i32_22 = arith.constant 8 : i32
      %14 = arith.minsi %13, %c8_i32_22 : i32
      %c0_23 = arith.constant 0 : index
      %15 = arith.index_cast %14 : i32 to index
      %c0_24 = arith.constant 0 : index
      %c0_25 = arith.constant 0 : index
      %16 = vector.load %arg1[%c0_23, %15, %c0_24, %c0_25] : memref<1x16x16x128xf32, #tpu.memory_space<vmem>>, vector<1x8x16x128xf32>
      %17 = vector.shape_cast %16 : vector<1x8x16x128xf32> to vector<8x16x128xf32>
      %18 = vector.shape_cast %17 : vector<8x16x128xf32> to vector<128x128xf32>
      %c0_26 = arith.constant 0 : index
      %c0_27 = arith.constant 0 : index
      %19 = vector.load %arg2[%c0_26, %c0_27] : memref<128x128xf32, #tpu.memory_space<vmem>>, vector<128x128xf32>
      %cst_28 = arith.constant dense<0.000000e+00> : vector<128x128xf32>
      %20 = tpu.matmul %18, %19, %cst_28 {dimension_numbers = #tpu.dot_dimension_numbers<[1], [0], [0], [1], [0, 0, 1, 1], [], []>, precision = #tpu.contract_precision<fp32>} : vector<128x128xf32>, vector<128x128xf32>, vector<128x128xf32> -> vector<128x128xf32>
      %c0_29 = arith.constant 0 : index
      %c0_30 = arith.constant 0 : index
      %21 = vector.load %arg3[%c0_29, %c0_30] : memref<1x128xf32, #tpu.memory_space<vmem>>, vector<1x128xf32>
      %22 = vector.broadcast %21 : vector<1x128xf32> to vector<128x128xf32>
      %23 = arith.addf %20, %22 : vector<128x128xf32>
      %24 = vector.shape_cast %23 : vector<128x128xf32> to vector<8x16x128xf32>
      %c3_i32 = arith.constant 3 : i32
      %25 = arith.addi %c3_i32, %14 : i32
      %26 = arith.index_cast %25 : i32 to index
      %c8 = arith.constant 8 : index
      %c0_31 = arith.constant 0 : index
      %27 = vector.load %arg7[%26, %c8, %c0_31] : memref<22x32x128xf32, #tpu.memory_space<vmem>>, vector<8x16x128xf32>
      tpu.vector_store %arg7[%26, %c8, %c0_31], %24 {strides = array<i32>} : memref<22x32x128xf32, #tpu.memory_space<vmem>>, vector<8x16x128xf32>,
    }
    %c2_i32_12 = arith.constant 2 : i32
    %c0_13 = arith.constant 0 : index
    %c0_14 = arith.constant 0 : index
    %c0_15 = arith.constant 0 : index
    %9 = vector.load %arg4[%c0_13, %c0_14, %c0_15] : memref<7x7x128xf32, #tpu.memory_space<vmem>>, vector<7x7x128xf32>
    %c0_16 = arith.constant 0 : index
    %c0_17 = arith.constant 0 : index
    %10 = vector.load %arg5[%c0_16, %c0_17] : memref<1x128xf32, #tpu.memory_space<vmem>>, vector<1x128xf32>
    %11 = vector.shape_cast %10 : vector<1x128xf32> to vector<128xf32>
    %c0_i32_18 = arith.constant 0 : i32
    %c2_i32_19 = arith.constant 2 : i32
    %12 = arith.addi %c0_i32_18, %c2_i32_19 : i32
    %c1_i32_20 = arith.constant 1 : i32
    scf.for %arg9 = %c0_i32_18 to %12 step %c1_i32_20  : i32 {
      %c8_i32 = arith.constant 8 : i32
      %13 = arith.muli %arg9, %c8_i32 : i32
      %c8_i32_22 = arith.constant 8 : i32
      %14 = arith.minsi %13, %c8_i32_22 : i32
      %15 = arith.index_cast %14 : i32 to index
      %c5 = arith.constant 5 : index
      %c0_23 = arith.constant 0 : index
      %16 = vector.load %arg7[%15, %c5, %c0_23] : memref<22x32x128xf32, #tpu.memory_space<vmem>>, vector<14x16x128xf32>
      %c0_24 = arith.constant 0 : index
      %c0_25 = arith.constant 0 : index
      %c0_26 = arith.constant 0 : index
      %c0_27 = arith.constant 0 : index
      %17 = vector.load %arg8[%c0_24, %c0_25, %c0_26, %c0_27] : memref<7x14x16x128xf32, #tpu.memory_space<vmem>>, vector<1x14x16x128xf32>
      %18 = vector.shape_cast %17 : vector<1x14x16x128xf32> to vector<14x16x128xf32>
      %19 = vector.shape_cast %16 : vector<14x16x128xf32> to vector<1x14x16x128xf32>
      tpu.vector_store %arg8[%c0_24, %c0_25, %c0_26, %c0_27], %19 {strides = array<i32>} : memref<7x14x16x128xf32, #tpu.memory_space<vmem>>, vector<1x14x16x128xf32>,
      %20 = arith.index_cast %14 : i32 to index
      %c6 = arith.constant 6 : index
      %c0_28 = arith.constant 0 : index
      %21 = vector.load %arg7[%20, %c6, %c0_28] : memref<22x32x128xf32, #tpu.memory_space<vmem>>, vector<14x16x128xf32>
      %c1 = arith.constant 1 : index
      %c0_29 = arith.constant 0 : index
      %c0_30 = arith.constant 0 : index
      %c0_31 = arith.constant 0 : index
      %22 = vector.load %arg8[%c1, %c0_29, %c0_30, %c0_31] : memref<7x14x16x128xf32, #tpu.memory_space<vmem>>, vector<1x14x16x128xf32>
      %23 = vector.shape_cast %22 : vector<1x14x16x128xf32> to vector<14x16x128xf32>
      %24 = vector.shape_cast %21 : vector<14x16x128xf32> to vector<1x14x16x128xf32>
      tpu.vector_store %arg8[%c1, %c0_29, %c0_30, %c0_31], %24 {strides = array<i32>} : memref<7x14x16x128xf32, #tpu.memory_space<vmem>>, vector<1x14x16x128xf32>,
      %25 = arith.index_cast %14 : i32 to index
      %c7 = arith.constant 7 : index
      %c0_32 = arith.constant 0 : index
      %26 = vector.load %arg7[%25, %c7, %c0_32] : memref<22x32x128xf32, #tpu.memory_space<vmem>>, vector<14x16x128xf32>
      %c2 = arith.constant 2 : index
      %c0_33 = arith.constant 0 : index
      %c0_34 = arith.constant 0 : index
      %c0_35 = arith.constant 0 : index
      %27 = vector.load %arg8[%c2, %c0_33, %c0_34, %c0_35] : memref<7x14x16x128xf32, #tpu.memory_space<vmem>>, vector<1x14x16x128xf32>
      %28 = vector.shape_cast %27 : vector<1x14x16x128xf32> to vector<14x16x128xf32>
      %29 = vector.shape_cast %26 : vector<14x16x128xf32> to vector<1x14x16x128xf32>
      tpu.vector_store %arg8[%c2, %c0_33, %c0_34, %c0_35], %29 {strides = array<i32>} : memref<7x14x16x128xf32, #tpu.memory_space<vmem>>, vector<1x14x16x128xf32>,
      %30 = arith.index_cast %14 : i32 to index
      %c8 = arith.constant 8 : index
      %c0_36 = arith.constant 0 : index
      %31 = vector.load %arg7[%30, %c8, %c0_36] : memref<22x32x128xf32, #tpu.memory_space<vmem>>, vector<14x16x128xf32>
      %c3 = arith.constant 3 : index
      %c0_37 = arith.constant 0 : index
      %c0_38 = arith.constant 0 : index
      %c0_39 = arith.constant 0 : index
      %32 = vector.load %arg8[%c3, %c0_37, %c0_38, %c0_39] : memref<7x14x16x128xf32, #tpu.memory_space<vmem>>, vector<1x14x16x128xf32>
      %33 = vector.shape_cast %32 : vector<1x14x16x128xf32> to vector<14x16x128xf32>
      %34 = vector.shape_cast %31 : vector<14x16x128xf32> to vector<1x14x16x128xf32>
      tpu.vector_store %arg8[%c3, %c0_37, %c0_38, %c0_39], %34 {strides = array<i32>} : memref<7x14x16x128xf32, #tpu.memory_space<vmem>>, vector<1x14x16x128xf32>,
      %35 = arith.index_cast %14 : i32 to index
      %c9 = arith.constant 9 : index
      %c0_40 = arith.constant 0 : index
      %36 = vector.load %arg7[%35, %c9, %c0_40] : memref<22x32x128xf32, #tpu.memory_space<vmem>>, vector<14x16x128xf32>
      %c4 = arith.constant 4 : index
      %c0_41 = arith.constant 0 : index
      %c0_42 = arith.constant 0 : index
      %c0_43 = arith.constant 0 : index
      %37 = vector.load %arg8[%c4, %c0_41, %c0_42, %c0_43] : memref<7x14x16x128xf32, #tpu.memory_space<vmem>>, vector<1x14x16x128xf32>
      %38 = vector.shape_cast %37 : vector<1x14x16x128xf32> to vector<14x16x128xf32>
      %39 = vector.shape_cast %36 : vector<14x16x128xf32> to vector<1x14x16x128xf32>
      tpu.vector_store %arg8[%c4, %c0_41, %c0_42, %c0_43], %39 {strides = array<i32>} : memref<7x14x16x128xf32, #tpu.memory_space<vmem>>, vector<1x14x16x128xf32>,
      %40 = arith.index_cast %14 : i32 to index
      %c10 = arith.constant 10 : index
      %c0_44 = arith.constant 0 : index
      %41 = vector.load %arg7[%40, %c10, %c0_44] : memref<22x32x128xf32, #tpu.memory_space<vmem>>, vector<14x16x128xf32>
      %c5_45 = arith.constant 5 : index
      %c0_46 = arith.constant 0 : index
      %c0_47 = arith.constant 0 : index
      %c0_48 = arith.constant 0 : index
      %42 = vector.load %arg8[%c5_45, %c0_46, %c0_47, %c0_48] : memref<7x14x16x128xf32, #tpu.memory_space<vmem>>, vector<1x14x16x128xf32>
      %43 = vector.shape_cast %42 : vector<1x14x16x128xf32> to vector<14x16x128xf32>
      %44 = vector.shape_cast %41 : vector<14x16x128xf32> to vector<1x14x16x128xf32>
      tpu.vector_store %arg8[%c5_45, %c0_46, %c0_47, %c0_48], %44 {strides = array<i32>} : memref<7x14x16x128xf32, #tpu.memory_space<vmem>>, vector<1x14x16x128xf32>,
      %45 = arith.index_cast %14 : i32 to index
      %c11 = arith.constant 11 : index
      %c0_49 = arith.constant 0 : index
      %46 = vector.load %arg7[%45, %c11, %c0_49] : memref<22x32x128xf32, #tpu.memory_space<vmem>>, vector<14x16x128xf32>
      %c6_50 = arith.constant 6 : index
      %c0_51 = arith.constant 0 : index
      %c0_52 = arith.constant 0 : index
      %c0_53 = arith.constant 0 : index
      %47 = vector.load %arg8[%c6_50, %c0_51, %c0_52, %c0_53] : memref<7x14x16x128xf32, #tpu.memory_space<vmem>>, vector<1x14x16x128xf32>
      %48 = vector.shape_cast %47 : vector<1x14x16x128xf32> to vector<14x16x128xf32>
      %49 = vector.shape_cast %46 : vector<14x16x128xf32> to vector<1x14x16x128xf32>
      tpu.vector_store %arg8[%c6_50, %c0_51, %c0_52, %c0_53], %49 {strides = array<i32>} : memref<7x14x16x128xf32, #tpu.memory_space<vmem>>, vector<1x14x16x128xf32>,
      %cst_54 = arith.constant 0.000000e+00 : f32
      %50 = vector.broadcast %cst_54 : f32 to vector<8x16x128xf32>
      %c0_55 = arith.constant 0 : index
      %c0_56 = arith.constant 0 : index
      %c0_57 = arith.constant 0 : index
      %c0_58 = arith.constant 0 : index
      %51 = vector.load %arg8[%c0_55, %c0_56, %c0_57, %c0_58] : memref<7x14x16x128xf32, #tpu.memory_space<vmem>>, vector<1x8x16x128xf32>
      %52 = vector.shape_cast %51 : vector<1x8x16x128xf32> to vector<8x16x128xf32>
      %53 = vector.extract_strided_slice %9 {offsets = [0, 0, 0], sizes = [1, 1, 128], strides = [1, 1, 1]} : vector<7x7x128xf32> to vector<1x1x128xf32>
      %54 = vector.shape_cast %53 : vector<1x1x128xf32> to vector<128xf32>
      %55 = vector.shape_cast %54 : vector<128xf32> to vector<1x1x128xf32>
      %56 = vector.broadcast %55 : vector<1x1x128xf32> to vector<8x16x128xf32>
      %57 = arith.mulf %52, %56 : vector<8x16x128xf32>
      %58 = arith.addf %50, %57 : vector<8x16x128xf32>
      %c1_59 = arith.constant 1 : index
      %c0_60 = arith.constant 0 : index
      %c0_61 = arith.constant 0 : index
      %c0_62 = arith.constant 0 : index
      %59 = vector.load %arg8[%c1_59, %c0_60, %c0_61, %c0_62] : memref<7x14x16x128xf32, #tpu.memory_space<vmem>>, vector<1x8x16x128xf32>
      %60 = vector.shape_cast %59 : vector<1x8x16x128xf32> to vector<8x16x128xf32>
      %61 = vector.extract_strided_slice %9 {offsets = [0, 1, 0], sizes = [1, 1, 128], strides = [1, 1, 1]} : vector<7x7x128xf32> to vector<1x1x128xf32>
      %62 = vector.shape_cast %61 : vector<1x1x128xf32> to vector<128xf32>
      %63 = vector.shape_cast %62 : vector<128xf32> to vector<1x1x128xf32>
      %64 = vector.broadcast %63 : vector<1x1x128xf32> to vector<8x16x128xf32>
      %65 = arith.mulf %60, %64 : vector<8x16x128xf32>
      %66 = arith.addf %58, %65 : vector<8x16x128xf32>
      %c2_63 = arith.constant 2 : index
      %c0_64 = arith.constant 0 : index
      %c0_65 = arith.constant 0 : index
      %c0_66 = arith.constant 0 : index
      %67 = vector.load %arg8[%c2_63, %c0_64, %c0_65, %c0_66] : memref<7x14x16x128xf32, #tpu.memory_space<vmem>>, vector<1x8x16x128xf32>
      %68 = vector.shape_cast %67 : vector<1x8x16x128xf32> to vector<8x16x128xf32>
      %69 = vector.extract_strided_slice %9 {offsets = [0, 2, 0], sizes = [1, 1, 128], strides = [1, 1, 1]} : vector<7x7x128xf32> to vector<1x1x128xf32>
      %70 = vector.shape_cast %69 : vector<1x1x128xf32> to vector<128xf32>
      %71 = vector.shape_cast %70 : vector<128xf32> to vector<1x1x128xf32>
      %72 = vector.broadcast %71 : vector<1x1x128xf32> to vector<8x16x128xf32>
      %73 = arith.mulf %68, %72 : vector<8x16x128xf32>
      %74 = arith.addf %66, %73 : vector<8x16x128xf32>
      %c3_67 = arith.constant 3 : index
      %c0_68 = arith.constant 0 : index
      %c0_69 = arith.constant 0 : index
      %c0_70 = arith.constant 0 : index
      %75 = vector.load %arg8[%c3_67, %c0_68, %c0_69, %c0_70] : memref<7x14x16x128xf32, #tpu.memory_space<vmem>>, vector<1x8x16x128xf32>
      %76 = vector.shape_cast %75 : vector<1x8x16x128xf32> to vector<8x16x128xf32>
      %77 = vector.extract_strided_slice %9 {offsets = [0, 3, 0], sizes = [1, 1, 128], strides = [1, 1, 1]} : vector<7x7x128xf32> to vector<1x1x128xf32>
      %78 = vector.shape_cast %77 : vector<1x1x128xf32> to vector<128xf32>
      %79 = vector.shape_cast %78 : vector<128xf32> to vector<1x1x128xf32>
      %80 = vector.broadcast %79 : vector<1x1x128xf32> to vector<8x16x128xf32>
      %81 = arith.mulf %76, %80 : vector<8x16x128xf32>
      %82 = arith.addf %74, %81 : vector<8x16x128xf32>
      %c4_71 = arith.constant 4 : index
      %c0_72 = arith.constant 0 : index
      %c0_73 = arith.constant 0 : index
      %c0_74 = arith.constant 0 : index
      %83 = vector.load %arg8[%c4_71, %c0_72, %c0_73, %c0_74] : memref<7x14x16x128xf32, #tpu.memory_space<vmem>>, vector<1x8x16x128xf32>
      %84 = vector.shape_cast %83 : vector<1x8x16x128xf32> to vector<8x16x128xf32>
      %85 = vector.extract_strided_slice %9 {offsets = [0, 4, 0], sizes = [1, 1, 128], strides = [1, 1, 1]} : vector<7x7x128xf32> to vector<1x1x128xf32>
      %86 = vector.shape_cast %85 : vector<1x1x128xf32> to vector<128xf32>
      %87 = vector.shape_cast %86 : vector<128xf32> to vector<1x1x128xf32>
      %88 = vector.broadcast %87 : vector<1x1x128xf32> to vector<8x16x128xf32>
      %89 = arith.mulf %84, %88 : vector<8x16x128xf32>
      %90 = arith.addf %82, %89 : vector<8x16x128xf32>
      %c5_75 = arith.constant 5 : index
      %c0_76 = arith.constant 0 : index
      %c0_77 = arith.constant 0 : index
      %c0_78 = arith.constant 0 : index
      %91 = vector.load %arg8[%c5_75, %c0_76, %c0_77, %c0_78] : memref<7x14x16x128xf32, #tpu.memory_space<vmem>>, vector<1x8x16x128xf32>
      %92 = vector.shape_cast %91 : vector<1x8x16x128xf32> to vector<8x16x128xf32>
      %93 = vector.extract_strided_slice %9 {offsets = [0, 5, 0], sizes = [1, 1, 128], strides = [1, 1, 1]} : vector<7x7x128xf32> to vector<1x1x128xf32>
      %94 = vector.shape_cast %93 : vector<1x1x128xf32> to vector<128xf32>
      %95 = vector.shape_cast %94 : vector<128xf32> to vector<1x1x128xf32>
      %96 = vector.broadcast %95 : vector<1x1x128xf32> to vector<8x16x128xf32>
      %97 = arith.mulf %92, %96 : vector<8x16x128xf32>
      %98 = arith.addf %90, %97 : vector<8x16x128xf32>
      %c6_79 = arith.constant 6 : index
      %c0_80 = arith.constant 0 : index
      %c0_81 = arith.constant 0 : index
      %c0_82 = arith.constant 0 : index
      %99 = vector.load %arg8[%c6_79, %c0_80, %c0_81, %c0_82] : memref<7x14x16x128xf32, #tpu.memory_space<vmem>>, vector<1x8x16x128xf32>
      %100 = vector.shape_cast %99 : vector<1x8x16x128xf32> to vector<8x16x128xf32>
      %101 = vector.extract_strided_slice %9 {offsets = [0, 6, 0], sizes = [1, 1, 128], strides = [1, 1, 1]} : vector<7x7x128xf32> to vector<1x1x128xf32>
      %102 = vector.shape_cast %101 : vector<1x1x128xf32> to vector<128xf32>
      %103 = vector.shape_cast %102 : vector<128xf32> to vector<1x1x128xf32>
      %104 = vector.broadcast %103 : vector<1x1x128xf32> to vector<8x16x128xf32>
      %105 = arith.mulf %100, %104 : vector<8x16x128xf32>
      %106 = arith.addf %98, %105 : vector<8x16x128xf32>
      %c0_83 = arith.constant 0 : index
      %c1_84 = arith.constant 1 : index
      %c0_85 = arith.constant 0 : index
      %c0_86 = arith.constant 0 : index
      %107 = vector.load %arg8[%c0_83, %c1_84, %c0_85, %c0_86] : memref<7x14x16x128xf32, #tpu.memory_space<vmem>>, vector<1x8x16x128xf32>
      %108 = vector.shape_cast %107 : vector<1x8x16x128xf32> to vector<8x16x128xf32>
      %109 = vector.extract_strided_slice %9 {offsets = [1, 0, 0], sizes = [1, 1, 128], strides = [1, 1, 1]} : vector<7x7x128xf32> to vector<1x1x128xf32>
      %110 = vector.shape_cast %109 : vector<1x1x128xf32> to vector<128xf32>
      %111 = vector.shape_cast %110 : vector<128xf32> to vector<1x1x128xf32>
      %112 = vector.broadcast %111 : vector<1x1x128xf32> to vector<8x16x128xf32>
      %113 = arith.mulf %108, %112 : vector<8x16x128xf32>
      %114 = arith.addf %106, %113 : vector<8x16x128xf32>
      %c1_87 = arith.constant 1 : index
      %c1_88 = arith.constant 1 : index
      %c0_89 = arith.constant 0 : index
      %c0_90 = arith.constant 0 : index
      %115 = vector.load %arg8[%c1_87, %c1_88, %c0_89, %c0_90] : memref<7x14x16x128xf32, #tpu.memory_space<vmem>>, vector<1x8x16x128xf32>
      %116 = vector.shape_cast %115 : vector<1x8x16x128xf32> to vector<8x16x128xf32>
      %117 = vector.extract_strided_slice %9 {offsets = [1, 1, 0], sizes = [1, 1, 128], strides = [1, 1, 1]} : vector<7x7x128xf32> to vector<1x1x128xf32>
      %118 = vector.shape_cast %117 : vector<1x1x128xf32> to vector<128xf32>
      %119 = vector.shape_cast %118 : vector<128xf32> to vector<1x1x128xf32>
      %120 = vector.broadcast %119 : vector<1x1x128xf32> to vector<8x16x128xf32>
      %121 = arith.mulf %116, %120 : vector<8x16x128xf32>
      %122 = arith.addf %114, %121 : vector<8x16x128xf32>
      %c2_91 = arith.constant 2 : index
      %c1_92 = arith.constant 1 : index
      %c0_93 = arith.constant 0 : index
      %c0_94 = arith.constant 0 : index
      %123 = vector.load %arg8[%c2_91, %c1_92, %c0_93, %c0_94] : memref<7x14x16x128xf32, #tpu.memory_space<vmem>>, vector<1x8x16x128xf32>
      %124 = vector.shape_cast %123 : vector<1x8x16x128xf32> to vector<8x16x128xf32>
      %125 = vector.extract_strided_slice %9 {offsets = [1, 2, 0], sizes = [1, 1, 128], strides = [1, 1, 1]} : vector<7x7x128xf32> to vector<1x1x128xf32>
      %126 = vector.shape_cast %125 : vector<1x1x128xf32> to vector<128xf32>
      %127 = vector.shape_cast %126 : vector<128xf32> to vector<1x1x128xf32>
      %128 = vector.broadcast %127 : vector<1x1x128xf32> to vector<8x16x128xf32>
      %129 = arith.mulf %124, %128 : vector<8x16x128xf32>
      %130 = arith.addf %122, %129 : vector<8x16x128xf32>
      %c3_95 = arith.constant 3 : index
      %c1_96 = arith.constant 1 : index
      %c0_97 = arith.constant 0 : index
      %c0_98 = arith.constant 0 : index
      %131 = vector.load %arg8[%c3_95, %c1_96, %c0_97, %c0_98] : memref<7x14x16x128xf32, #tpu.memory_space<vmem>>, vector<1x8x16x128xf32>
      %132 = vector.shape_cast %131 : vector<1x8x16x128xf32> to vector<8x16x128xf32>
      %133 = vector.extract_strided_slice %9 {offsets = [1, 3, 0], sizes = [1, 1, 128], strides = [1, 1, 1]} : vector<7x7x128xf32> to vector<1x1x128xf32>
      %134 = vector.shape_cast %133 : vector<1x1x128xf32> to vector<128xf32>
      %135 = vector.shape_cast %134 : vector<128xf32> to vector<1x1x128xf32>
      %136 = vector.broadcast %135 : vector<1x1x128xf32> to vector<8x16x128xf32>
      %137 = arith.mulf %132, %136 : vector<8x16x128xf32>
      %138 = arith.addf %130, %137 : vector<8x16x128xf32>
      %c4_99 = arith.constant 4 : index
      %c1_100 = arith.constant 1 : index
      %c0_101 = arith.constant 0 : index
      %c0_102 = arith.constant 0 : index
      %139 = vector.load %arg8[%c4_99, %c1_100, %c0_101, %c0_102] : memref<7x14x16x128xf32, #tpu.memory_space<vmem>>, vector<1x8x16x128xf32>
      %140 = vector.shape_cast %139 : vector<1x8x16x128xf32> to vector<8x16x128xf32>
      %141 = vector.extract_strided_slice %9 {offsets = [1, 4, 0], sizes = [1, 1, 128], strides = [1, 1, 1]} : vector<7x7x128xf32> to vector<1x1x128xf32>
      %142 = vector.shape_cast %141 : vector<1x1x128xf32> to vector<128xf32>
      %143 = vector.shape_cast %142 : vector<128xf32> to vector<1x1x128xf32>
      %144 = vector.broadcast %143 : vector<1x1x128xf32> to vector<8x16x128xf32>
      %145 = arith.mulf %140, %144 : vector<8x16x128xf32>
      %146 = arith.addf %138, %145 : vector<8x16x128xf32>
      %c5_103 = arith.constant 5 : index
      %c1_104 = arith.constant 1 : index
      %c0_105 = arith.constant 0 : index
      %c0_106 = arith.constant 0 : index
      %147 = vector.load %arg8[%c5_103, %c1_104, %c0_105, %c0_106] : memref<7x14x16x128xf32, #tpu.memory_space<vmem>>, vector<1x8x16x128xf32>
      %148 = vector.shape_cast %147 : vector<1x8x16x128xf32> to vector<8x16x128xf32>
      %149 = vector.extract_strided_slice %9 {offsets = [1, 5, 0], sizes = [1, 1, 128], strides = [1, 1, 1]} : vector<7x7x128xf32> to vector<1x1x128xf32>
      %150 = vector.shape_cast %149 : vector<1x1x128xf32> to vector<128xf32>
      %151 = vector.shape_cast %150 : vector<128xf32> to vector<1x1x128xf32>
      %152 = vector.broadcast %151 : vector<1x1x128xf32> to vector<8x16x128xf32>
      %153 = arith.mulf %148, %152 : vector<8x16x128xf32>
      %154 = arith.addf %146, %153 : vector<8x16x128xf32>
      %c6_107 = arith.constant 6 : index
      %c1_108 = arith.constant 1 : index
      %c0_109 = arith.constant 0 : index
      %c0_110 = arith.constant 0 : index
      %155 = vector.load %arg8[%c6_107, %c1_108, %c0_109, %c0_110] : memref<7x14x16x128xf32, #tpu.memory_space<vmem>>, vector<1x8x16x128xf32>
      %156 = vector.shape_cast %155 : vector<1x8x16x128xf32> to vector<8x16x128xf32>
      %157 = vector.extract_strided_slice %9 {offsets = [1, 6, 0], sizes = [1, 1, 128], strides = [1, 1, 1]} : vector<7x7x128xf32> to vector<1x1x128xf32>
      %158 = vector.shape_cast %157 : vector<1x1x128xf32> to vector<128xf32>
      %159 = vector.shape_cast %158 : vector<128xf32> to vector<1x1x128xf32>
      %160 = vector.broadcast %159 : vector<1x1x128xf32> to vector<8x16x128xf32>
      %161 = arith.mulf %156, %160 : vector<8x16x128xf32>
      %162 = arith.addf %154, %161 : vector<8x16x128xf32>
      %c0_111 = arith.constant 0 : index
      %c2_112 = arith.constant 2 : index
      %c0_113 = arith.constant 0 : index
      %c0_114 = arith.constant 0 : index
      %163 = vector.load %arg8[%c0_111, %c2_112, %c0_113, %c0_114] : memref<7x14x16x128xf32, #tpu.memory_space<vmem>>, vector<1x8x16x128xf32>
      %164 = vector.shape_cast %163 : vector<1x8x16x128xf32> to vector<8x16x128xf32>
      %165 = vector.extract_strided_slice %9 {offsets = [2, 0, 0], sizes = [1, 1, 128], strides = [1, 1, 1]} : vector<7x7x128xf32> to vector<1x1x128xf32>
      %166 = vector.shape_cast %165 : vector<1x1x128xf32> to vector<128xf32>
      %167 = vector.shape_cast %166 : vector<128xf32> to vector<1x1x128xf32>
      %168 = vector.broadcast %167 : vector<1x1x128xf32> to vector<8x16x128xf32>
      %169 = arith.mulf %164, %168 : vector<8x16x128xf32>
      %170 = arith.addf %162, %169 : vector<8x16x128xf32>
      %c1_115 = arith.constant 1 : index
      %c2_116 = arith.constant 2 : index
      %c0_117 = arith.constant 0 : index
      %c0_118 = arith.constant 0 : index
      %171 = vector.load %arg8[%c1_115, %c2_116, %c0_117, %c0_118] : memref<7x14x16x128xf32, #tpu.memory_space<vmem>>, vector<1x8x16x128xf32>
      %172 = vector.shape_cast %171 : vector<1x8x16x128xf32> to vector<8x16x128xf32>
      %173 = vector.extract_strided_slice %9 {offsets = [2, 1, 0], sizes = [1, 1, 128], strides = [1, 1, 1]} : vector<7x7x128xf32> to vector<1x1x128xf32>
      %174 = vector.shape_cast %173 : vector<1x1x128xf32> to vector<128xf32>
      %175 = vector.shape_cast %174 : vector<128xf32> to vector<1x1x128xf32>
      %176 = vector.broadcast %175 : vector<1x1x128xf32> to vector<8x16x128xf32>
      %177 = arith.mulf %172, %176 : vector<8x16x128xf32>
      %178 = arith.addf %170, %177 : vector<8x16x128xf32>
      %c2_119 = arith.constant 2 : index
      %c2_120 = arith.constant 2 : index
      %c0_121 = arith.constant 0 : index
      %c0_122 = arith.constant 0 : index
      %179 = vector.load %arg8[%c2_119, %c2_120, %c0_121, %c0_122] : memref<7x14x16x128xf32, #tpu.memory_space<vmem>>, vector<1x8x16x128xf32>
      %180 = vector.shape_cast %179 : vector<1x8x16x128xf32> to vector<8x16x128xf32>
      %181 = vector.extract_strided_slice %9 {offsets = [2, 2, 0], sizes = [1, 1, 128], strides = [1, 1, 1]} : vector<7x7x128xf32> to vector<1x1x128xf32>
      %182 = vector.shape_cast %181 : vector<1x1x128xf32> to vector<128xf32>
      %183 = vector.shape_cast %182 : vector<128xf32> to vector<1x1x128xf32>
      %184 = vector.broadcast %183 : vector<1x1x128xf32> to vector<8x16x128xf32>
      %185 = arith.mulf %180, %184 : vector<8x16x128xf32>
      %186 = arith.addf %178, %185 : vector<8x16x128xf32>
      %c3_123 = arith.constant 3 : index
      %c2_124 = arith.constant 2 : index
      %c0_125 = arith.constant 0 : index
      %c0_126 = arith.constant 0 : index
      %187 = vector.load %arg8[%c3_123, %c2_124, %c0_125, %c0_126] : memref<7x14x16x128xf32, #tpu.memory_space<vmem>>, vector<1x8x16x128xf32>
      %188 = vector.shape_cast %187 : vector<1x8x16x128xf32> to vector<8x16x128xf32>
      %189 = vector.extract_strided_slice %9 {offsets = [2, 3, 0], sizes = [1, 1, 128], strides = [1, 1, 1]} : vector<7x7x128xf32> to vector<1x1x128xf32>
      %190 = vector.shape_cast %189 : vector<1x1x128xf32> to vector<128xf32>
      %191 = vector.shape_cast %190 : vector<128xf32> to vector<1x1x128xf32>
      %192 = vector.broadcast %191 : vector<1x1x128xf32> to vector<8x16x128xf32>
      %193 = arith.mulf %188, %192 : vector<8x16x128xf32>
      %194 = arith.addf %186, %193 : vector<8x16x128xf32>
      %c4_127 = arith.constant 4 : index
      %c2_128 = arith.constant 2 : index
      %c0_129 = arith.constant 0 : index
      %c0_130 = arith.constant 0 : index
      %195 = vector.load %arg8[%c4_127, %c2_128, %c0_129, %c0_130] : memref<7x14x16x128xf32, #tpu.memory_space<vmem>>, vector<1x8x16x128xf32>
      %196 = vector.shape_cast %195 : vector<1x8x16x128xf32> to vector<8x16x128xf32>
      %197 = vector.extract_strided_slice %9 {offsets = [2, 4, 0], sizes = [1, 1, 128], strides = [1, 1, 1]} : vector<7x7x128xf32> to vector<1x1x128xf32>
      %198 = vector.shape_cast %197 : vector<1x1x128xf32> to vector<128xf32>
      %199 = vector.shape_cast %198 : vector<128xf32> to vector<1x1x128xf32>
      %200 = vector.broadcast %199 : vector<1x1x128xf32> to vector<8x16x128xf32>
      %201 = arith.mulf %196, %200 : vector<8x16x128xf32>
      %202 = arith.addf %194, %201 : vector<8x16x128xf32>
      %c5_131 = arith.constant 5 : index
      %c2_132 = arith.constant 2 : index
      %c0_133 = arith.constant 0 : index
      %c0_134 = arith.constant 0 : index
      %203 = vector.load %arg8[%c5_131, %c2_132, %c0_133, %c0_134] : memref<7x14x16x128xf32, #tpu.memory_space<vmem>>, vector<1x8x16x128xf32>
      %204 = vector.shape_cast %203 : vector<1x8x16x128xf32> to vector<8x16x128xf32>
      %205 = vector.extract_strided_slice %9 {offsets = [2, 5, 0], sizes = [1, 1, 128], strides = [1, 1, 1]} : vector<7x7x128xf32> to vector<1x1x128xf32>
      %206 = vector.shape_cast %205 : vector<1x1x128xf32> to vector<128xf32>
      %207 = vector.shape_cast %206 : vector<128xf32> to vector<1x1x128xf32>
      %208 = vector.broadcast %207 : vector<1x1x128xf32> to vector<8x16x128xf32>
      %209 = arith.mulf %204, %208 : vector<8x16x128xf32>
      %210 = arith.addf %202, %209 : vector<8x16x128xf32>
      %c6_135 = arith.constant 6 : index
      %c2_136 = arith.constant 2 : index
      %c0_137 = arith.constant 0 : index
      %c0_138 = arith.constant 0 : index
      %211 = vector.load %arg8[%c6_135, %c2_136, %c0_137, %c0_138] : memref<7x14x16x128xf32, #tpu.memory_space<vmem>>, vector<1x8x16x128xf32>
      %212 = vector.shape_cast %211 : vector<1x8x16x128xf32> to vector<8x16x128xf32>
      %213 = vector.extract_strided_slice %9 {offsets = [2, 6, 0], sizes = [1, 1, 128], strides = [1, 1, 1]} : vector<7x7x128xf32> to vector<1x1x128xf32>
      %214 = vector.shape_cast %213 : vector<1x1x128xf32> to vector<128xf32>
      %215 = vector.shape_cast %214 : vector<128xf32> to vector<1x1x128xf32>
      %216 = vector.broadcast %215 : vector<1x1x128xf32> to vector<8x16x128xf32>
      %217 = arith.mulf %212, %216 : vector<8x16x128xf32>
      %218 = arith.addf %210, %217 : vector<8x16x128xf32>
      %c0_139 = arith.constant 0 : index
      %c3_140 = arith.constant 3 : index
      %c0_141 = arith.constant 0 : index
      %c0_142 = arith.constant 0 : index
      %219 = vector.load %arg8[%c0_139, %c3_140, %c0_141, %c0_142] : memref<7x14x16x128xf32, #tpu.memory_space<vmem>>, vector<1x8x16x128xf32>
      %220 = vector.shape_cast %219 : vector<1x8x16x128xf32> to vector<8x16x128xf32>
      %221 = vector.extract_strided_slice %9 {offsets = [3, 0, 0], sizes = [1, 1, 128], strides = [1, 1, 1]} : vector<7x7x128xf32> to vector<1x1x128xf32>
      %222 = vector.shape_cast %221 : vector<1x1x128xf32> to vector<128xf32>
      %223 = vector.shape_cast %222 : vector<128xf32> to vector<1x1x128xf32>
      %224 = vector.broadcast %223 : vector<1x1x128xf32> to vector<8x16x128xf32>
      %225 = arith.mulf %220, %224 : vector<8x16x128xf32>
      %226 = arith.addf %218, %225 : vector<8x16x128xf32>
      %c1_143 = arith.constant 1 : index
      %c3_144 = arith.constant 3 : index
      %c0_145 = arith.constant 0 : index
      %c0_146 = arith.constant 0 : index
      %227 = vector.load %arg8[%c1_143, %c3_144, %c0_145, %c0_146] : memref<7x14x16x128xf32, #tpu.memory_space<vmem>>, vector<1x8x16x128xf32>
      %228 = vector.shape_cast %227 : vector<1x8x16x128xf32> to vector<8x16x128xf32>
      %229 = vector.extract_strided_slice %9 {offsets = [3, 1, 0], sizes = [1, 1, 128], strides = [1, 1, 1]} : vector<7x7x128xf32> to vector<1x1x128xf32>
      %230 = vector.shape_cast %229 : vector<1x1x128xf32> to vector<128xf32>
      %231 = vector.shape_cast %230 : vector<128xf32> to vector<1x1x128xf32>
      %232 = vector.broadcast %231 : vector<1x1x128xf32> to vector<8x16x128xf32>
      %233 = arith.mulf %228, %232 : vector<8x16x128xf32>
      %234 = arith.addf %226, %233 : vector<8x16x128xf32>
      %c2_147 = arith.constant 2 : index
      %c3_148 = arith.constant 3 : index
      %c0_149 = arith.constant 0 : index
      %c0_150 = arith.constant 0 : index
      %235 = vector.load %arg8[%c2_147, %c3_148, %c0_149, %c0_150] : memref<7x14x16x128xf32, #tpu.memory_space<vmem>>, vector<1x8x16x128xf32>
      %236 = vector.shape_cast %235 : vector<1x8x16x128xf32> to vector<8x16x128xf32>
      %237 = vector.extract_strided_slice %9 {offsets = [3, 2, 0], sizes = [1, 1, 128], strides = [1, 1, 1]} : vector<7x7x128xf32> to vector<1x1x128xf32>
      %238 = vector.shape_cast %237 : vector<1x1x128xf32> to vector<128xf32>
      %239 = vector.shape_cast %238 : vector<128xf32> to vector<1x1x128xf32>
      %240 = vector.broadcast %239 : vector<1x1x128xf32> to vector<8x16x128xf32>
      %241 = arith.mulf %236, %240 : vector<8x16x128xf32>
      %242 = arith.addf %234, %241 : vector<8x16x128xf32>
      %c3_151 = arith.constant 3 : index
      %c3_152 = arith.constant 3 : index
      %c0_153 = arith.constant 0 : index
      %c0_154 = arith.constant 0 : index
      %243 = vector.load %arg8[%c3_151, %c3_152, %c0_153, %c0_154] : memref<7x14x16x128xf32, #tpu.memory_space<vmem>>, vector<1x8x16x128xf32>
      %244 = vector.shape_cast %243 : vector<1x8x16x128xf32> to vector<8x16x128xf32>
      %245 = vector.extract_strided_slice %9 {offsets = [3, 3, 0], sizes = [1, 1, 128], strides = [1, 1, 1]} : vector<7x7x128xf32> to vector<1x1x128xf32>
      %246 = vector.shape_cast %245 : vector<1x1x128xf32> to vector<128xf32>
      %247 = vector.shape_cast %246 : vector<128xf32> to vector<1x1x128xf32>
      %248 = vector.broadcast %247 : vector<1x1x128xf32> to vector<8x16x128xf32>
      %249 = arith.mulf %244, %248 : vector<8x16x128xf32>
      %250 = arith.addf %242, %249 : vector<8x16x128xf32>
      %c4_155 = arith.constant 4 : index
      %c3_156 = arith.constant 3 : index
      %c0_157 = arith.constant 0 : index
      %c0_158 = arith.constant 0 : index
      %251 = vector.load %arg8[%c4_155, %c3_156, %c0_157, %c0_158] : memref<7x14x16x128xf32, #tpu.memory_space<vmem>>, vector<1x8x16x128xf32>
      %252 = vector.shape_cast %251 : vector<1x8x16x128xf32> to vector<8x16x128xf32>
      %253 = vector.extract_strided_slice %9 {offsets = [3, 4, 0], sizes = [1, 1, 128], strides = [1, 1, 1]} : vector<7x7x128xf32> to vector<1x1x128xf32>
      %254 = vector.shape_cast %253 : vector<1x1x128xf32> to vector<128xf32>
      %255 = vector.shape_cast %254 : vector<128xf32> to vector<1x1x128xf32>
      %256 = vector.broadcast %255 : vector<1x1x128xf32> to vector<8x16x128xf32>
      %257 = arith.mulf %252, %256 : vector<8x16x128xf32>
      %258 = arith.addf %250, %257 : vector<8x16x128xf32>
      %c5_159 = arith.constant 5 : index
      %c3_160 = arith.constant 3 : index
      %c0_161 = arith.constant 0 : index
      %c0_162 = arith.constant 0 : index
      %259 = vector.load %arg8[%c5_159, %c3_160, %c0_161, %c0_162] : memref<7x14x16x128xf32, #tpu.memory_space<vmem>>, vector<1x8x16x128xf32>
      %260 = vector.shape_cast %259 : vector<1x8x16x128xf32> to vector<8x16x128xf32>
      %261 = vector.extract_strided_slice %9 {offsets = [3, 5, 0], sizes = [1, 1, 128], strides = [1, 1, 1]} : vector<7x7x128xf32> to vector<1x1x128xf32>
      %262 = vector.shape_cast %261 : vector<1x1x128xf32> to vector<128xf32>
      %263 = vector.shape_cast %262 : vector<128xf32> to vector<1x1x128xf32>
      %264 = vector.broadcast %263 : vector<1x1x128xf32> to vector<8x16x128xf32>
      %265 = arith.mulf %260, %264 : vector<8x16x128xf32>
      %266 = arith.addf %258, %265 : vector<8x16x128xf32>
      %c6_163 = arith.constant 6 : index
      %c3_164 = arith.constant 3 : index
      %c0_165 = arith.constant 0 : index
      %c0_166 = arith.constant 0 : index
      %267 = vector.load %arg8[%c6_163, %c3_164, %c0_165, %c0_166] : memref<7x14x16x128xf32, #tpu.memory_space<vmem>>, vector<1x8x16x128xf32>
      %268 = vector.shape_cast %267 : vector<1x8x16x128xf32> to vector<8x16x128xf32>
      %269 = vector.extract_strided_slice %9 {offsets = [3, 6, 0], sizes = [1, 1, 128], strides = [1, 1, 1]} : vector<7x7x128xf32> to vector<1x1x128xf32>
      %270 = vector.shape_cast %269 : vector<1x1x128xf32> to vector<128xf32>
      %271 = vector.shape_cast %270 : vector<128xf32> to vector<1x1x128xf32>
      %272 = vector.broadcast %271 : vector<1x1x128xf32> to vector<8x16x128xf32>
      %273 = arith.mulf %268, %272 : vector<8x16x128xf32>
      %274 = arith.addf %266, %273 : vector<8x16x128xf32>
      %c0_167 = arith.constant 0 : index
      %c4_168 = arith.constant 4 : index
      %c0_169 = arith.constant 0 : index
      %c0_170 = arith.constant 0 : index
      %275 = vector.load %arg8[%c0_167, %c4_168, %c0_169, %c0_170] : memref<7x14x16x128xf32, #tpu.memory_space<vmem>>, vector<1x8x16x128xf32>
      %276 = vector.shape_cast %275 : vector<1x8x16x128xf32> to vector<8x16x128xf32>
      %277 = vector.extract_strided_slice %9 {offsets = [4, 0, 0], sizes = [1, 1, 128], strides = [1, 1, 1]} : vector<7x7x128xf32> to vector<1x1x128xf32>
      %278 = vector.shape_cast %277 : vector<1x1x128xf32> to vector<128xf32>
      %279 = vector.shape_cast %278 : vector<128xf32> to vector<1x1x128xf32>
      %280 = vector.broadcast %279 : vector<1x1x128xf32> to vector<8x16x128xf32>
      %281 = arith.mulf %276, %280 : vector<8x16x128xf32>
      %282 = arith.addf %274, %281 : vector<8x16x128xf32>
      %c1_171 = arith.constant 1 : index
      %c4_172 = arith.constant 4 : index
      %c0_173 = arith.constant 0 : index
      %c0_174 = arith.constant 0 : index
      %283 = vector.load %arg8[%c1_171, %c4_172, %c0_173, %c0_174] : memref<7x14x16x128xf32, #tpu.memory_space<vmem>>, vector<1x8x16x128xf32>
      %284 = vector.shape_cast %283 : vector<1x8x16x128xf32> to vector<8x16x128xf32>
      %285 = vector.extract_strided_slice %9 {offsets = [4, 1, 0], sizes = [1, 1, 128], strides = [1, 1, 1]} : vector<7x7x128xf32> to vector<1x1x128xf32>
      %286 = vector.shape_cast %285 : vector<1x1x128xf32> to vector<128xf32>
      %287 = vector.shape_cast %286 : vector<128xf32> to vector<1x1x128xf32>
      %288 = vector.broadcast %287 : vector<1x1x128xf32> to vector<8x16x128xf32>
      %289 = arith.mulf %284, %288 : vector<8x16x128xf32>
      %290 = arith.addf %282, %289 : vector<8x16x128xf32>
      %c2_175 = arith.constant 2 : index
      %c4_176 = arith.constant 4 : index
      %c0_177 = arith.constant 0 : index
      %c0_178 = arith.constant 0 : index
      %291 = vector.load %arg8[%c2_175, %c4_176, %c0_177, %c0_178] : memref<7x14x16x128xf32, #tpu.memory_space<vmem>>, vector<1x8x16x128xf32>
      %292 = vector.shape_cast %291 : vector<1x8x16x128xf32> to vector<8x16x128xf32>
      %293 = vector.extract_strided_slice %9 {offsets = [4, 2, 0], sizes = [1, 1, 128], strides = [1, 1, 1]} : vector<7x7x128xf32> to vector<1x1x128xf32>
      %294 = vector.shape_cast %293 : vector<1x1x128xf32> to vector<128xf32>
      %295 = vector.shape_cast %294 : vector<128xf32> to vector<1x1x128xf32>
      %296 = vector.broadcast %295 : vector<1x1x128xf32> to vector<8x16x128xf32>
      %297 = arith.mulf %292, %296 : vector<8x16x128xf32>
      %298 = arith.addf %290, %297 : vector<8x16x128xf32>
      %c3_179 = arith.constant 3 : index
      %c4_180 = arith.constant 4 : index
      %c0_181 = arith.constant 0 : index
      %c0_182 = arith.constant 0 : index
      %299 = vector.load %arg8[%c3_179, %c4_180, %c0_181, %c0_182] : memref<7x14x16x128xf32, #tpu.memory_space<vmem>>, vector<1x8x16x128xf32>
      %300 = vector.shape_cast %299 : vector<1x8x16x128xf32> to vector<8x16x128xf32>
      %301 = vector.extract_strided_slice %9 {offsets = [4, 3, 0], sizes = [1, 1, 128], strides = [1, 1, 1]} : vector<7x7x128xf32> to vector<1x1x128xf32>
      %302 = vector.shape_cast %301 : vector<1x1x128xf32> to vector<128xf32>
      %303 = vector.shape_cast %302 : vector<128xf32> to vector<1x1x128xf32>
      %304 = vector.broadcast %303 : vector<1x1x128xf32> to vector<8x16x128xf32>
      %305 = arith.mulf %300, %304 : vector<8x16x128xf32>
      %306 = arith.addf %298, %305 : vector<8x16x128xf32>
      %c4_183 = arith.constant 4 : index
      %c4_184 = arith.constant 4 : index
      %c0_185 = arith.constant 0 : index
      %c0_186 = arith.constant 0 : index
      %307 = vector.load %arg8[%c4_183, %c4_184, %c0_185, %c0_186] : memref<7x14x16x128xf32, #tpu.memory_space<vmem>>, vector<1x8x16x128xf32>
      %308 = vector.shape_cast %307 : vector<1x8x16x128xf32> to vector<8x16x128xf32>
      %309 = vector.extract_strided_slice %9 {offsets = [4, 4, 0], sizes = [1, 1, 128], strides = [1, 1, 1]} : vector<7x7x128xf32> to vector<1x1x128xf32>
      %310 = vector.shape_cast %309 : vector<1x1x128xf32> to vector<128xf32>
      %311 = vector.shape_cast %310 : vector<128xf32> to vector<1x1x128xf32>
      %312 = vector.broadcast %311 : vector<1x1x128xf32> to vector<8x16x128xf32>
      %313 = arith.mulf %308, %312 : vector<8x16x128xf32>
      %314 = arith.addf %306, %313 : vector<8x16x128xf32>
      %c5_187 = arith.constant 5 : index
      %c4_188 = arith.constant 4 : index
      %c0_189 = arith.constant 0 : index
      %c0_190 = arith.constant 0 : index
      %315 = vector.load %arg8[%c5_187, %c4_188, %c0_189, %c0_190] : memref<7x14x16x128xf32, #tpu.memory_space<vmem>>, vector<1x8x16x128xf32>
      %316 = vector.shape_cast %315 : vector<1x8x16x128xf32> to vector<8x16x128xf32>
      %317 = vector.extract_strided_slice %9 {offsets = [4, 5, 0], sizes = [1, 1, 128], strides = [1, 1, 1]} : vector<7x7x128xf32> to vector<1x1x128xf32>
      %318 = vector.shape_cast %317 : vector<1x1x128xf32> to vector<128xf32>
      %319 = vector.shape_cast %318 : vector<128xf32> to vector<1x1x128xf32>
      %320 = vector.broadcast %319 : vector<1x1x128xf32> to vector<8x16x128xf32>
      %321 = arith.mulf %316, %320 : vector<8x16x128xf32>
      %322 = arith.addf %314, %321 : vector<8x16x128xf32>
      %c6_191 = arith.constant 6 : index
      %c4_192 = arith.constant 4 : index
      %c0_193 = arith.constant 0 : index
      %c0_194 = arith.constant 0 : index
      %323 = vector.load %arg8[%c6_191, %c4_192, %c0_193, %c0_194] : memref<7x14x16x128xf32, #tpu.memory_space<vmem>>, vector<1x8x16x128xf32>
      %324 = vector.shape_cast %323 : vector<1x8x16x128xf32> to vector<8x16x128xf32>
      %325 = vector.extract_strided_slice %9 {offsets = [4, 6, 0], sizes = [1, 1, 128], strides = [1, 1, 1]} : vector<7x7x128xf32> to vector<1x1x128xf32>
      %326 = vector.shape_cast %325 : vector<1x1x128xf32> to vector<128xf32>
      %327 = vector.shape_cast %326 : vector<128xf32> to vector<1x1x128xf32>
      %328 = vector.broadcast %327 : vector<1x1x128xf32> to vector<8x16x128xf32>
      %329 = arith.mulf %324, %328 : vector<8x16x128xf32>
      %330 = arith.addf %322, %329 : vector<8x16x128xf32>
      %c0_195 = arith.constant 0 : index
      %c5_196 = arith.constant 5 : index
      %c0_197 = arith.constant 0 : index
      %c0_198 = arith.constant 0 : index
      %331 = vector.load %arg8[%c0_195, %c5_196, %c0_197, %c0_198] : memref<7x14x16x128xf32, #tpu.memory_space<vmem>>, vector<1x8x16x128xf32>
      %332 = vector.shape_cast %331 : vector<1x8x16x128xf32> to vector<8x16x128xf32>
      %333 = vector.extract_strided_slice %9 {offsets = [5, 0, 0], sizes = [1, 1, 128], strides = [1, 1, 1]} : vector<7x7x128xf32> to vector<1x1x128xf32>
      %334 = vector.shape_cast %333 : vector<1x1x128xf32> to vector<128xf32>
      %335 = vector.shape_cast %334 : vector<128xf32> to vector<1x1x128xf32>
      %336 = vector.broadcast %335 : vector<1x1x128xf32> to vector<8x16x128xf32>
      %337 = arith.mulf %332, %336 : vector<8x16x128xf32>
      %338 = arith.addf %330, %337 : vector<8x16x128xf32>
      %c1_199 = arith.constant 1 : index
      %c5_200 = arith.constant 5 : index
      %c0_201 = arith.constant 0 : index
      %c0_202 = arith.constant 0 : index
      %339 = vector.load %arg8[%c1_199, %c5_200, %c0_201, %c0_202] : memref<7x14x16x128xf32, #tpu.memory_space<vmem>>, vector<1x8x16x128xf32>
      %340 = vector.shape_cast %339 : vector<1x8x16x128xf32> to vector<8x16x128xf32>
      %341 = vector.extract_strided_slice %9 {offsets = [5, 1, 0], sizes = [1, 1, 128], strides = [1, 1, 1]} : vector<7x7x128xf32> to vector<1x1x128xf32>
      %342 = vector.shape_cast %341 : vector<1x1x128xf32> to vector<128xf32>
      %343 = vector.shape_cast %342 : vector<128xf32> to vector<1x1x128xf32>
      %344 = vector.broadcast %343 : vector<1x1x128xf32> to vector<8x16x128xf32>
      %345 = arith.mulf %340, %344 : vector<8x16x128xf32>
      %346 = arith.addf %338, %345 : vector<8x16x128xf32>
      %c2_203 = arith.constant 2 : index
      %c5_204 = arith.constant 5 : index
      %c0_205 = arith.constant 0 : index
      %c0_206 = arith.constant 0 : index
      %347 = vector.load %arg8[%c2_203, %c5_204, %c0_205, %c0_206] : memref<7x14x16x128xf32, #tpu.memory_space<vmem>>, vector<1x8x16x128xf32>
      %348 = vector.shape_cast %347 : vector<1x8x16x128xf32> to vector<8x16x128xf32>
      %349 = vector.extract_strided_slice %9 {offsets = [5, 2, 0], sizes = [1, 1, 128], strides = [1, 1, 1]} : vector<7x7x128xf32> to vector<1x1x128xf32>
      %350 = vector.shape_cast %349 : vector<1x1x128xf32> to vector<128xf32>
      %351 = vector.shape_cast %350 : vector<128xf32> to vector<1x1x128xf32>
      %352 = vector.broadcast %351 : vector<1x1x128xf32> to vector<8x16x128xf32>
      %353 = arith.mulf %348, %352 : vector<8x16x128xf32>
      %354 = arith.addf %346, %353 : vector<8x16x128xf32>
      %c3_207 = arith.constant 3 : index
      %c5_208 = arith.constant 5 : index
      %c0_209 = arith.constant 0 : index
      %c0_210 = arith.constant 0 : index
      %355 = vector.load %arg8[%c3_207, %c5_208, %c0_209, %c0_210] : memref<7x14x16x128xf32, #tpu.memory_space<vmem>>, vector<1x8x16x128xf32>
      %356 = vector.shape_cast %355 : vector<1x8x16x128xf32> to vector<8x16x128xf32>
      %357 = vector.extract_strided_slice %9 {offsets = [5, 3, 0], sizes = [1, 1, 128], strides = [1, 1, 1]} : vector<7x7x128xf32> to vector<1x1x128xf32>
      %358 = vector.shape_cast %357 : vector<1x1x128xf32> to vector<128xf32>
      %359 = vector.shape_cast %358 : vector<128xf32> to vector<1x1x128xf32>
      %360 = vector.broadcast %359 : vector<1x1x128xf32> to vector<8x16x128xf32>
      %361 = arith.mulf %356, %360 : vector<8x16x128xf32>
      %362 = arith.addf %354, %361 : vector<8x16x128xf32>
      %c4_211 = arith.constant 4 : index
      %c5_212 = arith.constant 5 : index
      %c0_213 = arith.constant 0 : index
      %c0_214 = arith.constant 0 : index
      %363 = vector.load %arg8[%c4_211, %c5_212, %c0_213, %c0_214] : memref<7x14x16x128xf32, #tpu.memory_space<vmem>>, vector<1x8x16x128xf32>
      %364 = vector.shape_cast %363 : vector<1x8x16x128xf32> to vector<8x16x128xf32>
      %365 = vector.extract_strided_slice %9 {offsets = [5, 4, 0], sizes = [1, 1, 128], strides = [1, 1, 1]} : vector<7x7x128xf32> to vector<1x1x128xf32>
      %366 = vector.shape_cast %365 : vector<1x1x128xf32> to vector<128xf32>
      %367 = vector.shape_cast %366 : vector<128xf32> to vector<1x1x128xf32>
      %368 = vector.broadcast %367 : vector<1x1x128xf32> to vector<8x16x128xf32>
      %369 = arith.mulf %364, %368 : vector<8x16x128xf32>
      %370 = arith.addf %362, %369 : vector<8x16x128xf32>
      %c5_215 = arith.constant 5 : index
      %c5_216 = arith.constant 5 : index
      %c0_217 = arith.constant 0 : index
      %c0_218 = arith.constant 0 : index
      %371 = vector.load %arg8[%c5_215, %c5_216, %c0_217, %c0_218] : memref<7x14x16x128xf32, #tpu.memory_space<vmem>>, vector<1x8x16x128xf32>
      %372 = vector.shape_cast %371 : vector<1x8x16x128xf32> to vector<8x16x128xf32>
      %373 = vector.extract_strided_slice %9 {offsets = [5, 5, 0], sizes = [1, 1, 128], strides = [1, 1, 1]} : vector<7x7x128xf32> to vector<1x1x128xf32>
      %374 = vector.shape_cast %373 : vector<1x1x128xf32> to vector<128xf32>
      %375 = vector.shape_cast %374 : vector<128xf32> to vector<1x1x128xf32>
      %376 = vector.broadcast %375 : vector<1x1x128xf32> to vector<8x16x128xf32>
      %377 = arith.mulf %372, %376 : vector<8x16x128xf32>
      %378 = arith.addf %370, %377 : vector<8x16x128xf32>
      %c6_219 = arith.constant 6 : index
      %c5_220 = arith.constant 5 : index
      %c0_221 = arith.constant 0 : index
      %c0_222 = arith.constant 0 : index
      %379 = vector.load %arg8[%c6_219, %c5_220, %c0_221, %c0_222] : memref<7x14x16x128xf32, #tpu.memory_space<vmem>>, vector<1x8x16x128xf32>
      %380 = vector.shape_cast %379 : vector<1x8x16x128xf32> to vector<8x16x128xf32>
      %381 = vector.extract_strided_slice %9 {offsets = [5, 6, 0], sizes = [1, 1, 128], strides = [1, 1, 1]} : vector<7x7x128xf32> to vector<1x1x128xf32>
      %382 = vector.shape_cast %381 : vector<1x1x128xf32> to vector<128xf32>
      %383 = vector.shape_cast %382 : vector<128xf32> to vector<1x1x128xf32>
      %384 = vector.broadcast %383 : vector<1x1x128xf32> to vector<8x16x128xf32>
      %385 = arith.mulf %380, %384 : vector<8x16x128xf32>
      %386 = arith.addf %378, %385 : vector<8x16x128xf32>
      %c0_223 = arith.constant 0 : index
      %c6_224 = arith.constant 6 : index
      %c0_225 = arith.constant 0 : index
      %c0_226 = arith.constant 0 : index
      %387 = vector.load %arg8[%c0_223, %c6_224, %c0_225, %c0_226] : memref<7x14x16x128xf32, #tpu.memory_space<vmem>>, vector<1x8x16x128xf32>
      %388 = vector.shape_cast %387 : vector<1x8x16x128xf32> to vector<8x16x128xf32>
      %389 = vector.extract_strided_slice %9 {offsets = [6, 0, 0], sizes = [1, 1, 128], strides = [1, 1, 1]} : vector<7x7x128xf32> to vector<1x1x128xf32>
      %390 = vector.shape_cast %389 : vector<1x1x128xf32> to vector<128xf32>
      %391 = vector.shape_cast %390 : vector<128xf32> to vector<1x1x128xf32>
      %392 = vector.broadcast %391 : vector<1x1x128xf32> to vector<8x16x128xf32>
      %393 = arith.mulf %388, %392 : vector<8x16x128xf32>
      %394 = arith.addf %386, %393 : vector<8x16x128xf32>
      %c1_227 = arith.constant 1 : index
      %c6_228 = arith.constant 6 : index
      %c0_229 = arith.constant 0 : index
      %c0_230 = arith.constant 0 : index
      %395 = vector.load %arg8[%c1_227, %c6_228, %c0_229, %c0_230] : memref<7x14x16x128xf32, #tpu.memory_space<vmem>>, vector<1x8x16x128xf32>
      %396 = vector.shape_cast %395 : vector<1x8x16x128xf32> to vector<8x16x128xf32>
      %397 = vector.extract_strided_slice %9 {offsets = [6, 1, 0], sizes = [1, 1, 128], strides = [1, 1, 1]} : vector<7x7x128xf32> to vector<1x1x128xf32>
      %398 = vector.shape_cast %397 : vector<1x1x128xf32> to vector<128xf32>
      %399 = vector.shape_cast %398 : vector<128xf32> to vector<1x1x128xf32>
      %400 = vector.broadcast %399 : vector<1x1x128xf32> to vector<8x16x128xf32>
      %401 = arith.mulf %396, %400 : vector<8x16x128xf32>
      %402 = arith.addf %394, %401 : vector<8x16x128xf32>
      %c2_231 = arith.constant 2 : index
      %c6_232 = arith.constant 6 : index
      %c0_233 = arith.constant 0 : index
      %c0_234 = arith.constant 0 : index
      %403 = vector.load %arg8[%c2_231, %c6_232, %c0_233, %c0_234] : memref<7x14x16x128xf32, #tpu.memory_space<vmem>>, vector<1x8x16x128xf32>
      %404 = vector.shape_cast %403 : vector<1x8x16x128xf32> to vector<8x16x128xf32>
      %405 = vector.extract_strided_slice %9 {offsets = [6, 2, 0], sizes = [1, 1, 128], strides = [1, 1, 1]} : vector<7x7x128xf32> to vector<1x1x128xf32>
      %406 = vector.shape_cast %405 : vector<1x1x128xf32> to vector<128xf32>
      %407 = vector.shape_cast %406 : vector<128xf32> to vector<1x1x128xf32>
      %408 = vector.broadcast %407 : vector<1x1x128xf32> to vector<8x16x128xf32>
      %409 = arith.mulf %404, %408 : vector<8x16x128xf32>
      %410 = arith.addf %402, %409 : vector<8x16x128xf32>
      %c3_235 = arith.constant 3 : index
      %c6_236 = arith.constant 6 : index
      %c0_237 = arith.constant 0 : index
      %c0_238 = arith.constant 0 : index
      %411 = vector.load %arg8[%c3_235, %c6_236, %c0_237, %c0_238] : memref<7x14x16x128xf32, #tpu.memory_space<vmem>>, vector<1x8x16x128xf32>
      %412 = vector.shape_cast %411 : vector<1x8x16x128xf32> to vector<8x16x128xf32>
      %413 = vector.extract_strided_slice %9 {offsets = [6, 3, 0], sizes = [1, 1, 128], strides = [1, 1, 1]} : vector<7x7x128xf32> to vector<1x1x128xf32>
      %414 = vector.shape_cast %413 : vector<1x1x128xf32> to vector<128xf32>
      %415 = vector.shape_cast %414 : vector<128xf32> to vector<1x1x128xf32>
      %416 = vector.broadcast %415 : vector<1x1x128xf32> to vector<8x16x128xf32>
      %417 = arith.mulf %412, %416 : vector<8x16x128xf32>
      %418 = arith.addf %410, %417 : vector<8x16x128xf32>
      %c4_239 = arith.constant 4 : index
      %c6_240 = arith.constant 6 : index
      %c0_241 = arith.constant 0 : index
      %c0_242 = arith.constant 0 : index
      %419 = vector.load %arg8[%c4_239, %c6_240, %c0_241, %c0_242] : memref<7x14x16x128xf32, #tpu.memory_space<vmem>>, vector<1x8x16x128xf32>
      %420 = vector.shape_cast %419 : vector<1x8x16x128xf32> to vector<8x16x128xf32>
      %421 = vector.extract_strided_slice %9 {offsets = [6, 4, 0], sizes = [1, 1, 128], strides = [1, 1, 1]} : vector<7x7x128xf32> to vector<1x1x128xf32>
      %422 = vector.shape_cast %421 : vector<1x1x128xf32> to vector<128xf32>
      %423 = vector.shape_cast %422 : vector<128xf32> to vector<1x1x128xf32>
      %424 = vector.broadcast %423 : vector<1x1x128xf32> to vector<8x16x128xf32>
      %425 = arith.mulf %420, %424 : vector<8x16x128xf32>
      %426 = arith.addf %418, %425 : vector<8x16x128xf32>
      %c5_243 = arith.constant 5 : index
      %c6_244 = arith.constant 6 : index
      %c0_245 = arith.constant 0 : index
      %c0_246 = arith.constant 0 : index
      %427 = vector.load %arg8[%c5_243, %c6_244, %c0_245, %c0_246] : memref<7x14x16x128xf32, #tpu.memory_space<vmem>>, vector<1x8x16x128xf32>
      %428 = vector.shape_cast %427 : vector<1x8x16x128xf32> to vector<8x16x128xf32>
      %429 = vector.extract_strided_slice %9 {offsets = [6, 5, 0], sizes = [1, 1, 128], strides = [1, 1, 1]} : vector<7x7x128xf32> to vector<1x1x128xf32>
      %430 = vector.shape_cast %429 : vector<1x1x128xf32> to vector<128xf32>
      %431 = vector.shape_cast %430 : vector<128xf32> to vector<1x1x128xf32>
      %432 = vector.broadcast %431 : vector<1x1x128xf32> to vector<8x16x128xf32>
      %433 = arith.mulf %428, %432 : vector<8x16x128xf32>
      %434 = arith.addf %426, %433 : vector<8x16x128xf32>
      %c6_247 = arith.constant 6 : index
      %c6_248 = arith.constant 6 : index
      %c0_249 = arith.constant 0 : index
      %c0_250 = arith.constant 0 : index
      %435 = vector.load %arg8[%c6_247, %c6_248, %c0_249, %c0_250] : memref<7x14x16x128xf32, #tpu.memory_space<vmem>>, vector<1x8x16x128xf32>
      %436 = vector.shape_cast %435 : vector<1x8x16x128xf32> to vector<8x16x128xf32>
      %437 = vector.extract_strided_slice %9 {offsets = [6, 6, 0], sizes = [1, 1, 128], strides = [1, 1, 1]} : vector<7x7x128xf32> to vector<1x1x128xf32>
      %438 = vector.shape_cast %437 : vector<1x1x128xf32> to vector<128xf32>
      %439 = vector.shape_cast %438 : vector<128xf32> to vector<1x1x128xf32>
      %440 = vector.broadcast %439 : vector<1x1x128xf32> to vector<8x16x128xf32>
      %441 = arith.mulf %436, %440 : vector<8x16x128xf32>
      %442 = arith.addf %434, %441 : vector<8x16x128xf32>
      %c0_251 = arith.constant 0 : index
      %443 = arith.index_cast %14 : i32 to index
      %c0_252 = arith.constant 0 : index
      %c0_253 = arith.constant 0 : index
      %444 = vector.load %arg1[%c0_251, %443, %c0_252, %c0_253] : memref<1x16x16x128xf32, #tpu.memory_space<vmem>>, vector<1x8x16x128xf32>
      %445 = vector.shape_cast %444 : vector<1x8x16x128xf32> to vector<8x16x128xf32>
      %446 = arith.addf %442, %445 : vector<8x16x128xf32>
      %447 = vector.shape_cast %11 : vector<128xf32> to vector<1x1x128xf32>
      %448 = vector.broadcast %447 : vector<1x1x128xf32> to vector<8x16x128xf32>
      %449 = arith.addf %446, %448 : vector<8x16x128xf32>
      %c0_254 = arith.constant 0 : index
      %450 = arith.index_cast %14 : i32 to index
      %c0_255 = arith.constant 0 : index
      %c0_256 = arith.constant 0 : index
      %451 = vector.load %arg6[%c0_254, %450, %c0_255, %c0_256] : memref<1x16x16x128xf32, #tpu.memory_space<vmem>>, vector<1x8x16x128xf32>
      %452 = vector.shape_cast %451 : vector<1x8x16x128xf32> to vector<8x16x128xf32>
      %453 = vector.shape_cast %449 : vector<8x16x128xf32> to vector<1x8x16x128xf32>
      tpu.vector_store %arg6[%c0_254, %450, %c0_255, %c0_256], %453 {strides = array<i32>} : memref<1x16x16x128xf32, #tpu.memory_space<vmem>>, vector<1x8x16x128xf32>,
    }
    %c2_i32_21 = arith.constant 2 : i32
    return
  }
  func.func @transform_0(%arg0: i32) -> (i32, i32, i32, i32) {
    %c0_i32 = arith.constant 0 : i32
    %c0_i32_0 = arith.constant 0 : i32
    %c0_i32_1 = arith.constant 0 : i32
    %c0_i32_2 = arith.constant 0 : i32
    return %arg0, %c0_i32, %c0_i32_0, %c0_i32_1 : i32, i32, i32, i32
  }
  func.func @transform_1(%arg0: i32) -> (i32, i32) {
    %c0_i32 = arith.constant 0 : i32
    %c0_i32_0 = arith.constant 0 : i32
    %c0_i32_1 = arith.constant 0 : i32
    return %c0_i32, %c0_i32_0 : i32, i32
  }
  func.func @transform_2(%arg0: i32) -> (i32, i32) {
    %c0_i32 = arith.constant 0 : i32
    %c0_i32_0 = arith.constant 0 : i32
    %c0_i32_1 = arith.constant 0 : i32
    return %c0_i32, %c0_i32_0 : i32, i32
  }
  func.func @transform_3(%arg0: i32) -> (i32, i32, i32) {
    %c0_i32 = arith.constant 0 : i32
    %c0_i32_0 = arith.constant 0 : i32
    %c0_i32_1 = arith.constant 0 : i32
    %c0_i32_2 = arith.constant 0 : i32
    return %c0_i32, %c0_i32_0, %c0_i32_1 : i32, i32, i32
  }
  func.func @transform_4(%arg0: i32) -> (i32, i32) {
    %c0_i32 = arith.constant 0 : i32
    %c0_i32_0 = arith.constant 0 : i32
    %c0_i32_1 = arith.constant 0 : i32
    return %c0_i32, %c0_i32_0 : i32, i32
  }
  func.func @transform_5(%arg0: i32) -> (i32, i32, i32, i32) {
    %c0_i32 = arith.constant 0 : i32
    %c0_i32_0 = arith.constant 0 : i32
    %c0_i32_1 = arith.constant 0 : i32
    %c0_i32_2 = arith.constant 0 : i32
    return %arg0, %c0_i32, %c0_i32_0, %c0_i32_1 : i32, i32, i32, i32
  }
}

</mosaic_0001>

<llo_original>
// kernel: tile.29
$region0: #{tile.29}
  %s0 = inlined_call_operand.vmem [shape: f32[4,32], index: 0, kind: input, shape index: {}]
  %s1 = inlined_call_operand.vmem [shape: f32[1,128], index: 1, kind: output, shape index: {}]
  $region1: #{tile.29} parent=0
    #allocation0 [shape = 'u8[4096]{0}', space=vmem, size = 0x1000, scoped, tag = 'scoped mem for output reshape']
    #allocation1 [shape = 'u8[4096]{0}', space=vmem, size = 0x1000, scoped, tag = 'scoped mem for input reshape']
    %s3 = sshll.u32 1, 4
    %s4 = ssub.s32 %s3, 1
    %v5 = vld [vmem:[%s0] sm:%s4]
    %6 = vst [vmem:[#allocation1] sm:%s4] %v5
    %v7 = vld [vmem:[#allocation1] sm:$0x1]
    %vm8 = vcmask 261120
    %9 = vst.msk [vmem:[#allocation0] sm:$0x1] %vm8, %v7
    %s10 = scalar_lea.vmem [#allocation1], 3
    %v11 = vld [vmem:[%s10] sm:$0x1]
    %12 = vrot.lane.b32.xlu0 %v11, 96
    %v13 = vpop.permute.xlu0 %12
    %vm14 = vcmask 1048320
    %15 = vst.msk [vmem:[#allocation0] sm:$0x1] %vm14, %v13
    %s16 = scalar_lea.vmem [#allocation1], 2
    %v17 = vld [vmem:[%s16] sm:$0x1]
    %18 = vrot.lane.b32.xlu0 %v17, 64
    %v19 = vpop.permute.xlu0 %18
    %vm20 = vcmask 785920
    %21 = vst.msk [vmem:[#allocation0] sm:$0x1] %vm20, %v19
    %s22 = scalar_lea.vmem [#allocation1], 1
    %v23 = vld [vmem:[%s22] sm:$0x1]
    %24 = vrot.lane.b32.xlu0 %v23, 32
    %v25 = vpop.permute.xlu0 %24
    %vm26 = vcmask 523520
    %27 = vst.msk [vmem:[#allocation0] sm:$0x1] %vm26, %v25
    %s29 = sshll.u32 1, 1
    %s30 = ssub.s32 %s29, 1
    %v32 = vld [vmem:[#allocation0] sm:%s30]
    %s33 = sshll.u32 1, 1
    %s34 = ssub.s32 %s33, 1
    %35 = vst [vmem:[%s1] sm:%s34] %v32

// kernel: tile.28
$region0: #{tile.28}
  #allocation0 [shape = 's32[1]{0}', space=sflag, size = 0x4, scoped, tag = 'scoped memory for tile.28']
  %s0 = inlined_call_operand.vmem [shape: f32[32], index: 0, kind: input, shape index: {}]
  %s1 = inlined_call_operand.vmem [shape: f32[4,32], index: 1, kind: output, shape index: {}]
  // Predicated region
  $region2: #{tile.28} parent=0 // pred_check
    _
  $region3: #{tile.28} parent=0 // pred_check_branch
    %3 = sbr.rel (0) target = $region5
  $region4: #{tile.28} parent=0 // pred_region
    _
  $region5: #{tile.28} parent=0 // pred_fallthru
    _
  %v4 = vld [vmem:[%s0] ss:$0 sm:$0xff]
  %5 = vst [vmem:[%s1] sm:$0xf] %v4

// kernel: tile.18
$region0: #{tile.18}
  #allocation2 [shape = 's32[1]{0}', space=sflag, size = 0x4, scoped, tag = 'scoped memory for tile.18']
  %s0 = inlined_call_operand.hbm [shape: f32[32], index: 0, kind: input, shape index: {}]
  %s1 = inlined_call_operand.vmem [shape: f32[4,32], index: 1, kind: output, shape index: {}]
  $region1: #{tile.18} parent=0
    #allocation0 [shape = 'u8[512]{0}', space=vmem, size = 0x400, scoped, tag = 'operand span for operand 0']
    #allocation1 [shape = 's32[1]{0}', space=sflag, size = 0x4, scoped, tag = 'scoped memory for tile.18']
    %2 = vsyncpa [#allocation1], 0
    // Predicated region
    $region2: #{tile.18} parent=1 // pred_check
      _
    $region3: #{tile.18} parent=1 // pred_check_branch
      %4 = sbr.rel (0) target = $region5
    $region4: #{tile.18} parent=1 // pred_region
      %s6 = ssub.s32 16, 16
      %7 = vsyncadd [#allocation1], %s6
      %s9 = sshll.u32 [#allocation0], 4
      %s10 = int_to_ptr.vmem [resolvable:$true] %s9
      %12 = dma.hbm_to_vmem [thread:$0]  %s0, 16, %s10, [#allocation1]
    $region5: #{tile.18} parent=1 // pred_fallthru
      _
    // Predicated region
    $region6: #{tile.18} parent=1 // pred_check
      _
    $region7: #{tile.18} parent=1 // pred_check_branch
      %14 = sbr.rel (0) target = $region9
    $region8: #{tile.18} parent=1 // pred_region
      %15 = dma.done [#allocation1], 16
    $region9: #{tile.18} parent=1 // pred_fallthru
      _
    %v16 = vld [vmem:[#allocation0] ss:$0 sm:$0xff]
    %17 = vst [vmem:[%s1] sm:$0xf] %v16
    %18 = vsyncpa [#allocation1], 1

// kernel: tile.24
$region0: #{tile.24}
  %s0 = inlined_call_operand.vmem [shape: f32[7,7,4,32], index: 0, kind: input, shape index: {}]
  %s1 = inlined_call_operand.vmem [shape: f32[7,7,128], index: 1, kind: output, shape index: {}]
  $region1: #{tile.24} parent=0
    #allocation0 [shape = 'u8[200704]{0}', space=vmem, size = 0x31000, scoped, tag = 'scoped mem for input reshape']
    %s3 = sshll.u32 1, 4
    %s4 = ssub.s32 %s3, 1
    %s5 = smul.addr 4, 48
    %s6 = scalar_lea.vmem %s0, %s5
    %v7 = vld [vmem:[%s6] sm:%s4]
    %s8 = scalar_lea.vmem [#allocation0], 384
    %9 = vst [vmem:[%s8] sm:%s4] %v7
    %s10 = smul.addr 4, 47
    %s11 = scalar_lea.vmem %s0, %s10
    %v12 = vld [vmem:[%s11] sm:%s4]
    %s13 = scalar_lea.vmem [#allocation0], 376
    %14 = vst [vmem:[%s13] sm:%s4] %v12
    %s15 = smul.addr 4, 46
    %s16 = scalar_lea.vmem %s0, %s15
    %v17 = vld [vmem:[%s16] sm:%s4]
    %s18 = scalar_lea.vmem [#allocation0], 368
    %19 = vst [vmem:[%s18] sm:%s4] %v17
    %s20 = smul.addr 4, 45
    %s21 = scalar_lea.vmem %s0, %s20
    %v22 = vld [vmem:[%s21] sm:%s4]
    %s23 = scalar_lea.vmem [#allocation0], 360
    %24 = vst [vmem:[%s23] sm:%s4] %v22
    %s25 = smul.addr 4, 44
    %s26 = scalar_lea.vmem %s0, %s25
    %v27 = vld [vmem:[%s26] sm:%s4]
    %s28 = scalar_lea.vmem [#allocation0], 352
    %29 = vst [vmem:[%s28] sm:%s4] %v27
    %s30 = smul.addr 4, 43
    %s31 = scalar_lea.vmem %s0, %s30
    %v32 = vld [vmem:[%s31] sm:%s4]
    %s33 = scalar_lea.vmem [#allocation0], 344
    %34 = vst [vmem:[%s33] sm:%s4] %v32
    %s35 = smul.addr 4, 42
    %s36 = scalar_lea.vmem %s0, %s35
    %v37 = vld [vmem:[%s36] sm:%s4]
    %s38 = scalar_lea.vmem [#allocation0], 336
    %39 = vst [vmem:[%s38] sm:%s4] %v37
    %s40 = smul.addr 4, 41
    %s41 = scalar_lea.vmem %s0, %s40
    %v42 = vld [vmem:[%s41] sm:%s4]
    %s43 = scalar_lea.vmem [#allocation0], 328
    %44 = vst [vmem:[%s43] sm:%s4] %v42
    %s45 = smul.addr 4, 40
    %s46 = scalar_lea.vmem %s0, %s45
    %v47 = vld [vmem:[%s46] sm:%s4]
    %s48 = scalar_lea.vmem [#allocation0], 320
    %49 = vst [vmem:[%s48] sm:%s4] %v47
    %s50 = smul.addr 4, 39
    %s51 = scalar_lea.vmem %s0, %s50
    %v52 = vld [vmem:[%s51] sm:%s4]
    %s53 = scalar_lea.vmem [#allocation0], 312
    %54 = vst [vmem:[%s53] sm:%s4] %v52
    %s55 = smul.addr 4, 38
    %s56 = scalar_lea.vmem %s0, %s55
    %v57 = vld [vmem:[%s56] sm:%s4]
    %s58 = scalar_lea.vmem [#allocation0], 304
    %59 = vst [vmem:[%s58] sm:%s4] %v57
    %s60 = smul.addr 4, 37
    %s61 = scalar_lea.vmem %s0, %s60
    %v62 = vld [vmem:[%s61] sm:%s4]
    %s63 = scalar_lea.vmem [#allocation0], 296
    %64 = vst [vmem:[%s63] sm:%s4] %v62
    %s65 = smul.addr 4, 36
    %s66 = scalar_lea.vmem %s0, %s65
    %v67 = vld [vmem:[%s66] sm:%s4]
    %s68 = scalar_lea.vmem [#allocation0], 288
    %69 = vst [vmem:[%s68] sm:%s4] %v67
    %s70 = smul.addr 4, 35
    %s71 = scalar_lea.vmem %s0, %s70
    %v72 = vld [vmem:[%s71] sm:%s4]
    %s73 = scalar_lea.vmem [#allocation0], 280
    %74 = vst [vmem:[%s73] sm:%s4] %v72
    %s75 = smul.addr 4, 34
    %s76 = scalar_lea.vmem %s0, %s75
    %v77 = vld [vmem:[%s76] sm:%s4]
    %s78 = scalar_lea.vmem [#allocation0], 272
    %79 = vst [vmem:[%s78] sm:%s4] %v77
    %s80 = smul.addr 4, 33
    %s81 = scalar_lea.vmem %s0, %s80
    %v82 = vld [vmem:[%s81] sm:%s4]
    %s83 = scalar_lea.vmem [#allocation0], 264
    %84 = vst [vmem:[%s83] sm:%s4] %v82
    %s85 = smul.addr 4, 32
    %s86 = scalar_lea.vmem %s0, %s85
    %v87 = vld [vmem:[%s86] sm:%s4]
    %s88 = scalar_lea.vmem [#allocation0], 256
    %89 = vst [vmem:[%s88] sm:%s4] %v87
    %s90 = smul.addr 4, 31
    %s91 = scalar_lea.vmem %s0, %s90
    %v92 = vld [vmem:[%s91] sm:%s4]
    %s93 = scalar_lea.vmem [#allocation0], 248
    %94 = vst [vmem:[%s93] sm:%s4] %v92
    %s95 = smul.addr 4, 30
    %s96 = scalar_lea.vmem %s0, %s95
    %v97 = vld [vmem:[%s96] sm:%s4]
    %s98 = scalar_lea.vmem [#allocation0], 240
    %99 = vst [vmem:[%s98] sm:%s4] %v97
    %s100 = smul.addr 4, 29
    %s101 = scalar_lea.vmem %s0, %s100
    %v102 = vld [vmem:[%s101] sm:%s4]
    %s103 = scalar_lea.vmem [#allocation0], 232
    %104 = vst [vmem:[%s103] sm:%s4] %v102
    %s105 = smul.addr 4, 28
    %s106 = scalar_lea.vmem %s0, %s105
    %v107 = vld [vmem:[%s106] sm:%s4]
    %s108 = scalar_lea.vmem [#allocation0], 224
    %109 = vst [vmem:[%s108] sm:%s4] %v107
    %s110 = smul.addr 4, 27
    %s111 = scalar_lea.vmem %s0, %s110
    %v112 = vld [vmem:[%s111] sm:%s4]
    %s113 = scalar_lea.vmem [#allocation0], 216
    %114 = vst [vmem:[%s113] sm:%s4] %v112
    %s115 = smul.addr 4, 26
    %s116 = scalar_lea.vmem %s0, %s115
    %v117 = vld [vmem:[%s116] sm:%s4]
    %s118 = scalar_lea.vmem [#allocation0], 208
    %119 = vst [vmem:[%s118] sm:%s4] %v117
    %s120 = smul.addr 4, 25
    %s121 = scalar_lea.vmem %s0, %s120
    %v122 = vld [vmem:[%s121] sm:%s4]
    %s123 = scalar_lea.vmem [#allocation0], 200
    %124 = vst [vmem:[%s123] sm:%s4] %v122
    %s125 = smul.addr 4, 24
    %s126 = scalar_lea.vmem %s0, %s125
    %v127 = vld [vmem:[%s126] sm:%s4]
    %s128 = scalar_lea.vmem [#allocation0], 192
    %129 = vst [vmem:[%s128] sm:%s4] %v127
    %s130 = smul.addr 4, 23
    %s131 = scalar_lea.vmem %s0, %s130
    %v132 = vld [vmem:[%s131] sm:%s4]
    %s133 = scalar_lea.vmem [#allocation0], 184
    %134 = vst [vmem:[%s133] sm:%s4] %v132
    %s135 = smul.addr 4, 22
    %s136 = scalar_lea.vmem %s0, %s135
    %v137 = vld [vmem:[%s136] sm:%s4]
    %s138 = scalar_lea.vmem [#allocation0], 176
    %139 = vst [vmem:[%s138] sm:%s4] %v137
    %s140 = smul.addr 4, 21
    %s141 = scalar_lea.vmem %s0, %s140
    %v142 = vld [vmem:[%s141] sm:%s4]
    %s143 = scalar_lea.vmem [#allocation0], 168
    %144 = vst [vmem:[%s143] sm:%s4] %v142
    %s145 = smul.addr 4, 20
    %s146 = scalar_lea.vmem %s0, %s145
    %v147 = vld [vmem:[%s146] sm:%s4]
    %s148 = scalar_lea.vmem [#allocation0], 160
    %149 = vst [vmem:[%s148] sm:%s4] %v147
    %s150 = smul.addr 4, 19
    %s151 = scalar_lea.vmem %s0, %s150
    %v152 = vld [vmem:[%s151] sm:%s4]
    %s153 = scalar_lea.vmem [#allocation0], 152
    %154 = vst [vmem:[%s153] sm:%s4] %v152
    %s155 = smul.addr 4, 18
    %s156 = scalar_lea.vmem %s0, %s155
    %v157 = vld [vmem:[%s156] sm:%s4]
    %s158 = scalar_lea.vmem [#allocation0], 144
    %159 = vst [vmem:[%s158] sm:%s4] %v157
    %s160 = smul.addr 4, 17
    %s161 = scalar_lea.vmem %s0, %s160
    %v162 = vld [vmem:[%s161] sm:%s4]
    %s163 = scalar_lea.vmem [#allocation0], 136
    %164 = vst [vmem:[%s163] sm:%s4] %v162
    %s165 = smul.addr 4, 16
    %s166 = scalar_lea.vmem %s0, %s165
    %v167 = vld [vmem:[%s166] sm:%s4]
    %s168 = scalar_lea.vmem [#allocation0], 128
    %169 = vst [vmem:[%s168] sm:%s4] %v167
    %s170 = smul.addr 4, 15
    %s171 = scalar_lea.vmem %s0, %s170
    %v172 = vld [vmem:[%s171] sm:%s4]
    %s173 = scalar_lea.vmem [#allocation0], 120
    %174 = vst [vmem:[%s173] sm:%s4] %v172
    %s175 = smul.addr 4, 14
    %s176 = scalar_lea.vmem %s0, %s175
    %v177 = vld [vmem:[%s176] sm:%s4]
    %s178 = scalar_lea.vmem [#allocation0], 112
    %179 = vst [vmem:[%s178] sm:%s4] %v177
    %s180 = smul.addr 4, 13
    %s181 = scalar_lea.vmem %s0, %s180
    %v182 = vld [vmem:[%s181] sm:%s4]
    %s183 = scalar_lea.vmem [#allocation0], 104
    %184 = vst [vmem:[%s183] sm:%s4] %v182
    %s185 = smul.addr 4, 12
    %s186 = scalar_lea.vmem %s0, %s185
    %v187 = vld [vmem:[%s186] sm:%s4]
    %s188 = scalar_lea.vmem [#allocation0], 96
    %189 = vst [vmem:[%s188] sm:%s4] %v187
    %s190 = smul.addr 4, 11
    %s191 = scalar_lea.vmem %s0, %s190
    %v192 = vld [vmem:[%s191] sm:%s4]
    %s193 = scalar_lea.vmem [#allocation0], 88
    %194 = vst [vmem:[%s193] sm:%s4] %v192
    %s195 = smul.addr 4, 10
    %s196 = scalar_lea.vmem %s0, %s195
    %v197 = vld [vmem:[%s196] sm:%s4]
    %s198 = scalar_lea.vmem [#allocation0], 80
    %199 = vst [vmem:[%s198] sm:%s4] %v197
    %s200 = smul.addr 4, 9
    %s201 = scalar_lea.vmem %s0, %s200
    %v202 = vld [vmem:[%s201] sm:%s4]
    %s203 = scalar_lea.vmem [#allocation0], 72
    %204 = vst [vmem:[%s203] sm:%s4] %v202
    %s205 = smul.addr 4, 8
    %s206 = scalar_lea.vmem %s0, %s205
    %v207 = vld [vmem:[%s206] sm:%s4]
    %s208 = scalar_lea.vmem [#allocation0], 64
    %209 = vst [vmem:[%s208] sm:%s4] %v207
    %s210 = smul.addr 4, 7
    %s211 = scalar_lea.vmem %s0, %s210
    %v212 = vld [vmem:[%s211] sm:%s4]
    %s213 = scalar_lea.vmem [#allocation0], 56
    %214 = vst [vmem:[%s213] sm:%s4] %v212
    %s215 = smul.addr 4, 6
    %s216 = scalar_lea.vmem %s0, %s215
    %v217 = vld [vmem:[%s216] sm:%s4]
    %s218 = scalar_lea.vmem [#allocation0], 48
    %219 = vst [vmem:[%s218] sm:%s4] %v217
    %s220 = smul.addr 4, 5
    %s221 = scalar_lea.vmem %s0, %s220
    %v222 = vld [vmem:[%s221] sm:%s4]
    %s223 = scalar_lea.vmem [#allocation0], 40
    %224 = vst [vmem:[%s223] sm:%s4] %v222
    %s225 = smul.addr 4, 4
    %s226 = scalar_lea.vmem %s0, %s225
    %v227 = vld [vmem:[%s226] sm:%s4]
    %s228 = scalar_lea.vmem [#allocation0], 32
    %229 = vst [vmem:[%s228] sm:%s4] %v227
    %s230 = smul.addr 4, 3
    %s231 = scalar_lea.vmem %s0, %s230
    %v232 = vld [vmem:[%s231] sm:%s4]
    %s233 = scalar_lea.vmem [#allocation0], 24
    %234 = vst [vmem:[%s233] sm:%s4] %v232
    %s235 = smul.addr 4, 2
    %s236 = scalar_lea.vmem %s0, %s235
    %v237 = vld [vmem:[%s236] sm:%s4]
    %s238 = scalar_lea.vmem [#allocation0], 16
    %239 = vst [vmem:[%s238] sm:%s4] %v237
    %s240 = scalar_lea.vmem %s0, 4
    %v241 = vld [vmem:[%s240] sm:%s4]
    %s242 = scalar_lea.vmem [#allocation0], 8
    %243 = vst [vmem:[%s242] sm:%s4] %v241
    %v244 = vld [vmem:[%s0] sm:%s4]
    %245 = vst [vmem:[#allocation0] sm:%s4] %v244
    %v246 = vld [vmem:[#allocation0] ss:$8 sm:$0xf]
    %v247 = vld [vmem:[#allocation0] ss:$8 sm:$0xf0]
    %vm248 = vcmask 1047556
    %v249 = vsel %vm248, %v247, %v246
    %vm250 = vcmask 261120
    %251 = vst.msk [vmem:[%s1] sm:$0x7f] %vm250, %v249
    %s252 = scalar_lea.vmem %s1, 1
    %253 = vst.msk [vmem:[%s252] sm:$0x80] %vm250, %v249
    %s254 = scalar_lea.vmem [#allocation0], 64
    %v255 = vld [vmem:[%s254] ss:$8 sm:$0xf]
    %s256 = scalar_lea.vmem [#allocation0], 64
    %v257 = vld [vmem:[%s256] ss:$8 sm:$0xf0]
    %vm258 = vcmask 1047556
    %v259 = vsel %vm258, %v257, %v255
    %vm260 = vcmask 261120
    %s261 = scalar_lea.vmem %s1, 9
    %262 = vst.msk [vmem:[%s261] sm:$0x3f] %vm260, %v259
    %s263 = scalar_lea.vmem %s1, 10
    %264 = vst.msk [vmem:[%s263] sm:$0xc0] %vm260, %v259
    %s265 = scalar_lea.vmem [#allocation0], 128
    %v266 = vld [vmem:[%s265] ss:$8 sm:$0xf]
    %s267 = scalar_lea.vmem [#allocation0], 128
    %v268 = vld [vmem:[%s267] ss:$8 sm:$0xf0]
    %vm269 = vcmask 1047556
    %v270 = vsel %vm269, %v268, %v266
    %vm271 = vcmask 261120
    %s272 = scalar_lea.vmem %s1, 18
    %273 = vst.msk [vmem:[%s272] sm:$0x1f] %vm271, %v270
    %s274 = scalar_lea.vmem %s1, 19
    %275 = vst.msk [vmem:[%s274] sm:$0xe0] %vm271, %v270
    %s276 = scalar_lea.vmem [#allocation0], 192
    %v277 = vld [vmem:[%s276] ss:$8 sm:$0xf]
    %s278 = scalar_lea.vmem [#allocation0], 192
    %v279 = vld [vmem:[%s278] ss:$8 sm:$0xf0]
    %vm280 = vcmask 1047556
    %v281 = vsel %vm280, %v279, %v277
    %vm282 = vcmask 261120
    %s283 = scalar_lea.vmem %s1, 27
    %284 = vst.msk [vmem:[%s283] sm:$0xf] %vm282, %v281
    %s285 = scalar_lea.vmem %s1, 28
    %286 = vst.msk [vmem:[%s285] sm:$0xf0] %vm282, %v281
    %s287 = scalar_lea.vmem [#allocation0], 256
    %v288 = vld [vmem:[%s287] ss:$8 sm:$0xf]
    %s289 = scalar_lea.vmem [#allocation0], 256
    %v290 = vld [vmem:[%s289] ss:$8 sm:$0xf0]
    %vm291 = vcmask 1047556
    %v292 = vsel %vm291, %v290, %v288
    %vm293 = vcmask 261120
    %s294 = scalar_lea.vmem %s1, 36
    %295 = vst.msk [vmem:[%s294] sm:$0x7] %vm293, %v292
    %s296 = scalar_lea.vmem %s1, 37
    %297 = vst.msk [vmem:[%s296] sm:$0xf8] %vm293, %v292
    %s298 = scalar_lea.vmem [#allocation0], 320
    %v299 = vld [vmem:[%s298] ss:$8 sm:$0xf]
    %s300 = scalar_lea.vmem [#allocation0], 320
    %v301 = vld [vmem:[%s300] ss:$8 sm:$0xf0]
    %vm302 = vcmask 1047556
    %v303 = vsel %vm302, %v301, %v299
    %vm304 = vcmask 261120
    %s305 = scalar_lea.vmem %s1, 45
    %306 = vst.msk [vmem:[%s305] sm:$0x3] %vm304, %v303
    %s307 = scalar_lea.vmem %s1, 46
    %308 = vst.msk [vmem:[%s307] sm:$0xfc] %vm304, %v303
    %s309 = scalar_lea.vmem [#allocation0], 384
    %v310 = vld [vmem:[%s309] sm:$0x1]
    %vm311 = vcmask 261120
    %s312 = scalar_lea.vmem %s1, 54
    %313 = vst.msk [vmem:[%s312] sm:$0x1] %vm311, %v310
    %s314 = scalar_lea.vmem [#allocation0], 3
    %v315 = vld [vmem:[%s314] ss:$8 sm:$0xf]
    %s316 = scalar_lea.vmem [#allocation0], 3
    %v317 = vld [vmem:[%s316] ss:$8 sm:$0xf0]
    %vm318 = vcmask 1047556
    %v319 = vsel %vm318, %v317, %v315
    %320 = vrot.lane.b32.xlu0 %v319, 96
    %v321 = vpop.permute.xlu0 %320
    %vm322 = vcmask 1048320
    %323 = vst.msk [vmem:[%s1] sm:$0x7f] %vm322, %v321
    %s324 = scalar_lea.vmem %s1, 1
    %325 = vst.msk [vmem:[%s324] sm:$0x80] %vm322, %v321
    %s326 = scalar_lea.vmem [#allocation0], 227
    %v327 = vld [vmem:[%s326] ss:$8 sm:$0xf]
    %s328 = scalar_lea.vmem [#allocation0], 227
    %v329 = vld [vmem:[%s328] ss:$8 sm:$0xf0]
    %vm330 = vcmask 1047556
    %v331 = vsel %vm330, %v329, %v327
    %332 = vrot.lane.b32.xlu0 %v331, 96
    %v333 = vpop.permute.xlu0 %332
    %vm334 = vcmask 1048320
    %s335 = scalar_lea.vmem %s1, 32
    %336 = vst.msk [vmem:[%s335] sm:$0x7f] %vm334, %v333
    %s337 = scalar_lea.vmem %s1, 33
    %338 = vst.msk [vmem:[%s337] sm:$0x80] %vm334, %v333
    %s339 = scalar_lea.vmem [#allocation0], 67
    %v340 = vld [vmem:[%s339] ss:$8 sm:$0xf]
    %s341 = scalar_lea.vmem [#allocation0], 67
    %v342 = vld [vmem:[%s341] ss:$8 sm:$0xf0]
    %vm343 = vcmask 1047556
    %v344 = vsel %vm343, %v342, %v340
    %345 = vrot.lane.b32.xlu0 %v344, 96
    %v346 = vpop.permute.xlu0 %345
    %vm347 = vcmask 1048320
    %s348 = scalar_lea.vmem %s1, 9
    %349 = vst.msk [vmem:[%s348] sm:$0x3f] %vm347, %v346
    %s350 = scalar_lea.vmem %s1, 10
    %351 = vst.msk [vmem:[%s350] sm:$0xc0] %vm347, %v346
    %s352 = scalar_lea.vmem [#allocation0], 291
    %v353 = vld [vmem:[%s352] ss:$8 sm:$0xf]
    %s354 = scalar_lea.vmem [#allocation0], 291
    %v355 = vld [vmem:[%s354] ss:$8 sm:$0xf0]
    %vm356 = vcmask 1047556
    %v357 = vsel %vm356, %v355, %v353
    %358 = vrot.lane.b32.xlu0 %v357, 96
    %v359 = vpop.permute.xlu0 %358
    %vm360 = vcmask 1048320
    %s361 = scalar_lea.vmem %s1, 41
    %362 = vst.msk [vmem:[%s361] sm:$0x3f] %vm360, %v359
    %s363 = scalar_lea.vmem %s1, 42
    %364 = vst.msk [vmem:[%s363] sm:$0xc0] %vm360, %v359
    %s365 = scalar_lea.vmem [#allocation0], 131
    %v366 = vld [vmem:[%s365] ss:$8 sm:$0xf]
    %s367 = scalar_lea.vmem [#allocation0], 131
    %v368 = vld [vmem:[%s367] ss:$8 sm:$0xf0]
    %vm369 = vcmask 1047556
    %v370 = vsel %vm369, %v368, %v366
    %371 = vrot.lane.b32.xlu0 %v370, 96
    %v372 = vpop.permute.xlu0 %371
    %vm373 = vcmask 1048320
    %s374 = scalar_lea.vmem %s1, 18
    %375 = vst.msk [vmem:[%s374] sm:$0x1f] %vm373, %v372
    %s376 = scalar_lea.vmem %s1, 19
    %377 = vst.msk [vmem:[%s376] sm:$0xe0] %vm373, %v372
    %s378 = scalar_lea.vmem [#allocation0], 355
    %v379 = vld [vmem:[%s378] ss:$8 sm:$0xf]
    %s380 = scalar_lea.vmem [#allocation0], 383
    %v381 = vld [vmem:[%s380] sm:$0x10]
    %vm382 = vcmask 1044484
    %v383 = vsel %vm382, %v381, %v379
    %s384 = scalar_lea.vmem [#allocation0], 155
    %v385 = vld [vmem:[%s384] ss:$8 sm:$0xe0]
    %vm386 = vcmask 1047557
    %v387 = vsel %vm386, %v385, %v383
    %388 = vrot.lane.b32.xlu0 %v387, 96
    %v389 = vpop.permute.xlu0 %388
    %vm390 = vcmask 1048320
    %s391 = scalar_lea.vmem %s1, 50
    %392 = vst.msk [vmem:[%s391] sm:$0x1f] %vm390, %v389
    %s393 = scalar_lea.vmem %s1, 22
    %394 = vst.msk [vmem:[%s393] sm:$0xe0] %vm390, %v389
    %s395 = scalar_lea.vmem [#allocation0], 219
    %v396 = vld [vmem:[%s395] sm:$0x1]
    %397 = vrot.lane.b32.xlu0 %v396, 96
    %v398 = vpop.permute.xlu0 %397
    %vm399 = vcmask 1048320
    %s400 = scalar_lea.vmem %s1, 30
    %401 = vst.msk [vmem:[%s400] sm:$0x1] %vm399, %v398
    %s402 = scalar_lea.vmem [#allocation0], 2
    %v403 = vld [vmem:[%s402] ss:$8 sm:$0xf]
    %s404 = scalar_lea.vmem [#allocation0], 2
    %v405 = vld [vmem:[%s404] ss:$8 sm:$0xf0]
    %vm406 = vcmask 1047556
    %v407 = vsel %vm406, %v405, %v403
    %408 = vrot.lane.b32.xlu0 %v407, 64
    %v409 = vpop.permute.xlu0 %408
    %vm410 = vcmask 785920
    %411 = vst.msk [vmem:[%s1] sm:$0x7f] %vm410, %v409
    %s412 = scalar_lea.vmem %s1, 1
    %413 = vst.msk [vmem:[%s412] sm:$0x80] %vm410, %v409
    %s414 = scalar_lea.vmem [#allocation0], 226
    %v415 = vld [vmem:[%s414] ss:$8 sm:$0xf]
    %s416 = scalar_lea.vmem [#allocation0], 226
    %v417 = vld [vmem:[%s416] ss:$8 sm:$0xf0]
    %vm418 = vcmask 1047556
    %v419 = vsel %vm418, %v417, %v415
    %420 = vrot.lane.b32.xlu0 %v419, 64
    %v421 = vpop.permute.xlu0 %420
    %vm422 = vcmask 785920
    %s423 = scalar_lea.vmem %s1, 32
    %424 = vst.msk [vmem:[%s423] sm:$0x7f] %vm422, %v421
    %s425 = scalar_lea.vmem %s1, 33
    %426 = vst.msk [vmem:[%s425] sm:$0x80] %vm422, %v421
    %s427 = scalar_lea.vmem [#allocation0], 66
    %v428 = vld [vmem:[%s427] ss:$8 sm:$0xf]
    %s429 = scalar_lea.vmem [#allocation0], 66
    %v430 = vld [vmem:[%s429] ss:$8 sm:$0xf0]
    %vm431 = vcmask 1047556
    %v432 = vsel %vm431, %v430, %v428
    %433 = vrot.lane.b32.xlu0 %v432, 64
    %v434 = vpop.permute.xlu0 %433
    %vm435 = vcmask 785920
    %s436 = scalar_lea.vmem %s1, 9
    %437 = vst.msk [vmem:[%s436] sm:$0x3f] %vm435, %v434
    %s438 = scalar_lea.vmem %s1, 10
    %439 = vst.msk [vmem:[%s438] sm:$0xc0] %vm435, %v434
    %s440 = scalar_lea.vmem [#allocation0], 290
    %v441 = vld [vmem:[%s440] ss:$8 sm:$0xf]
    %s442 = scalar_lea.vmem [#allocation0], 290
    %v443 = vld [vmem:[%s442] ss:$8 sm:$0xf0]
    %vm444 = vcmask 1047556
    %v445 = vsel %vm444, %v443, %v441
    %446 = vrot.lane.b32.xlu0 %v445, 64
    %v447 = vpop.permute.xlu0 %446
    %vm448 = vcmask 785920
    %s449 = scalar_lea.vmem %s1, 41
    %450 = vst.msk [vmem:[%s449] sm:$0x3f] %vm448, %v447
    %s451 = scalar_lea.vmem %s1, 42
    %452 = vst.msk [vmem:[%s451] sm:$0xc0] %vm448, %v447
    %s453 = scalar_lea.vmem [#allocation0], 130
    %v454 = vld [vmem:[%s453] ss:$8 sm:$0xf]
    %s455 = scalar_lea.vmem [#allocation0], 130
    %v456 = vld [vmem:[%s455] ss:$8 sm:$0xf0]
    %vm457 = vcmask 1047556
    %v458 = vsel %vm457, %v456, %v454
    %459 = vrot.lane.b32.xlu0 %v458, 64
    %v460 = vpop.permute.xlu0 %459
    %vm461 = vcmask 785920
    %s462 = scalar_lea.vmem %s1, 18
    %463 = vst.msk [vmem:[%s462] sm:$0x1f] %vm461, %v460
    %s464 = scalar_lea.vmem %s1, 19
    %465 = vst.msk [vmem:[%s464] sm:$0xe0] %vm461, %v460
    %s466 = scalar_lea.vmem [#allocation0], 354
    %v467 = vld [vmem:[%s466] ss:$8 sm:$0xf]
    %s468 = scalar_lea.vmem [#allocation0], 382
    %v469 = vld [vmem:[%s468] sm:$0x10]
    %vm470 = vcmask 1044484
    %v471 = vsel %vm470, %v469, %v467
    %s472 = scalar_lea.vmem [#allocation0], 154
    %v473 = vld [vmem:[%s472] ss:$8 sm:$0xe0]
    %vm474 = vcmask 1047557
    %v475 = vsel %vm474, %v473, %v471
    %476 = vrot.lane.b32.xlu0 %v475, 64
    %v477 = vpop.permute.xlu0 %476
    %vm478 = vcmask 785920
    %s479 = scalar_lea.vmem %s1, 50
    %480 = vst.msk [vmem:[%s479] sm:$0x1f] %vm478, %v477
    %s481 = scalar_lea.vmem %s1, 22
    %482 = vst.msk [vmem:[%s481] sm:$0xe0] %vm478, %v477
    %s483 = scalar_lea.vmem [#allocation0], 218
    %v484 = vld [vmem:[%s483] sm:$0x1]
    %485 = vrot.lane.b32.xlu0 %v484, 64
    %v486 = vpop.permute.xlu0 %485
    %vm487 = vcmask 785920
    %s488 = scalar_lea.vmem %s1, 30
    %489 = vst.msk [vmem:[%s488] sm:$0x1] %vm487, %v486
    %s490 = scalar_lea.vmem [#allocation0], 1
    %v491 = vld [vmem:[%s490] ss:$8 sm:$0xf]
    %s492 = scalar_lea.vmem [#allocation0], 1
    %v493 = vld [vmem:[%s492] ss:$8 sm:$0xf0]
    %vm494 = vcmask 1047556
    %v495 = vsel %vm494, %v493, %v491
    %496 = vrot.lane.b32.xlu0 %v495, 32
    %v497 = vpop.permute.xlu0 %496
    %vm498 = vcmask 523520
    %499 = vst.msk [vmem:[%s1] sm:$0x7f] %vm498, %v497
    %s500 = scalar_lea.vmem %s1, 1
    %501 = vst.msk [vmem:[%s500] sm:$0x80] %vm498, %v497
    %s502 = scalar_lea.vmem [#allocation0], 225
    %v503 = vld [vmem:[%s502] ss:$8 sm:$0xf]
    %s504 = scalar_lea.vmem [#allocation0], 225
    %v505 = vld [vmem:[%s504] ss:$8 sm:$0xf0]
    %vm506 = vcmask 1047556
    %v507 = vsel %vm506, %v505, %v503
    %508 = vrot.lane.b32.xlu0 %v507, 32
    %v509 = vpop.permute.xlu0 %508
    %vm510 = vcmask 523520
    %s511 = scalar_lea.vmem %s1, 32
    %512 = vst.msk [vmem:[%s511] sm:$0x7f] %vm510, %v509
    %s513 = scalar_lea.vmem %s1, 33
    %514 = vst.msk [vmem:[%s513] sm:$0x80] %vm510, %v509
    %s515 = scalar_lea.vmem [#allocation0], 65
    %v516 = vld [vmem:[%s515] ss:$8 sm:$0xf]
    %s517 = scalar_lea.vmem [#allocation0], 65
    %v518 = vld [vmem:[%s517] ss:$8 sm:$0xf0]
    %vm519 = vcmask 1047556
    %v520 = vsel %vm519, %v518, %v516
    %521 = vrot.lane.b32.xlu0 %v520, 32
    %v522 = vpop.permute.xlu0 %521
    %vm523 = vcmask 523520
    %s524 = scalar_lea.vmem %s1, 9
    %525 = vst.msk [vmem:[%s524] sm:$0x3f] %vm523, %v522
    %s526 = scalar_lea.vmem %s1, 10
    %527 = vst.msk [vmem:[%s526] sm:$0xc0] %vm523, %v522
    %s528 = scalar_lea.vmem [#allocation0], 289
    %v529 = vld [vmem:[%s528] ss:$8 sm:$0xf]
    %s530 = scalar_lea.vmem [#allocation0], 289
    %v531 = vld [vmem:[%s530] ss:$8 sm:$0xf0]
    %vm532 = vcmask 1047556
    %v533 = vsel %vm532, %v531, %v529
    %534 = vrot.lane.b32.xlu0 %v533, 32
    %v535 = vpop.permute.xlu0 %534
    %vm536 = vcmask 523520
    %s537 = scalar_lea.vmem %s1, 41
    %538 = vst.msk [vmem:[%s537] sm:$0x3f] %vm536, %v535
    %s539 = scalar_lea.vmem %s1, 42
    %540 = vst.msk [vmem:[%s539] sm:$0xc0] %vm536, %v535
    %s541 = scalar_lea.vmem [#allocation0], 129
    %v542 = vld [vmem:[%s541] ss:$8 sm:$0xf]
    %s543 = scalar_lea.vmem [#allocation0], 129
    %v544 = vld [vmem:[%s543] ss:$8 sm:$0xf0]
    %vm545 = vcmask 1047556
    %v546 = vsel %vm545, %v544, %v542
    %547 = vrot.lane.b32.xlu0 %v546, 32
    %v548 = vpop.permute.xlu0 %547
    %vm549 = vcmask 523520
    %s550 = scalar_lea.vmem %s1, 18
    %551 = vst.msk [vmem:[%s550] sm:$0x1f] %vm549, %v548
    %s552 = scalar_lea.vmem %s1, 19
    %553 = vst.msk [vmem:[%s552] sm:$0xe0] %vm549, %v548
    %s554 = scalar_lea.vmem [#allocation0], 353
    %v555 = vld [vmem:[%s554] ss:$8 sm:$0xf]
    %s556 = scalar_lea.vmem [#allocation0], 381
    %v557 = vld [vmem:[%s556] sm:$0x10]
    %vm558 = vcmask 1044484
    %v559 = vsel %vm558, %v557, %v555
    %s560 = scalar_lea.vmem [#allocation0], 153
    %v561 = vld [vmem:[%s560] ss:$8 sm:$0xe0]
    %vm562 = vcmask 1047557
    %v563 = vsel %vm562, %v561, %v559
    %564 = vrot.lane.b32.xlu0 %v563, 32
    %v565 = vpop.permute.xlu0 %564
    %vm566 = vcmask 523520
    %s567 = scalar_lea.vmem %s1, 50
    %568 = vst.msk [vmem:[%s567] sm:$0x1f] %vm566, %v565
    %s569 = scalar_lea.vmem %s1, 22
    %570 = vst.msk [vmem:[%s569] sm:$0xe0] %vm566, %v565
    %s571 = scalar_lea.vmem [#allocation0], 217
    %v572 = vld [vmem:[%s571] sm:$0x1]
    %573 = vrot.lane.b32.xlu0 %v572, 32
    %v574 = vpop.permute.xlu0 %573
    %vm575 = vcmask 523520
    %s576 = scalar_lea.vmem %s1, 30
    %577 = vst.msk [vmem:[%s576] sm:$0x1] %vm575, %v574

// kernel: _amscm_forward_impl.1
$region0: #{_amscm_forward_impl.1}
  #allocation0 [shape = 'u32[]', space=smem, size = 0x4, offset = 0x4, fixed_abs, tag = 'smem constant byte address 0x4 - core index']
  #allocation1 [shape = 'u32[144,128]{1,0:T(1,128)}', space=vmem, size = 0x12000, scoped, tag = 'internal scratch']
  #allocation2 [shape = 'f32[22,32,128]{2,1,0:T(8,128)}', space=vmem, size = 0x58000, scoped, tag = 'scratch operand']
  #allocation3 [shape = 'f32[7,14,16,128]{3,2,1,0:T(8,128)}', space=vmem, size = 0xc4000, scoped, tag = 'scratch operand']
  %s0 = inlined_call_operand.vmem [shape: f32[2,16,16,128], index: 0, kind: input, shape index: {}]
  %s1 = inlined_call_operand.vmem [shape: f32[128,128], index: 1, kind: input, shape index: {}]
  %s2 = inlined_call_operand.vmem [shape: f32[1,128], index: 2, kind: input, shape index: {}]
  %s3 = inlined_call_operand.vmem [shape: f32[7,7,128], index: 3, kind: input, shape index: {}]
  %s4 = inlined_call_operand.vmem [shape: f32[1,128], index: 4, kind: input, shape index: {}]
  %s5 = inlined_call_operand.vmem [shape: f32[2,16,16,128], index: 5, kind: output, shape index: {}]
  %s6 = sld [smem:[#allocation0]]
  $region67: #{_amscm_forward_impl.1} parent=0
    _
  %s8 = ssub.s32 1, %s6
  %s9 = scalar_select 0, %s8, %s6
  loop: start=0, step=1, limit=4
  $region2: #{_amscm_forward_impl.1} parent=0 // loop_pre_header
    _
  $region3: #{_amscm_forward_impl.1} parent=0 // loop_header
    %s11 = sphi 0, %s15
    %p12 = scmp.ge.s32.totalorder %s11, 4
    %s21 = sphi 0, %s23
    %s24 = sphi 0, %s21
    %s25 = sphi 0, %s24
    %s41 = sphi 0, %s25
    %s45 = sphi 0, %s45
    %s47 = sphi 0, %s45
    %s48 = sphi 0, %s47
    %s62 = sphi 0, %s48
    %s66 = sphi 0, %s66
    %s68 = sphi 0, %s66
    %s69 = sphi 0, %s68
    %s83 = sphi 0, %s69
    %s87 = sphi 0, %s87
    %s89 = sphi 0, %s87
    %s90 = sphi 0, %s89
    %s104 = sphi 0, %s90
    %s108 = sphi 0, %s108
    %s110 = sphi 0, %s108
    %s111 = sphi 0, %s110
    %s125 = sphi 0, %s111
    %s131 = sphi 0, %s133
    %s134 = sphi 0, %s131
    %s135 = sphi 0, %s134
    %s151 = sphi 0, %s135
  $region4: #{_amscm_forward_impl.1} parent=0 // loop_header_branch
    %14 = sbr.rel (%p12) target = $region8
  $region5: #{_amscm_forward_impl.1} parent=0 // loop_body
    %s16 = ssub.s32 %s11, 1
    %s17 = ssub.s32 %s11, 2
    %s18 = sadd.s32 %s11, 1
    %s19 = ssub.s32 %s11, %s18
    %p20 = scmp.eq.s32.totalorder %s19, 0
    %s22 = sadd.s32 %s21, 1
    %s23 = scalar_select %p20, %s21, %s22
    %p26 = pneg %p20
    %p27 = scmp.eq.s32.totalorder %s11, 1
    %p28 = por %p26, %p27
    %p29 = scmp.ne.s32.totalorder %s21, %s24
    %p30 = scmp.eq.s32.totalorder %s11, 0
    %p31 = por %p29, %p30
    %p32 = scmp.ne.s32.totalorder %s21, %s24
    %p33 = scmp.eq.s32.totalorder %s16, 1
    %p34 = por %p32, %p33
    %p35 = scmp.ne.s32.totalorder %s24, %s25
    %p36 = scmp.eq.s32.totalorder %s16, 0
    %p37 = por %p35, %p36
    %p38 = scmp.ne.s32.totalorder %s24, %s25
    %p39 = scmp.eq.s32.totalorder %s17, 1
    %p40 = por %p38, %p39
    %p42 = scmp.ne.s32.totalorder %s25, %s41
    %p43 = scmp.eq.s32.totalorder %s17, 0
    %p44 = por %p42, %p43
    %s46 = sadd.s32 %s45, 1
    %p49 = scmp.eq.s32.totalorder %s11, 1
    %p50 = scmp.ne.s32.totalorder %s45, %s47
    %p51 = scmp.eq.s32.totalorder %s11, 0
    %p52 = por %p50, %p51
    %p53 = scmp.ne.s32.totalorder %s45, %s47
    %p54 = scmp.eq.s32.totalorder %s16, 1
    %p55 = por %p53, %p54
    %p56 = scmp.ne.s32.totalorder %s47, %s48
    %p57 = scmp.eq.s32.totalorder %s16, 0
    %p58 = por %p56, %p57
    %p59 = scmp.ne.s32.totalorder %s47, %s48
    %p60 = scmp.eq.s32.totalorder %s17, 1
    %p61 = por %p59, %p60
    %p63 = scmp.ne.s32.totalorder %s48, %s62
    %p64 = scmp.eq.s32.totalorder %s17, 0
    %p65 = por %p63, %p64
    %s67 = sadd.s32 %s66, 1
    %p70 = scmp.eq.s32.totalorder %s11, 1
    %p71 = scmp.ne.s32.totalorder %s66, %s68
    %p72 = scmp.eq.s32.totalorder %s11, 0
    %p73 = por %p71, %p72
    %p74 = scmp.ne.s32.totalorder %s66, %s68
    %p75 = scmp.eq.s32.totalorder %s16, 1
    %p76 = por %p74, %p75
    %p77 = scmp.ne.s32.totalorder %s68, %s69
    %p78 = scmp.eq.s32.totalorder %s16, 0
    %p79 = por %p77, %p78
    %p80 = scmp.ne.s32.totalorder %s68, %s69
    %p81 = scmp.eq.s32.totalorder %s17, 1
    %p82 = por %p80, %p81
    %p84 = scmp.ne.s32.totalorder %s69, %s83
    %p85 = scmp.eq.s32.totalorder %s17, 0
    %p86 = por %p84, %p85
    %s88 = sadd.s32 %s87, 1
    %p91 = scmp.eq.s32.totalorder %s11, 1
    %p92 = scmp.ne.s32.totalorder %s87, %s89
    %p93 = scmp.eq.s32.totalorder %s11, 0
    %p94 = por %p92, %p93
    %p95 = scmp.ne.s32.totalorder %s87, %s89
    %p96 = scmp.eq.s32.totalorder %s16, 1
    %p97 = por %p95, %p96
    %p98 = scmp.ne.s32.totalorder %s89, %s90
    %p99 = scmp.eq.s32.totalorder %s16, 0
    %p100 = por %p98, %p99
    %p101 = scmp.ne.s32.totalorder %s89, %s90
    %p102 = scmp.eq.s32.totalorder %s17, 1
    %p103 = por %p101, %p102
    %p105 = scmp.ne.s32.totalorder %s90, %s104
    %p106 = scmp.eq.s32.totalorder %s17, 0
    %p107 = por %p105, %p106
    %s109 = sadd.s32 %s108, 1
    %p112 = scmp.eq.s32.totalorder %s11, 1
    %p113 = scmp.ne.s32.totalorder %s108, %s110
    %p114 = scmp.eq.s32.totalorder %s11, 0
    %p115 = por %p113, %p114
    %p116 = scmp.ne.s32.totalorder %s108, %s110
    %p117 = scmp.eq.s32.totalorder %s16, 1
    %p118 = por %p116, %p117
    %p119 = scmp.ne.s32.totalorder %s110, %s111
    %p120 = scmp.eq.s32.totalorder %s16, 0
    %p121 = por %p119, %p120
    %p122 = scmp.ne.s32.totalorder %s110, %s111
    %p123 = scmp.eq.s32.totalorder %s17, 1
    %p124 = por %p122, %p123
    %p126 = scmp.ne.s32.totalorder %s111, %s125
    %p127 = scmp.eq.s32.totalorder %s17, 0
    %p128 = por %p126, %p127
    %s129 = ssub.s32 %s11, %s18
    %p130 = scmp.eq.s32.totalorder %s129, 0
    %s132 = sadd.s32 %s131, 1
    %s133 = scalar_select %p130, %s131, %s132
    %p136 = pneg %p130
    %p137 = scmp.eq.s32.totalorder %s11, 1
    %p138 = por %p136, %p137
    %p139 = scmp.ne.s32.totalorder %s131, %s134
    %p140 = scmp.eq.s32.totalorder %s11, 0
    %p141 = por %p139, %p140
    %p142 = scmp.ne.s32.totalorder %s131, %s134
    %p143 = scmp.eq.s32.totalorder %s16, 1
    %p144 = por %p142, %p143
    %p145 = scmp.ne.s32.totalorder %s134, %s135
    %p146 = scmp.eq.s32.totalorder %s16, 0
    %p147 = por %p145, %p146
    %p148 = scmp.ne.s32.totalorder %s134, %s135
    %p149 = scmp.eq.s32.totalorder %s17, 1
    %p150 = por %p148, %p149
    %p152 = scmp.ne.s32.totalorder %s135, %s151
    %p153 = scmp.eq.s32.totalorder %s17, 0
    %p154 = por %p152, %p153
    %p155 = scmp.le.s32.totalorder 1, %s11
    %p156 = scmp.lt.s32.totalorder %s11, 3
    %p157 = pnand %p155, %p156
    %p158 = pneg %p157
    // Predicated region
    $region9: #{_amscm_forward_impl.1} parent=5 // pred_check
      _
    $region10: #{_amscm_forward_impl.1} parent=5 // pred_check_branch
      %160 = sbr.rel (%p157) target = $region12
    $region11: #{_amscm_forward_impl.1} parent=5 // pred_region
      %s161 = ssub.s32 %s11, 1
      // Predicated region
      $region13: #{_amscm_forward_impl.1} parent=11 // pred_check
        %p162 = pneg %p58
      $region14: #{_amscm_forward_impl.1} parent=11 // pred_check_branch
        %164 = sbr.rel (%p162) target = $region16
      $region15: #{_amscm_forward_impl.1} parent=11 // pred_region
        _
      $region16: #{_amscm_forward_impl.1} parent=11 // pred_fallthru
        _
      // Predicated region
      $region17: #{_amscm_forward_impl.1} parent=11 // pred_check
        %p165 = pneg %p79
      $region18: #{_amscm_forward_impl.1} parent=11 // pred_check_branch
        %167 = sbr.rel (%p165) target = $region20
      $region19: #{_amscm_forward_impl.1} parent=11 // pred_region
        _
      $region20: #{_amscm_forward_impl.1} parent=11 // pred_fallthru
        _
      // Predicated region
      $region21: #{_amscm_forward_impl.1} parent=11 // pred_check
        %p168 = pneg %p100
      $region22: #{_amscm_forward_impl.1} parent=11 // pred_check_branch
        %170 = sbr.rel (%p168) target = $region24
      $region23: #{_amscm_forward_impl.1} parent=11 // pred_region
        _
      $region24: #{_amscm_forward_impl.1} parent=11 // pred_fallthru
        _
      // Predicated region
      $region25: #{_amscm_forward_impl.1} parent=11 // pred_check
        %p171 = pneg %p121
      $region26: #{_amscm_forward_impl.1} parent=11 // pred_check_branch
        %173 = sbr.rel (%p171) target = $region28
      $region27: #{_amscm_forward_impl.1} parent=11 // pred_region
        _
      $region28: #{_amscm_forward_impl.1} parent=11 // pred_fallthru
        _
    $region12: #{_amscm_forward_impl.1} parent=5 // pred_fallthru
      _
    %p174 = scmp.lt.s32.totalorder %s11, 2
    // Predicated region
    $region29: #{_amscm_forward_impl.1} parent=5 // pred_check
      %p175 = pneg %p174
    $region30: #{_amscm_forward_impl.1} parent=5 // pred_check_branch
      %177 = sbr.rel (%p175) target = $region32
    $region31: #{_amscm_forward_impl.1} parent=5 // pred_region
      // Predicated region
      $region33: #{_amscm_forward_impl.1} parent=31 // pred_check
        %p178 = pneg %p31
      $region34: #{_amscm_forward_impl.1} parent=31 // pred_check_branch
        %180 = sbr.rel (%p178) target = $region36
      $region35: #{_amscm_forward_impl.1} parent=31 // pred_region
        %p181 = scmp.lt.s32.totalorder %s11, 1
        %s182 = scalar_select %p181, %s11, 1
        %s183 = smul.addr %s182, 32
        %s184 = smul.addr %s183, 8
        %s185 = scalar_lea.vmem %s0, %s184
      $region36: #{_amscm_forward_impl.1} parent=31 // pred_fallthru
        _
    $region32: #{_amscm_forward_impl.1} parent=5 // pred_fallthru
      _
    %p186 = scmp.le.s32.totalorder 1, %s11
    %p187 = scmp.lt.s32.totalorder %s11, 3
    %p188 = pnand %p186, %p187
    %p189 = pneg %p188
    // Predicated region
    $region37: #{_amscm_forward_impl.1} parent=5 // pred_check
      _
    $region38: #{_amscm_forward_impl.1} parent=5 // pred_check_branch
      %191 = sbr.rel (%p188) target = $region40
    $region39: #{_amscm_forward_impl.1} parent=5 // pred_region
      %s192 = ssub.s32 %s11, 1
      %p193 = scmp.lt.s32.totalorder %s16, 1
      %s194 = scalar_select %p193, %s16, 1
      %s195 = smul.addr %s194, 32
      %s196 = smul.addr %s195, 8
      %s197 = scalar_lea.vmem %s0, %s196
      %p198 = pneg %p37
      %p199 = pneg %p34
      %p200 = pneg %p58
      %p201 = pneg %p55
      %p202 = pneg %p79
      %p203 = pneg %p76
      %p204 = pneg %p100
      %p205 = pneg %p97
      %p206 = pneg %p121
      %p207 = pneg %p118
      %p208 = pneg %p147
      %p209 = pneg %p144
      %p210 = scmp.lt.s32.totalorder %s16, 1
      %s211 = scalar_select %p210, %s16, 1
      %s212 = smul.addr %s211, 32
      %s213 = smul.addr %s212, 8
      %s214 = scalar_lea.vmem %s5, %s213
      %p215 = scmp.lt.s32.totalorder %s16, 1
      %s216 = scalar_select %p215, %s16, 1
      %s217 = smul.addr %s216, 32
      %s218 = smul.addr %s217, 8
      %s219 = scalar_lea.vmem %s0, %s218
      %p220 = scmp.lt.s32.totalorder %s16, 1
      %s221 = scalar_select %p220, %s16, 1
      %s222 = smul.addr %s221, 32
      %s223 = smul.addr %s222, 8
      %s224 = scalar_lea.vmem %s5, %s223
      %225 = vst [vmem:[#allocation2] sm:$0xff] 0.0
      %226 = vst [vmem:[#allocation2 + $0x8] sm:$0xff] 0.0
      %227 = vst [vmem:[#allocation2 + $0x10] sm:$0xff] 0.0
      %228 = vst [vmem:[#allocation2 + $0x18] sm:$0xff] 0.0
      %229 = vst [vmem:[#allocation2 + $0x20] sm:$0xff] 0.0
      %230 = vst [vmem:[#allocation2 + $0x28] sm:$0xff] 0.0
      %231 = vst [vmem:[#allocation2 + $0x30] sm:$0xff] 0.0
      %232 = vst [vmem:[#allocation2 + $0x38] sm:$0xff] 0.0
      %233 = vst [vmem:[#allocation2 + $0x40] sm:$0xff] 0.0
      %234 = vst [vmem:[#allocation2 + $0x48] sm:$0xff] 0.0
      %235 = vst [vmem:[#allocation2 + $0x50] sm:$0xff] 0.0
      %236 = vst [vmem:[#allocation2 + $0x58] sm:$0xff] 0.0
      %s237 = scalar_lea.vmem [#allocation2], 608
      %238 = vst [vmem:[%s237] sm:$0xff] 0.0
      %239 = vst [vmem:[%s237 + $0x8] sm:$0xff] 0.0
      %240 = vst [vmem:[%s237 + $0x10] sm:$0xff] 0.0
      %241 = vst [vmem:[%s237 + $0x18] sm:$0xff] 0.0
      %242 = vst [vmem:[%s237 + $0x20] sm:$0xff] 0.0
      %243 = vst [vmem:[%s237 + $0x28] sm:$0xff] 0.0
      %244 = vst [vmem:[%s237 + $0x30] sm:$0xff] 0.0
      %245 = vst [vmem:[%s237 + $0x38] sm:$0xff] 0.0
      %246 = vst [vmem:[%s237 + $0x40] sm:$0xff] 0.0
      %247 = vst [vmem:[%s237 + $0x48] sm:$0xff] 0.0
      %248 = vst [vmem:[%s237 + $0x50] sm:$0xff] 0.0
      %249 = vst [vmem:[%s237 + $0x58] sm:$0xff] 0.0
      %250 = vst [vmem:[#allocation2] sm:$0xff] 0.0
      %251 = vst [vmem:[#allocation2 + $0x20] sm:$0xff] 0.0
      %252 = vst [vmem:[#allocation2 + $0x40] sm:$0xff] 0.0
      %253 = vst [vmem:[#allocation2 + $0x60] sm:$0xff] 0.0
      %254 = vst [vmem:[#allocation2 + $0x80] sm:$0xff] 0.0
      %255 = vst [vmem:[#allocation2 + $0xa0] sm:$0xff] 0.0
      %256 = vst [vmem:[#allocation2 + $0xc0] sm:$0xff] 0.0
      %257 = vst [vmem:[#allocation2 + $0xe0] sm:$0xff] 0.0
      %258 = vst [vmem:[#allocation2 + $0x100] sm:$0xff] 0.0
      %259 = vst [vmem:[#allocation2 + $0x120] sm:$0xff] 0.0
      %260 = vst [vmem:[#allocation2 + $0x140] sm:$0xff] 0.0
      %261 = vst [vmem:[#allocation2 + $0x160] sm:$0xff] 0.0
      %262 = vst [vmem:[#allocation2 + $0x180] sm:$0xff] 0.0
      %263 = vst [vmem:[#allocation2 + $0x1a0] sm:$0xff] 0.0
      %264 = vst [vmem:[#allocation2 + $0x1c0] sm:$0xff] 0.0
      %265 = vst [vmem:[#allocation2 + $0x1e0] sm:$0xff] 0.0
      %266 = vst [vmem:[#allocation2 + $0x200] sm:$0xff] 0.0
      %267 = vst [vmem:[#allocation2 + $0x220] sm:$0xff] 0.0
      %268 = vst [vmem:[#allocation2 + $0x240] sm:$0xff] 0.0
      %269 = vst [vmem:[#allocation2 + $0x260] sm:$0xff] 0.0
      %270 = vst [vmem:[#allocation2 + $0x280] sm:$0xff] 0.0
      %271 = vst [vmem:[#allocation2 + $0x2a0] sm:$0xff] 0.0
      %272 = vst [vmem:[#allocation2 + $0x18] sm:$0xff] 0.0
      %273 = vst [vmem:[#allocation2 + $0x38] sm:$0xff] 0.0
      %274 = vst [vmem:[#allocation2 + $0x58] sm:$0xff] 0.0
      %275 = vst [vmem:[#allocation2 + $0x78] sm:$0xff] 0.0
      %276 = vst [vmem:[#allocation2 + $0x98] sm:$0xff] 0.0
      %277 = vst [vmem:[#allocation2 + $0xb8] sm:$0xff] 0.0
      %278 = vst [vmem:[#allocation2 + $0xd8] sm:$0xff] 0.0
      %279 = vst [vmem:[#allocation2 + $0xf8] sm:$0xff] 0.0
      %280 = vst [vmem:[#allocation2 + $0x118] sm:$0xff] 0.0
      %281 = vst [vmem:[#allocation2 + $0x138] sm:$0xff] 0.0
      %282 = vst [vmem:[#allocation2 + $0x158] sm:$0xff] 0.0
      %283 = vst [vmem:[#allocation2 + $0x178] sm:$0xff] 0.0
      %284 = vst [vmem:[#allocation2 + $0x198] sm:$0xff] 0.0
      %285 = vst [vmem:[#allocation2 + $0x1b8] sm:$0xff] 0.0
      %286 = vst [vmem:[#allocation2 + $0x1d8] sm:$0xff] 0.0
      %287 = vst [vmem:[#allocation2 + $0x1f8] sm:$0xff] 0.0
      %288 = vst [vmem:[#allocation2 + $0x218] sm:$0xff] 0.0
      %289 = vst [vmem:[#allocation2 + $0x238] sm:$0xff] 0.0
      %290 = vst [vmem:[#allocation2 + $0x258] sm:$0xff] 0.0
      %291 = vst [vmem:[#allocation2 + $0x278] sm:$0xff] 0.0
      %292 = vst [vmem:[#allocation2 + $0x298] sm:$0xff] 0.0
      %293 = vst [vmem:[#allocation2 + $0x2b8] sm:$0xff] 0.0
      loop: start=0, step=1, limit=2
      $region41: #{_amscm_forward_impl.1} parent=39 // loop_pre_header
        _
      $region42: #{_amscm_forward_impl.1} parent=39 // loop_header
        %s295 = sphi 0, %s299
        %p296 = scmp.ge.s32.totalorder %s295, 2
      $region43: #{_amscm_forward_impl.1} parent=39 // loop_header_branch
        %298 = sbr.rel (%p296) target = $region47
      $region44: #{_amscm_forward_impl.1} parent=39 // loop_body
        %s300 = smul.u32 %s295, 8
        %p301 = scmp.lt.s32.totalorder %s300, 8
        %s302 = scalar_select %p301, %s300, 8
        %s303 = smul.u32 %s302, 16
        %s304 = scalar_lea.vmem %s219, %s303
        %v305 = vld [vmem:[%s304] sm:$0xff]
        %v306 = vld [vmem:[%s304 + $0x8] sm:$0xff]
        %v307 = vld [vmem:[%s304 + $0x10] sm:$0xff]
        %v308 = vld [vmem:[%s304 + $0x18] sm:$0xff]
        %v309 = vld [vmem:[%s304 + $0x20] sm:$0xff]
        %v310 = vld [vmem:[%s304 + $0x28] sm:$0xff]
        %v311 = vld [vmem:[%s304 + $0x30] sm:$0xff]
        %v312 = vld [vmem:[%s304 + $0x38] sm:$0xff]
        %v313 = vld [vmem:[%s304 + $0x40] sm:$0xff]
        %v314 = vld [vmem:[%s304 + $0x48] sm:$0xff]
        %v315 = vld [vmem:[%s304 + $0x50] sm:$0xff]
        %v316 = vld [vmem:[%s304 + $0x58] sm:$0xff]
        %v317 = vld [vmem:[%s304 + $0x60] sm:$0xff]
        %v318 = vld [vmem:[%s304 + $0x68] sm:$0xff]
        %v319 = vld [vmem:[%s304 + $0x70] sm:$0xff]
        %v320 = vld [vmem:[%s304 + $0x78] sm:$0xff]
        %v321 = vld [vmem:[%s1] sm:$0xff]
        %v322 = vld [vmem:[%s1 + $0x8] sm:$0xff]
        %v323 = vld [vmem:[%s1 + $0x10] sm:$0xff]
        %v324 = vld [vmem:[%s1 + $0x18] sm:$0xff]
        %v325 = vld [vmem:[%s1 + $0x20] sm:$0xff]
        %v326 = vld [vmem:[%s1 + $0x28] sm:$0xff]
        %v327 = vld [vmem:[%s1 + $0x30] sm:$0xff]
        %v328 = vld [vmem:[%s1 + $0x38] sm:$0xff]
        %v329 = vld [vmem:[%s1 + $0x40] sm:$0xff]
        %v330 = vld [vmem:[%s1 + $0x48] sm:$0xff]
        %v331 = vld [vmem:[%s1 + $0x50] sm:$0xff]
        %v332 = vld [vmem:[%s1 + $0x58] sm:$0xff]
        %v333 = vld [vmem:[%s1 + $0x60] sm:$0xff]
        %v334 = vld [vmem:[%s1 + $0x68] sm:$0xff]
        %v335 = vld [vmem:[%s1 + $0x70] sm:$0xff]
        %v336 = vld [vmem:[%s1 + $0x78] sm:$0xff]
        %v337 = vld [vmem:[%s2] sm:$0x1]
        %v339 = vlaneseq
        %v340 = vshrl.u32 %v339, 7
        %v341 = vsub.s32 0, %v340
        %v342 = vrot.slane %v337, %v341
        %344 = vmatprep.subr.mxu0 0.0
        %v345 = vand.u32 %v336, 4294901760
        %346 = vmatpush1.msra.mxu0 %v345
        %347 = vmatprep.subr.mxu0 0.0
        %v348 = vand.u32 %v335, 4294901760
        %349 = vmatpush1.msra.mxu0 %v348
        %350 = vmatprep.subr.mxu0 0.0
        %v351 = vand.u32 %v334, 4294901760
        %352 = vmatpush1.msra.mxu0 %v351
        %353 = vmatprep.subr.mxu0 0.0
        %v354 = vand.u32 %v333, 4294901760
        %355 = vmatpush1.msra.mxu0 %v354
        %356 = vmatprep.subr.mxu0 0.0
        %v357 = vand.u32 %v332, 4294901760
        %358 = vmatpush1.msra.mxu0 %v357
        %359 = vmatprep.subr.mxu0 0.0
        %v360 = vand.u32 %v331, 4294901760
        %361 = vmatpush1.msra.mxu0 %v360
        %362 = vmatprep.subr.mxu0 0.0
        %v363 = vand.u32 %v330, 4294901760
        %364 = vmatpush1.msra.mxu0 %v363
        %365 = vmatprep.subr.mxu0 0.0
        %v366 = vand.u32 %v329, 4294901760
        %367 = vmatpush1.msra.mxu0 %v366
        %368 = vmatprep.subr.mxu0 0.0
        %v369 = vand.u32 %v328, 4294901760
        %370 = vmatpush1.msra.mxu0 %v369
        %371 = vmatprep.subr.mxu0 0.0
        %v372 = vand.u32 %v327, 4294901760
        %373 = vmatpush1.msra.mxu0 %v372
        %374 = vmatprep.subr.mxu0 0.0
        %v375 = vand.u32 %v326, 4294901760
        %376 = vmatpush1.msra.mxu0 %v375
        %377 = vmatprep.subr.mxu0 0.0
        %v378 = vand.u32 %v325, 4294901760
        %379 = vmatpush1.msra.mxu0 %v378
        %380 = vmatprep.subr.mxu0 0.0
        %v381 = vand.u32 %v324, 4294901760
        %382 = vmatpush1.msra.mxu0 %v381
        %383 = vmatprep.subr.mxu0 0.0
        %v384 = vand.u32 %v323, 4294901760
        %385 = vmatpush1.msra.mxu0 %v384
        %386 = vmatprep.subr.mxu0 0.0
        %v387 = vand.u32 %v322, 4294901760
        %388 = vmatpush1.msra.mxu0 %v387
        %389 = vmatprep.subr.mxu0 0.0
        %v390 = vand.u32 %v321, 4294901760
        %391 = vmatpush1.msra.mxu0 %v390
        %392 = vmatprep.subr.mxu0 0.0
        %393 = vmatpush2.msra.mxu0 0.0
        %394 = vmatprep.subr.mxu0 0.0
        %395 = vmatpush2.msra.mxu0 0.0
        %396 = vmatprep.subr.mxu0 0.0
        %397 = vmatpush2.msra.mxu0 0.0
        %398 = vmatprep.subr.mxu0 0.0
        %399 = vmatpush2.msra.mxu0 0.0
        %400 = vmatprep.subr.mxu0 0.0
        %401 = vmatpush2.msra.mxu0 0.0
        %402 = vmatprep.subr.mxu0 0.0
        %403 = vmatpush2.msra.mxu0 0.0
        %404 = vmatprep.subr.mxu0 0.0
        %405 = vmatpush2.msra.mxu0 0.0
        %406 = vmatprep.subr.mxu0 0.0
        %407 = vmatpush2.msra.mxu0 0.0
        %408 = vmatprep.subr.mxu0 0.0
        %409 = vmatpush2.msra.mxu0 0.0
        %410 = vmatprep.subr.mxu0 0.0
        %411 = vmatpush2.msra.mxu0 0.0
        %412 = vmatprep.subr.mxu0 0.0
        %413 = vmatpush2.msra.mxu0 0.0
        %414 = vmatprep.subr.mxu0 0.0
        %415 = vmatpush2.msra.mxu0 0.0
        %416 = vmatprep.subr.mxu0 0.0
        %417 = vmatpush2.msra.mxu0 0.0
        %418 = vmatprep.subr.mxu0 0.0
        %419 = vmatpush2.msra.mxu0 0.0
        %420 = vmatprep.subr.mxu0 0.0
        %421 = vmatpush2.msra.mxu0 0.0
        %422 = vmatprep.subr.mxu0 0.0
        %423 = vmatpush2.msra.mxu0 0.0
        %424 = vmatprep.mubr.f32.mxu0 0.0
        %v425 = vand.u32 %v305, 4294901760
        %v426 = vsub.f32 %v305, %v425
        %v427 = vand.u32 %v426, 4294901760
        %v428 = vsub.f32 %v426, %v427
        %v429 = vand.u32 %v428, 4294901760
        %430 = vmatmul.mubr.f32.gmra.mxu0 %v429
        %v431 = vpop.f32.mrf.mxu0
        %v432 = vadd.f32 %v342, %v431
        %v433 = vpop.f32.mrf.mxu0
        %434 = vmatprep.mubr.f32.mxu0 0.0
        %v435 = vand.u32 %v306, 4294901760
        %v436 = vsub.f32 %v306, %v435
        %v437 = vand.u32 %v436, 4294901760
        %v438 = vsub.f32 %v436, %v437
        %v439 = vand.u32 %v438, 4294901760
        %440 = vmatmul.mubr.f32.gmra.mxu0 %v439
        %v441 = vpop.f32.mrf.mxu0
        %v442 = vadd.f32 %v342, %v441
        %v443 = vpop.f32.mrf.mxu0
        %444 = vmatprep.mubr.f32.mxu0 0.0
        %v445 = vand.u32 %v307, 4294901760
        %v446 = vsub.f32 %v307, %v445
        %v447 = vand.u32 %v446, 4294901760
        %v448 = vsub.f32 %v446, %v447
        %v449 = vand.u32 %v448, 4294901760
        %450 = vmatmul.mubr.f32.gmra.mxu0 %v449
        %v451 = vpop.f32.mrf.mxu0
        %v452 = vadd.f32 %v342, %v451
        %v453 = vpop.f32.mrf.mxu0
        %454 = vmatprep.mubr.f32.mxu0 0.0
        %v455 = vand.u32 %v308, 4294901760
        %v456 = vsub.f32 %v308, %v455
        %v457 = vand.u32 %v456, 4294901760
        %v458 = vsub.f32 %v456, %v457
        %v459 = vand.u32 %v458, 4294901760
        %460 = vmatmul.mubr.f32.gmra.mxu0 %v459
        %v461 = vpop.f32.mrf.mxu0
        %v462 = vadd.f32 %v342, %v461
        %v463 = vpop.f32.mrf.mxu0
        %464 = vmatprep.mubr.f32.mxu0 0.0
        %v465 = vand.u32 %v309, 4294901760
        %v466 = vsub.f32 %v309, %v465
        %v467 = vand.u32 %v466, 4294901760
        %v468 = vsub.f32 %v466, %v467
        %v469 = vand.u32 %v468, 4294901760
        %470 = vmatmul.mubr.f32.gmra.mxu0 %v469
        %v471 = vpop.f32.mrf.mxu0
        %v472 = vadd.f32 %v342, %v471
        %v473 = vpop.f32.mrf.mxu0
        %474 = vmatprep.mubr.f32.mxu0 0.0
        %v475 = vand.u32 %v310, 4294901760
        %v476 = vsub.f32 %v310, %v475
        %v477 = vand.u32 %v476, 4294901760
        %v478 = vsub.f32 %v476, %v477
        %v479 = vand.u32 %v478, 4294901760
        %480 = vmatmul.mubr.f32.gmra.mxu0 %v479
        %v481 = vpop.f32.mrf.mxu0
        %v482 = vadd.f32 %v342, %v481
        %v483 = vpop.f32.mrf.mxu0
        %484 = vmatprep.mubr.f32.mxu0 0.0
        %v485 = vand.u32 %v311, 4294901760
        %v486 = vsub.f32 %v311, %v485
        %v487 = vand.u32 %v486, 4294901760
        %v488 = vsub.f32 %v486, %v487
        %v489 = vand.u32 %v488, 4294901760
        %490 = vmatmul.mubr.f32.gmra.mxu0 %v489
        %v491 = vpop.f32.mrf.mxu0
        %v492 = vadd.f32 %v342, %v491
        %v493 = vpop.f32.mrf.mxu0
        %494 = vmatprep.mubr.f32.mxu0 0.0
        %v495 = vand.u32 %v312, 4294901760
        %v496 = vsub.f32 %v312, %v495
        %v497 = vand.u32 %v496, 4294901760
        %v498 = vsub.f32 %v496, %v497
        %v499 = vand.u32 %v498, 4294901760
        %500 = vmatmul.mubr.f32.gmra.mxu0 %v499
        %v501 = vpop.f32.mrf.mxu0
        %v502 = vadd.f32 %v342, %v501
        %v503 = vpop.f32.mrf.mxu0
        %504 = vmatprep.mubr.f32.mxu0 0.0
        %v505 = vand.u32 %v313, 4294901760
        %v506 = vsub.f32 %v313, %v505
        %v507 = vand.u32 %v506, 4294901760
        %v508 = vsub.f32 %v506, %v507
        %v509 = vand.u32 %v508, 4294901760
        %510 = vmatmul.mubr.f32.gmra.mxu0 %v509
        %v511 = vpop.f32.mrf.mxu0
        %v512 = vadd.f32 %v342, %v511
        %v513 = vpop.f32.mrf.mxu0
        %514 = vmatprep.mubr.f32.mxu0 0.0
        %v515 = vand.u32 %v314, 4294901760
        %v516 = vsub.f32 %v314, %v515
        %v517 = vand.u32 %v516, 4294901760
        %v518 = vsub.f32 %v516, %v517
        %v519 = vand.u32 %v518, 4294901760
        %520 = vmatmul.mubr.f32.gmra.mxu0 %v519
        %v521 = vpop.f32.mrf.mxu0
        %v522 = vadd.f32 %v342, %v521
        %v523 = vpop.f32.mrf.mxu0
        %524 = vmatprep.mubr.f32.mxu0 0.0
        %v525 = vand.u32 %v315, 4294901760
        %v526 = vsub.f32 %v315, %v525
        %v527 = vand.u32 %v526, 4294901760
        %v528 = vsub.f32 %v526, %v527
        %v529 = vand.u32 %v528, 4294901760
        %530 = vmatmul.mubr.f32.gmra.mxu0 %v529
        %v531 = vpop.f32.mrf.mxu0
        %v532 = vadd.f32 %v342, %v531
        %v533 = vpop.f32.mrf.mxu0
        %534 = vmatprep.mubr.f32.mxu0 0.0
        %v535 = vand.u32 %v316, 4294901760
        %v536 = vsub.f32 %v316, %v535
        %v537 = vand.u32 %v536, 4294901760
        %v538 = vsub.f32 %v536, %v537
        %v539 = vand.u32 %v538, 4294901760
        %540 = vmatmul.mubr.f32.gmra.mxu0 %v539
        %v541 = vpop.f32.mrf.mxu0
        %v542 = vadd.f32 %v342, %v541
        %v543 = vpop.f32.mrf.mxu0
        %544 = vmatprep.mubr.f32.mxu0 0.0
        %v545 = vand.u32 %v317, 4294901760
        %v546 = vsub.f32 %v317, %v545
        %v547 = vand.u32 %v546, 4294901760
        %v548 = vsub.f32 %v546, %v547
        %v549 = vand.u32 %v548, 4294901760
        %550 = vmatmul.mubr.f32.gmra.mxu0 %v549
        %v551 = vpop.f32.mrf.mxu0
        %v552 = vadd.f32 %v342, %v551
        %v553 = vpop.f32.mrf.mxu0
        %554 = vmatprep.mubr.f32.mxu0 0.0
        %v555 = vand.u32 %v318, 4294901760
        %v556 = vsub.f32 %v318, %v555
        %v557 = vand.u32 %v556, 4294901760
        %v558 = vsub.f32 %v556, %v557
        %v559 = vand.u32 %v558, 4294901760
        %560 = vmatmul.mubr.f32.gmra.mxu0 %v559
        %v561 = vpop.f32.mrf.mxu0
        %v562 = vadd.f32 %v342, %v561
        %v563 = vpop.f32.mrf.mxu0
        %564 = vmatprep.mubr.f32.mxu0 0.0
        %v565 = vand.u32 %v319, 4294901760
        %v566 = vsub.f32 %v319, %v565
        %v567 = vand.u32 %v566, 4294901760
        %v568 = vsub.f32 %v566, %v567
        %v569 = vand.u32 %v568, 4294901760
        %570 = vmatmul.mubr.f32.gmra.mxu0 %v569
        %v571 = vpop.f32.mrf.mxu0
        %v572 = vadd.f32 %v342, %v571
        %v573 = vpop.f32.mrf.mxu0
        %574 = vmatprep.mubr.f32.mxu0 0.0
        %v575 = vand.u32 %v320, 4294901760
        %v576 = vsub.f32 %v320, %v575
        %v577 = vand.u32 %v576, 4294901760
        %v578 = vsub.f32 %v576, %v577
        %v579 = vand.u32 %v578, 4294901760
        %580 = vmatmul.mubr.f32.gmra.mxu0 %v579
        %v581 = vpop.f32.mrf.mxu0
        %v582 = vadd.f32 %v342, %v581
        %v583 = vpop.f32.mrf.mxu0
        %584 = vdwg.mxu0
        %585 = vmatprep.subr.mxu0 0.0
        %v586 = vand.u32 %v336, 4294901760
        %v587 = vsub.f32 %v336, %v586
        %v588 = vand.u32 %v587, 4294901760
        %v589 = vsub.f32 %v587, %v588
        %v590 = vand.u32 %v589, 4294901760
        %591 = vmatpush1.msra.mxu0 %v590
        %592 = vmatprep.subr.mxu0 0.0
        %v593 = vand.u32 %v335, 4294901760
        %v594 = vsub.f32 %v335, %v593
        %v595 = vand.u32 %v594, 4294901760
        %v596 = vsub.f32 %v594, %v595
        %v597 = vand.u32 %v596, 4294901760
        %598 = vmatpush1.msra.mxu0 %v597
        %599 = vmatprep.subr.mxu0 0.0
        %v600 = vand.u32 %v334, 4294901760
        %v601 = vsub.f32 %v334, %v600
        %v602 = vand.u32 %v601, 4294901760
        %v603 = vsub.f32 %v601, %v602
        %v604 = vand.u32 %v603, 4294901760
        %605 = vmatpush1.msra.mxu0 %v604
        %606 = vmatprep.subr.mxu0 0.0
        %v607 = vand.u32 %v333, 4294901760
        %v608 = vsub.f32 %v333, %v607
        %v609 = vand.u32 %v608, 4294901760
        %v610 = vsub.f32 %v608, %v609
        %v611 = vand.u32 %v610, 4294901760
        %612 = vmatpush1.msra.mxu0 %v611
        %613 = vmatprep.subr.mxu0 0.0
        %v614 = vand.u32 %v332, 4294901760
        %v615 = vsub.f32 %v332, %v614
        %v616 = vand.u32 %v615, 4294901760
        %v617 = vsub.f32 %v615, %v616
        %v618 = vand.u32 %v617, 4294901760
        %619 = vmatpush1.msra.mxu0 %v618
        %620 = vmatprep.subr.mxu0 0.0
        %v621 = vand.u32 %v331, 4294901760
        %v622 = vsub.f32 %v331, %v621
        %v623 = vand.u32 %v622, 4294901760
        %v624 = vsub.f32 %v622, %v623
        %v625 = vand.u32 %v624, 4294901760
        %626 = vmatpush1.msra.mxu0 %v625
        %627 = vmatprep.subr.mxu0 0.0
        %v628 = vand.u32 %v330, 4294901760
        %v629 = vsub.f32 %v330, %v628
        %v630 = vand.u32 %v629, 4294901760
        %v631 = vsub.f32 %v629, %v630
        %v632 = vand.u32 %v631, 4294901760
        %633 = vmatpush1.msra.mxu0 %v632
        %634 = vmatprep.subr.mxu0 0.0
        %v635 = vand.u32 %v329, 4294901760
        %v636 = vsub.f32 %v329, %v635
        %v637 = vand.u32 %v636, 4294901760
        %v638 = vsub.f32 %v636, %v637
        %v639 = vand.u32 %v638, 4294901760
        %640 = vmatpush1.msra.mxu0 %v639
        %641 = vmatprep.subr.mxu0 0.0
        %v642 = vand.u32 %v328, 4294901760
        %v643 = vsub.f32 %v328, %v642
        %v644 = vand.u32 %v643, 4294901760
        %v645 = vsub.f32 %v643, %v644
        %v646 = vand.u32 %v645, 4294901760
        %647 = vmatpush1.msra.mxu0 %v646
        %648 = vmatprep.subr.mxu0 0.0
        %v649 = vand.u32 %v327, 4294901760
        %v650 = vsub.f32 %v327, %v649
        %v651 = vand.u32 %v650, 4294901760
        %v652 = vsub.f32 %v650, %v651
        %v653 = vand.u32 %v652, 4294901760
        %654 = vmatpush1.msra.mxu0 %v653
        %655 = vmatprep.subr.mxu0 0.0
        %v656 = vand.u32 %v326, 4294901760
        %v657 = vsub.f32 %v326, %v656
        %v658 = vand.u32 %v657, 4294901760
        %v659 = vsub.f32 %v657, %v658
        %v660 = vand.u32 %v659, 4294901760
        %661 = vmatpush1.msra.mxu0 %v660
        %662 = vmatprep.subr.mxu0 0.0
        %v663 = vand.u32 %v325, 4294901760
        %v664 = vsub.f32 %v325, %v663
        %v665 = vand.u32 %v664, 4294901760
        %v666 = vsub.f32 %v664, %v665
        %v667 = vand.u32 %v666, 4294901760
        %668 = vmatpush1.msra.mxu0 %v667
        %669 = vmatprep.subr.mxu0 0.0
        %v670 = vand.u32 %v324, 4294901760
        %v671 = vsub.f32 %v324, %v670
        %v672 = vand.u32 %v671, 4294901760
        %v673 = vsub.f32 %v671, %v672
        %v674 = vand.u32 %v673, 4294901760
        %675 = vmatpush1.msra.mxu0 %v674
        %676 = vmatprep.subr.mxu0 0.0
        %v677 = vand.u32 %v323, 4294901760
        %v678 = vsub.f32 %v323, %v677
        %v679 = vand.u32 %v678, 4294901760
        %v680 = vsub.f32 %v678, %v679
        %v681 = vand.u32 %v680, 4294901760
        %682 = vmatpush1.msra.mxu0 %v681
        %683 = vmatprep.subr.mxu0 0.0
        %v684 = vand.u32 %v322, 4294901760
        %v685 = vsub.f32 %v322, %v684
        %v686 = vand.u32 %v685, 4294901760
        %v687 = vsub.f32 %v685, %v686
        %v688 = vand.u32 %v687, 4294901760
        %689 = vmatpush1.msra.mxu0 %v688
        %690 = vmatprep.subr.mxu0 0.0
        %v691 = vand.u32 %v321, 4294901760
        %v692 = vsub.f32 %v321, %v691
        %v693 = vand.u32 %v692, 4294901760
        %v694 = vsub.f32 %v692, %v693
        %v695 = vand.u32 %v694, 4294901760
        %696 = vmatpush1.msra.mxu0 %v695
        %697 = vmatprep.subr.mxu0 0.0
        %698 = vmatpush2.msra.mxu0 0.0
        %699 = vmatprep.subr.mxu0 0.0
        %700 = vmatpush2.msra.mxu0 0.0
        %701 = vmatprep.subr.mxu0 0.0
        %702 = vmatpush2.msra.mxu0 0.0
        %703 = vmatprep.subr.mxu0 0.0
        %704 = vmatpush2.msra.mxu0 0.0
        %705 = vmatprep.subr.mxu0 0.0
        %706 = vmatpush2.msra.mxu0 0.0
        %707 = vmatprep.subr.mxu0 0.0
        %708 = vmatpush2.msra.mxu0 0.0
        %709 = vmatprep.subr.mxu0 0.0
        %710 = vmatpush2.msra.mxu0 0.0
        %711 = vmatprep.subr.mxu0 0.0
        %712 = vmatpush2.msra.mxu0 0.0
        %713 = vmatprep.subr.mxu0 0.0
        %714 = vmatpush2.msra.mxu0 0.0
        %715 = vmatprep.subr.mxu0 0.0
        %716 = vmatpush2.msra.mxu0 0.0
        %717 = vmatprep.subr.mxu0 0.0
        %718 = vmatpush2.msra.mxu0 0.0
        %719 = vmatprep.subr.mxu0 0.0
        %720 = vmatpush2.msra.mxu0 0.0
        %721 = vmatprep.subr.mxu0 0.0
        %722 = vmatpush2.msra.mxu0 0.0
        %723 = vmatprep.subr.mxu0 0.0
        %724 = vmatpush2.msra.mxu0 0.0
        %725 = vmatprep.subr.mxu0 0.0
        %726 = vmatpush2.msra.mxu0 0.0
        %727 = vmatprep.subr.mxu0 0.0
        %728 = vmatpush2.msra.mxu0 0.0
        %729 = vmatprep.mubr.f32.mxu0 0.0
        %v730 = vand.u32 %v305, 4294901760
        %731 = vmatmul.mubr.f32.gmra.mxu0 %v730
        %v732 = vpop.f32.mrf.mxu0
        %v733 = vadd.f32 %v432, %v732
        %v734 = vpop.f32.mrf.mxu0
        %735 = vmatprep.mubr.f32.mxu0 0.0
        %v736 = vand.u32 %v306, 4294901760
        %737 = vmatmul.mubr.f32.gmra.mxu0 %v736
        %v738 = vpop.f32.mrf.mxu0
        %v739 = vadd.f32 %v442, %v738
        %v740 = vpop.f32.mrf.mxu0
        %741 = vmatprep.mubr.f32.mxu0 0.0
        %v742 = vand.u32 %v307, 4294901760
        %743 = vmatmul.mubr.f32.gmra.mxu0 %v742
        %v744 = vpop.f32.mrf.mxu0
        %v745 = vadd.f32 %v452, %v744
        %v746 = vpop.f32.mrf.mxu0
        %747 = vmatprep.mubr.f32.mxu0 0.0
        %v748 = vand.u32 %v308, 4294901760
        %749 = vmatmul.mubr.f32.gmra.mxu0 %v748
        %v750 = vpop.f32.mrf.mxu0
        %v751 = vadd.f32 %v462, %v750
        %v752 = vpop.f32.mrf.mxu0
        %753 = vmatprep.mubr.f32.mxu0 0.0
        %v754 = vand.u32 %v309, 4294901760
        %755 = vmatmul.mubr.f32.gmra.mxu0 %v754
        %v756 = vpop.f32.mrf.mxu0
        %v757 = vadd.f32 %v472, %v756
        %v758 = vpop.f32.mrf.mxu0
        %759 = vmatprep.mubr.f32.mxu0 0.0
        %v760 = vand.u32 %v310, 4294901760
        %761 = vmatmul.mubr.f32.gmra.mxu0 %v760
        %v762 = vpop.f32.mrf.mxu0
        %v763 = vadd.f32 %v482, %v762
        %v764 = vpop.f32.mrf.mxu0
        %765 = vmatprep.mubr.f32.mxu0 0.0
        %v766 = vand.u32 %v311, 4294901760
        %767 = vmatmul.mubr.f32.gmra.mxu0 %v766
        %v768 = vpop.f32.mrf.mxu0
        %v769 = vadd.f32 %v492, %v768
        %v770 = vpop.f32.mrf.mxu0
        %771 = vmatprep.mubr.f32.mxu0 0.0
        %v772 = vand.u32 %v312, 4294901760
        %773 = vmatmul.mubr.f32.gmra.mxu0 %v772
        %v774 = vpop.f32.mrf.mxu0
        %v775 = vadd.f32 %v502, %v774
        %v776 = vpop.f32.mrf.mxu0
        %777 = vmatprep.mubr.f32.mxu0 0.0
        %v778 = vand.u32 %v313, 4294901760
        %779 = vmatmul.mubr.f32.gmra.mxu0 %v778
        %v780 = vpop.f32.mrf.mxu0
        %v781 = vadd.f32 %v512, %v780
        %v782 = vpop.f32.mrf.mxu0
        %783 = vmatprep.mubr.f32.mxu0 0.0
        %v784 = vand.u32 %v314, 4294901760
        %785 = vmatmul.mubr.f32.gmra.mxu0 %v784
        %v786 = vpop.f32.mrf.mxu0
        %v787 = vadd.f32 %v522, %v786
        %v788 = vpop.f32.mrf.mxu0
        %789 = vmatprep.mubr.f32.mxu0 0.0
        %v790 = vand.u32 %v315, 4294901760
        %791 = vmatmul.mubr.f32.gmra.mxu0 %v790
        %v792 = vpop.f32.mrf.mxu0
        %v793 = vadd.f32 %v532, %v792
        %v794 = vpop.f32.mrf.mxu0
        %795 = vmatprep.mubr.f32.mxu0 0.0
        %v796 = vand.u32 %v316, 4294901760
        %797 = vmatmul.mubr.f32.gmra.mxu0 %v796
        %v798 = vpop.f32.mrf.mxu0
        %v799 = vadd.f32 %v542, %v798
        %v800 = vpop.f32.mrf.mxu0
        %801 = vmatprep.mubr.f32.mxu0 0.0
        %v802 = vand.u32 %v317, 4294901760
        %803 = vmatmul.mubr.f32.gmra.mxu0 %v802
        %v804 = vpop.f32.mrf.mxu0
        %v805 = vadd.f32 %v552, %v804
        %v806 = vpop.f32.mrf.mxu0
        %807 = vmatprep.mubr.f32.mxu0 0.0
        %v808 = vand.u32 %v318, 4294901760
        %809 = vmatmul.mubr.f32.gmra.mxu0 %v808
        %v810 = vpop.f32.mrf.mxu0
        %v811 = vadd.f32 %v562, %v810
        %v812 = vpop.f32.mrf.mxu0
        %813 = vmatprep.mubr.f32.mxu0 0.0
        %v814 = vand.u32 %v319, 4294901760
        %815 = vmatmul.mubr.f32.gmra.mxu0 %v814
        %v816 = vpop.f32.mrf.mxu0
        %v817 = vadd.f32 %v572, %v816
        %v818 = vpop.f32.mrf.mxu0
        %819 = vmatprep.mubr.f32.mxu0 0.0
        %v820 = vand.u32 %v320, 4294901760
        %821 = vmatmul.mubr.f32.gmra.mxu0 %v820
        %v822 = vpop.f32.mrf.mxu0
        %v823 = vadd.f32 %v582, %v822
        %v824 = vpop.f32.mrf.mxu0
        %825 = vdwg.mxu0
        %826 = vmatprep.subr.mxu0 0.0
        %v827 = vand.u32 %v336, 4294901760
        %v828 = vsub.f32 %v336, %v827
        %829 = vmatpush1.msra.mxu0 %v828
        %830 = vmatprep.subr.mxu0 0.0
        %v831 = vand.u32 %v335, 4294901760
        %v832 = vsub.f32 %v335, %v831
        %833 = vmatpush1.msra.mxu0 %v832
        %834 = vmatprep.subr.mxu0 0.0
        %v835 = vand.u32 %v334, 4294901760
        %v836 = vsub.f32 %v334, %v835
        %837 = vmatpush1.msra.mxu0 %v836
        %838 = vmatprep.subr.mxu0 0.0
        %v839 = vand.u32 %v333, 4294901760
        %v840 = vsub.f32 %v333, %v839
        %841 = vmatpush1.msra.mxu0 %v840
        %842 = vmatprep.subr.mxu0 0.0
        %v843 = vand.u32 %v332, 4294901760
        %v844 = vsub.f32 %v332, %v843
        %845 = vmatpush1.msra.mxu0 %v844
        %846 = vmatprep.subr.mxu0 0.0
        %v847 = vand.u32 %v331, 4294901760
        %v848 = vsub.f32 %v331, %v847
        %849 = vmatpush1.msra.mxu0 %v848
        %850 = vmatprep.subr.mxu0 0.0
        %v851 = vand.u32 %v330, 4294901760
        %v852 = vsub.f32 %v330, %v851
        %853 = vmatpush1.msra.mxu0 %v852
        %854 = vmatprep.subr.mxu0 0.0
        %v855 = vand.u32 %v329, 4294901760
        %v856 = vsub.f32 %v329, %v855
        %857 = vmatpush1.msra.mxu0 %v856
        %858 = vmatprep.subr.mxu0 0.0
        %v859 = vand.u32 %v328, 4294901760
        %v860 = vsub.f32 %v328, %v859
        %861 = vmatpush1.msra.mxu0 %v860
        %862 = vmatprep.subr.mxu0 0.0
        %v863 = vand.u32 %v327, 4294901760
        %v864 = vsub.f32 %v327, %v863
        %865 = vmatpush1.msra.mxu0 %v864
        %866 = vmatprep.subr.mxu0 0.0
        %v867 = vand.u32 %v326, 4294901760
        %v868 = vsub.f32 %v326, %v867
        %869 = vmatpush1.msra.mxu0 %v868
        %870 = vmatprep.subr.mxu0 0.0
        %v871 = vand.u32 %v325, 4294901760
        %v872 = vsub.f32 %v325, %v871
        %873 = vmatpush1.msra.mxu0 %v872
        %874 = vmatprep.subr.mxu0 0.0
        %v875 = vand.u32 %v324, 4294901760
        %v876 = vsub.f32 %v324, %v875
        %877 = vmatpush1.msra.mxu0 %v876
        %878 = vmatprep.subr.mxu0 0.0
        %v879 = vand.u32 %v323, 4294901760
        %v880 = vsub.f32 %v323, %v879
        %881 = vmatpush1.msra.mxu0 %v880
        %882 = vmatprep.subr.mxu0 0.0
        %v883 = vand.u32 %v322, 4294901760
        %v884 = vsub.f32 %v322, %v883
        %885 = vmatpush1.msra.mxu0 %v884
        %886 = vmatprep.subr.mxu0 0.0
        %v887 = vand.u32 %v321, 4294901760
        %v888 = vsub.f32 %v321, %v887
        %889 = vmatpush1.msra.mxu0 %v888
        %890 = vmatprep.subr.mxu0 0.0
        %891 = vmatpush2.msra.mxu0 0.0
        %892 = vmatprep.subr.mxu0 0.0
        %893 = vmatpush2.msra.mxu0 0.0
        %894 = vmatprep.subr.mxu0 0.0
        %895 = vmatpush2.msra.mxu0 0.0
        %896 = vmatprep.subr.mxu0 0.0
        %897 = vmatpush2.msra.mxu0 0.0
        %898 = vmatprep.subr.mxu0 0.0
        %899 = vmatpush2.msra.mxu0 0.0
        %900 = vmatprep.subr.mxu0 0.0
        %901 = vmatpush2.msra.mxu0 0.0
        %902 = vmatprep.subr.mxu0 0.0
        %903 = vmatpush2.msra.mxu0 0.0
        %904 = vmatprep.subr.mxu0 0.0
        %905 = vmatpush2.msra.mxu0 0.0
        %906 = vmatprep.subr.mxu0 0.0
        %907 = vmatpush2.msra.mxu0 0.0
        %908 = vmatprep.subr.mxu0 0.0
        %909 = vmatpush2.msra.mxu0 0.0
        %910 = vmatprep.subr.mxu0 0.0
        %911 = vmatpush2.msra.mxu0 0.0
        %912 = vmatprep.subr.mxu0 0.0
        %913 = vmatpush2.msra.mxu0 0.0
        %914 = vmatprep.subr.mxu0 0.0
        %915 = vmatpush2.msra.mxu0 0.0
        %916 = vmatprep.subr.mxu0 0.0
        %917 = vmatpush2.msra.mxu0 0.0
        %918 = vmatprep.subr.mxu0 0.0
        %919 = vmatpush2.msra.mxu0 0.0
        %920 = vmatprep.subr.mxu0 0.0
        %921 = vmatpush2.msra.mxu0 0.0
        %922 = vmatprep.mubr.f32.mxu0 0.0
        %v923 = vand.u32 %v305, 4294901760
        %v924 = vsub.f32 %v305, %v923
        %925 = vmatmul.mubr.f32.gmra.mxu0 %v924
        %v926 = vpop.f32.mrf.mxu0
        %v927 = vadd.f32 %v733, %v926
        %v928 = vpop.f32.mrf.mxu0
        %929 = vmatprep.mubr.f32.mxu0 0.0
        %v930 = vand.u32 %v306, 4294901760
        %v931 = vsub.f32 %v306, %v930
        %932 = vmatmul.mubr.f32.gmra.mxu0 %v931
        %v933 = vpop.f32.mrf.mxu0
        %v934 = vadd.f32 %v739, %v933
        %v935 = vpop.f32.mrf.mxu0
        %936 = vmatprep.mubr.f32.mxu0 0.0
        %v937 = vand.u32 %v307, 4294901760
        %v938 = vsub.f32 %v307, %v937
        %939 = vmatmul.mubr.f32.gmra.mxu0 %v938
        %v940 = vpop.f32.mrf.mxu0
        %v941 = vadd.f32 %v745, %v940
        %v942 = vpop.f32.mrf.mxu0
        %943 = vmatprep.mubr.f32.mxu0 0.0
        %v944 = vand.u32 %v308, 4294901760
        %v945 = vsub.f32 %v308, %v944
        %946 = vmatmul.mubr.f32.gmra.mxu0 %v945
        %v947 = vpop.f32.mrf.mxu0
        %v948 = vadd.f32 %v751, %v947
        %v949 = vpop.f32.mrf.mxu0
        %950 = vmatprep.mubr.f32.mxu0 0.0
        %v951 = vand.u32 %v309, 4294901760
        %v952 = vsub.f32 %v309, %v951
        %953 = vmatmul.mubr.f32.gmra.mxu0 %v952
        %v954 = vpop.f32.mrf.mxu0
        %v955 = vadd.f32 %v757, %v954
        %v956 = vpop.f32.mrf.mxu0
        %957 = vmatprep.mubr.f32.mxu0 0.0
        %v958 = vand.u32 %v310, 4294901760
        %v959 = vsub.f32 %v310, %v958
        %960 = vmatmul.mubr.f32.gmra.mxu0 %v959
        %v961 = vpop.f32.mrf.mxu0
        %v962 = vadd.f32 %v763, %v961
        %v963 = vpop.f32.mrf.mxu0
        %964 = vmatprep.mubr.f32.mxu0 0.0
        %v965 = vand.u32 %v311, 4294901760
        %v966 = vsub.f32 %v311, %v965
        %967 = vmatmul.mubr.f32.gmra.mxu0 %v966
        %v968 = vpop.f32.mrf.mxu0
        %v969 = vadd.f32 %v769, %v968
        %v970 = vpop.f32.mrf.mxu0
        %971 = vmatprep.mubr.f32.mxu0 0.0
        %v972 = vand.u32 %v312, 4294901760
        %v973 = vsub.f32 %v312, %v972
        %974 = vmatmul.mubr.f32.gmra.mxu0 %v973
        %v975 = vpop.f32.mrf.mxu0
        %v976 = vadd.f32 %v775, %v975
        %v977 = vpop.f32.mrf.mxu0
        %978 = vmatprep.mubr.f32.mxu0 0.0
        %v979 = vand.u32 %v313, 4294901760
        %v980 = vsub.f32 %v313, %v979
        %981 = vmatmul.mubr.f32.gmra.mxu0 %v980
        %v982 = vpop.f32.mrf.mxu0
        %v983 = vadd.f32 %v781, %v982
        %v984 = vpop.f32.mrf.mxu0
        %985 = vmatprep.mubr.f32.mxu0 0.0
        %v986 = vand.u32 %v314, 4294901760
        %v987 = vsub.f32 %v314, %v986
        %988 = vmatmul.mubr.f32.gmra.mxu0 %v987
        %v989 = vpop.f32.mrf.mxu0
        %v990 = vadd.f32 %v787, %v989
        %v991 = vpop.f32.mrf.mxu0
        %992 = vmatprep.mubr.f32.mxu0 0.0
        %v993 = vand.u32 %v315, 4294901760
        %v994 = vsub.f32 %v315, %v993
        %995 = vmatmul.mubr.f32.gmra.mxu0 %v994
        %v996 = vpop.f32.mrf.mxu0
        %v997 = vadd.f32 %v793, %v996
        %v998 = vpop.f32.mrf.mxu0
        %999 = vmatprep.mubr.f32.mxu0 0.0
        %v1000 = vand.u32 %v316, 4294901760
        %v1001 = vsub.f32 %v316, %v1000
        %1002 = vmatmul.mubr.f32.gmra.mxu0 %v1001
        %v1003 = vpop.f32.mrf.mxu0
        %v1004 = vadd.f32 %v799, %v1003
        %v1005 = vpop.f32.mrf.mxu0
        %1006 = vmatprep.mubr.f32.mxu0 0.0
        %v1007 = vand.u32 %v317, 4294901760
        %v1008 = vsub.f32 %v317, %v1007
        %1009 = vmatmul.mubr.f32.gmra.mxu0 %v1008
        %v1010 = vpop.f32.mrf.mxu0
        %v1011 = vadd.f32 %v805, %v1010
        %v1012 = vpop.f32.mrf.mxu0
        %1013 = vmatprep.mubr.f32.mxu0 0.0
        %v1014 = vand.u32 %v318, 4294901760
        %v1015 = vsub.f32 %v318, %v1014
        %1016 = vmatmul.mubr.f32.gmra.mxu0 %v1015
        %v1017 = vpop.f32.mrf.mxu0
        %v1018 = vadd.f32 %v811, %v1017
        %v1019 = vpop.f32.mrf.mxu0
        %1020 = vmatprep.mubr.f32.mxu0 0.0
        %v1021 = vand.u32 %v319, 4294901760
        %v1022 = vsub.f32 %v319, %v1021
        %1023 = vmatmul.mubr.f32.gmra.mxu0 %v1022
        %v1024 = vpop.f32.mrf.mxu0
        %v1025 = vadd.f32 %v817, %v1024
        %v1026 = vpop.f32.mrf.mxu0
        %1027 = vmatprep.mubr.f32.mxu0 0.0
        %v1028 = vand.u32 %v320, 4294901760
        %v1029 = vsub.f32 %v320, %v1028
        %1030 = vmatmul.mubr.f32.gmra.mxu0 %v1029
        %v1031 = vpop.f32.mrf.mxu0
        %v1032 = vadd.f32 %v823, %v1031
        %v1033 = vpop.f32.mrf.mxu0
        %1034 = vdwg.mxu0
        %1035 = vmatprep.subr.mxu0 0.0
        %v1036 = vand.u32 %v336, 4294901760
        %1037 = vmatpush1.msra.mxu0 %v1036
        %1038 = vmatprep.subr.mxu0 0.0
        %v1039 = vand.u32 %v335, 4294901760
        %1040 = vmatpush1.msra.mxu0 %v1039
        %1041 = vmatprep.subr.mxu0 0.0
        %v1042 = vand.u32 %v334, 4294901760
        %1043 = vmatpush1.msra.mxu0 %v1042
        %1044 = vmatprep.subr.mxu0 0.0
        %v1045 = vand.u32 %v333, 4294901760
        %1046 = vmatpush1.msra.mxu0 %v1045
        %1047 = vmatprep.subr.mxu0 0.0
        %v1048 = vand.u32 %v332, 4294901760
        %1049 = vmatpush1.msra.mxu0 %v1048
        %1050 = vmatprep.subr.mxu0 0.0
        %v1051 = vand.u32 %v331, 4294901760
        %1052 = vmatpush1.msra.mxu0 %v1051
        %1053 = vmatprep.subr.mxu0 0.0
        %v1054 = vand.u32 %v330, 4294901760
        %1055 = vmatpush1.msra.mxu0 %v1054
        %1056 = vmatprep.subr.mxu0 0.0
        %v1057 = vand.u32 %v329, 4294901760
        %1058 = vmatpush1.msra.mxu0 %v1057
        %1059 = vmatprep.subr.mxu0 0.0
        %v1060 = vand.u32 %v328, 4294901760
        %1061 = vmatpush1.msra.mxu0 %v1060
        %1062 = vmatprep.subr.mxu0 0.0
        %v1063 = vand.u32 %v327, 4294901760
        %1064 = vmatpush1.msra.mxu0 %v1063
        %1065 = vmatprep.subr.mxu0 0.0
        %v1066 = vand.u32 %v326, 4294901760
        %1067 = vmatpush1.msra.mxu0 %v1066
        %1068 = vmatprep.subr.mxu0 0.0
        %v1069 = vand.u32 %v325, 4294901760
        %1070 = vmatpush1.msra.mxu0 %v1069
        %1071 = vmatprep.subr.mxu0 0.0
        %v1072 = vand.u32 %v324, 4294901760
        %1073 = vmatpush1.msra.mxu0 %v1072
        %1074 = vmatprep.subr.mxu0 0.0
        %v1075 = vand.u32 %v323, 4294901760
        %1076 = vmatpush1.msra.mxu0 %v1075
        %1077 = vmatprep.subr.mxu0 0.0
        %v1078 = vand.u32 %v322, 4294901760
        %1079 = vmatpush1.msra.mxu0 %v1078
        %1080 = vmatprep.subr.mxu0 0.0
        %v1081 = vand.u32 %v321, 4294901760
        %1082 = vmatpush1.msra.mxu0 %v1081
        %1083 = vmatprep.subr.mxu0 0.0
        %1084 = vmatpush2.msra.mxu0 0.0
        %1085 = vmatprep.subr.mxu0 0.0
        %1086 = vmatpush2.msra.mxu0 0.0
        %1087 = vmatprep.subr.mxu0 0.0
        %1088 = vmatpush2.msra.mxu0 0.0
        %1089 = vmatprep.subr.mxu0 0.0
        %1090 = vmatpush2.msra.mxu0 0.0
        %1091 = vmatprep.subr.mxu0 0.0
        %1092 = vmatpush2.msra.mxu0 0.0
        %1093 = vmatprep.subr.mxu0 0.0
        %1094 = vmatpush2.msra.mxu0 0.0
        %1095 = vmatprep.subr.mxu0 0.0
        %1096 = vmatpush2.msra.mxu0 0.0
        %1097 = vmatprep.subr.mxu0 0.0
        %1098 = vmatpush2.msra.mxu0 0.0
        %1099 = vmatprep.subr.mxu0 0.0
        %1100 = vmatpush2.msra.mxu0 0.0
        %1101 = vmatprep.subr.mxu0 0.0
        %1102 = vmatpush2.msra.mxu0 0.0
        %1103 = vmatprep.subr.mxu0 0.0
        %1104 = vmatpush2.msra.mxu0 0.0
        %1105 = vmatprep.subr.mxu0 0.0
        %1106 = vmatpush2.msra.mxu0 0.0
        %1107 = vmatprep.subr.mxu0 0.0
        %1108 = vmatpush2.msra.mxu0 0.0
        %1109 = vmatprep.subr.mxu0 0.0
        %1110 = vmatpush2.msra.mxu0 0.0
        %1111 = vmatprep.subr.mxu0 0.0
        %1112 = vmatpush2.msra.mxu0 0.0
        %1113 = vmatprep.subr.mxu0 0.0
        %1114 = vmatpush2.msra.mxu0 0.0
        %1115 = vmatprep.mubr.f32.mxu0 0.0
        %v1116 = vand.u32 %v305, 4294901760
        %v1117 = vsub.f32 %v305, %v1116
        %v1118 = vand.u32 %v1117, 4294901760
        %1119 = vmatmul.mubr.f32.gmra.mxu0 %v1118
        %v1120 = vpop.f32.mrf.mxu0
        %v1121 = vadd.f32 %v927, %v1120
        %v1122 = vpop.f32.mrf.mxu0
        %1123 = vmatprep.mubr.f32.mxu0 0.0
        %v1124 = vand.u32 %v306, 4294901760
        %v1125 = vsub.f32 %v306, %v1124
        %v1126 = vand.u32 %v1125, 4294901760
        %1127 = vmatmul.mubr.f32.gmra.mxu0 %v1126
        %v1128 = vpop.f32.mrf.mxu0
        %v1129 = vadd.f32 %v934, %v1128
        %v1130 = vpop.f32.mrf.mxu0
        %1131 = vmatprep.mubr.f32.mxu0 0.0
        %v1132 = vand.u32 %v307, 4294901760
        %v1133 = vsub.f32 %v307, %v1132
        %v1134 = vand.u32 %v1133, 4294901760
        %1135 = vmatmul.mubr.f32.gmra.mxu0 %v1134
        %v1136 = vpop.f32.mrf.mxu0
        %v1137 = vadd.f32 %v941, %v1136
        %v1138 = vpop.f32.mrf.mxu0
        %1139 = vmatprep.mubr.f32.mxu0 0.0
        %v1140 = vand.u32 %v308, 4294901760
        %v1141 = vsub.f32 %v308, %v1140
        %v1142 = vand.u32 %v1141, 4294901760
        %1143 = vmatmul.mubr.f32.gmra.mxu0 %v1142
        %v1144 = vpop.f32.mrf.mxu0
        %v1145 = vadd.f32 %v948, %v1144
        %v1146 = vpop.f32.mrf.mxu0
        %1147 = vmatprep.mubr.f32.mxu0 0.0
        %v1148 = vand.u32 %v309, 4294901760
        %v1149 = vsub.f32 %v309, %v1148
        %v1150 = vand.u32 %v1149, 4294901760
        %1151 = vmatmul.mubr.f32.gmra.mxu0 %v1150
        %v1152 = vpop.f32.mrf.mxu0
        %v1153 = vadd.f32 %v955, %v1152
        %v1154 = vpop.f32.mrf.mxu0
        %1155 = vmatprep.mubr.f32.mxu0 0.0
        %v1156 = vand.u32 %v310, 4294901760
        %v1157 = vsub.f32 %v310, %v1156
        %v1158 = vand.u32 %v1157, 4294901760
        %1159 = vmatmul.mubr.f32.gmra.mxu0 %v1158
        %v1160 = vpop.f32.mrf.mxu0
        %v1161 = vadd.f32 %v962, %v1160
        %v1162 = vpop.f32.mrf.mxu0
        %1163 = vmatprep.mubr.f32.mxu0 0.0
        %v1164 = vand.u32 %v311, 4294901760
        %v1165 = vsub.f32 %v311, %v1164
        %v1166 = vand.u32 %v1165, 4294901760
        %1167 = vmatmul.mubr.f32.gmra.mxu0 %v1166
        %v1168 = vpop.f32.mrf.mxu0
        %v1169 = vadd.f32 %v969, %v1168
        %v1170 = vpop.f32.mrf.mxu0
        %1171 = vmatprep.mubr.f32.mxu0 0.0
        %v1172 = vand.u32 %v312, 4294901760
        %v1173 = vsub.f32 %v312, %v1172
        %v1174 = vand.u32 %v1173, 4294901760
        %1175 = vmatmul.mubr.f32.gmra.mxu0 %v1174
        %v1176 = vpop.f32.mrf.mxu0
        %v1177 = vadd.f32 %v976, %v1176
        %v1178 = vpop.f32.mrf.mxu0
        %1179 = vmatprep.mubr.f32.mxu0 0.0
        %v1180 = vand.u32 %v313, 4294901760
        %v1181 = vsub.f32 %v313, %v1180
        %v1182 = vand.u32 %v1181, 4294901760
        %1183 = vmatmul.mubr.f32.gmra.mxu0 %v1182
        %v1184 = vpop.f32.mrf.mxu0
        %v1185 = vadd.f32 %v983, %v1184
        %v1186 = vpop.f32.mrf.mxu0
        %1187 = vmatprep.mubr.f32.mxu0 0.0
        %v1188 = vand.u32 %v314, 4294901760
        %v1189 = vsub.f32 %v314, %v1188
        %v1190 = vand.u32 %v1189, 4294901760
        %1191 = vmatmul.mubr.f32.gmra.mxu0 %v1190
        %v1192 = vpop.f32.mrf.mxu0
        %v1193 = vadd.f32 %v990, %v1192
        %v1194 = vpop.f32.mrf.mxu0
        %1195 = vmatprep.mubr.f32.mxu0 0.0
        %v1196 = vand.u32 %v315, 4294901760
        %v1197 = vsub.f32 %v315, %v1196
        %v1198 = vand.u32 %v1197, 4294901760
        %1199 = vmatmul.mubr.f32.gmra.mxu0 %v1198
        %v1200 = vpop.f32.mrf.mxu0
        %v1201 = vadd.f32 %v997, %v1200
        %v1202 = vpop.f32.mrf.mxu0
        %1203 = vmatprep.mubr.f32.mxu0 0.0
        %v1204 = vand.u32 %v316, 4294901760
        %v1205 = vsub.f32 %v316, %v1204
        %v1206 = vand.u32 %v1205, 4294901760
        %1207 = vmatmul.mubr.f32.gmra.mxu0 %v1206
        %v1208 = vpop.f32.mrf.mxu0
        %v1209 = vadd.f32 %v1004, %v1208
        %v1210 = vpop.f32.mrf.mxu0
        %1211 = vmatprep.mubr.f32.mxu0 0.0
        %v1212 = vand.u32 %v317, 4294901760
        %v1213 = vsub.f32 %v317, %v1212
        %v1214 = vand.u32 %v1213, 4294901760
        %1215 = vmatmul.mubr.f32.gmra.mxu0 %v1214
        %v1216 = vpop.f32.mrf.mxu0
        %v1217 = vadd.f32 %v1011, %v1216
        %v1218 = vpop.f32.mrf.mxu0
        %1219 = vmatprep.mubr.f32.mxu0 0.0
        %v1220 = vand.u32 %v318, 4294901760
        %v1221 = vsub.f32 %v318, %v1220
        %v1222 = vand.u32 %v1221, 4294901760
        %1223 = vmatmul.mubr.f32.gmra.mxu0 %v1222
        %v1224 = vpop.f32.mrf.mxu0
        %v1225 = vadd.f32 %v1018, %v1224
        %v1226 = vpop.f32.mrf.mxu0
        %1227 = vmatprep.mubr.f32.mxu0 0.0
        %v1228 = vand.u32 %v319, 4294901760
        %v1229 = vsub.f32 %v319, %v1228
        %v1230 = vand.u32 %v1229, 4294901760
        %1231 = vmatmul.mubr.f32.gmra.mxu0 %v1230
        %v1232 = vpop.f32.mrf.mxu0
        %v1233 = vadd.f32 %v1025, %v1232
        %v1234 = vpop.f32.mrf.mxu0
        %1235 = vmatprep.mubr.f32.mxu0 0.0
        %v1236 = vand.u32 %v320, 4294901760
        %v1237 = vsub.f32 %v320, %v1236
        %v1238 = vand.u32 %v1237, 4294901760
        %1239 = vmatmul.mubr.f32.gmra.mxu0 %v1238
        %v1240 = vpop.f32.mrf.mxu0
        %v1241 = vadd.f32 %v1032, %v1240
        %v1242 = vpop.f32.mrf.mxu0
        %1243 = vdwg.mxu0
        %1244 = vmatprep.subr.mxu0 0.0
        %v1245 = vand.u32 %v336, 4294901760
        %v1246 = vsub.f32 %v336, %v1245
        %v1247 = vand.u32 %v1246, 4294901760
        %1248 = vmatpush1.msra.mxu0 %v1247
        %1249 = vmatprep.subr.mxu0 0.0
        %v1250 = vand.u32 %v335, 4294901760
        %v1251 = vsub.f32 %v335, %v1250
        %v1252 = vand.u32 %v1251, 4294901760
        %1253 = vmatpush1.msra.mxu0 %v1252
        %1254 = vmatprep.subr.mxu0 0.0
        %v1255 = vand.u32 %v334, 4294901760
        %v1256 = vsub.f32 %v334, %v1255
        %v1257 = vand.u32 %v1256, 4294901760
        %1258 = vmatpush1.msra.mxu0 %v1257
        %1259 = vmatprep.subr.mxu0 0.0
        %v1260 = vand.u32 %v333, 4294901760
        %v1261 = vsub.f32 %v333, %v1260
        %v1262 = vand.u32 %v1261, 4294901760
        %1263 = vmatpush1.msra.mxu0 %v1262
        %1264 = vmatprep.subr.mxu0 0.0
        %v1265 = vand.u32 %v332, 4294901760
        %v1266 = vsub.f32 %v332, %v1265
        %v1267 = vand.u32 %v1266, 4294901760
        %1268 = vmatpush1.msra.mxu0 %v1267
        %1269 = vmatprep.subr.mxu0 0.0
        %v1270 = vand.u32 %v331, 4294901760
        %v1271 = vsub.f32 %v331, %v1270
        %v1272 = vand.u32 %v1271, 4294901760
        %1273 = vmatpush1.msra.mxu0 %v1272
        %1274 = vmatprep.subr.mxu0 0.0
        %v1275 = vand.u32 %v330, 4294901760
        %v1276 = vsub.f32 %v330, %v1275
        %v1277 = vand.u32 %v1276, 4294901760
        %1278 = vmatpush1.msra.mxu0 %v1277
        %1279 = vmatprep.subr.mxu0 0.0
        %v1280 = vand.u32 %v329, 4294901760
        %v1281 = vsub.f32 %v329, %v1280
        %v1282 = vand.u32 %v1281, 4294901760
        %1283 = vmatpush1.msra.mxu0 %v1282
        %1284 = vmatprep.subr.mxu0 0.0
        %v1285 = vand.u32 %v328, 4294901760
        %v1286 = vsub.f32 %v328, %v1285
        %v1287 = vand.u32 %v1286, 4294901760
        %1288 = vmatpush1.msra.mxu0 %v1287
        %1289 = vmatprep.subr.mxu0 0.0
        %v1290 = vand.u32 %v327, 4294901760
        %v1291 = vsub.f32 %v327, %v1290
        %v1292 = vand.u32 %v1291, 4294901760
        %1293 = vmatpush1.msra.mxu0 %v1292
        %1294 = vmatprep.subr.mxu0 0.0
        %v1295 = vand.u32 %v326, 4294901760
        %v1296 = vsub.f32 %v326, %v1295
        %v1297 = vand.u32 %v1296, 4294901760
        %1298 = vmatpush1.msra.mxu0 %v1297
        %1299 = vmatprep.subr.mxu0 0.0
        %v1300 = vand.u32 %v325, 4294901760
        %v1301 = vsub.f32 %v325, %v1300
        %v1302 = vand.u32 %v1301, 4294901760
        %1303 = vmatpush1.msra.mxu0 %v1302
        %1304 = vmatprep.subr.mxu0 0.0
        %v1305 = vand.u32 %v324, 4294901760
        %v1306 = vsub.f32 %v324, %v1305
        %v1307 = vand.u32 %v1306, 4294901760
        %1308 = vmatpush1.msra.mxu0 %v1307
        %1309 = vmatprep.subr.mxu0 0.0
        %v1310 = vand.u32 %v323, 4294901760
        %v1311 = vsub.f32 %v323, %v1310
        %v1312 = vand.u32 %v1311, 4294901760
        %1313 = vmatpush1.msra.mxu0 %v1312
        %1314 = vmatprep.subr.mxu0 0.0
        %v1315 = vand.u32 %v322, 4294901760
        %v1316 = vsub.f32 %v322, %v1315
        %v1317 = vand.u32 %v1316, 4294901760
        %1318 = vmatpush1.msra.mxu0 %v1317
        %1319 = vmatprep.subr.mxu0 0.0
        %v1320 = vand.u32 %v321, 4294901760
        %v1321 = vsub.f32 %v321, %v1320
        %v1322 = vand.u32 %v1321, 4294901760
        %1323 = vmatpush1.msra.mxu0 %v1322
        %1324 = vmatprep.subr.mxu0 0.0
        %1325 = vmatpush2.msra.mxu0 0.0
        %1326 = vmatprep.subr.mxu0 0.0
        %1327 = vmatpush2.msra.mxu0 0.0
        %1328 = vmatprep.subr.mxu0 0.0
        %1329 = vmatpush2.msra.mxu0 0.0
        %1330 = vmatprep.subr.mxu0 0.0
        %1331 = vmatpush2.msra.mxu0 0.0
        %1332 = vmatprep.subr.mxu0 0.0
        %1333 = vmatpush2.msra.mxu0 0.0
        %1334 = vmatprep.subr.mxu0 0.0
        %1335 = vmatpush2.msra.mxu0 0.0
        %1336 = vmatprep.subr.mxu0 0.0
        %1337 = vmatpush2.msra.mxu0 0.0
        %1338 = vmatprep.subr.mxu0 0.0
        %1339 = vmatpush2.msra.mxu0 0.0
        %1340 = vmatprep.subr.mxu0 0.0
        %1341 = vmatpush2.msra.mxu0 0.0
        %1342 = vmatprep.subr.mxu0 0.0
        %1343 = vmatpush2.msra.mxu0 0.0
        %1344 = vmatprep.subr.mxu0 0.0
        %1345 = vmatpush2.msra.mxu0 0.0
        %1346 = vmatprep.subr.mxu0 0.0
        %1347 = vmatpush2.msra.mxu0 0.0
        %1348 = vmatprep.subr.mxu0 0.0
        %1349 = vmatpush2.msra.mxu0 0.0
        %1350 = vmatprep.subr.mxu0 0.0
        %1351 = vmatpush2.msra.mxu0 0.0
        %1352 = vmatprep.subr.mxu0 0.0
        %1353 = vmatpush2.msra.mxu0 0.0
        %1354 = vmatprep.subr.mxu0 0.0
        %1355 = vmatpush2.msra.mxu0 0.0
        %1356 = vmatprep.mubr.f32.mxu0 0.0
        %v1357 = vand.u32 %v305, 4294901760
        %1358 = vmatmul.mubr.f32.gmra.mxu0 %v1357
        %v1359 = vpop.f32.mrf.mxu0
        %v1360 = vadd.f32 %v1121, %v1359
        %v1361 = vpop.f32.mrf.mxu0
        %1362 = vmatprep.mubr.f32.mxu0 0.0
        %v1363 = vand.u32 %v306, 4294901760
        %1364 = vmatmul.mubr.f32.gmra.mxu0 %v1363
        %v1365 = vpop.f32.mrf.mxu0
        %v1366 = vadd.f32 %v1129, %v1365
        %v1367 = vpop.f32.mrf.mxu0
        %1368 = vmatprep.mubr.f32.mxu0 0.0
        %v1369 = vand.u32 %v307, 4294901760
        %1370 = vmatmul.mubr.f32.gmra.mxu0 %v1369
        %v1371 = vpop.f32.mrf.mxu0
        %v1372 = vadd.f32 %v1137, %v1371
        %v1373 = vpop.f32.mrf.mxu0
        %1374 = vmatprep.mubr.f32.mxu0 0.0
        %v1375 = vand.u32 %v308, 4294901760
        %1376 = vmatmul.mubr.f32.gmra.mxu0 %v1375
        %v1377 = vpop.f32.mrf.mxu0
        %v1378 = vadd.f32 %v1145, %v1377
        %v1379 = vpop.f32.mrf.mxu0
        %1380 = vmatprep.mubr.f32.mxu0 0.0
        %v1381 = vand.u32 %v309, 4294901760
        %1382 = vmatmul.mubr.f32.gmra.mxu0 %v1381
        %v1383 = vpop.f32.mrf.mxu0
        %v1384 = vadd.f32 %v1153, %v1383
        %v1385 = vpop.f32.mrf.mxu0
        %1386 = vmatprep.mubr.f32.mxu0 0.0
        %v1387 = vand.u32 %v310, 4294901760
        %1388 = vmatmul.mubr.f32.gmra.mxu0 %v1387
        %v1389 = vpop.f32.mrf.mxu0
        %v1390 = vadd.f32 %v1161, %v1389
        %v1391 = vpop.f32.mrf.mxu0
        %1392 = vmatprep.mubr.f32.mxu0 0.0
        %v1393 = vand.u32 %v311, 4294901760
        %1394 = vmatmul.mubr.f32.gmra.mxu0 %v1393
        %v1395 = vpop.f32.mrf.mxu0
        %v1396 = vadd.f32 %v1169, %v1395
        %v1397 = vpop.f32.mrf.mxu0
        %1398 = vmatprep.mubr.f32.mxu0 0.0
        %v1399 = vand.u32 %v312, 4294901760
        %1400 = vmatmul.mubr.f32.gmra.mxu0 %v1399
        %v1401 = vpop.f32.mrf.mxu0
        %v1402 = vadd.f32 %v1177, %v1401
        %v1403 = vpop.f32.mrf.mxu0
        %1404 = vmatprep.mubr.f32.mxu0 0.0
        %v1405 = vand.u32 %v313, 4294901760
        %1406 = vmatmul.mubr.f32.gmra.mxu0 %v1405
        %v1407 = vpop.f32.mrf.mxu0
        %v1408 = vadd.f32 %v1185, %v1407
        %v1409 = vpop.f32.mrf.mxu0
        %1410 = vmatprep.mubr.f32.mxu0 0.0
        %v1411 = vand.u32 %v314, 4294901760
        %1412 = vmatmul.mubr.f32.gmra.mxu0 %v1411
        %v1413 = vpop.f32.mrf.mxu0
        %v1414 = vadd.f32 %v1193, %v1413
        %v1415 = vpop.f32.mrf.mxu0
        %1416 = vmatprep.mubr.f32.mxu0 0.0
        %v1417 = vand.u32 %v315, 4294901760
        %1418 = vmatmul.mubr.f32.gmra.mxu0 %v1417
        %v1419 = vpop.f32.mrf.mxu0
        %v1420 = vadd.f32 %v1201, %v1419
        %v1421 = vpop.f32.mrf.mxu0
        %1422 = vmatprep.mubr.f32.mxu0 0.0
        %v1423 = vand.u32 %v316, 4294901760
        %1424 = vmatmul.mubr.f32.gmra.mxu0 %v1423
        %v1425 = vpop.f32.mrf.mxu0
        %v1426 = vadd.f32 %v1209, %v1425
        %v1427 = vpop.f32.mrf.mxu0
        %1428 = vmatprep.mubr.f32.mxu0 0.0
        %v1429 = vand.u32 %v317, 4294901760
        %1430 = vmatmul.mubr.f32.gmra.mxu0 %v1429
        %v1431 = vpop.f32.mrf.mxu0
        %v1432 = vadd.f32 %v1217, %v1431
        %v1433 = vpop.f32.mrf.mxu0
        %1434 = vmatprep.mubr.f32.mxu0 0.0
        %v1435 = vand.u32 %v318, 4294901760
        %1436 = vmatmul.mubr.f32.gmra.mxu0 %v1435
        %v1437 = vpop.f32.mrf.mxu0
        %v1438 = vadd.f32 %v1225, %v1437
        %v1439 = vpop.f32.mrf.mxu0
        %1440 = vmatprep.mubr.f32.mxu0 0.0
        %v1441 = vand.u32 %v319, 4294901760
        %1442 = vmatmul.mubr.f32.gmra.mxu0 %v1441
        %v1443 = vpop.f32.mrf.mxu0
        %v1444 = vadd.f32 %v1233, %v1443
        %v1445 = vpop.f32.mrf.mxu0
        %1446 = vmatprep.mubr.f32.mxu0 0.0
        %v1447 = vand.u32 %v320, 4294901760
        %1448 = vmatmul.mubr.f32.gmra.mxu0 %v1447
        %v1449 = vpop.f32.mrf.mxu0
        %v1450 = vadd.f32 %v1241, %v1449
        %v1451 = vpop.f32.mrf.mxu0
        %1452 = vdwg.mxu0
        %1453 = vmatprep.subr.mxu0 0.0
        %v1454 = vand.u32 %v336, 4294901760
        %1455 = vmatpush1.msra.mxu0 %v1454
        %1456 = vmatprep.subr.mxu0 0.0
        %v1457 = vand.u32 %v335, 4294901760
        %1458 = vmatpush1.msra.mxu0 %v1457
        %1459 = vmatprep.subr.mxu0 0.0
        %v1460 = vand.u32 %v334, 4294901760
        %1461 = vmatpush1.msra.mxu0 %v1460
        %1462 = vmatprep.subr.mxu0 0.0
        %v1463 = vand.u32 %v333, 4294901760
        %1464 = vmatpush1.msra.mxu0 %v1463
        %1465 = vmatprep.subr.mxu0 0.0
        %v1466 = vand.u32 %v332, 4294901760
        %1467 = vmatpush1.msra.mxu0 %v1466
        %1468 = vmatprep.subr.mxu0 0.0
        %v1469 = vand.u32 %v331, 4294901760
        %1470 = vmatpush1.msra.mxu0 %v1469
        %1471 = vmatprep.subr.mxu0 0.0
        %v1472 = vand.u32 %v330, 4294901760
        %1473 = vmatpush1.msra.mxu0 %v1472
        %1474 = vmatprep.subr.mxu0 0.0
        %v1475 = vand.u32 %v329, 4294901760
        %1476 = vmatpush1.msra.mxu0 %v1475
        %1477 = vmatprep.subr.mxu0 0.0
        %v1478 = vand.u32 %v328, 4294901760
        %1479 = vmatpush1.msra.mxu0 %v1478
        %1480 = vmatprep.subr.mxu0 0.0
        %v1481 = vand.u32 %v327, 4294901760
        %1482 = vmatpush1.msra.mxu0 %v1481
        %1483 = vmatprep.subr.mxu0 0.0
        %v1484 = vand.u32 %v326, 4294901760
        %1485 = vmatpush1.msra.mxu0 %v1484
        %1486 = vmatprep.subr.mxu0 0.0
        %v1487 = vand.u32 %v325, 4294901760
        %1488 = vmatpush1.msra.mxu0 %v1487
        %1489 = vmatprep.subr.mxu0 0.0
        %v1490 = vand.u32 %v324, 4294901760
        %1491 = vmatpush1.msra.mxu0 %v1490
        %1492 = vmatprep.subr.mxu0 0.0
        %v1493 = vand.u32 %v323, 4294901760
        %1494 = vmatpush1.msra.mxu0 %v1493
        %1495 = vmatprep.subr.mxu0 0.0
        %v1496 = vand.u32 %v322, 4294901760
        %1497 = vmatpush1.msra.mxu0 %v1496
        %1498 = vmatprep.subr.mxu0 0.0
        %v1499 = vand.u32 %v321, 4294901760
        %1500 = vmatpush1.msra.mxu0 %v1499
        %1501 = vmatprep.subr.mxu0 0.0
        %1502 = vmatpush2.msra.mxu0 0.0
        %1503 = vmatprep.subr.mxu0 0.0
        %1504 = vmatpush2.msra.mxu0 0.0
        %1505 = vmatprep.subr.mxu0 0.0
        %1506 = vmatpush2.msra.mxu0 0.0
        %1507 = vmatprep.subr.mxu0 0.0
        %1508 = vmatpush2.msra.mxu0 0.0
        %1509 = vmatprep.subr.mxu0 0.0
        %1510 = vmatpush2.msra.mxu0 0.0
        %1511 = vmatprep.subr.mxu0 0.0
        %1512 = vmatpush2.msra.mxu0 0.0
        %1513 = vmatprep.subr.mxu0 0.0
        %1514 = vmatpush2.msra.mxu0 0.0
        %1515 = vmatprep.subr.mxu0 0.0
        %1516 = vmatpush2.msra.mxu0 0.0
        %1517 = vmatprep.subr.mxu0 0.0
        %1518 = vmatpush2.msra.mxu0 0.0
        %1519 = vmatprep.subr.mxu0 0.0
        %1520 = vmatpush2.msra.mxu0 0.0
        %1521 = vmatprep.subr.mxu0 0.0
        %1522 = vmatpush2.msra.mxu0 0.0
        %1523 = vmatprep.subr.mxu0 0.0
        %1524 = vmatpush2.msra.mxu0 0.0
        %1525 = vmatprep.subr.mxu0 0.0
        %1526 = vmatpush2.msra.mxu0 0.0
        %1527 = vmatprep.subr.mxu0 0.0
        %1528 = vmatpush2.msra.mxu0 0.0
        %1529 = vmatprep.subr.mxu0 0.0
        %1530 = vmatpush2.msra.mxu0 0.0
        %1531 = vmatprep.subr.mxu0 0.0
        %1532 = vmatpush2.msra.mxu0 0.0
        %1533 = vmatprep.mubr.f32.mxu0 0.0
        %v1534 = vand.u32 %v305, 4294901760
        %1535 = vmatmul.mubr.f32.gmra.mxu0 %v1534
        %v1536 = vpop.f32.mrf.mxu0
        %v1537 = vadd.f32 %v1360, %v1536
        %v1538 = vpop.f32.mrf.mxu0
        %1539 = vmatprep.mubr.f32.mxu0 0.0
        %v1540 = vand.u32 %v306, 4294901760
        %1541 = vmatmul.mubr.f32.gmra.mxu0 %v1540
        %v1542 = vpop.f32.mrf.mxu0
        %v1543 = vadd.f32 %v1366, %v1542
        %v1544 = vpop.f32.mrf.mxu0
        %1545 = vmatprep.mubr.f32.mxu0 0.0
        %v1546 = vand.u32 %v307, 4294901760
        %1547 = vmatmul.mubr.f32.gmra.mxu0 %v1546
        %v1548 = vpop.f32.mrf.mxu0
        %v1549 = vadd.f32 %v1372, %v1548
        %v1550 = vpop.f32.mrf.mxu0
        %1551 = vmatprep.mubr.f32.mxu0 0.0
        %v1552 = vand.u32 %v308, 4294901760
        %1553 = vmatmul.mubr.f32.gmra.mxu0 %v1552
        %v1554 = vpop.f32.mrf.mxu0
        %v1555 = vadd.f32 %v1378, %v1554
        %v1556 = vpop.f32.mrf.mxu0
        %1557 = vmatprep.mubr.f32.mxu0 0.0
        %v1558 = vand.u32 %v309, 4294901760
        %1559 = vmatmul.mubr.f32.gmra.mxu0 %v1558
        %v1560 = vpop.f32.mrf.mxu0
        %v1561 = vadd.f32 %v1384, %v1560
        %v1562 = vpop.f32.mrf.mxu0
        %1563 = vmatprep.mubr.f32.mxu0 0.0
        %v1564 = vand.u32 %v310, 4294901760
        %1565 = vmatmul.mubr.f32.gmra.mxu0 %v1564
        %v1566 = vpop.f32.mrf.mxu0
        %v1567 = vadd.f32 %v1390, %v1566
        %v1568 = vpop.f32.mrf.mxu0
        %1569 = vmatprep.mubr.f32.mxu0 0.0
        %v1570 = vand.u32 %v311, 4294901760
        %1571 = vmatmul.mubr.f32.gmra.mxu0 %v1570
        %v1572 = vpop.f32.mrf.mxu0
        %v1573 = vadd.f32 %v1396, %v1572
        %v1574 = vpop.f32.mrf.mxu0
        %1575 = vmatprep.mubr.f32.mxu0 0.0
        %v1576 = vand.u32 %v312, 4294901760
        %1577 = vmatmul.mubr.f32.gmra.mxu0 %v1576
        %v1578 = vpop.f32.mrf.mxu0
        %v1579 = vadd.f32 %v1402, %v1578
        %v1580 = vpop.f32.mrf.mxu0
        %1581 = vmatprep.mubr.f32.mxu0 0.0
        %v1582 = vand.u32 %v313, 4294901760
        %1583 = vmatmul.mubr.f32.gmra.mxu0 %v1582
        %v1584 = vpop.f32.mrf.mxu0
        %v1585 = vadd.f32 %v1408, %v1584
        %v1586 = vpop.f32.mrf.mxu0
        %1587 = vmatprep.mubr.f32.mxu0 0.0
        %v1588 = vand.u32 %v314, 4294901760
        %1589 = vmatmul.mubr.f32.gmra.mxu0 %v1588
        %v1590 = vpop.f32.mrf.mxu0
        %v1591 = vadd.f32 %v1414, %v1590
        %v1592 = vpop.f32.mrf.mxu0
        %1593 = vmatprep.mubr.f32.mxu0 0.0
        %v1594 = vand.u32 %v315, 4294901760
        %1595 = vmatmul.mubr.f32.gmra.mxu0 %v1594
        %v1596 = vpop.f32.mrf.mxu0
        %v1597 = vadd.f32 %v1420, %v1596
        %v1598 = vpop.f32.mrf.mxu0
        %1599 = vmatprep.mubr.f32.mxu0 0.0
        %v1600 = vand.u32 %v316, 4294901760
        %1601 = vmatmul.mubr.f32.gmra.mxu0 %v1600
        %v1602 = vpop.f32.mrf.mxu0
        %v1603 = vadd.f32 %v1426, %v1602
        %v1604 = vpop.f32.mrf.mxu0
        %1605 = vmatprep.mubr.f32.mxu0 0.0
        %v1606 = vand.u32 %v317, 4294901760
        %1607 = vmatmul.mubr.f32.gmra.mxu0 %v1606
        %v1608 = vpop.f32.mrf.mxu0
        %v1609 = vadd.f32 %v1432, %v1608
        %v1610 = vpop.f32.mrf.mxu0
        %1611 = vmatprep.mubr.f32.mxu0 0.0
        %v1612 = vand.u32 %v318, 4294901760
        %1613 = vmatmul.mubr.f32.gmra.mxu0 %v1612
        %v1614 = vpop.f32.mrf.mxu0
        %v1615 = vadd.f32 %v1438, %v1614
        %v1616 = vpop.f32.mrf.mxu0
        %1617 = vmatprep.mubr.f32.mxu0 0.0
        %v1618 = vand.u32 %v319, 4294901760
        %1619 = vmatmul.mubr.f32.gmra.mxu0 %v1618
        %v1620 = vpop.f32.mrf.mxu0
        %v1621 = vadd.f32 %v1444, %v1620
        %v1622 = vpop.f32.mrf.mxu0
        %1623 = vmatprep.mubr.f32.mxu0 0.0
        %v1624 = vand.u32 %v320, 4294901760
        %1625 = vmatmul.mubr.f32.gmra.mxu0 %v1624
        %v1626 = vpop.f32.mrf.mxu0
        %v1627 = vadd.f32 %v1450, %v1626
        %v1628 = vpop.f32.mrf.mxu0
        %1629 = vdwg.mxu0
        %s1630 = sadd.s32 %s302, 3
        %s1631 = smul.u32 %s1630, 32
        %s1632 = scalar_lea.vmem [#allocation2], %s1631
        %1633 = vst [vmem:[%s1632 + $0x8] sm:$0xff] %v1537
        %1634 = vst [vmem:[%s1632 + $0x10] sm:$0xff] %v1543
        %1635 = vst [vmem:[%s1632 + $0x28] sm:$0xff] %v1549
        %1636 = vst [vmem:[%s1632 + $0x30] sm:$0xff] %v1555
        %1637 = vst [vmem:[%s1632 + $0x48] sm:$0xff] %v1561
        %1638 = vst [vmem:[%s1632 + $0x50] sm:$0xff] %v1567
        %1639 = vst [vmem:[%s1632 + $0x68] sm:$0xff] %v1573
        %1640 = vst [vmem:[%s1632 + $0x70] sm:$0xff] %v1579
        %1641 = vst [vmem:[%s1632 + $0x88] sm:$0xff] %v1585
        %1642 = vst [vmem:[%s1632 + $0x90] sm:$0xff] %v1591
        %1643 = vst [vmem:[%s1632 + $0xa8] sm:$0xff] %v1597
        %1644 = vst [vmem:[%s1632 + $0xb0] sm:$0xff] %v1603
        %1645 = vst [vmem:[%s1632 + $0xc8] sm:$0xff] %v1609
        %1646 = vst [vmem:[%s1632 + $0xd0] sm:$0xff] %v1615
        %1647 = vst [vmem:[%s1632 + $0xe8] sm:$0xff] %v1621
        %1648 = vst [vmem:[%s1632 + $0xf0] sm:$0xff] %v1627
      $region45: #{_amscm_forward_impl.1} parent=39 // loop_footer
        %s299 = sadd.s32 1, %s295
      $region46: #{_amscm_forward_impl.1} parent=39 // loop_footer_branch
        %294 = sbr.rel target = $region42
      $region47: #{_amscm_forward_impl.1} parent=39 // loop_exit
        _
      %v1649 = vld [vmem:[%s3] sm:$0x7f]
      %v1650 = vld [vmem:[%s3 + $0x8] sm:$0x7f]
      %v1651 = vld [vmem:[%s3 + $0x10] sm:$0x7f]
      %v1652 = vld [vmem:[%s3 + $0x18] sm:$0x7f]
      %v1653 = vld [vmem:[%s3 + $0x20] sm:$0x7f]
      %v1654 = vld [vmem:[%s3 + $0x28] sm:$0x7f]
      %v1655 = vld [vmem:[%s3 + $0x30] sm:$0x7f]
      %v1656 = vld [vmem:[%s4] sm:$0x1]
      loop: start=0, step=1, limit=2
      $region48: #{_amscm_forward_impl.1} parent=39 // loop_pre_header
        _
      $region49: #{_amscm_forward_impl.1} parent=39 // loop_header
        %s1658 = sphi 0, %s1662
        %p1659 = scmp.ge.s32.totalorder %s1658, 2
      $region50: #{_amscm_forward_impl.1} parent=39 // loop_header_branch
        %1661 = sbr.rel (%p1659) target = $region54
      $region51: #{_amscm_forward_impl.1} parent=39 // loop_body
        %s1663 = smul.u32 %s1658, 8
        %p1664 = scmp.lt.s32.totalorder %s1663, 8
        %s1665 = scalar_select %p1664, %s1663, 8
        %s1666 = smul.u32 %s1665, 32
        %s1667 = scalar_lea.vmem [#allocation2], %s1666
        %v1668 = vld [vmem:[%s1667 + $0x5] sm:$0xff]
        %v1669 = vld [vmem:[%s1667 + $0xd] sm:$0xff]
        %v1670 = vld [vmem:[%s1667 + $0x25] sm:$0xff]
        %v1671 = vld [vmem:[%s1667 + $0x2d] sm:$0xff]
        %v1672 = vld [vmem:[%s1667 + $0x45] sm:$0xff]
        %v1673 = vld [vmem:[%s1667 + $0x4d] sm:$0xff]
        %v1674 = vld [vmem:[%s1667 + $0x65] sm:$0xff]
        %v1675 = vld [vmem:[%s1667 + $0x6d] sm:$0xff]
        %v1676 = vld [vmem:[%s1667 + $0x85] sm:$0xff]
        %v1677 = vld [vmem:[%s1667 + $0x8d] sm:$0xff]
        %v1678 = vld [vmem:[%s1667 + $0xa5] sm:$0xff]
        %v1679 = vld [vmem:[%s1667 + $0xad] sm:$0xff]
        %v1680 = vld [vmem:[%s1667 + $0xc5] sm:$0xff]
        %v1681 = vld [vmem:[%s1667 + $0xcd] sm:$0xff]
        %v1682 = vld [vmem:[%s1667 + $0xe5] sm:$0xff]
        %v1683 = vld [vmem:[%s1667 + $0xed] sm:$0xff]
        %v1684 = vld [vmem:[%s1667 + $0x105] sm:$0xff]
        %v1685 = vld [vmem:[%s1667 + $0x10d] sm:$0xff]
        %v1686 = vld [vmem:[%s1667 + $0x125] sm:$0xff]
        %v1687 = vld [vmem:[%s1667 + $0x12d] sm:$0xff]
        %v1688 = vld [vmem:[%s1667 + $0x145] sm:$0xff]
        %v1689 = vld [vmem:[%s1667 + $0x14d] sm:$0xff]
        %v1690 = vld [vmem:[%s1667 + $0x165] sm:$0xff]
        %v1691 = vld [vmem:[%s1667 + $0x16d] sm:$0xff]
        %v1692 = vld [vmem:[%s1667 + $0x185] sm:$0xff]
        %v1693 = vld [vmem:[%s1667 + $0x18d] sm:$0xff]
        %v1694 = vld [vmem:[%s1667 + $0x1a5] sm:$0xff]
        %v1695 = vld [vmem:[%s1667 + $0x1ad] sm:$0xff]
        %1696 = vst [vmem:[#allocation3] sm:$0xff] %v1668
        %1697 = vst [vmem:[#allocation3 + $0x8] sm:$0xff] %v1669
        %1698 = vst [vmem:[#allocation3 + $0x10] sm:$0xff] %v1670
        %1699 = vst [vmem:[#allocation3 + $0x18] sm:$0xff] %v1671
        %1700 = vst [vmem:[#allocation3 + $0x20] sm:$0xff] %v1672
        %1701 = vst [vmem:[#allocation3 + $0x28] sm:$0xff] %v1673
        %1702 = vst [vmem:[#allocation3 + $0x30] sm:$0xff] %v1674
        %1703 = vst [vmem:[#allocation3 + $0x38] sm:$0xff] %v1675
        %1704 = vst [vmem:[#allocation3 + $0x40] sm:$0xff] %v1676
        %1705 = vst [vmem:[#allocation3 + $0x48] sm:$0xff] %v1677
        %1706 = vst [vmem:[#allocation3 + $0x50] sm:$0xff] %v1678
        %1707 = vst [vmem:[#allocation3 + $0x58] sm:$0xff] %v1679
        %1708 = vst [vmem:[#allocation3 + $0x60] sm:$0xff] %v1680
        %1709 = vst [vmem:[#allocation3 + $0x68] sm:$0xff] %v1681
        %1710 = vst [vmem:[#allocation3 + $0x70] sm:$0xff] %v1682
        %1711 = vst [vmem:[#allocation3 + $0x78] sm:$0xff] %v1683
        %1712 = vst [vmem:[#allocation3 + $0x80] sm:$0xff] %v1684
        %1713 = vst [vmem:[#allocation3 + $0x88] sm:$0xff] %v1685
        %1714 = vst [vmem:[#allocation3 + $0x90] sm:$0xff] %v1686
        %1715 = vst [vmem:[#allocation3 + $0x98] sm:$0xff] %v1687
        %1716 = vst [vmem:[#allocation3 + $0xa0] sm:$0xff] %v1688
        %1717 = vst [vmem:[#allocation3 + $0xa8] sm:$0xff] %v1689
        %1718 = vst [vmem:[#allocation3 + $0xb0] sm:$0xff] %v1690
        %1719 = vst [vmem:[#allocation3 + $0xb8] sm:$0xff] %v1691
        %1720 = vst [vmem:[#allocation3 + $0xc0] sm:$0xff] %v1692
        %1721 = vst [vmem:[#allocation3 + $0xc8] sm:$0xff] %v1693
        %1722 = vst [vmem:[#allocation3 + $0xd0] sm:$0xff] %v1694
        %1723 = vst [vmem:[#allocation3 + $0xd8] sm:$0xff] %v1695
        %v1724 = vld [vmem:[%s1667 + $0x6] sm:$0xff]
        %v1725 = vld [vmem:[%s1667 + $0xe] sm:$0xff]
        %v1726 = vld [vmem:[%s1667 + $0x26] sm:$0xff]
        %v1727 = vld [vmem:[%s1667 + $0x2e] sm:$0xff]
        %v1728 = vld [vmem:[%s1667 + $0x46] sm:$0xff]
        %v1729 = vld [vmem:[%s1667 + $0x4e] sm:$0xff]
        %v1730 = vld [vmem:[%s1667 + $0x66] sm:$0xff]
        %v1731 = vld [vmem:[%s1667 + $0x6e] sm:$0xff]
        %v1732 = vld [vmem:[%s1667 + $0x86] sm:$0xff]
        %v1733 = vld [vmem:[%s1667 + $0x8e] sm:$0xff]
        %v1734 = vld [vmem:[%s1667 + $0xa6] sm:$0xff]
        %v1735 = vld [vmem:[%s1667 + $0xae] sm:$0xff]
        %v1736 = vld [vmem:[%s1667 + $0xc6] sm:$0xff]
        %v1737 = vld [vmem:[%s1667 + $0xce] sm:$0xff]
        %v1738 = vld [vmem:[%s1667 + $0xe6] sm:$0xff]
        %v1739 = vld [vmem:[%s1667 + $0xee] sm:$0xff]
        %v1740 = vld [vmem:[%s1667 + $0x106] sm:$0xff]
        %v1741 = vld [vmem:[%s1667 + $0x10e] sm:$0xff]
        %v1742 = vld [vmem:[%s1667 + $0x126] sm:$0xff]
        %v1743 = vld [vmem:[%s1667 + $0x12e] sm:$0xff]
        %v1744 = vld [vmem:[%s1667 + $0x146] sm:$0xff]
        %v1745 = vld [vmem:[%s1667 + $0x14e] sm:$0xff]
        %v1746 = vld [vmem:[%s1667 + $0x166] sm:$0xff]
        %v1747 = vld [vmem:[%s1667 + $0x16e] sm:$0xff]
        %v1748 = vld [vmem:[%s1667 + $0x186] sm:$0xff]
        %v1749 = vld [vmem:[%s1667 + $0x18e] sm:$0xff]
        %v1750 = vld [vmem:[%s1667 + $0x1a6] sm:$0xff]
        %v1751 = vld [vmem:[%s1667 + $0x1ae] sm:$0xff]
        %s1752 = scalar_lea.vmem [#allocation3], 224
        %1753 = vst [vmem:[%s1752] sm:$0xff] %v1724
        %1754 = vst [vmem:[%s1752 + $0x8] sm:$0xff] %v1725
        %1755 = vst [vmem:[%s1752 + $0x10] sm:$0xff] %v1726
        %1756 = vst [vmem:[%s1752 + $0x18] sm:$0xff] %v1727
        %1757 = vst [vmem:[%s1752 + $0x20] sm:$0xff] %v1728
        %1758 = vst [vmem:[%s1752 + $0x28] sm:$0xff] %v1729
        %1759 = vst [vmem:[%s1752 + $0x30] sm:$0xff] %v1730
        %1760 = vst [vmem:[%s1752 + $0x38] sm:$0xff] %v1731
        %1761 = vst [vmem:[%s1752 + $0x40] sm:$0xff] %v1732
        %1762 = vst [vmem:[%s1752 + $0x48] sm:$0xff] %v1733
        %1763 = vst [vmem:[%s1752 + $0x50] sm:$0xff] %v1734
        %1764 = vst [vmem:[%s1752 + $0x58] sm:$0xff] %v1735
        %1765 = vst [vmem:[%s1752 + $0x60] sm:$0xff] %v1736
        %1766 = vst [vmem:[%s1752 + $0x68] sm:$0xff] %v1737
        %1767 = vst [vmem:[%s1752 + $0x70] sm:$0xff] %v1738
        %1768 = vst [vmem:[%s1752 + $0x78] sm:$0xff] %v1739
        %1769 = vst [vmem:[%s1752 + $0x80] sm:$0xff] %v1740
        %1770 = vst [vmem:[%s1752 + $0x88] sm:$0xff] %v1741
        %1771 = vst [vmem:[%s1752 + $0x90] sm:$0xff] %v1742
        %1772 = vst [vmem:[%s1752 + $0x98] sm:$0xff] %v1743
        %1773 = vst [vmem:[%s1752 + $0xa0] sm:$0xff] %v1744
        %1774 = vst [vmem:[%s1752 + $0xa8] sm:$0xff] %v1745
        %1775 = vst [vmem:[%s1752 + $0xb0] sm:$0xff] %v1746
        %1776 = vst [vmem:[%s1752 + $0xb8] sm:$0xff] %v1747
        %1777 = vst [vmem:[%s1752 + $0xc0] sm:$0xff] %v1748
        %1778 = vst [vmem:[%s1752 + $0xc8] sm:$0xff] %v1749
        %1779 = vst [vmem:[%s1752 + $0xd0] sm:$0xff] %v1750
        %1780 = vst [vmem:[%s1752 + $0xd8] sm:$0xff] %v1751
        %v1781 = vld [vmem:[%s1667 + $0x7] sm:$0xff]
        %v1782 = vld [vmem:[%s1667 + $0xf] sm:$0xff]
        %v1783 = vld [vmem:[%s1667 + $0x27] sm:$0xff]
        %v1784 = vld [vmem:[%s1667 + $0x2f] sm:$0xff]
        %v1785 = vld [vmem:[%s1667 + $0x47] sm:$0xff]
        %v1786 = vld [vmem:[%s1667 + $0x4f] sm:$0xff]
        %v1787 = vld [vmem:[%s1667 + $0x67] sm:$0xff]
        %v1788 = vld [vmem:[%s1667 + $0x6f] sm:$0xff]
        %v1789 = vld [vmem:[%s1667 + $0x87] sm:$0xff]
        %v1790 = vld [vmem:[%s1667 + $0x8f] sm:$0xff]
        %v1791 = vld [vmem:[%s1667 + $0xa7] sm:$0xff]
        %v1792 = vld [vmem:[%s1667 + $0xaf] sm:$0xff]
        %v1793 = vld [vmem:[%s1667 + $0xc7] sm:$0xff]
        %v1794 = vld [vmem:[%s1667 + $0xcf] sm:$0xff]
        %v1795 = vld [vmem:[%s1667 + $0xe7] sm:$0xff]
        %v1796 = vld [vmem:[%s1667 + $0xef] sm:$0xff]
        %v1797 = vld [vmem:[%s1667 + $0x107] sm:$0xff]
        %v1798 = vld [vmem:[%s1667 + $0x10f] sm:$0xff]
        %v1799 = vld [vmem:[%s1667 + $0x127] sm:$0xff]
        %v1800 = vld [vmem:[%s1667 + $0x12f] sm:$0xff]
        %v1801 = vld [vmem:[%s1667 + $0x147] sm:$0xff]
        %v1802 = vld [vmem:[%s1667 + $0x14f] sm:$0xff]
        %v1803 = vld [vmem:[%s1667 + $0x167] sm:$0xff]
        %v1804 = vld [vmem:[%s1667 + $0x16f] sm:$0xff]
        %v1805 = vld [vmem:[%s1667 + $0x187] sm:$0xff]
        %v1806 = vld [vmem:[%s1667 + $0x18f] sm:$0xff]
        %v1807 = vld [vmem:[%s1667 + $0x1a7] sm:$0xff]
        %v1808 = vld [vmem:[%s1667 + $0x1af] sm:$0xff]
        %s1809 = scalar_lea.vmem [#allocation3], 448
        %1810 = vst [vmem:[%s1809] sm:$0xff] %v1781
        %1811 = vst [vmem:[%s1809 + $0x8] sm:$0xff] %v1782
        %1812 = vst [vmem:[%s1809 + $0x10] sm:$0xff] %v1783
        %1813 = vst [vmem:[%s1809 + $0x18] sm:$0xff] %v1784
        %1814 = vst [vmem:[%s1809 + $0x20] sm:$0xff] %v1785
        %1815 = vst [vmem:[%s1809 + $0x28] sm:$0xff] %v1786
        %1816 = vst [vmem:[%s1809 + $0x30] sm:$0xff] %v1787
        %1817 = vst [vmem:[%s1809 + $0x38] sm:$0xff] %v1788
        %1818 = vst [vmem:[%s1809 + $0x40] sm:$0xff] %v1789
        %1819 = vst [vmem:[%s1809 + $0x48] sm:$0xff] %v1790
        %1820 = vst [vmem:[%s1809 + $0x50] sm:$0xff] %v1791
        %1821 = vst [vmem:[%s1809 + $0x58] sm:$0xff] %v1792
        %1822 = vst [vmem:[%s1809 + $0x60] sm:$0xff] %v1793
        %1823 = vst [vmem:[%s1809 + $0x68] sm:$0xff] %v1794
        %1824 = vst [vmem:[%s1809 + $0x70] sm:$0xff] %v1795
        %1825 = vst [vmem:[%s1809 + $0x78] sm:$0xff] %v1796
        %1826 = vst [vmem:[%s1809 + $0x80] sm:$0xff] %v1797
        %1827 = vst [vmem:[%s1809 + $0x88] sm:$0xff] %v1798
        %1828 = vst [vmem:[%s1809 + $0x90] sm:$0xff] %v1799
        %1829 = vst [vmem:[%s1809 + $0x98] sm:$0xff] %v1800
        %1830 = vst [vmem:[%s1809 + $0xa0] sm:$0xff] %v1801
        %1831 = vst [vmem:[%s1809 + $0xa8] sm:$0xff] %v1802
        %1832 = vst [vmem:[%s1809 + $0xb0] sm:$0xff] %v1803
        %1833 = vst [vmem:[%s1809 + $0xb8] sm:$0xff] %v1804
        %1834 = vst [vmem:[%s1809 + $0xc0] sm:$0xff] %v1805
        %1835 = vst [vmem:[%s1809 + $0xc8] sm:$0xff] %v1806
        %1836 = vst [vmem:[%s1809 + $0xd0] sm:$0xff] %v1807
        %1837 = vst [vmem:[%s1809 + $0xd8] sm:$0xff] %v1808
        %v1838 = vld [vmem:[%s1667 + $0x8] sm:$0xff]
        %v1839 = vld [vmem:[%s1667 + $0x10] sm:$0xff]
        %v1840 = vld [vmem:[%s1667 + $0x28] sm:$0xff]
        %v1841 = vld [vmem:[%s1667 + $0x30] sm:$0xff]
        %v1842 = vld [vmem:[%s1667 + $0x48] sm:$0xff]
        %v1843 = vld [vmem:[%s1667 + $0x50] sm:$0xff]
        %v1844 = vld [vmem:[%s1667 + $0x68] sm:$0xff]
        %v1845 = vld [vmem:[%s1667 + $0x70] sm:$0xff]
        %v1846 = vld [vmem:[%s1667 + $0x88] sm:$0xff]
        %v1847 = vld [vmem:[%s1667 + $0x90] sm:$0xff]
        %v1848 = vld [vmem:[%s1667 + $0xa8] sm:$0xff]
        %v1849 = vld [vmem:[%s1667 + $0xb0] sm:$0xff]
        %v1850 = vld [vmem:[%s1667 + $0xc8] sm:$0xff]
        %v1851 = vld [vmem:[%s1667 + $0xd0] sm:$0xff]
        %v1852 = vld [vmem:[%s1667 + $0xe8] sm:$0xff]
        %v1853 = vld [vmem:[%s1667 + $0xf0] sm:$0xff]
        %v1854 = vld [vmem:[%s1667 + $0x108] sm:$0xff]
        %v1855 = vld [vmem:[%s1667 + $0x110] sm:$0xff]
        %v1856 = vld [vmem:[%s1667 + $0x128] sm:$0xff]
        %v1857 = vld [vmem:[%s1667 + $0x130] sm:$0xff]
        %v1858 = vld [vmem:[%s1667 + $0x148] sm:$0xff]
        %v1859 = vld [vmem:[%s1667 + $0x150] sm:$0xff]
        %v1860 = vld [vmem:[%s1667 + $0x168] sm:$0xff]
        %v1861 = vld [vmem:[%s1667 + $0x170] sm:$0xff]
        %v1862 = vld [vmem:[%s1667 + $0x188] sm:$0xff]
        %v1863 = vld [vmem:[%s1667 + $0x190] sm:$0xff]
        %v1864 = vld [vmem:[%s1667 + $0x1a8] sm:$0xff]
        %v1865 = vld [vmem:[%s1667 + $0x1b0] sm:$0xff]
        %s1866 = scalar_lea.vmem [#allocation3], 672
        %1867 = vst [vmem:[%s1866] sm:$0xff] %v1838
        %1868 = vst [vmem:[%s1866 + $0x8] sm:$0xff] %v1839
        %1869 = vst [vmem:[%s1866 + $0x10] sm:$0xff] %v1840
        %1870 = vst [vmem:[%s1866 + $0x18] sm:$0xff] %v1841
        %1871 = vst [vmem:[%s1866 + $0x20] sm:$0xff] %v1842
        %1872 = vst [vmem:[%s1866 + $0x28] sm:$0xff] %v1843
        %1873 = vst [vmem:[%s1866 + $0x30] sm:$0xff] %v1844
        %1874 = vst [vmem:[%s1866 + $0x38] sm:$0xff] %v1845
        %1875 = vst [vmem:[%s1866 + $0x40] sm:$0xff] %v1846
        %1876 = vst [vmem:[%s1866 + $0x48] sm:$0xff] %v1847
        %1877 = vst [vmem:[%s1866 + $0x50] sm:$0xff] %v1848
        %1878 = vst [vmem:[%s1866 + $0x58] sm:$0xff] %v1849
        %1879 = vst [vmem:[%s1866 + $0x60] sm:$0xff] %v1850
        %1880 = vst [vmem:[%s1866 + $0x68] sm:$0xff] %v1851
        %1881 = vst [vmem:[%s1866 + $0x70] sm:$0xff] %v1852
        %1882 = vst [vmem:[%s1866 + $0x78] sm:$0xff] %v1853
        %1883 = vst [vmem:[%s1866 + $0x80] sm:$0xff] %v1854
        %1884 = vst [vmem:[%s1866 + $0x88] sm:$0xff] %v1855
        %1885 = vst [vmem:[%s1866 + $0x90] sm:$0xff] %v1856
        %1886 = vst [vmem:[%s1866 + $0x98] sm:$0xff] %v1857
        %1887 = vst [vmem:[%s1866 + $0xa0] sm:$0xff] %v1858
        %1888 = vst [vmem:[%s1866 + $0xa8] sm:$0xff] %v1859
        %1889 = vst [vmem:[%s1866 + $0xb0] sm:$0xff] %v1860
        %1890 = vst [vmem:[%s1866 + $0xb8] sm:$0xff] %v1861
        %1891 = vst [vmem:[%s1866 + $0xc0] sm:$0xff] %v1862
        %1892 = vst [vmem:[%s1866 + $0xc8] sm:$0xff] %v1863
        %1893 = vst [vmem:[%s1866 + $0xd0] sm:$0xff] %v1864
        %1894 = vst [vmem:[%s1866 + $0xd8] sm:$0xff] %v1865
        %v1895 = vld [vmem:[%s1667 + $0x9] sm:$0xff]
        %v1896 = vld [vmem:[%s1667 + $0x11] sm:$0xff]
        %v1897 = vld [vmem:[%s1667 + $0x29] sm:$0xff]
        %v1898 = vld [vmem:[%s1667 + $0x31] sm:$0xff]
        %v1899 = vld [vmem:[%s1667 + $0x49] sm:$0xff]
        %v1900 = vld [vmem:[%s1667 + $0x51] sm:$0xff]
        %v1901 = vld [vmem:[%s1667 + $0x69] sm:$0xff]
        %v1902 = vld [vmem:[%s1667 + $0x71] sm:$0xff]
        %v1903 = vld [vmem:[%s1667 + $0x89] sm:$0xff]
        %v1904 = vld [vmem:[%s1667 + $0x91] sm:$0xff]
        %v1905 = vld [vmem:[%s1667 + $0xa9] sm:$0xff]
        %v1906 = vld [vmem:[%s1667 + $0xb1] sm:$0xff]
        %v1907 = vld [vmem:[%s1667 + $0xc9] sm:$0xff]
        %v1908 = vld [vmem:[%s1667 + $0xd1] sm:$0xff]
        %v1909 = vld [vmem:[%s1667 + $0xe9] sm:$0xff]
        %v1910 = vld [vmem:[%s1667 + $0xf1] sm:$0xff]
        %v1911 = vld [vmem:[%s1667 + $0x109] sm:$0xff]
        %v1912 = vld [vmem:[%s1667 + $0x111] sm:$0xff]
        %v1913 = vld [vmem:[%s1667 + $0x129] sm:$0xff]
        %v1914 = vld [vmem:[%s1667 + $0x131] sm:$0xff]
        %v1915 = vld [vmem:[%s1667 + $0x149] sm:$0xff]
        %v1916 = vld [vmem:[%s1667 + $0x151] sm:$0xff]
        %v1917 = vld [vmem:[%s1667 + $0x169] sm:$0xff]
        %v1918 = vld [vmem:[%s1667 + $0x171] sm:$0xff]
        %v1919 = vld [vmem:[%s1667 + $0x189] sm:$0xff]
        %v1920 = vld [vmem:[%s1667 + $0x191] sm:$0xff]
        %v1921 = vld [vmem:[%s1667 + $0x1a9] sm:$0xff]
        %v1922 = vld [vmem:[%s1667 + $0x1b1] sm:$0xff]
        %s1923 = scalar_lea.vmem [#allocation3], 896
        %1924 = vst [vmem:[%s1923] sm:$0xff] %v1895
        %1925 = vst [vmem:[%s1923 + $0x8] sm:$0xff] %v1896
        %1926 = vst [vmem:[%s1923 + $0x10] sm:$0xff] %v1897
        %1927 = vst [vmem:[%s1923 + $0x18] sm:$0xff] %v1898
        %1928 = vst [vmem:[%s1923 + $0x20] sm:$0xff] %v1899
        %1929 = vst [vmem:[%s1923 + $0x28] sm:$0xff] %v1900
        %1930 = vst [vmem:[%s1923 + $0x30] sm:$0xff] %v1901
        %1931 = vst [vmem:[%s1923 + $0x38] sm:$0xff] %v1902
        %1932 = vst [vmem:[%s1923 + $0x40] sm:$0xff] %v1903
        %1933 = vst [vmem:[%s1923 + $0x48] sm:$0xff] %v1904
        %1934 = vst [vmem:[%s1923 + $0x50] sm:$0xff] %v1905
        %1935 = vst [vmem:[%s1923 + $0x58] sm:$0xff] %v1906
        %1936 = vst [vmem:[%s1923 + $0x60] sm:$0xff] %v1907
        %1937 = vst [vmem:[%s1923 + $0x68] sm:$0xff] %v1908
        %1938 = vst [vmem:[%s1923 + $0x70] sm:$0xff] %v1909
        %1939 = vst [vmem:[%s1923 + $0x78] sm:$0xff] %v1910
        %1940 = vst [vmem:[%s1923 + $0x80] sm:$0xff] %v1911
        %1941 = vst [vmem:[%s1923 + $0x88] sm:$0xff] %v1912
        %1942 = vst [vmem:[%s1923 + $0x90] sm:$0xff] %v1913
        %1943 = vst [vmem:[%s1923 + $0x98] sm:$0xff] %v1914
        %1944 = vst [vmem:[%s1923 + $0xa0] sm:$0xff] %v1915
        %1945 = vst [vmem:[%s1923 + $0xa8] sm:$0xff] %v1916
        %1946 = vst [vmem:[%s1923 + $0xb0] sm:$0xff] %v1917
        %1947 = vst [vmem:[%s1923 + $0xb8] sm:$0xff] %v1918
        %1948 = vst [vmem:[%s1923 + $0xc0] sm:$0xff] %v1919
        %1949 = vst [vmem:[%s1923 + $0xc8] sm:$0xff] %v1920
        %1950 = vst [vmem:[%s1923 + $0xd0] sm:$0xff] %v1921
        %1951 = vst [vmem:[%s1923 + $0xd8] sm:$0xff] %v1922
        %v1952 = vld [vmem:[%s1667 + $0xa] sm:$0xff]
        %v1953 = vld [vmem:[%s1667 + $0x12] sm:$0xff]
        %v1954 = vld [vmem:[%s1667 + $0x2a] sm:$0xff]
        %v1955 = vld [vmem:[%s1667 + $0x32] sm:$0xff]
        %v1956 = vld [vmem:[%s1667 + $0x4a] sm:$0xff]
        %v1957 = vld [vmem:[%s1667 + $0x52] sm:$0xff]
        %v1958 = vld [vmem:[%s1667 + $0x6a] sm:$0xff]
        %v1959 = vld [vmem:[%s1667 + $0x72] sm:$0xff]
        %v1960 = vld [vmem:[%s1667 + $0x8a] sm:$0xff]
        %v1961 = vld [vmem:[%s1667 + $0x92] sm:$0xff]
        %v1962 = vld [vmem:[%s1667 + $0xaa] sm:$0xff]
        %v1963 = vld [vmem:[%s1667 + $0xb2] sm:$0xff]
        %v1964 = vld [vmem:[%s1667 + $0xca] sm:$0xff]
        %v1965 = vld [vmem:[%s1667 + $0xd2] sm:$0xff]
        %v1966 = vld [vmem:[%s1667 + $0xea] sm:$0xff]
        %v1967 = vld [vmem:[%s1667 + $0xf2] sm:$0xff]
        %v1968 = vld [vmem:[%s1667 + $0x10a] sm:$0xff]
        %v1969 = vld [vmem:[%s1667 + $0x112] sm:$0xff]
        %v1970 = vld [vmem:[%s1667 + $0x12a] sm:$0xff]
        %v1971 = vld [vmem:[%s1667 + $0x132] sm:$0xff]
        %v1972 = vld [vmem:[%s1667 + $0x14a] sm:$0xff]
        %v1973 = vld [vmem:[%s1667 + $0x152] sm:$0xff]
        %v1974 = vld [vmem:[%s1667 + $0x16a] sm:$0xff]
        %v1975 = vld [vmem:[%s1667 + $0x172] sm:$0xff]
        %v1976 = vld [vmem:[%s1667 + $0x18a] sm:$0xff]
        %v1977 = vld [vmem:[%s1667 + $0x192] sm:$0xff]
        %v1978 = vld [vmem:[%s1667 + $0x1aa] sm:$0xff]
        %v1979 = vld [vmem:[%s1667 + $0x1b2] sm:$0xff]
        %s1980 = scalar_lea.vmem [#allocation3], 1120
        %1981 = vst [vmem:[%s1980] sm:$0xff] %v1952
        %1982 = vst [vmem:[%s1980 + $0x8] sm:$0xff] %v1953
        %1983 = vst [vmem:[%s1980 + $0x10] sm:$0xff] %v1954
        %1984 = vst [vmem:[%s1980 + $0x18] sm:$0xff] %v1955
        %1985 = vst [vmem:[%s1980 + $0x20] sm:$0xff] %v1956
        %1986 = vst [vmem:[%s1980 + $0x28] sm:$0xff] %v1957
        %1987 = vst [vmem:[%s1980 + $0x30] sm:$0xff] %v1958
        %1988 = vst [vmem:[%s1980 + $0x38] sm:$0xff] %v1959
        %1989 = vst [vmem:[%s1980 + $0x40] sm:$0xff] %v1960
        %1990 = vst [vmem:[%s1980 + $0x48] sm:$0xff] %v1961
        %1991 = vst [vmem:[%s1980 + $0x50] sm:$0xff] %v1962
        %1992 = vst [vmem:[%s1980 + $0x58] sm:$0xff] %v1963
        %1993 = vst [vmem:[%s1980 + $0x60] sm:$0xff] %v1964
        %1994 = vst [vmem:[%s1980 + $0x68] sm:$0xff] %v1965
        %1995 = vst [vmem:[%s1980 + $0x70] sm:$0xff] %v1966
        %1996 = vst [vmem:[%s1980 + $0x78] sm:$0xff] %v1967
        %1997 = vst [vmem:[%s1980 + $0x80] sm:$0xff] %v1968
        %1998 = vst [vmem:[%s1980 + $0x88] sm:$0xff] %v1969
        %1999 = vst [vmem:[%s1980 + $0x90] sm:$0xff] %v1970
        %2000 = vst [vmem:[%s1980 + $0x98] sm:$0xff] %v1971
        %2001 = vst [vmem:[%s1980 + $0xa0] sm:$0xff] %v1972
        %2002 = vst [vmem:[%s1980 + $0xa8] sm:$0xff] %v1973
        %2003 = vst [vmem:[%s1980 + $0xb0] sm:$0xff] %v1974
        %2004 = vst [vmem:[%s1980 + $0xb8] sm:$0xff] %v1975
        %2005 = vst [vmem:[%s1980 + $0xc0] sm:$0xff] %v1976
        %2006 = vst [vmem:[%s1980 + $0xc8] sm:$0xff] %v1977
        %2007 = vst [vmem:[%s1980 + $0xd0] sm:$0xff] %v1978
        %2008 = vst [vmem:[%s1980 + $0xd8] sm:$0xff] %v1979
        %v2009 = vld [vmem:[%s1667 + $0xb] sm:$0xff]
        %v2010 = vld [vmem:[%s1667 + $0x13] sm:$0xff]
        %v2011 = vld [vmem:[%s1667 + $0x2b] sm:$0xff]
        %v2012 = vld [vmem:[%s1667 + $0x33] sm:$0xff]
        %v2013 = vld [vmem:[%s1667 + $0x4b] sm:$0xff]
        %v2014 = vld [vmem:[%s1667 + $0x53] sm:$0xff]
        %v2015 = vld [vmem:[%s1667 + $0x6b] sm:$0xff]
        %v2016 = vld [vmem:[%s1667 + $0x73] sm:$0xff]
        %v2017 = vld [vmem:[%s1667 + $0x8b] sm:$0xff]
        %v2018 = vld [vmem:[%s1667 + $0x93] sm:$0xff]
        %v2019 = vld [vmem:[%s1667 + $0xab] sm:$0xff]
        %v2020 = vld [vmem:[%s1667 + $0xb3] sm:$0xff]
        %v2021 = vld [vmem:[%s1667 + $0xcb] sm:$0xff]
        %v2022 = vld [vmem:[%s1667 + $0xd3] sm:$0xff]
        %v2023 = vld [vmem:[%s1667 + $0xeb] sm:$0xff]
        %v2024 = vld [vmem:[%s1667 + $0xf3] sm:$0xff]
        %v2025 = vld [vmem:[%s1667 + $0x10b] sm:$0xff]
        %v2026 = vld [vmem:[%s1667 + $0x113] sm:$0xff]
        %v2027 = vld [vmem:[%s1667 + $0x12b] sm:$0xff]
        %v2028 = vld [vmem:[%s1667 + $0x133] sm:$0xff]
        %v2029 = vld [vmem:[%s1667 + $0x14b] sm:$0xff]
        %v2030 = vld [vmem:[%s1667 + $0x153] sm:$0xff]
        %v2031 = vld [vmem:[%s1667 + $0x16b] sm:$0xff]
        %v2032 = vld [vmem:[%s1667 + $0x173] sm:$0xff]
        %v2033 = vld [vmem:[%s1667 + $0x18b] sm:$0xff]
        %v2034 = vld [vmem:[%s1667 + $0x193] sm:$0xff]
        %v2035 = vld [vmem:[%s1667 + $0x1ab] sm:$0xff]
        %v2036 = vld [vmem:[%s1667 + $0x1b3] sm:$0xff]
        %s2037 = scalar_lea.vmem [#allocation3], 1344
        %2038 = vst [vmem:[%s2037] sm:$0xff] %v2009
        %2039 = vst [vmem:[%s2037 + $0x8] sm:$0xff] %v2010
        %2040 = vst [vmem:[%s2037 + $0x10] sm:$0xff] %v2011
        %2041 = vst [vmem:[%s2037 + $0x18] sm:$0xff] %v2012
        %2042 = vst [vmem:[%s2037 + $0x20] sm:$0xff] %v2013
        %2043 = vst [vmem:[%s2037 + $0x28] sm:$0xff] %v2014
        %2044 = vst [vmem:[%s2037 + $0x30] sm:$0xff] %v2015
        %2045 = vst [vmem:[%s2037 + $0x38] sm:$0xff] %v2016
        %2046 = vst [vmem:[%s2037 + $0x40] sm:$0xff] %v2017
        %2047 = vst [vmem:[%s2037 + $0x48] sm:$0xff] %v2018
        %2048 = vst [vmem:[%s2037 + $0x50] sm:$0xff] %v2019
        %2049 = vst [vmem:[%s2037 + $0x58] sm:$0xff] %v2020
        %2050 = vst [vmem:[%s2037 + $0x60] sm:$0xff] %v2021
        %2051 = vst [vmem:[%s2037 + $0x68] sm:$0xff] %v2022
        %2052 = vst [vmem:[%s2037 + $0x70] sm:$0xff] %v2023
        %2053 = vst [vmem:[%s2037 + $0x78] sm:$0xff] %v2024
        %2054 = vst [vmem:[%s2037 + $0x80] sm:$0xff] %v2025
        %2055 = vst [vmem:[%s2037 + $0x88] sm:$0xff] %v2026
        %2056 = vst [vmem:[%s2037 + $0x90] sm:$0xff] %v2027
        %2057 = vst [vmem:[%s2037 + $0x98] sm:$0xff] %v2028
        %2058 = vst [vmem:[%s2037 + $0xa0] sm:$0xff] %v2029
        %2059 = vst [vmem:[%s2037 + $0xa8] sm:$0xff] %v2030
        %2060 = vst [vmem:[%s2037 + $0xb0] sm:$0xff] %v2031
        %2061 = vst [vmem:[%s2037 + $0xb8] sm:$0xff] %v2032
        %2062 = vst [vmem:[%s2037 + $0xc0] sm:$0xff] %v2033
        %2063 = vst [vmem:[%s2037 + $0xc8] sm:$0xff] %v2034
        %2064 = vst [vmem:[%s2037 + $0xd0] sm:$0xff] %v2035
        %2065 = vst [vmem:[%s2037 + $0xd8] sm:$0xff] %v2036
        %v2066 = vld [vmem:[#allocation3] sm:$0xff]
        %v2067 = vld [vmem:[#allocation3 + $0x8] sm:$0xff]
        %v2068 = vld [vmem:[#allocation3 + $0x10] sm:$0xff]
        %v2069 = vld [vmem:[#allocation3 + $0x18] sm:$0xff]
        %v2070 = vld [vmem:[#allocation3 + $0x20] sm:$0xff]
        %v2071 = vld [vmem:[#allocation3 + $0x28] sm:$0xff]
        %v2072 = vld [vmem:[#allocation3 + $0x30] sm:$0xff]
        %v2073 = vld [vmem:[#allocation3 + $0x38] sm:$0xff]
        %v2074 = vld [vmem:[#allocation3 + $0x40] sm:$0xff]
        %v2075 = vld [vmem:[#allocation3 + $0x48] sm:$0xff]
        %v2076 = vld [vmem:[#allocation3 + $0x50] sm:$0xff]
        %v2077 = vld [vmem:[#allocation3 + $0x58] sm:$0xff]
        %v2078 = vld [vmem:[#allocation3 + $0x60] sm:$0xff]
        %v2079 = vld [vmem:[#allocation3 + $0x68] sm:$0xff]
        %v2080 = vld [vmem:[#allocation3 + $0x70] sm:$0xff]
        %v2081 = vld [vmem:[#allocation3 + $0x78] sm:$0xff]
        %v2082 = vlaneseq
        %v2083 = vshrl.u32 %v2082, 7
        %v2084 = vsub.s32 0, %v2083
        %v2085 = vrot.slane %v1649, %v2084
        %v2086 = vmul.f32 %v2066, %v2085
        %v2087 = vmul.f32 %v2067, %v2085
        %v2088 = vmul.f32 %v2068, %v2085
        %v2089 = vmul.f32 %v2069, %v2085
        %v2090 = vmul.f32 %v2070, %v2085
        %v2091 = vmul.f32 %v2071, %v2085
        %v2092 = vmul.f32 %v2072, %v2085
        %v2093 = vmul.f32 %v2073, %v2085
        %v2094 = vmul.f32 %v2074, %v2085
        %v2095 = vmul.f32 %v2075, %v2085
        %v2096 = vmul.f32 %v2076, %v2085
        %v2097 = vmul.f32 %v2077, %v2085
        %v2098 = vmul.f32 %v2078, %v2085
        %v2099 = vmul.f32 %v2079, %v2085
        %v2100 = vmul.f32 %v2080, %v2085
        %v2101 = vmul.f32 %v2081, %v2085
        %v2102 = vadd.f32 %v2086, 0.0
        %v2103 = vadd.f32 %v2087, 0.0
        %v2104 = vadd.f32 %v2088, 0.0
        %v2105 = vadd.f32 %v2089, 0.0
        %v2106 = vadd.f32 %v2090, 0.0
        %v2107 = vadd.f32 %v2091, 0.0
        %v2108 = vadd.f32 %v2092, 0.0
        %v2109 = vadd.f32 %v2093, 0.0
        %v2110 = vadd.f32 %v2094, 0.0
        %v2111 = vadd.f32 %v2095, 0.0
        %v2112 = vadd.f32 %v2096, 0.0
        %v2113 = vadd.f32 %v2097, 0.0
        %v2114 = vadd.f32 %v2098, 0.0
        %v2115 = vadd.f32 %v2099, 0.0
        %v2116 = vadd.f32 %v2100, 0.0
        %v2117 = vadd.f32 %v2101, 0.0
        %v2118 = vld [vmem:[%s1752] sm:$0xff]
        %v2119 = vld [vmem:[%s1752 + $0x8] sm:$0xff]
        %v2120 = vld [vmem:[%s1752 + $0x10] sm:$0xff]
        %v2121 = vld [vmem:[%s1752 + $0x18] sm:$0xff]
        %v2122 = vld [vmem:[%s1752 + $0x20] sm:$0xff]
        %v2123 = vld [vmem:[%s1752 + $0x28] sm:$0xff]
        %v2124 = vld [vmem:[%s1752 + $0x30] sm:$0xff]
        %v2125 = vld [vmem:[%s1752 + $0x38] sm:$0xff]
        %v2126 = vld [vmem:[%s1752 + $0x40] sm:$0xff]
        %v2127 = vld [vmem:[%s1752 + $0x48] sm:$0xff]
        %v2128 = vld [vmem:[%s1752 + $0x50] sm:$0xff]
        %v2129 = vld [vmem:[%s1752 + $0x58] sm:$0xff]
        %v2130 = vld [vmem:[%s1752 + $0x60] sm:$0xff]
        %v2131 = vld [vmem:[%s1752 + $0x68] sm:$0xff]
        %v2132 = vld [vmem:[%s1752 + $0x70] sm:$0xff]
        %v2133 = vld [vmem:[%s1752 + $0x78] sm:$0xff]
        %v2134 = vlaneseq
        %v2135 = vshrl.u32 %v2134, 7
        %v2136 = vsub.s32 1, %v2135
        %v2137 = vrot.slane %v1649, %v2136
        %v2138 = vmul.f32 %v2118, %v2137
        %v2139 = vmul.f32 %v2119, %v2137
        %v2140 = vmul.f32 %v2120, %v2137
        %v2141 = vmul.f32 %v2121, %v2137
        %v2142 = vmul.f32 %v2122, %v2137
        %v2143 = vmul.f32 %v2123, %v2137
        %v2144 = vmul.f32 %v2124, %v2137
        %v2145 = vmul.f32 %v2125, %v2137
        %v2146 = vmul.f32 %v2126, %v2137
        %v2147 = vmul.f32 %v2127, %v2137
        %v2148 = vmul.f32 %v2128, %v2137
        %v2149 = vmul.f32 %v2129, %v2137
        %v2150 = vmul.f32 %v2130, %v2137
        %v2151 = vmul.f32 %v2131, %v2137
        %v2152 = vmul.f32 %v2132, %v2137
        %v2153 = vmul.f32 %v2133, %v2137
        %v2154 = vadd.f32 %v2102, %v2138
        %v2155 = vadd.f32 %v2103, %v2139
        %v2156 = vadd.f32 %v2104, %v2140
        %v2157 = vadd.f32 %v2105, %v2141
        %v2158 = vadd.f32 %v2106, %v2142
        %v2159 = vadd.f32 %v2107, %v2143
        %v2160 = vadd.f32 %v2108, %v2144
        %v2161 = vadd.f32 %v2109, %v2145
        %v2162 = vadd.f32 %v2110, %v2146
        %v2163 = vadd.f32 %v2111, %v2147
        %v2164 = vadd.f32 %v2112, %v2148
        %v2165 = vadd.f32 %v2113, %v2149
        %v2166 = vadd.f32 %v2114, %v2150
        %v2167 = vadd.f32 %v2115, %v2151
        %v2168 = vadd.f32 %v2116, %v2152
        %v2169 = vadd.f32 %v2117, %v2153
        %v2170 = vld [vmem:[%s1809] sm:$0xff]
        %v2171 = vld [vmem:[%s1809 + $0x8] sm:$0xff]
        %v2172 = vld [vmem:[%s1809 + $0x10] sm:$0xff]
        %v2173 = vld [vmem:[%s1809 + $0x18] sm:$0xff]
        %v2174 = vld [vmem:[%s1809 + $0x20] sm:$0xff]
        %v2175 = vld [vmem:[%s1809 + $0x28] sm:$0xff]
        %v2176 = vld [vmem:[%s1809 + $0x30] sm:$0xff]
        %v2177 = vld [vmem:[%s1809 + $0x38] sm:$0xff]
        %v2178 = vld [vmem:[%s1809 + $0x40] sm:$0xff]
        %v2179 = vld [vmem:[%s1809 + $0x48] sm:$0xff]
        %v2180 = vld [vmem:[%s1809 + $0x50] sm:$0xff]
        %v2181 = vld [vmem:[%s1809 + $0x58] sm:$0xff]
        %v2182 = vld [vmem:[%s1809 + $0x60] sm:$0xff]
        %v2183 = vld [vmem:[%s1809 + $0x68] sm:$0xff]
        %v2184 = vld [vmem:[%s1809 + $0x70] sm:$0xff]
        %v2185 = vld [vmem:[%s1809 + $0x78] sm:$0xff]
        %v2186 = vlaneseq
        %v2187 = vshrl.u32 %v2186, 7
        %v2188 = vsub.s32 2, %v2187
        %v2189 = vrot.slane %v1649, %v2188
        %v2190 = vmul.f32 %v2170, %v2189
        %v2191 = vmul.f32 %v2171, %v2189
        %v2192 = vmul.f32 %v2172, %v2189
        %v2193 = vmul.f32 %v2173, %v2189
        %v2194 = vmul.f32 %v2174, %v2189
        %v2195 = vmul.f32 %v2175, %v2189
        %v2196 = vmul.f32 %v2176, %v2189
        %v2197 = vmul.f32 %v2177, %v2189
        %v2198 = vmul.f32 %v2178, %v2189
        %v2199 = vmul.f32 %v2179, %v2189
        %v2200 = vmul.f32 %v2180, %v2189
        %v2201 = vmul.f32 %v2181, %v2189
        %v2202 = vmul.f32 %v2182, %v2189
        %v2203 = vmul.f32 %v2183, %v2189
        %v2204 = vmul.f32 %v2184, %v2189
        %v2205 = vmul.f32 %v2185, %v2189
        %v2206 = vadd.f32 %v2154, %v2190
        %v2207 = vadd.f32 %v2155, %v2191
        %v2208 = vadd.f32 %v2156, %v2192
        %v2209 = vadd.f32 %v2157, %v2193
        %v2210 = vadd.f32 %v2158, %v2194
        %v2211 = vadd.f32 %v2159, %v2195
        %v2212 = vadd.f32 %v2160, %v2196
        %v2213 = vadd.f32 %v2161, %v2197
        %v2214 = vadd.f32 %v2162, %v2198
        %v2215 = vadd.f32 %v2163, %v2199
        %v2216 = vadd.f32 %v2164, %v2200
        %v2217 = vadd.f32 %v2165, %v2201
        %v2218 = vadd.f32 %v2166, %v2202
        %v2219 = vadd.f32 %v2167, %v2203
        %v2220 = vadd.f32 %v2168, %v2204
        %v2221 = vadd.f32 %v2169, %v2205
        %v2222 = vld [vmem:[%s1866] sm:$0xff]
        %v2223 = vld [vmem:[%s1866 + $0x8] sm:$0xff]
        %v2224 = vld [vmem:[%s1866 + $0x10] sm:$0xff]
        %v2225 = vld [vmem:[%s1866 + $0x18] sm:$0xff]
        %v2226 = vld [vmem:[%s1866 + $0x20] sm:$0xff]
        %v2227 = vld [vmem:[%s1866 + $0x28] sm:$0xff]
        %v2228 = vld [vmem:[%s1866 + $0x30] sm:$0xff]
        %v2229 = vld [vmem:[%s1866 + $0x38] sm:$0xff]
        %v2230 = vld [vmem:[%s1866 + $0x40] sm:$0xff]
        %v2231 = vld [vmem:[%s1866 + $0x48] sm:$0xff]
        %v2232 = vld [vmem:[%s1866 + $0x50] sm:$0xff]
        %v2233 = vld [vmem:[%s1866 + $0x58] sm:$0xff]
        %v2234 = vld [vmem:[%s1866 + $0x60] sm:$0xff]
        %v2235 = vld [vmem:[%s1866 + $0x68] sm:$0xff]
        %v2236 = vld [vmem:[%s1866 + $0x70] sm:$0xff]
        %v2237 = vld [vmem:[%s1866 + $0x78] sm:$0xff]
        %v2238 = vlaneseq
        %v2239 = vshrl.u32 %v2238, 7
        %v2240 = vsub.s32 3, %v2239
        %v2241 = vrot.slane %v1649, %v2240
        %v2242 = vmul.f32 %v2222, %v2241
        %v2243 = vmul.f32 %v2223, %v2241
        %v2244 = vmul.f32 %v2224, %v2241
        %v2245 = vmul.f32 %v2225, %v2241
        %v2246 = vmul.f32 %v2226, %v2241
        %v2247 = vmul.f32 %v2227, %v2241
        %v2248 = vmul.f32 %v2228, %v2241
        %v2249 = vmul.f32 %v2229, %v2241
        %v2250 = vmul.f32 %v2230, %v2241
        %v2251 = vmul.f32 %v2231, %v2241
        %v2252 = vmul.f32 %v2232, %v2241
        %v2253 = vmul.f32 %v2233, %v2241
        %v2254 = vmul.f32 %v2234, %v2241
        %v2255 = vmul.f32 %v2235, %v2241
        %v2256 = vmul.f32 %v2236, %v2241
        %v2257 = vmul.f32 %v2237, %v2241
        %v2258 = vadd.f32 %v2206, %v2242
        %v2259 = vadd.f32 %v2207, %v2243
        %v2260 = vadd.f32 %v2208, %v2244
        %v2261 = vadd.f32 %v2209, %v2245
        %v2262 = vadd.f32 %v2210, %v2246
        %v2263 = vadd.f32 %v2211, %v2247
        %v2264 = vadd.f32 %v2212, %v2248
        %v2265 = vadd.f32 %v2213, %v2249
        %v2266 = vadd.f32 %v2214, %v2250
        %v2267 = vadd.f32 %v2215, %v2251
        %v2268 = vadd.f32 %v2216, %v2252
        %v2269 = vadd.f32 %v2217, %v2253
        %v2270 = vadd.f32 %v2218, %v2254
        %v2271 = vadd.f32 %v2219, %v2255
        %v2272 = vadd.f32 %v2220, %v2256
        %v2273 = vadd.f32 %v2221, %v2257
        %v2274 = vld [vmem:[%s1923] sm:$0xff]
        %v2275 = vld [vmem:[%s1923 + $0x8] sm:$0xff]
        %v2276 = vld [vmem:[%s1923 + $0x10] sm:$0xff]
        %v2277 = vld [vmem:[%s1923 + $0x18] sm:$0xff]
        %v2278 = vld [vmem:[%s1923 + $0x20] sm:$0xff]
        %v2279 = vld [vmem:[%s1923 + $0x28] sm:$0xff]
        %v2280 = vld [vmem:[%s1923 + $0x30] sm:$0xff]
        %v2281 = vld [vmem:[%s1923 + $0x38] sm:$0xff]
        %v2282 = vld [vmem:[%s1923 + $0x40] sm:$0xff]
        %v2283 = vld [vmem:[%s1923 + $0x48] sm:$0xff]
        %v2284 = vld [vmem:[%s1923 + $0x50] sm:$0xff]
        %v2285 = vld [vmem:[%s1923 + $0x58] sm:$0xff]
        %v2286 = vld [vmem:[%s1923 + $0x60] sm:$0xff]
        %v2287 = vld [vmem:[%s1923 + $0x68] sm:$0xff]
        %v2288 = vld [vmem:[%s1923 + $0x70] sm:$0xff]
        %v2289 = vld [vmem:[%s1923 + $0x78] sm:$0xff]
        %v2290 = vlaneseq
        %v2291 = vshrl.u32 %v2290, 7
        %v2292 = vsub.s32 4, %v2291
        %v2293 = vrot.slane %v1649, %v2292
        %v2294 = vmul.f32 %v2274, %v2293
        %v2295 = vmul.f32 %v2275, %v2293
        %v2296 = vmul.f32 %v2276, %v2293
        %v2297 = vmul.f32 %v2277, %v2293
        %v2298 = vmul.f32 %v2278, %v2293
        %v2299 = vmul.f32 %v2279, %v2293
        %v2300 = vmul.f32 %v2280, %v2293
        %v2301 = vmul.f32 %v2281, %v2293
        %v2302 = vmul.f32 %v2282, %v2293
        %v2303 = vmul.f32 %v2283, %v2293
        %v2304 = vmul.f32 %v2284, %v2293
        %v2305 = vmul.f32 %v2285, %v2293
        %v2306 = vmul.f32 %v2286, %v2293
        %v2307 = vmul.f32 %v2287, %v2293
        %v2308 = vmul.f32 %v2288, %v2293
        %v2309 = vmul.f32 %v2289, %v2293
        %v2310 = vadd.f32 %v2258, %v2294
        %v2311 = vadd.f32 %v2259, %v2295
        %v2312 = vadd.f32 %v2260, %v2296
        %v2313 = vadd.f32 %v2261, %v2297
        %v2314 = vadd.f32 %v2262, %v2298
        %v2315 = vadd.f32 %v2263, %v2299
        %v2316 = vadd.f32 %v2264, %v2300
        %v2317 = vadd.f32 %v2265, %v2301
        %v2318 = vadd.f32 %v2266, %v2302
        %v2319 = vadd.f32 %v2267, %v2303
        %v2320 = vadd.f32 %v2268, %v2304
        %v2321 = vadd.f32 %v2269, %v2305
        %v2322 = vadd.f32 %v2270, %v2306
        %v2323 = vadd.f32 %v2271, %v2307
        %v2324 = vadd.f32 %v2272, %v2308
        %v2325 = vadd.f32 %v2273, %v2309
        %v2326 = vld [vmem:[%s1980] sm:$0xff]
        %v2327 = vld [vmem:[%s1980 + $0x8] sm:$0xff]
        %v2328 = vld [vmem:[%s1980 + $0x10] sm:$0xff]
        %v2329 = vld [vmem:[%s1980 + $0x18] sm:$0xff]
        %v2330 = vld [vmem:[%s1980 + $0x20] sm:$0xff]
        %v2331 = vld [vmem:[%s1980 + $0x28] sm:$0xff]
        %v2332 = vld [vmem:[%s1980 + $0x30] sm:$0xff]
        %v2333 = vld [vmem:[%s1980 + $0x38] sm:$0xff]
        %v2334 = vld [vmem:[%s1980 + $0x40] sm:$0xff]
        %v2335 = vld [vmem:[%s1980 + $0x48] sm:$0xff]
        %v2336 = vld [vmem:[%s1980 + $0x50] sm:$0xff]
        %v2337 = vld [vmem:[%s1980 + $0x58] sm:$0xff]
        %v2338 = vld [vmem:[%s1980 + $0x60] sm:$0xff]
        %v2339 = vld [vmem:[%s1980 + $0x68] sm:$0xff]
        %v2340 = vld [vmem:[%s1980 + $0x70] sm:$0xff]
        %v2341 = vld [vmem:[%s1980 + $0x78] sm:$0xff]
        %v2342 = vlaneseq
        %v2343 = vshrl.u32 %v2342, 7
        %v2344 = vsub.s32 5, %v2343
        %v2345 = vrot.slane %v1649, %v2344
        %v2346 = vmul.f32 %v2326, %v2345
        %v2347 = vmul.f32 %v2327, %v2345
        %v2348 = vmul.f32 %v2328, %v2345
        %v2349 = vmul.f32 %v2329, %v2345
        %v2350 = vmul.f32 %v2330, %v2345
        %v2351 = vmul.f32 %v2331, %v2345
        %v2352 = vmul.f32 %v2332, %v2345
        %v2353 = vmul.f32 %v2333, %v2345
        %v2354 = vmul.f32 %v2334, %v2345
        %v2355 = vmul.f32 %v2335, %v2345
        %v2356 = vmul.f32 %v2336, %v2345
        %v2357 = vmul.f32 %v2337, %v2345
        %v2358 = vmul.f32 %v2338, %v2345
        %v2359 = vmul.f32 %v2339, %v2345
        %v2360 = vmul.f32 %v2340, %v2345
        %v2361 = vmul.f32 %v2341, %v2345
        %v2362 = vadd.f32 %v2310, %v2346
        %v2363 = vadd.f32 %v2311, %v2347
        %v2364 = vadd.f32 %v2312, %v2348
        %v2365 = vadd.f32 %v2313, %v2349
        %v2366 = vadd.f32 %v2314, %v2350
        %v2367 = vadd.f32 %v2315, %v2351
        %v2368 = vadd.f32 %v2316, %v2352
        %v2369 = vadd.f32 %v2317, %v2353
        %v2370 = vadd.f32 %v2318, %v2354
        %v2371 = vadd.f32 %v2319, %v2355
        %v2372 = vadd.f32 %v2320, %v2356
        %v2373 = vadd.f32 %v2321, %v2357
        %v2374 = vadd.f32 %v2322, %v2358
        %v2375 = vadd.f32 %v2323, %v2359
        %v2376 = vadd.f32 %v2324, %v2360
        %v2377 = vadd.f32 %v2325, %v2361
        %v2378 = vld [vmem:[%s2037] sm:$0xff]
        %v2379 = vld [vmem:[%s2037 + $0x8] sm:$0xff]
        %v2380 = vld [vmem:[%s2037 + $0x10] sm:$0xff]
        %v2381 = vld [vmem:[%s2037 + $0x18] sm:$0xff]
        %v2382 = vld [vmem:[%s2037 + $0x20] sm:$0xff]
        %v2383 = vld [vmem:[%s2037 + $0x28] sm:$0xff]
        %v2384 = vld [vmem:[%s2037 + $0x30] sm:$0xff]
        %v2385 = vld [vmem:[%s2037 + $0x38] sm:$0xff]
        %v2386 = vld [vmem:[%s2037 + $0x40] sm:$0xff]
        %v2387 = vld [vmem:[%s2037 + $0x48] sm:$0xff]
        %v2388 = vld [vmem:[%s2037 + $0x50] sm:$0xff]
        %v2389 = vld [vmem:[%s2037 + $0x58] sm:$0xff]
        %v2390 = vld [vmem:[%s2037 + $0x60] sm:$0xff]
        %v2391 = vld [vmem:[%s2037 + $0x68] sm:$0xff]
        %v2392 = vld [vmem:[%s2037 + $0x70] sm:$0xff]
        %v2393 = vld [vmem:[%s2037 + $0x78] sm:$0xff]
        %v2394 = vlaneseq
        %v2395 = vshrl.u32 %v2394, 7
        %v2396 = vsub.s32 6, %v2395
        %v2397 = vrot.slane %v1649, %v2396
        %v2398 = vmul.f32 %v2378, %v2397
        %v2399 = vmul.f32 %v2379, %v2397
        %v2400 = vmul.f32 %v2380, %v2397
        %v2401 = vmul.f32 %v2381, %v2397
        %v2402 = vmul.f32 %v2382, %v2397
        %v2403 = vmul.f32 %v2383, %v2397
        %v2404 = vmul.f32 %v2384, %v2397
        %v2405 = vmul.f32 %v2385, %v2397
        %v2406 = vmul.f32 %v2386, %v2397
        %v2407 = vmul.f32 %v2387, %v2397
        %v2408 = vmul.f32 %v2388, %v2397
        %v2409 = vmul.f32 %v2389, %v2397
        %v2410 = vmul.f32 %v2390, %v2397
        %v2411 = vmul.f32 %v2391, %v2397
        %v2412 = vmul.f32 %v2392, %v2397
        %v2413 = vmul.f32 %v2393, %v2397
        %v2414 = vadd.f32 %v2362, %v2398
        %v2415 = vadd.f32 %v2363, %v2399
        %v2416 = vadd.f32 %v2364, %v2400
        %v2417 = vadd.f32 %v2365, %v2401
        %v2418 = vadd.f32 %v2366, %v2402
        %v2419 = vadd.f32 %v2367, %v2403
        %v2420 = vadd.f32 %v2368, %v2404
        %v2421 = vadd.f32 %v2369, %v2405
        %v2422 = vadd.f32 %v2370, %v2406
        %v2423 = vadd.f32 %v2371, %v2407
        %v2424 = vadd.f32 %v2372, %v2408
        %v2425 = vadd.f32 %v2373, %v2409
        %v2426 = vadd.f32 %v2374, %v2410
        %v2427 = vadd.f32 %v2375, %v2411
        %v2428 = vadd.f32 %v2376, %v2412
        %v2429 = vadd.f32 %v2377, %v2413
        %s2430 = scalar_lea.vmem [#allocation3], 16
        %v2431 = vld [vmem:[%s2430] sm:$0xff]
        %v2432 = vld [vmem:[%s2430 + $0x8] sm:$0xff]
        %v2433 = vld [vmem:[%s2430 + $0x10] sm:$0xff]
        %v2434 = vld [vmem:[%s2430 + $0x18] sm:$0xff]
        %v2435 = vld [vmem:[%s2430 + $0x20] sm:$0xff]
        %v2436 = vld [vmem:[%s2430 + $0x28] sm:$0xff]
        %v2437 = vld [vmem:[%s2430 + $0x30] sm:$0xff]
        %v2438 = vld [vmem:[%s2430 + $0x38] sm:$0xff]
        %v2439 = vld [vmem:[%s2430 + $0x40] sm:$0xff]
        %v2440 = vld [vmem:[%s2430 + $0x48] sm:$0xff]
        %v2441 = vld [vmem:[%s2430 + $0x50] sm:$0xff]
        %v2442 = vld [vmem:[%s2430 + $0x58] sm:$0xff]
        %v2443 = vld [vmem:[%s2430 + $0x60] sm:$0xff]
        %v2444 = vld [vmem:[%s2430 + $0x68] sm:$0xff]
        %v2445 = vld [vmem:[%s2430 + $0x70] sm:$0xff]
        %v2446 = vld [vmem:[%s2430 + $0x78] sm:$0xff]
        %v2447 = vlaneseq
        %v2448 = vshrl.u32 %v2447, 7
        %v2449 = vsub.s32 0, %v2448
        %v2450 = vrot.slane %v1650, %v2449
        %v2451 = vmul.f32 %v2431, %v2450
        %v2452 = vmul.f32 %v2432, %v2450
        %v2453 = vmul.f32 %v2433, %v2450
        %v2454 = vmul.f32 %v2434, %v2450
        %v2455 = vmul.f32 %v2435, %v2450
        %v2456 = vmul.f32 %v2436, %v2450
        %v2457 = vmul.f32 %v2437, %v2450
        %v2458 = vmul.f32 %v2438, %v2450
        %v2459 = vmul.f32 %v2439, %v2450
        %v2460 = vmul.f32 %v2440, %v2450
        %v2461 = vmul.f32 %v2441, %v2450
        %v2462 = vmul.f32 %v2442, %v2450
        %v2463 = vmul.f32 %v2443, %v2450
        %v2464 = vmul.f32 %v2444, %v2450
        %v2465 = vmul.f32 %v2445, %v2450
        %v2466 = vmul.f32 %v2446, %v2450
        %v2467 = vadd.f32 %v2414, %v2451
        %v2468 = vadd.f32 %v2415, %v2452
        %v2469 = vadd.f32 %v2416, %v2453
        %v2470 = vadd.f32 %v2417, %v2454
        %v2471 = vadd.f32 %v2418, %v2455
        %v2472 = vadd.f32 %v2419, %v2456
        %v2473 = vadd.f32 %v2420, %v2457
        %v2474 = vadd.f32 %v2421, %v2458
        %v2475 = vadd.f32 %v2422, %v2459
        %v2476 = vadd.f32 %v2423, %v2460
        %v2477 = vadd.f32 %v2424, %v2461
        %v2478 = vadd.f32 %v2425, %v2462
        %v2479 = vadd.f32 %v2426, %v2463
        %v2480 = vadd.f32 %v2427, %v2464
        %v2481 = vadd.f32 %v2428, %v2465
        %v2482 = vadd.f32 %v2429, %v2466
        %s2483 = scalar_lea.vmem [#allocation3], 240
        %v2484 = vld [vmem:[%s2483] sm:$0xff]
        %v2485 = vld [vmem:[%s2483 + $0x8] sm:$0xff]
        %v2486 = vld [vmem:[%s2483 + $0x10] sm:$0xff]
        %v2487 = vld [vmem:[%s2483 + $0x18] sm:$0xff]
        %v2488 = vld [vmem:[%s2483 + $0x20] sm:$0xff]
        %v2489 = vld [vmem:[%s2483 + $0x28] sm:$0xff]
        %v2490 = vld [vmem:[%s2483 + $0x30] sm:$0xff]
        %v2491 = vld [vmem:[%s2483 + $0x38] sm:$0xff]
        %v2492 = vld [vmem:[%s2483 + $0x40] sm:$0xff]
        %v2493 = vld [vmem:[%s2483 + $0x48] sm:$0xff]
        %v2494 = vld [vmem:[%s2483 + $0x50] sm:$0xff]
        %v2495 = vld [vmem:[%s2483 + $0x58] sm:$0xff]
        %v2496 = vld [vmem:[%s2483 + $0x60] sm:$0xff]
        %v2497 = vld [vmem:[%s2483 + $0x68] sm:$0xff]
        %v2498 = vld [vmem:[%s2483 + $0x70] sm:$0xff]
        %v2499 = vld [vmem:[%s2483 + $0x78] sm:$0xff]
        %v2500 = vlaneseq
        %v2501 = vshrl.u32 %v2500, 7
        %v2502 = vsub.s32 1, %v2501
        %v2503 = vrot.slane %v1650, %v2502
        %v2504 = vmul.f32 %v2484, %v2503
        %v2505 = vmul.f32 %v2485, %v2503
        %v2506 = vmul.f32 %v2486, %v2503
        %v2507 = vmul.f32 %v2487, %v2503
        %v2508 = vmul.f32 %v2488, %v2503
        %v2509 = vmul.f32 %v2489, %v2503
        %v2510 = vmul.f32 %v2490, %v2503
        %v2511 = vmul.f32 %v2491, %v2503
        %v2512 = vmul.f32 %v2492, %v2503
        %v2513 = vmul.f32 %v2493, %v2503
        %v2514 = vmul.f32 %v2494, %v2503
        %v2515 = vmul.f32 %v2495, %v2503
        %v2516 = vmul.f32 %v2496, %v2503
        %v2517 = vmul.f32 %v2497, %v2503
        %v2518 = vmul.f32 %v2498, %v2503
        %v2519 = vmul.f32 %v2499, %v2503
        %v2520 = vadd.f32 %v2467, %v2504
        %v2521 = vadd.f32 %v2468, %v2505
        %v2522 = vadd.f32 %v2469, %v2506
        %v2523 = vadd.f32 %v2470, %v2507
        %v2524 = vadd.f32 %v2471, %v2508
        %v2525 = vadd.f32 %v2472, %v2509
        %v2526 = vadd.f32 %v2473, %v2510
        %v2527 = vadd.f32 %v2474, %v2511
        %v2528 = vadd.f32 %v2475, %v2512
        %v2529 = vadd.f32 %v2476, %v2513
        %v2530 = vadd.f32 %v2477, %v2514
        %v2531 = vadd.f32 %v2478, %v2515
        %v2532 = vadd.f32 %v2479, %v2516
        %v2533 = vadd.f32 %v2480, %v2517
        %v2534 = vadd.f32 %v2481, %v2518
        %v2535 = vadd.f32 %v2482, %v2519
        %s2536 = scalar_lea.vmem [#allocation3], 464
        %v2537 = vld [vmem:[%s2536] sm:$0xff]
        %v2538 = vld [vmem:[%s2536 + $0x8] sm:$0xff]
        %v2539 = vld [vmem:[%s2536 + $0x10] sm:$0xff]
        %v2540 = vld [vmem:[%s2536 + $0x18] sm:$0xff]
        %v2541 = vld [vmem:[%s2536 + $0x20] sm:$0xff]
        %v2542 = vld [vmem:[%s2536 + $0x28] sm:$0xff]
        %v2543 = vld [vmem:[%s2536 + $0x30] sm:$0xff]
        %v2544 = vld [vmem:[%s2536 + $0x38] sm:$0xff]
        %v2545 = vld [vmem:[%s2536 + $0x40] sm:$0xff]
        %v2546 = vld [vmem:[%s2536 + $0x48] sm:$0xff]
        %v2547 = vld [vmem:[%s2536 + $0x50] sm:$0xff]
        %v2548 = vld [vmem:[%s2536 + $0x58] sm:$0xff]
        %v2549 = vld [vmem:[%s2536 + $0x60] sm:$0xff]
        %v2550 = vld [vmem:[%s2536 + $0x68] sm:$0xff]
        %v2551 = vld [vmem:[%s2536 + $0x70] sm:$0xff]
        %v2552 = vld [vmem:[%s2536 + $0x78] sm:$0xff]
        %v2553 = vlaneseq
        %v2554 = vshrl.u32 %v2553, 7
        %v2555 = vsub.s32 2, %v2554
        %v2556 = vrot.slane %v1650, %v2555
        %v2557 = vmul.f32 %v2537, %v2556
        %v2558 = vmul.f32 %v2538, %v2556
        %v2559 = vmul.f32 %v2539, %v2556
        %v2560 = vmul.f32 %v2540, %v2556
        %v2561 = vmul.f32 %v2541, %v2556
        %v2562 = vmul.f32 %v2542, %v2556
        %v2563 = vmul.f32 %v2543, %v2556
        %v2564 = vmul.f32 %v2544, %v2556
        %v2565 = vmul.f32 %v2545, %v2556
        %v2566 = vmul.f32 %v2546, %v2556
        %v2567 = vmul.f32 %v2547, %v2556
        %v2568 = vmul.f32 %v2548, %v2556
        %v2569 = vmul.f32 %v2549, %v2556
        %v2570 = vmul.f32 %v2550, %v2556
        %v2571 = vmul.f32 %v2551, %v2556
        %v2572 = vmul.f32 %v2552, %v2556
        %v2573 = vadd.f32 %v2520, %v2557
        %v2574 = vadd.f32 %v2521, %v2558
        %v2575 = vadd.f32 %v2522, %v2559
        %v2576 = vadd.f32 %v2523, %v2560
        %v2577 = vadd.f32 %v2524, %v2561
        %v2578 = vadd.f32 %v2525, %v2562
        %v2579 = vadd.f32 %v2526, %v2563
        %v2580 = vadd.f32 %v2527, %v2564
        %v2581 = vadd.f32 %v2528, %v2565
        %v2582 = vadd.f32 %v2529, %v2566
        %v2583 = vadd.f32 %v2530, %v2567
        %v2584 = vadd.f32 %v2531, %v2568
        %v2585 = vadd.f32 %v2532, %v2569
        %v2586 = vadd.f32 %v2533, %v2570
        %v2587 = vadd.f32 %v2534, %v2571
        %v2588 = vadd.f32 %v2535, %v2572
        %s2589 = scalar_lea.vmem [#allocation3], 688
        %v2590 = vld [vmem:[%s2589] sm:$0xff]
        %v2591 = vld [vmem:[%s2589 + $0x8] sm:$0xff]
        %v2592 = vld [vmem:[%s2589 + $0x10] sm:$0xff]
        %v2593 = vld [vmem:[%s2589 + $0x18] sm:$0xff]
        %v2594 = vld [vmem:[%s2589 + $0x20] sm:$0xff]
        %v2595 = vld [vmem:[%s2589 + $0x28] sm:$0xff]
        %v2596 = vld [vmem:[%s2589 + $0x30] sm:$0xff]
        %v2597 = vld [vmem:[%s2589 + $0x38] sm:$0xff]
        %v2598 = vld [vmem:[%s2589 + $0x40] sm:$0xff]
        %v2599 = vld [vmem:[%s2589 + $0x48] sm:$0xff]
        %v2600 = vld [vmem:[%s2589 + $0x50] sm:$0xff]
        %v2601 = vld [vmem:[%s2589 + $0x58] sm:$0xff]
        %v2602 = vld [vmem:[%s2589 + $0x60] sm:$0xff]
        %v2603 = vld [vmem:[%s2589 + $0x68] sm:$0xff]
        %v2604 = vld [vmem:[%s2589 + $0x70] sm:$0xff]
        %v2605 = vld [vmem:[%s2589 + $0x78] sm:$0xff]
        %v2606 = vlaneseq
        %v2607 = vshrl.u32 %v2606, 7
        %v2608 = vsub.s32 3, %v2607
        %v2609 = vrot.slane %v1650, %v2608
        %v2610 = vmul.f32 %v2590, %v2609
        %v2611 = vmul.f32 %v2591, %v2609
        %v2612 = vmul.f32 %v2592, %v2609
        %v2613 = vmul.f32 %v2593, %v2609
        %v2614 = vmul.f32 %v2594, %v2609
        %v2615 = vmul.f32 %v2595, %v2609
        %v2616 = vmul.f32 %v2596, %v2609
        %v2617 = vmul.f32 %v2597, %v2609
        %v2618 = vmul.f32 %v2598, %v2609
        %v2619 = vmul.f32 %v2599, %v2609
        %v2620 = vmul.f32 %v2600, %v2609
        %v2621 = vmul.f32 %v2601, %v2609
        %v2622 = vmul.f32 %v2602, %v2609
        %v2623 = vmul.f32 %v2603, %v2609
        %v2624 = vmul.f32 %v2604, %v2609
        %v2625 = vmul.f32 %v2605, %v2609
        %v2626 = vadd.f32 %v2573, %v2610
        %v2627 = vadd.f32 %v2574, %v2611
        %v2628 = vadd.f32 %v2575, %v2612
        %v2629 = vadd.f32 %v2576, %v2613
        %v2630 = vadd.f32 %v2577, %v2614
        %v2631 = vadd.f32 %v2578, %v2615
        %v2632 = vadd.f32 %v2579, %v2616
        %v2633 = vadd.f32 %v2580, %v2617
        %v2634 = vadd.f32 %v2581, %v2618
        %v2635 = vadd.f32 %v2582, %v2619
        %v2636 = vadd.f32 %v2583, %v2620
        %v2637 = vadd.f32 %v2584, %v2621
        %v2638 = vadd.f32 %v2585, %v2622
        %v2639 = vadd.f32 %v2586, %v2623
        %v2640 = vadd.f32 %v2587, %v2624
        %v2641 = vadd.f32 %v2588, %v2625
        %s2642 = scalar_lea.vmem [#allocation3], 912
        %v2643 = vld [vmem:[%s2642] sm:$0xff]
        %v2644 = vld [vmem:[%s2642 + $0x8] sm:$0xff]
        %v2645 = vld [vmem:[%s2642 + $0x10] sm:$0xff]
        %v2646 = vld [vmem:[%s2642 + $0x18] sm:$0xff]
        %v2647 = vld [vmem:[%s2642 + $0x20] sm:$0xff]
        %v2648 = vld [vmem:[%s2642 + $0x28] sm:$0xff]
        %v2649 = vld [vmem:[%s2642 + $0x30] sm:$0xff]
        %v2650 = vld [vmem:[%s2642 + $0x38] sm:$0xff]
        %v2651 = vld [vmem:[%s2642 + $0x40] sm:$0xff]
        %v2652 = vld [vmem:[%s2642 + $0x48] sm:$0xff]
        %v2653 = vld [vmem:[%s2642 + $0x50] sm:$0xff]
        %v2654 = vld [vmem:[%s2642 + $0x58] sm:$0xff]
        %v2655 = vld [vmem:[%s2642 + $0x60] sm:$0xff]
        %v2656 = vld [vmem:[%s2642 + $0x68] sm:$0xff]
        %v2657 = vld [vmem:[%s2642 + $0x70] sm:$0xff]
        %v2658 = vld [vmem:[%s2642 + $0x78] sm:$0xff]
        %v2659 = vlaneseq
        %v2660 = vshrl.u32 %v2659, 7
        %v2661 = vsub.s32 4, %v2660
        %v2662 = vrot.slane %v1650, %v2661
        %v2663 = vmul.f32 %v2643, %v2662
        %v2664 = vmul.f32 %v2644, %v2662
        %v2665 = vmul.f32 %v2645, %v2662
        %v2666 = vmul.f32 %v2646, %v2662
        %v2667 = vmul.f32 %v2647, %v2662
        %v2668 = vmul.f32 %v2648, %v2662
        %v2669 = vmul.f32 %v2649, %v2662
        %v2670 = vmul.f32 %v2650, %v2662
        %v2671 = vmul.f32 %v2651, %v2662
        %v2672 = vmul.f32 %v2652, %v2662
        %v2673 = vmul.f32 %v2653, %v2662
        %v2674 = vmul.f32 %v2654, %v2662
        %v2675 = vmul.f32 %v2655, %v2662
        %v2676 = vmul.f32 %v2656, %v2662
        %v2677 = vmul.f32 %v2657, %v2662
        %v2678 = vmul.f32 %v2658, %v2662
        %v2679 = vadd.f32 %v2626, %v2663
        %v2680 = vadd.f32 %v2627, %v2664
        %v2681 = vadd.f32 %v2628, %v2665
        %v2682 = vadd.f32 %v2629, %v2666
        %v2683 = vadd.f32 %v2630, %v2667
        %v2684 = vadd.f32 %v2631, %v2668
        %v2685 = vadd.f32 %v2632, %v2669
        %v2686 = vadd.f32 %v2633, %v2670
        %v2687 = vadd.f32 %v2634, %v2671
        %v2688 = vadd.f32 %v2635, %v2672
        %v2689 = vadd.f32 %v2636, %v2673
        %v2690 = vadd.f32 %v2637, %v2674
        %v2691 = vadd.f32 %v2638, %v2675
        %v2692 = vadd.f32 %v2639, %v2676
        %v2693 = vadd.f32 %v2640, %v2677
        %v2694 = vadd.f32 %v2641, %v2678
        %s2695 = scalar_lea.vmem [#allocation3], 1136
        %v2696 = vld [vmem:[%s2695] sm:$0xff]
        %v2697 = vld [vmem:[%s2695 + $0x8] sm:$0xff]
        %v2698 = vld [vmem:[%s2695 + $0x10] sm:$0xff]
        %v2699 = vld [vmem:[%s2695 + $0x18] sm:$0xff]
        %v2700 = vld [vmem:[%s2695 + $0x20] sm:$0xff]
        %v2701 = vld [vmem:[%s2695 + $0x28] sm:$0xff]
        %v2702 = vld [vmem:[%s2695 + $0x30] sm:$0xff]
        %v2703 = vld [vmem:[%s2695 + $0x38] sm:$0xff]
        %v2704 = vld [vmem:[%s2695 + $0x40] sm:$0xff]
        %v2705 = vld [vmem:[%s2695 + $0x48] sm:$0xff]
        %v2706 = vld [vmem:[%s2695 + $0x50] sm:$0xff]
        %v2707 = vld [vmem:[%s2695 + $0x58] sm:$0xff]
        %v2708 = vld [vmem:[%s2695 + $0x60] sm:$0xff]
        %v2709 = vld [vmem:[%s2695 + $0x68] sm:$0xff]
        %v2710 = vld [vmem:[%s2695 + $0x70] sm:$0xff]
        %v2711 = vld [vmem:[%s2695 + $0x78] sm:$0xff]
        %v2712 = vlaneseq
        %v2713 = vshrl.u32 %v2712, 7
        %v2714 = vsub.s32 5, %v2713
        %v2715 = vrot.slane %v1650, %v2714
        %v2716 = vmul.f32 %v2696, %v2715
        %v2717 = vmul.f32 %v2697, %v2715
        %v2718 = vmul.f32 %v2698, %v2715
        %v2719 = vmul.f32 %v2699, %v2715
        %v2720 = vmul.f32 %v2700, %v2715
        %v2721 = vmul.f32 %v2701, %v2715
        %v2722 = vmul.f32 %v2702, %v2715
        %v2723 = vmul.f32 %v2703, %v2715
        %v2724 = vmul.f32 %v2704, %v2715
        %v2725 = vmul.f32 %v2705, %v2715
        %v2726 = vmul.f32 %v2706, %v2715
        %v2727 = vmul.f32 %v2707, %v2715
        %v2728 = vmul.f32 %v2708, %v2715
        %v2729 = vmul.f32 %v2709, %v2715
        %v2730 = vmul.f32 %v2710, %v2715
        %v2731 = vmul.f32 %v2711, %v2715
        %v2732 = vadd.f32 %v2679, %v2716
        %v2733 = vadd.f32 %v2680, %v2717
        %v2734 = vadd.f32 %v2681, %v2718
        %v2735 = vadd.f32 %v2682, %v2719
        %v2736 = vadd.f32 %v2683, %v2720
        %v2737 = vadd.f32 %v2684, %v2721
        %v2738 = vadd.f32 %v2685, %v2722
        %v2739 = vadd.f32 %v2686, %v2723
        %v2740 = vadd.f32 %v2687, %v2724
        %v2741 = vadd.f32 %v2688, %v2725
        %v2742 = vadd.f32 %v2689, %v2726
        %v2743 = vadd.f32 %v2690, %v2727
        %v2744 = vadd.f32 %v2691, %v2728
        %v2745 = vadd.f32 %v2692, %v2729
        %v2746 = vadd.f32 %v2693, %v2730
        %v2747 = vadd.f32 %v2694, %v2731
        %s2748 = scalar_lea.vmem [#allocation3], 1360
        %v2749 = vld [vmem:[%s2748] sm:$0xff]
        %v2750 = vld [vmem:[%s2748 + $0x8] sm:$0xff]
        %v2751 = vld [vmem:[%s2748 + $0x10] sm:$0xff]
        %v2752 = vld [vmem:[%s2748 + $0x18] sm:$0xff]
        %v2753 = vld [vmem:[%s2748 + $0x20] sm:$0xff]
        %v2754 = vld [vmem:[%s2748 + $0x28] sm:$0xff]
        %v2755 = vld [vmem:[%s2748 + $0x30] sm:$0xff]
        %v2756 = vld [vmem:[%s2748 + $0x38] sm:$0xff]
        %v2757 = vld [vmem:[%s2748 + $0x40] sm:$0xff]
        %v2758 = vld [vmem:[%s2748 + $0x48] sm:$0xff]
        %v2759 = vld [vmem:[%s2748 + $0x50] sm:$0xff]
        %v2760 = vld [vmem:[%s2748 + $0x58] sm:$0xff]
        %v2761 = vld [vmem:[%s2748 + $0x60] sm:$0xff]
        %v2762 = vld [vmem:[%s2748 + $0x68] sm:$0xff]
        %v2763 = vld [vmem:[%s2748 + $0x70] sm:$0xff]
        %v2764 = vld [vmem:[%s2748 + $0x78] sm:$0xff]
        %v2765 = vlaneseq
        %v2766 = vshrl.u32 %v2765, 7
        %v2767 = vsub.s32 6, %v2766
        %v2768 = vrot.slane %v1650, %v2767
        %v2769 = vmul.f32 %v2749, %v2768
        %v2770 = vmul.f32 %v2750, %v2768
        %v2771 = vmul.f32 %v2751, %v2768
        %v2772 = vmul.f32 %v2752, %v2768
        %v2773 = vmul.f32 %v2753, %v2768
        %v2774 = vmul.f32 %v2754, %v2768
        %v2775 = vmul.f32 %v2755, %v2768
        %v2776 = vmul.f32 %v2756, %v2768
        %v2777 = vmul.f32 %v2757, %v2768
        %v2778 = vmul.f32 %v2758, %v2768
        %v2779 = vmul.f32 %v2759, %v2768
        %v2780 = vmul.f32 %v2760, %v2768
        %v2781 = vmul.f32 %v2761, %v2768
        %v2782 = vmul.f32 %v2762, %v2768
        %v2783 = vmul.f32 %v2763, %v2768
        %v2784 = vmul.f32 %v2764, %v2768
        %v2785 = vadd.f32 %v2732, %v2769
        %v2786 = vadd.f32 %v2733, %v2770
        %v2787 = vadd.f32 %v2734, %v2771
        %v2788 = vadd.f32 %v2735, %v2772
        %v2789 = vadd.f32 %v2736, %v2773
        %v2790 = vadd.f32 %v2737, %v2774
        %v2791 = vadd.f32 %v2738, %v2775
        %v2792 = vadd.f32 %v2739, %v2776
        %v2793 = vadd.f32 %v2740, %v2777
        %v2794 = vadd.f32 %v2741, %v2778
        %v2795 = vadd.f32 %v2742, %v2779
        %v2796 = vadd.f32 %v2743, %v2780
        %v2797 = vadd.f32 %v2744, %v2781
        %v2798 = vadd.f32 %v2745, %v2782
        %v2799 = vadd.f32 %v2746, %v2783
        %v2800 = vadd.f32 %v2747, %v2784
        %s2801 = scalar_lea.vmem [#allocation3], 32
        %v2802 = vld [vmem:[%s2801] sm:$0xff]
        %v2803 = vld [vmem:[%s2801 + $0x8] sm:$0xff]
        %v2804 = vld [vmem:[%s2801 + $0x10] sm:$0xff]
        %v2805 = vld [vmem:[%s2801 + $0x18] sm:$0xff]
        %v2806 = vld [vmem:[%s2801 + $0x20] sm:$0xff]
        %v2807 = vld [vmem:[%s2801 + $0x28] sm:$0xff]
        %v2808 = vld [vmem:[%s2801 + $0x30] sm:$0xff]
        %v2809 = vld [vmem:[%s2801 + $0x38] sm:$0xff]
        %v2810 = vld [vmem:[%s2801 + $0x40] sm:$0xff]
        %v2811 = vld [vmem:[%s2801 + $0x48] sm:$0xff]
        %v2812 = vld [vmem:[%s2801 + $0x50] sm:$0xff]
        %v2813 = vld [vmem:[%s2801 + $0x58] sm:$0xff]
        %v2814 = vld [vmem:[%s2801 + $0x60] sm:$0xff]
        %v2815 = vld [vmem:[%s2801 + $0x68] sm:$0xff]
        %v2816 = vld [vmem:[%s2801 + $0x70] sm:$0xff]
        %v2817 = vld [vmem:[%s2801 + $0x78] sm:$0xff]
        %v2818 = vlaneseq
        %v2819 = vshrl.u32 %v2818, 7
        %v2820 = vsub.s32 0, %v2819
        %v2821 = vrot.slane %v1651, %v2820
        %v2822 = vmul.f32 %v2802, %v2821
        %v2823 = vmul.f32 %v2803, %v2821
        %v2824 = vmul.f32 %v2804, %v2821
        %v2825 = vmul.f32 %v2805, %v2821
        %v2826 = vmul.f32 %v2806, %v2821
        %v2827 = vmul.f32 %v2807, %v2821
        %v2828 = vmul.f32 %v2808, %v2821
        %v2829 = vmul.f32 %v2809, %v2821
        %v2830 = vmul.f32 %v2810, %v2821
        %v2831 = vmul.f32 %v2811, %v2821
        %v2832 = vmul.f32 %v2812, %v2821
        %v2833 = vmul.f32 %v2813, %v2821
        %v2834 = vmul.f32 %v2814, %v2821
        %v2835 = vmul.f32 %v2815, %v2821
        %v2836 = vmul.f32 %v2816, %v2821
        %v2837 = vmul.f32 %v2817, %v2821
        %v2838 = vadd.f32 %v2785, %v2822
        %v2839 = vadd.f32 %v2786, %v2823
        %v2840 = vadd.f32 %v2787, %v2824
        %v2841 = vadd.f32 %v2788, %v2825
        %v2842 = vadd.f32 %v2789, %v2826
        %v2843 = vadd.f32 %v2790, %v2827
        %v2844 = vadd.f32 %v2791, %v2828
        %v2845 = vadd.f32 %v2792, %v2829
        %v2846 = vadd.f32 %v2793, %v2830
        %v2847 = vadd.f32 %v2794, %v2831
        %v2848 = vadd.f32 %v2795, %v2832
        %v2849 = vadd.f32 %v2796, %v2833
        %v2850 = vadd.f32 %v2797, %v2834
        %v2851 = vadd.f32 %v2798, %v2835
        %v2852 = vadd.f32 %v2799, %v2836
        %v2853 = vadd.f32 %v2800, %v2837
        %s2854 = scalar_lea.vmem [#allocation3], 256
        %v2855 = vld [vmem:[%s2854] sm:$0xff]
        %v2856 = vld [vmem:[%s2854 + $0x8] sm:$0xff]
        %v2857 = vld [vmem:[%s2854 + $0x10] sm:$0xff]
        %v2858 = vld [vmem:[%s2854 + $0x18] sm:$0xff]
        %v2859 = vld [vmem:[%s2854 + $0x20] sm:$0xff]
        %v2860 = vld [vmem:[%s2854 + $0x28] sm:$0xff]
        %v2861 = vld [vmem:[%s2854 + $0x30] sm:$0xff]
        %v2862 = vld [vmem:[%s2854 + $0x38] sm:$0xff]
        %v2863 = vld [vmem:[%s2854 + $0x40] sm:$0xff]
        %v2864 = vld [vmem:[%s2854 + $0x48] sm:$0xff]
        %v2865 = vld [vmem:[%s2854 + $0x50] sm:$0xff]
        %v2866 = vld [vmem:[%s2854 + $0x58] sm:$0xff]
        %v2867 = vld [vmem:[%s2854 + $0x60] sm:$0xff]
        %v2868 = vld [vmem:[%s2854 + $0x68] sm:$0xff]
        %v2869 = vld [vmem:[%s2854 + $0x70] sm:$0xff]
        %v2870 = vld [vmem:[%s2854 + $0x78] sm:$0xff]
        %v2871 = vlaneseq
        %v2872 = vshrl.u32 %v2871, 7
        %v2873 = vsub.s32 1, %v2872
        %v2874 = vrot.slane %v1651, %v2873
        %v2875 = vmul.f32 %v2855, %v2874
        %v2876 = vmul.f32 %v2856, %v2874
        %v2877 = vmul.f32 %v2857, %v2874
        %v2878 = vmul.f32 %v2858, %v2874
        %v2879 = vmul.f32 %v2859, %v2874
        %v2880 = vmul.f32 %v2860, %v2874
        %v2881 = vmul.f32 %v2861, %v2874
        %v2882 = vmul.f32 %v2862, %v2874
        %v2883 = vmul.f32 %v2863, %v2874
        %v2884 = vmul.f32 %v2864, %v2874
        %v2885 = vmul.f32 %v2865, %v2874
        %v2886 = vmul.f32 %v2866, %v2874
        %v2887 = vmul.f32 %v2867, %v2874
        %v2888 = vmul.f32 %v2868, %v2874
        %v2889 = vmul.f32 %v2869, %v2874
        %v2890 = vmul.f32 %v2870, %v2874
        %v2891 = vadd.f32 %v2838, %v2875
        %v2892 = vadd.f32 %v2839, %v2876
        %v2893 = vadd.f32 %v2840, %v2877
        %v2894 = vadd.f32 %v2841, %v2878
        %v2895 = vadd.f32 %v2842, %v2879
        %v2896 = vadd.f32 %v2843, %v2880
        %v2897 = vadd.f32 %v2844, %v2881
        %v2898 = vadd.f32 %v2845, %v2882
        %v2899 = vadd.f32 %v2846, %v2883
        %v2900 = vadd.f32 %v2847, %v2884
        %v2901 = vadd.f32 %v2848, %v2885
        %v2902 = vadd.f32 %v2849, %v2886
        %v2903 = vadd.f32 %v2850, %v2887
        %v2904 = vadd.f32 %v2851, %v2888
        %v2905 = vadd.f32 %v2852, %v2889
        %v2906 = vadd.f32 %v2853, %v2890
        %s2907 = scalar_lea.vmem [#allocation3], 480
        %v2908 = vld [vmem:[%s2907] sm:$0xff]
        %v2909 = vld [vmem:[%s2907 + $0x8] sm:$0xff]
        %v2910 = vld [vmem:[%s2907 + $0x10] sm:$0xff]
        %v2911 = vld [vmem:[%s2907 + $0x18] sm:$0xff]
        %v2912 = vld [vmem:[%s2907 + $0x20] sm:$0xff]
        %v2913 = vld [vmem:[%s2907 + $0x28] sm:$0xff]
        %v2914 = vld [vmem:[%s2907 + $0x30] sm:$0xff]
        %v2915 = vld [vmem:[%s2907 + $0x38] sm:$0xff]
        %v2916 = vld [vmem:[%s2907 + $0x40] sm:$0xff]
        %v2917 = vld [vmem:[%s2907 + $0x48] sm:$0xff]
        %v2918 = vld [vmem:[%s2907 + $0x50] sm:$0xff]
        %v2919 = vld [vmem:[%s2907 + $0x58] sm:$0xff]
        %v2920 = vld [vmem:[%s2907 + $0x60] sm:$0xff]
        %v2921 = vld [vmem:[%s2907 + $0x68] sm:$0xff]
        %v2922 = vld [vmem:[%s2907 + $0x70] sm:$0xff]
        %v2923 = vld [vmem:[%s2907 + $0x78] sm:$0xff]
        %v2924 = vlaneseq
        %v2925 = vshrl.u32 %v2924, 7
        %v2926 = vsub.s32 2, %v2925
        %v2927 = vrot.slane %v1651, %v2926
        %v2928 = vmul.f32 %v2908, %v2927
        %v2929 = vmul.f32 %v2909, %v2927
        %v2930 = vmul.f32 %v2910, %v2927
        %v2931 = vmul.f32 %v2911, %v2927
        %v2932 = vmul.f32 %v2912, %v2927
        %v2933 = vmul.f32 %v2913, %v2927
        %v2934 = vmul.f32 %v2914, %v2927
        %v2935 = vmul.f32 %v2915, %v2927
        %v2936 = vmul.f32 %v2916, %v2927
        %v2937 = vmul.f32 %v2917, %v2927
        %v2938 = vmul.f32 %v2918, %v2927
        %v2939 = vmul.f32 %v2919, %v2927
        %v2940 = vmul.f32 %v2920, %v2927
        %v2941 = vmul.f32 %v2921, %v2927
        %v2942 = vmul.f32 %v2922, %v2927
        %v2943 = vmul.f32 %v2923, %v2927
        %v2944 = vadd.f32 %v2891, %v2928
        %v2945 = vadd.f32 %v2892, %v2929
        %v2946 = vadd.f32 %v2893, %v2930
        %v2947 = vadd.f32 %v2894, %v2931
        %v2948 = vadd.f32 %v2895, %v2932
        %v2949 = vadd.f32 %v2896, %v2933
        %v2950 = vadd.f32 %v2897, %v2934
        %v2951 = vadd.f32 %v2898, %v2935
        %v2952 = vadd.f32 %v2899, %v2936
        %v2953 = vadd.f32 %v2900, %v2937
        %v2954 = vadd.f32 %v2901, %v2938
        %v2955 = vadd.f32 %v2902, %v2939
        %v2956 = vadd.f32 %v2903, %v2940
        %v2957 = vadd.f32 %v2904, %v2941
        %v2958 = vadd.f32 %v2905, %v2942
        %v2959 = vadd.f32 %v2906, %v2943
        %s2960 = scalar_lea.vmem [#allocation3], 704
        %v2961 = vld [vmem:[%s2960] sm:$0xff]
        %v2962 = vld [vmem:[%s2960 + $0x8] sm:$0xff]
        %v2963 = vld [vmem:[%s2960 + $0x10] sm:$0xff]
        %v2964 = vld [vmem:[%s2960 + $0x18] sm:$0xff]
        %v2965 = vld [vmem:[%s2960 + $0x20] sm:$0xff]
        %v2966 = vld [vmem:[%s2960 + $0x28] sm:$0xff]
        %v2967 = vld [vmem:[%s2960 + $0x30] sm:$0xff]
        %v2968 = vld [vmem:[%s2960 + $0x38] sm:$0xff]
        %v2969 = vld [vmem:[%s2960 + $0x40] sm:$0xff]
        %v2970 = vld [vmem:[%s2960 + $0x48] sm:$0xff]
        %v2971 = vld [vmem:[%s2960 + $0x50] sm:$0xff]
        %v2972 = vld [vmem:[%s2960 + $0x58] sm:$0xff]
        %v2973 = vld [vmem:[%s2960 + $0x60] sm:$0xff]
        %v2974 = vld [vmem:[%s2960 + $0x68] sm:$0xff]
        %v2975 = vld [vmem:[%s2960 + $0x70] sm:$0xff]
        %v2976 = vld [vmem:[%s2960 + $0x78] sm:$0xff]
        %v2977 = vlaneseq
        %v2978 = vshrl.u32 %v2977, 7
        %v2979 = vsub.s32 3, %v2978
        %v2980 = vrot.slane %v1651, %v2979
        %v2981 = vmul.f32 %v2961, %v2980
        %v2982 = vmul.f32 %v2962, %v2980
        %v2983 = vmul.f32 %v2963, %v2980
        %v2984 = vmul.f32 %v2964, %v2980
        %v2985 = vmul.f32 %v2965, %v2980
        %v2986 = vmul.f32 %v2966, %v2980
        %v2987 = vmul.f32 %v2967, %v2980
        %v2988 = vmul.f32 %v2968, %v2980
        %v2989 = vmul.f32 %v2969, %v2980
        %v2990 = vmul.f32 %v2970, %v2980
        %v2991 = vmul.f32 %v2971, %v2980
        %v2992 = vmul.f32 %v2972, %v2980
        %v2993 = vmul.f32 %v2973, %v2980
        %v2994 = vmul.f32 %v2974, %v2980
        %v2995 = vmul.f32 %v2975, %v2980
        %v2996 = vmul.f32 %v2976, %v2980
        %v2997 = vadd.f32 %v2944, %v2981
        %v2998 = vadd.f32 %v2945, %v2982
        %v2999 = vadd.f32 %v2946, %v2983
        %v3000 = vadd.f32 %v2947, %v2984
        %v3001 = vadd.f32 %v2948, %v2985
        %v3002 = vadd.f32 %v2949, %v2986
        %v3003 = vadd.f32 %v2950, %v2987
        %v3004 = vadd.f32 %v2951, %v2988
        %v3005 = vadd.f32 %v2952, %v2989
        %v3006 = vadd.f32 %v2953, %v2990
        %v3007 = vadd.f32 %v2954, %v2991
        %v3008 = vadd.f32 %v2955, %v2992
        %v3009 = vadd.f32 %v2956, %v2993
        %v3010 = vadd.f32 %v2957, %v2994
        %v3011 = vadd.f32 %v2958, %v2995
        %v3012 = vadd.f32 %v2959, %v2996
        %s3013 = scalar_lea.vmem [#allocation3], 928
        %v3014 = vld [vmem:[%s3013] sm:$0xff]
        %v3015 = vld [vmem:[%s3013 + $0x8] sm:$0xff]
        %v3016 = vld [vmem:[%s3013 + $0x10] sm:$0xff]
        %v3017 = vld [vmem:[%s3013 + $0x18] sm:$0xff]
        %v3018 = vld [vmem:[%s3013 + $0x20] sm:$0xff]
        %v3019 = vld [vmem:[%s3013 + $0x28] sm:$0xff]
        %v3020 = vld [vmem:[%s3013 + $0x30] sm:$0xff]
        %v3021 = vld [vmem:[%s3013 + $0x38] sm:$0xff]
        %v3022 = vld [vmem:[%s3013 + $0x40] sm:$0xff]
        %v3023 = vld [vmem:[%s3013 + $0x48] sm:$0xff]
        %v3024 = vld [vmem:[%s3013 + $0x50] sm:$0xff]
        %v3025 = vld [vmem:[%s3013 + $0x58] sm:$0xff]
        %v3026 = vld [vmem:[%s3013 + $0x60] sm:$0xff]
        %v3027 = vld [vmem:[%s3013 + $0x68] sm:$0xff]
        %v3028 = vld [vmem:[%s3013 + $0x70] sm:$0xff]
        %v3029 = vld [vmem:[%s3013 + $0x78] sm:$0xff]
        %v3030 = vlaneseq
        %v3031 = vshrl.u32 %v3030, 7
        %v3032 = vsub.s32 4, %v3031
        %v3033 = vrot.slane %v1651, %v3032
        %v3034 = vmul.f32 %v3014, %v3033
        %v3035 = vmul.f32 %v3015, %v3033
        %v3036 = vmul.f32 %v3016, %v3033
        %v3037 = vmul.f32 %v3017, %v3033
        %v3038 = vmul.f32 %v3018, %v3033
        %v3039 = vmul.f32 %v3019, %v3033
        %v3040 = vmul.f32 %v3020, %v3033
        %v3041 = vmul.f32 %v3021, %v3033
        %v3042 = vmul.f32 %v3022, %v3033
        %v3043 = vmul.f32 %v3023, %v3033
        %v3044 = vmul.f32 %v3024, %v3033
        %v3045 = vmul.f32 %v3025, %v3033
        %v3046 = vmul.f32 %v3026, %v3033
        %v3047 = vmul.f32 %v3027, %v3033
        %v3048 = vmul.f32 %v3028, %v3033
        %v3049 = vmul.f32 %v3029, %v3033
        %v3050 = vadd.f32 %v2997, %v3034
        %v3051 = vadd.f32 %v2998, %v3035
        %v3052 = vadd.f32 %v2999, %v3036
        %v3053 = vadd.f32 %v3000, %v3037
        %v3054 = vadd.f32 %v3001, %v3038
        %v3055 = vadd.f32 %v3002, %v3039
        %v3056 = vadd.f32 %v3003, %v3040
        %v3057 = vadd.f32 %v3004, %v3041
        %v3058 = vadd.f32 %v3005, %v3042
        %v3059 = vadd.f32 %v3006, %v3043
        %v3060 = vadd.f32 %v3007, %v3044
        %v3061 = vadd.f32 %v3008, %v3045
        %v3062 = vadd.f32 %v3009, %v3046
        %v3063 = vadd.f32 %v3010, %v3047
        %v3064 = vadd.f32 %v3011, %v3048
        %v3065 = vadd.f32 %v3012, %v3049
        %s3066 = scalar_lea.vmem [#allocation3], 1152
        %v3067 = vld [vmem:[%s3066] sm:$0xff]
        %v3068 = vld [vmem:[%s3066 + $0x8] sm:$0xff]
        %v3069 = vld [vmem:[%s3066 + $0x10] sm:$0xff]
        %v3070 = vld [vmem:[%s3066 + $0x18] sm:$0xff]
        %v3071 = vld [vmem:[%s3066 + $0x20] sm:$0xff]
        %v3072 = vld [vmem:[%s3066 + $0x28] sm:$0xff]
        %v3073 = vld [vmem:[%s3066 + $0x30] sm:$0xff]
        %v3074 = vld [vmem:[%s3066 + $0x38] sm:$0xff]
        %v3075 = vld [vmem:[%s3066 + $0x40] sm:$0xff]
        %v3076 = vld [vmem:[%s3066 + $0x48] sm:$0xff]
        %v3077 = vld [vmem:[%s3066 + $0x50] sm:$0xff]
        %v3078 = vld [vmem:[%s3066 + $0x58] sm:$0xff]
        %v3079 = vld [vmem:[%s3066 + $0x60] sm:$0xff]
        %v3080 = vld [vmem:[%s3066 + $0x68] sm:$0xff]
        %v3081 = vld [vmem:[%s3066 + $0x70] sm:$0xff]
        %v3082 = vld [vmem:[%s3066 + $0x78] sm:$0xff]
        %v3083 = vlaneseq
        %v3084 = vshrl.u32 %v3083, 7
        %v3085 = vsub.s32 5, %v3084
        %v3086 = vrot.slane %v1651, %v3085
        %v3087 = vmul.f32 %v3067, %v3086
        %v3088 = vmul.f32 %v3068, %v3086
        %v3089 = vmul.f32 %v3069, %v3086
        %v3090 = vmul.f32 %v3070, %v3086
        %v3091 = vmul.f32 %v3071, %v3086
        %v3092 = vmul.f32 %v3072, %v3086
        %v3093 = vmul.f32 %v3073, %v3086
        %v3094 = vmul.f32 %v3074, %v3086
        %v3095 = vmul.f32 %v3075, %v3086
        %v3096 = vmul.f32 %v3076, %v3086
        %v3097 = vmul.f32 %v3077, %v3086
        %v3098 = vmul.f32 %v3078, %v3086
        %v3099 = vmul.f32 %v3079, %v3086
        %v3100 = vmul.f32 %v3080, %v3086
        %v3101 = vmul.f32 %v3081, %v3086
        %v3102 = vmul.f32 %v3082, %v3086
        %v3103 = vadd.f32 %v3050, %v3087
        %v3104 = vadd.f32 %v3051, %v3088
        %v3105 = vadd.f32 %v3052, %v3089
        %v3106 = vadd.f32 %v3053, %v3090
        %v3107 = vadd.f32 %v3054, %v3091
        %v3108 = vadd.f32 %v3055, %v3092
        %v3109 = vadd.f32 %v3056, %v3093
        %v3110 = vadd.f32 %v3057, %v3094
        %v3111 = vadd.f32 %v3058, %v3095
        %v3112 = vadd.f32 %v3059, %v3096
        %v3113 = vadd.f32 %v3060, %v3097
        %v3114 = vadd.f32 %v3061, %v3098
        %v3115 = vadd.f32 %v3062, %v3099
        %v3116 = vadd.f32 %v3063, %v3100
        %v3117 = vadd.f32 %v3064, %v3101
        %v3118 = vadd.f32 %v3065, %v3102
        %s3119 = scalar_lea.vmem [#allocation3], 1376
        %v3120 = vld [vmem:[%s3119] sm:$0xff]
        %v3121 = vld [vmem:[%s3119 + $0x8] sm:$0xff]
        %v3122 = vld [vmem:[%s3119 + $0x10] sm:$0xff]
        %v3123 = vld [vmem:[%s3119 + $0x18] sm:$0xff]
        %v3124 = vld [vmem:[%s3119 + $0x20] sm:$0xff]
        %v3125 = vld [vmem:[%s3119 + $0x28] sm:$0xff]
        %v3126 = vld [vmem:[%s3119 + $0x30] sm:$0xff]
        %v3127 = vld [vmem:[%s3119 + $0x38] sm:$0xff]
        %v3128 = vld [vmem:[%s3119 + $0x40] sm:$0xff]
        %v3129 = vld [vmem:[%s3119 + $0x48] sm:$0xff]
        %v3130 = vld [vmem:[%s3119 + $0x50] sm:$0xff]
        %v3131 = vld [vmem:[%s3119 + $0x58] sm:$0xff]
        %v3132 = vld [vmem:[%s3119 + $0x60] sm:$0xff]
        %v3133 = vld [vmem:[%s3119 + $0x68] sm:$0xff]
        %v3134 = vld [vmem:[%s3119 + $0x70] sm:$0xff]
        %v3135 = vld [vmem:[%s3119 + $0x78] sm:$0xff]
        %v3136 = vlaneseq
        %v3137 = vshrl.u32 %v3136, 7
        %v3138 = vsub.s32 6, %v3137
        %v3139 = vrot.slane %v1651, %v3138
        %v3140 = vmul.f32 %v3120, %v3139
        %v3141 = vmul.f32 %v3121, %v3139
        %v3142 = vmul.f32 %v3122, %v3139
        %v3143 = vmul.f32 %v3123, %v3139
        %v3144 = vmul.f32 %v3124, %v3139
        %v3145 = vmul.f32 %v3125, %v3139
        %v3146 = vmul.f32 %v3126, %v3139
        %v3147 = vmul.f32 %v3127, %v3139
        %v3148 = vmul.f32 %v3128, %v3139
        %v3149 = vmul.f32 %v3129, %v3139
        %v3150 = vmul.f32 %v3130, %v3139
        %v3151 = vmul.f32 %v3131, %v3139
        %v3152 = vmul.f32 %v3132, %v3139
        %v3153 = vmul.f32 %v3133, %v3139
        %v3154 = vmul.f32 %v3134, %v3139
        %v3155 = vmul.f32 %v3135, %v3139
        %v3156 = vadd.f32 %v3103, %v3140
        %v3157 = vadd.f32 %v3104, %v3141
        %v3158 = vadd.f32 %v3105, %v3142
        %v3159 = vadd.f32 %v3106, %v3143
        %v3160 = vadd.f32 %v3107, %v3144
        %v3161 = vadd.f32 %v3108, %v3145
        %v3162 = vadd.f32 %v3109, %v3146
        %v3163 = vadd.f32 %v3110, %v3147
        %v3164 = vadd.f32 %v3111, %v3148
        %v3165 = vadd.f32 %v3112, %v3149
        %v3166 = vadd.f32 %v3113, %v3150
        %v3167 = vadd.f32 %v3114, %v3151
        %v3168 = vadd.f32 %v3115, %v3152
        %v3169 = vadd.f32 %v3116, %v3153
        %v3170 = vadd.f32 %v3117, %v3154
        %v3171 = vadd.f32 %v3118, %v3155
        %s3172 = scalar_lea.vmem [#allocation3], 48
        %v3173 = vld [vmem:[%s3172] sm:$0xff]
        %v3174 = vld [vmem:[%s3172 + $0x8] sm:$0xff]
        %v3175 = vld [vmem:[%s3172 + $0x10] sm:$0xff]
        %v3176 = vld [vmem:[%s3172 + $0x18] sm:$0xff]
        %v3177 = vld [vmem:[%s3172 + $0x20] sm:$0xff]
        %v3178 = vld [vmem:[%s3172 + $0x28] sm:$0xff]
        %v3179 = vld [vmem:[%s3172 + $0x30] sm:$0xff]
        %v3180 = vld [vmem:[%s3172 + $0x38] sm:$0xff]
        %v3181 = vld [vmem:[%s3172 + $0x40] sm:$0xff]
        %v3182 = vld [vmem:[%s3172 + $0x48] sm:$0xff]
        %v3183 = vld [vmem:[%s3172 + $0x50] sm:$0xff]
        %v3184 = vld [vmem:[%s3172 + $0x58] sm:$0xff]
        %v3185 = vld [vmem:[%s3172 + $0x60] sm:$0xff]
        %v3186 = vld [vmem:[%s3172 + $0x68] sm:$0xff]
        %v3187 = vld [vmem:[%s3172 + $0x70] sm:$0xff]
        %v3188 = vld [vmem:[%s3172 + $0x78] sm:$0xff]
        %v3189 = vlaneseq
        %v3190 = vshrl.u32 %v3189, 7
        %v3191 = vsub.s32 0, %v3190
        %v3192 = vrot.slane %v1652, %v3191
        %v3193 = vmul.f32 %v3173, %v3192
        %v3194 = vmul.f32 %v3174, %v3192
        %v3195 = vmul.f32 %v3175, %v3192
        %v3196 = vmul.f32 %v3176, %v3192
        %v3197 = vmul.f32 %v3177, %v3192
        %v3198 = vmul.f32 %v3178, %v3192
        %v3199 = vmul.f32 %v3179, %v3192
        %v3200 = vmul.f32 %v3180, %v3192
        %v3201 = vmul.f32 %v3181, %v3192
        %v3202 = vmul.f32 %v3182, %v3192
        %v3203 = vmul.f32 %v3183, %v3192
        %v3204 = vmul.f32 %v3184, %v3192
        %v3205 = vmul.f32 %v3185, %v3192
        %v3206 = vmul.f32 %v3186, %v3192
        %v3207 = vmul.f32 %v3187, %v3192
        %v3208 = vmul.f32 %v3188, %v3192
        %v3209 = vadd.f32 %v3156, %v3193
        %v3210 = vadd.f32 %v3157, %v3194
        %v3211 = vadd.f32 %v3158, %v3195
        %v3212 = vadd.f32 %v3159, %v3196
        %v3213 = vadd.f32 %v3160, %v3197
        %v3214 = vadd.f32 %v3161, %v3198
        %v3215 = vadd.f32 %v3162, %v3199
        %v3216 = vadd.f32 %v3163, %v3200
        %v3217 = vadd.f32 %v3164, %v3201
        %v3218 = vadd.f32 %v3165, %v3202
        %v3219 = vadd.f32 %v3166, %v3203
        %v3220 = vadd.f32 %v3167, %v3204
        %v3221 = vadd.f32 %v3168, %v3205
        %v3222 = vadd.f32 %v3169, %v3206
        %v3223 = vadd.f32 %v3170, %v3207
        %v3224 = vadd.f32 %v3171, %v3208
        %s3225 = scalar_lea.vmem [#allocation3], 272
        %v3226 = vld [vmem:[%s3225] sm:$0xff]
        %v3227 = vld [vmem:[%s3225 + $0x8] sm:$0xff]
        %v3228 = vld [vmem:[%s3225 + $0x10] sm:$0xff]
        %v3229 = vld [vmem:[%s3225 + $0x18] sm:$0xff]
        %v3230 = vld [vmem:[%s3225 + $0x20] sm:$0xff]
        %v3231 = vld [vmem:[%s3225 + $0x28] sm:$0xff]
        %v3232 = vld [vmem:[%s3225 + $0x30] sm:$0xff]
        %v3233 = vld [vmem:[%s3225 + $0x38] sm:$0xff]
        %v3234 = vld [vmem:[%s3225 + $0x40] sm:$0xff]
        %v3235 = vld [vmem:[%s3225 + $0x48] sm:$0xff]
        %v3236 = vld [vmem:[%s3225 + $0x50] sm:$0xff]
        %v3237 = vld [vmem:[%s3225 + $0x58] sm:$0xff]
        %v3238 = vld [vmem:[%s3225 + $0x60] sm:$0xff]
        %v3239 = vld [vmem:[%s3225 + $0x68] sm:$0xff]
        %v3240 = vld [vmem:[%s3225 + $0x70] sm:$0xff]
        %v3241 = vld [vmem:[%s3225 + $0x78] sm:$0xff]
        %v3242 = vlaneseq
        %v3243 = vshrl.u32 %v3242, 7
        %v3244 = vsub.s32 1, %v3243
        %v3245 = vrot.slane %v1652, %v3244
        %v3246 = vmul.f32 %v3226, %v3245
        %v3247 = vmul.f32 %v3227, %v3245
        %v3248 = vmul.f32 %v3228, %v3245
        %v3249 = vmul.f32 %v3229, %v3245
        %v3250 = vmul.f32 %v3230, %v3245
        %v3251 = vmul.f32 %v3231, %v3245
        %v3252 = vmul.f32 %v3232, %v3245
        %v3253 = vmul.f32 %v3233, %v3245
        %v3254 = vmul.f32 %v3234, %v3245
        %v3255 = vmul.f32 %v3235, %v3245
        %v3256 = vmul.f32 %v3236, %v3245
        %v3257 = vmul.f32 %v3237, %v3245
        %v3258 = vmul.f32 %v3238, %v3245
        %v3259 = vmul.f32 %v3239, %v3245
        %v3260 = vmul.f32 %v3240, %v3245
        %v3261 = vmul.f32 %v3241, %v3245
        %v3262 = vadd.f32 %v3209, %v3246
        %v3263 = vadd.f32 %v3210, %v3247
        %v3264 = vadd.f32 %v3211, %v3248
        %v3265 = vadd.f32 %v3212, %v3249
        %v3266 = vadd.f32 %v3213, %v3250
        %v3267 = vadd.f32 %v3214, %v3251
        %v3268 = vadd.f32 %v3215, %v3252
        %v3269 = vadd.f32 %v3216, %v3253
        %v3270 = vadd.f32 %v3217, %v3254
        %v3271 = vadd.f32 %v3218, %v3255
        %v3272 = vadd.f32 %v3219, %v3256
        %v3273 = vadd.f32 %v3220, %v3257
        %v3274 = vadd.f32 %v3221, %v3258
        %v3275 = vadd.f32 %v3222, %v3259
        %v3276 = vadd.f32 %v3223, %v3260
        %v3277 = vadd.f32 %v3224, %v3261
        %s3278 = scalar_lea.vmem [#allocation3], 496
        %v3279 = vld [vmem:[%s3278] sm:$0xff]
        %v3280 = vld [vmem:[%s3278 + $0x8] sm:$0xff]
        %v3281 = vld [vmem:[%s3278 + $0x10] sm:$0xff]
        %v3282 = vld [vmem:[%s3278 + $0x18] sm:$0xff]
        %v3283 = vld [vmem:[%s3278 + $0x20] sm:$0xff]
        %v3284 = vld [vmem:[%s3278 + $0x28] sm:$0xff]
        %v3285 = vld [vmem:[%s3278 + $0x30] sm:$0xff]
        %v3286 = vld [vmem:[%s3278 + $0x38] sm:$0xff]
        %v3287 = vld [vmem:[%s3278 + $0x40] sm:$0xff]
        %v3288 = vld [vmem:[%s3278 + $0x48] sm:$0xff]
        %v3289 = vld [vmem:[%s3278 + $0x50] sm:$0xff]
        %v3290 = vld [vmem:[%s3278 + $0x58] sm:$0xff]
        %v3291 = vld [vmem:[%s3278 + $0x60] sm:$0xff]
        %v3292 = vld [vmem:[%s3278 + $0x68] sm:$0xff]
        %v3293 = vld [vmem:[%s3278 + $0x70] sm:$0xff]
        %v3294 = vld [vmem:[%s3278 + $0x78] sm:$0xff]
        %v3295 = vlaneseq
        %v3296 = vshrl.u32 %v3295, 7
        %v3297 = vsub.s32 2, %v3296
        %v3298 = vrot.slane %v1652, %v3297
        %v3299 = vmul.f32 %v3279, %v3298
        %v3300 = vmul.f32 %v3280, %v3298
        %v3301 = vmul.f32 %v3281, %v3298
        %v3302 = vmul.f32 %v3282, %v3298
        %v3303 = vmul.f32 %v3283, %v3298
        %v3304 = vmul.f32 %v3284, %v3298
        %v3305 = vmul.f32 %v3285, %v3298
        %v3306 = vmul.f32 %v3286, %v3298
        %v3307 = vmul.f32 %v3287, %v3298
        %v3308 = vmul.f32 %v3288, %v3298
        %v3309 = vmul.f32 %v3289, %v3298
        %v3310 = vmul.f32 %v3290, %v3298
        %v3311 = vmul.f32 %v3291, %v3298
        %v3312 = vmul.f32 %v3292, %v3298
        %v3313 = vmul.f32 %v3293, %v3298
        %v3314 = vmul.f32 %v3294, %v3298
        %v3315 = vadd.f32 %v3262, %v3299
        %v3316 = vadd.f32 %v3263, %v3300
        %v3317 = vadd.f32 %v3264, %v3301
        %v3318 = vadd.f32 %v3265, %v3302
        %v3319 = vadd.f32 %v3266, %v3303
        %v3320 = vadd.f32 %v3267, %v3304
        %v3321 = vadd.f32 %v3268, %v3305
        %v3322 = vadd.f32 %v3269, %v3306
        %v3323 = vadd.f32 %v3270, %v3307
        %v3324 = vadd.f32 %v3271, %v3308
        %v3325 = vadd.f32 %v3272, %v3309
        %v3326 = vadd.f32 %v3273, %v3310
        %v3327 = vadd.f32 %v3274, %v3311
        %v3328 = vadd.f32 %v3275, %v3312
        %v3329 = vadd.f32 %v3276, %v3313
        %v3330 = vadd.f32 %v3277, %v3314
        %s3331 = scalar_lea.vmem [#allocation3], 720
        %v3332 = vld [vmem:[%s3331] sm:$0xff]
        %v3333 = vld [vmem:[%s3331 + $0x8] sm:$0xff]
        %v3334 = vld [vmem:[%s3331 + $0x10] sm:$0xff]
        %v3335 = vld [vmem:[%s3331 + $0x18] sm:$0xff]
        %v3336 = vld [vmem:[%s3331 + $0x20] sm:$0xff]
        %v3337 = vld [vmem:[%s3331 + $0x28] sm:$0xff]
        %v3338 = vld [vmem:[%s3331 + $0x30] sm:$0xff]
        %v3339 = vld [vmem:[%s3331 + $0x38] sm:$0xff]
        %v3340 = vld [vmem:[%s3331 + $0x40] sm:$0xff]
        %v3341 = vld [vmem:[%s3331 + $0x48] sm:$0xff]
        %v3342 = vld [vmem:[%s3331 + $0x50] sm:$0xff]
        %v3343 = vld [vmem:[%s3331 + $0x58] sm:$0xff]
        %v3344 = vld [vmem:[%s3331 + $0x60] sm:$0xff]
        %v3345 = vld [vmem:[%s3331 + $0x68] sm:$0xff]
        %v3346 = vld [vmem:[%s3331 + $0x70] sm:$0xff]
        %v3347 = vld [vmem:[%s3331 + $0x78] sm:$0xff]
        %v3348 = vlaneseq
        %v3349 = vshrl.u32 %v3348, 7
        %v3350 = vsub.s32 3, %v3349
        %v3351 = vrot.slane %v1652, %v3350
        %v3352 = vmul.f32 %v3332, %v3351
        %v3353 = vmul.f32 %v3333, %v3351
        %v3354 = vmul.f32 %v3334, %v3351
        %v3355 = vmul.f32 %v3335, %v3351
        %v3356 = vmul.f32 %v3336, %v3351
        %v3357 = vmul.f32 %v3337, %v3351
        %v3358 = vmul.f32 %v3338, %v3351
        %v3359 = vmul.f32 %v3339, %v3351
        %v3360 = vmul.f32 %v3340, %v3351
        %v3361 = vmul.f32 %v3341, %v3351
        %v3362 = vmul.f32 %v3342, %v3351
        %v3363 = vmul.f32 %v3343, %v3351
        %v3364 = vmul.f32 %v3344, %v3351
        %v3365 = vmul.f32 %v3345, %v3351
        %v3366 = vmul.f32 %v3346, %v3351
        %v3367 = vmul.f32 %v3347, %v3351
        %v3368 = vadd.f32 %v3315, %v3352
        %v3369 = vadd.f32 %v3316, %v3353
        %v3370 = vadd.f32 %v3317, %v3354
        %v3371 = vadd.f32 %v3318, %v3355
        %v3372 = vadd.f32 %v3319, %v3356
        %v3373 = vadd.f32 %v3320, %v3357
        %v3374 = vadd.f32 %v3321, %v3358
        %v3375 = vadd.f32 %v3322, %v3359
        %v3376 = vadd.f32 %v3323, %v3360
        %v3377 = vadd.f32 %v3324, %v3361
        %v3378 = vadd.f32 %v3325, %v3362
        %v3379 = vadd.f32 %v3326, %v3363
        %v3380 = vadd.f32 %v3327, %v3364
        %v3381 = vadd.f32 %v3328, %v3365
        %v3382 = vadd.f32 %v3329, %v3366
        %v3383 = vadd.f32 %v3330, %v3367
        %s3384 = scalar_lea.vmem [#allocation3], 944
        %v3385 = vld [vmem:[%s3384] sm:$0xff]
        %v3386 = vld [vmem:[%s3384 + $0x8] sm:$0xff]
        %v3387 = vld [vmem:[%s3384 + $0x10] sm:$0xff]
        %v3388 = vld [vmem:[%s3384 + $0x18] sm:$0xff]
        %v3389 = vld [vmem:[%s3384 + $0x20] sm:$0xff]
        %v3390 = vld [vmem:[%s3384 + $0x28] sm:$0xff]
        %v3391 = vld [vmem:[%s3384 + $0x30] sm:$0xff]
        %v3392 = vld [vmem:[%s3384 + $0x38] sm:$0xff]
        %v3393 = vld [vmem:[%s3384 + $0x40] sm:$0xff]
        %v3394 = vld [vmem:[%s3384 + $0x48] sm:$0xff]
        %v3395 = vld [vmem:[%s3384 + $0x50] sm:$0xff]
        %v3396 = vld [vmem:[%s3384 + $0x58] sm:$0xff]
        %v3397 = vld [vmem:[%s3384 + $0x60] sm:$0xff]
        %v3398 = vld [vmem:[%s3384 + $0x68] sm:$0xff]
        %v3399 = vld [vmem:[%s3384 + $0x70] sm:$0xff]
        %v3400 = vld [vmem:[%s3384 + $0x78] sm:$0xff]
        %v3401 = vlaneseq
        %v3402 = vshrl.u32 %v3401, 7
        %v3403 = vsub.s32 4, %v3402
        %v3404 = vrot.slane %v1652, %v3403
        %v3405 = vmul.f32 %v3385, %v3404
        %v3406 = vmul.f32 %v3386, %v3404
        %v3407 = vmul.f32 %v3387, %v3404
        %v3408 = vmul.f32 %v3388, %v3404
        %v3409 = vmul.f32 %v3389, %v3404
        %v3410 = vmul.f32 %v3390, %v3404
        %v3411 = vmul.f32 %v3391, %v3404
        %v3412 = vmul.f32 %v3392, %v3404
        %v3413 = vmul.f32 %v3393, %v3404
        %v3414 = vmul.f32 %v3394, %v3404
        %v3415 = vmul.f32 %v3395, %v3404
        %v3416 = vmul.f32 %v3396, %v3404
        %v3417 = vmul.f32 %v3397, %v3404
        %v3418 = vmul.f32 %v3398, %v3404
        %v3419 = vmul.f32 %v3399, %v3404
        %v3420 = vmul.f32 %v3400, %v3404
        %v3421 = vadd.f32 %v3368, %v3405
        %v3422 = vadd.f32 %v3369, %v3406
        %v3423 = vadd.f32 %v3370, %v3407
        %v3424 = vadd.f32 %v3371, %v3408
        %v3425 = vadd.f32 %v3372, %v3409
        %v3426 = vadd.f32 %v3373, %v3410
        %v3427 = vadd.f32 %v3374, %v3411
        %v3428 = vadd.f32 %v3375, %v3412
        %v3429 = vadd.f32 %v3376, %v3413
        %v3430 = vadd.f32 %v3377, %v3414
        %v3431 = vadd.f32 %v3378, %v3415
        %v3432 = vadd.f32 %v3379, %v3416
        %v3433 = vadd.f32 %v3380, %v3417
        %v3434 = vadd.f32 %v3381, %v3418
        %v3435 = vadd.f32 %v3382, %v3419
        %v3436 = vadd.f32 %v3383, %v3420
        %s3437 = scalar_lea.vmem [#allocation3], 1168
        %v3438 = vld [vmem:[%s3437] sm:$0xff]
        %v3439 = vld [vmem:[%s3437 + $0x8] sm:$0xff]
        %v3440 = vld [vmem:[%s3437 + $0x10] sm:$0xff]
        %v3441 = vld [vmem:[%s3437 + $0x18] sm:$0xff]
        %v3442 = vld [vmem:[%s3437 + $0x20] sm:$0xff]
        %v3443 = vld [vmem:[%s3437 + $0x28] sm:$0xff]
        %v3444 = vld [vmem:[%s3437 + $0x30] sm:$0xff]
        %v3445 = vld [vmem:[%s3437 + $0x38] sm:$0xff]
        %v3446 = vld [vmem:[%s3437 + $0x40] sm:$0xff]
        %v3447 = vld [vmem:[%s3437 + $0x48] sm:$0xff]
        %v3448 = vld [vmem:[%s3437 + $0x50] sm:$0xff]
        %v3449 = vld [vmem:[%s3437 + $0x58] sm:$0xff]
        %v3450 = vld [vmem:[%s3437 + $0x60] sm:$0xff]
        %v3451 = vld [vmem:[%s3437 + $0x68] sm:$0xff]
        %v3452 = vld [vmem:[%s3437 + $0x70] sm:$0xff]
        %v3453 = vld [vmem:[%s3437 + $0x78] sm:$0xff]
        %v3454 = vlaneseq
        %v3455 = vshrl.u32 %v3454, 7
        %v3456 = vsub.s32 5, %v3455
        %v3457 = vrot.slane %v1652, %v3456
        %v3458 = vmul.f32 %v3438, %v3457
        %v3459 = vmul.f32 %v3439, %v3457
        %v3460 = vmul.f32 %v3440, %v3457
        %v3461 = vmul.f32 %v3441, %v3457
        %v3462 = vmul.f32 %v3442, %v3457
        %v3463 = vmul.f32 %v3443, %v3457
        %v3464 = vmul.f32 %v3444, %v3457
        %v3465 = vmul.f32 %v3445, %v3457
        %v3466 = vmul.f32 %v3446, %v3457
        %v3467 = vmul.f32 %v3447, %v3457
        %v3468 = vmul.f32 %v3448, %v3457
        %v3469 = vmul.f32 %v3449, %v3457
        %v3470 = vmul.f32 %v3450, %v3457
        %v3471 = vmul.f32 %v3451, %v3457
        %v3472 = vmul.f32 %v3452, %v3457
        %v3473 = vmul.f32 %v3453, %v3457
        %v3474 = vadd.f32 %v3421, %v3458
        %v3475 = vadd.f32 %v3422, %v3459
        %v3476 = vadd.f32 %v3423, %v3460
        %v3477 = vadd.f32 %v3424, %v3461
        %v3478 = vadd.f32 %v3425, %v3462
        %v3479 = vadd.f32 %v3426, %v3463
        %v3480 = vadd.f32 %v3427, %v3464
        %v3481 = vadd.f32 %v3428, %v3465
        %v3482 = vadd.f32 %v3429, %v3466
        %v3483 = vadd.f32 %v3430, %v3467
        %v3484 = vadd.f32 %v3431, %v3468
        %v3485 = vadd.f32 %v3432, %v3469
        %v3486 = vadd.f32 %v3433, %v3470
        %v3487 = vadd.f32 %v3434, %v3471
        %v3488 = vadd.f32 %v3435, %v3472
        %v3489 = vadd.f32 %v3436, %v3473
        %s3490 = scalar_lea.vmem [#allocation3], 1392
        %v3491 = vld [vmem:[%s3490] sm:$0xff]
        %v3492 = vld [vmem:[%s3490 + $0x8] sm:$0xff]
        %v3493 = vld [vmem:[%s3490 + $0x10] sm:$0xff]
        %v3494 = vld [vmem:[%s3490 + $0x18] sm:$0xff]
        %v3495 = vld [vmem:[%s3490 + $0x20] sm:$0xff]
        %v3496 = vld [vmem:[%s3490 + $0x28] sm:$0xff]
        %v3497 = vld [vmem:[%s3490 + $0x30] sm:$0xff]
        %v3498 = vld [vmem:[%s3490 + $0x38] sm:$0xff]
        %v3499 = vld [vmem:[%s3490 + $0x40] sm:$0xff]
        %v3500 = vld [vmem:[%s3490 + $0x48] sm:$0xff]
        %v3501 = vld [vmem:[%s3490 + $0x50] sm:$0xff]
        %v3502 = vld [vmem:[%s3490 + $0x58] sm:$0xff]
        %v3503 = vld [vmem:[%s3490 + $0x60] sm:$0xff]
        %v3504 = vld [vmem:[%s3490 + $0x68] sm:$0xff]
        %v3505 = vld [vmem:[%s3490 + $0x70] sm:$0xff]
        %v3506 = vld [vmem:[%s3490 + $0x78] sm:$0xff]
        %v3507 = vlaneseq
        %v3508 = vshrl.u32 %v3507, 7
        %v3509 = vsub.s32 6, %v3508
        %v3510 = vrot.slane %v1652, %v3509
        %v3511 = vmul.f32 %v3491, %v3510
        %v3512 = vmul.f32 %v3492, %v3510
        %v3513 = vmul.f32 %v3493, %v3510
        %v3514 = vmul.f32 %v3494, %v3510
        %v3515 = vmul.f32 %v3495, %v3510
        %v3516 = vmul.f32 %v3496, %v3510
        %v3517 = vmul.f32 %v3497, %v3510
        %v3518 = vmul.f32 %v3498, %v3510
        %v3519 = vmul.f32 %v3499, %v3510
        %v3520 = vmul.f32 %v3500, %v3510
        %v3521 = vmul.f32 %v3501, %v3510
        %v3522 = vmul.f32 %v3502, %v3510
        %v3523 = vmul.f32 %v3503, %v3510
        %v3524 = vmul.f32 %v3504, %v3510
        %v3525 = vmul.f32 %v3505, %v3510
        %v3526 = vmul.f32 %v3506, %v3510
        %v3527 = vadd.f32 %v3474, %v3511
        %v3528 = vadd.f32 %v3475, %v3512
        %v3529 = vadd.f32 %v3476, %v3513
        %v3530 = vadd.f32 %v3477, %v3514
        %v3531 = vadd.f32 %v3478, %v3515
        %v3532 = vadd.f32 %v3479, %v3516
        %v3533 = vadd.f32 %v3480, %v3517
        %v3534 = vadd.f32 %v3481, %v3518
        %v3535 = vadd.f32 %v3482, %v3519
        %v3536 = vadd.f32 %v3483, %v3520
        %v3537 = vadd.f32 %v3484, %v3521
        %v3538 = vadd.f32 %v3485, %v3522
        %v3539 = vadd.f32 %v3486, %v3523
        %v3540 = vadd.f32 %v3487, %v3524
        %v3541 = vadd.f32 %v3488, %v3525
        %v3542 = vadd.f32 %v3489, %v3526
        %s3543 = scalar_lea.vmem [#allocation3], 64
        %v3544 = vld [vmem:[%s3543] sm:$0xff]
        %v3545 = vld [vmem:[%s3543 + $0x8] sm:$0xff]
        %v3546 = vld [vmem:[%s3543 + $0x10] sm:$0xff]
        %v3547 = vld [vmem:[%s3543 + $0x18] sm:$0xff]
        %v3548 = vld [vmem:[%s3543 + $0x20] sm:$0xff]
        %v3549 = vld [vmem:[%s3543 + $0x28] sm:$0xff]
        %v3550 = vld [vmem:[%s3543 + $0x30] sm:$0xff]
        %v3551 = vld [vmem:[%s3543 + $0x38] sm:$0xff]
        %v3552 = vld [vmem:[%s3543 + $0x40] sm:$0xff]
        %v3553 = vld [vmem:[%s3543 + $0x48] sm:$0xff]
        %v3554 = vld [vmem:[%s3543 + $0x50] sm:$0xff]
        %v3555 = vld [vmem:[%s3543 + $0x58] sm:$0xff]
        %v3556 = vld [vmem:[%s3543 + $0x60] sm:$0xff]
        %v3557 = vld [vmem:[%s3543 + $0x68] sm:$0xff]
        %v3558 = vld [vmem:[%s3543 + $0x70] sm:$0xff]
        %v3559 = vld [vmem:[%s3543 + $0x78] sm:$0xff]
        %v3560 = vlaneseq
        %v3561 = vshrl.u32 %v3560, 7
        %v3562 = vsub.s32 0, %v3561
        %v3563 = vrot.slane %v1653, %v3562
        %v3564 = vmul.f32 %v3544, %v3563
        %v3565 = vmul.f32 %v3545, %v3563
        %v3566 = vmul.f32 %v3546, %v3563
        %v3567 = vmul.f32 %v3547, %v3563
        %v3568 = vmul.f32 %v3548, %v3563
        %v3569 = vmul.f32 %v3549, %v3563
        %v3570 = vmul.f32 %v3550, %v3563
        %v3571 = vmul.f32 %v3551, %v3563
        %v3572 = vmul.f32 %v3552, %v3563
        %v3573 = vmul.f32 %v3553, %v3563
        %v3574 = vmul.f32 %v3554, %v3563
        %v3575 = vmul.f32 %v3555, %v3563
        %v3576 = vmul.f32 %v3556, %v3563
        %v3577 = vmul.f32 %v3557, %v3563
        %v3578 = vmul.f32 %v3558, %v3563
        %v3579 = vmul.f32 %v3559, %v3563
        %v3580 = vadd.f32 %v3527, %v3564
        %v3581 = vadd.f32 %v3528, %v3565
        %v3582 = vadd.f32 %v3529, %v3566
        %v3583 = vadd.f32 %v3530, %v3567
        %v3584 = vadd.f32 %v3531, %v3568
        %v3585 = vadd.f32 %v3532, %v3569
        %v3586 = vadd.f32 %v3533, %v3570
        %v3587 = vadd.f32 %v3534, %v3571
        %v3588 = vadd.f32 %v3535, %v3572
        %v3589 = vadd.f32 %v3536, %v3573
        %v3590 = vadd.f32 %v3537, %v3574
        %v3591 = vadd.f32 %v3538, %v3575
        %v3592 = vadd.f32 %v3539, %v3576
        %v3593 = vadd.f32 %v3540, %v3577
        %v3594 = vadd.f32 %v3541, %v3578
        %v3595 = vadd.f32 %v3542, %v3579
        %s3596 = scalar_lea.vmem [#allocation3], 288
        %v3597 = vld [vmem:[%s3596] sm:$0xff]
        %v3598 = vld [vmem:[%s3596 + $0x8] sm:$0xff]
        %v3599 = vld [vmem:[%s3596 + $0x10] sm:$0xff]
        %v3600 = vld [vmem:[%s3596 + $0x18] sm:$0xff]
        %v3601 = vld [vmem:[%s3596 + $0x20] sm:$0xff]
        %v3602 = vld [vmem:[%s3596 + $0x28] sm:$0xff]
        %v3603 = vld [vmem:[%s3596 + $0x30] sm:$0xff]
        %v3604 = vld [vmem:[%s3596 + $0x38] sm:$0xff]
        %v3605 = vld [vmem:[%s3596 + $0x40] sm:$0xff]
        %v3606 = vld [vmem:[%s3596 + $0x48] sm:$0xff]
        %v3607 = vld [vmem:[%s3596 + $0x50] sm:$0xff]
        %v3608 = vld [vmem:[%s3596 + $0x58] sm:$0xff]
        %v3609 = vld [vmem:[%s3596 + $0x60] sm:$0xff]
        %v3610 = vld [vmem:[%s3596 + $0x68] sm:$0xff]
        %v3611 = vld [vmem:[%s3596 + $0x70] sm:$0xff]
        %v3612 = vld [vmem:[%s3596 + $0x78] sm:$0xff]
        %v3613 = vlaneseq
        %v3614 = vshrl.u32 %v3613, 7
        %v3615 = vsub.s32 1, %v3614
        %v3616 = vrot.slane %v1653, %v3615
        %v3617 = vmul.f32 %v3597, %v3616
        %v3618 = vmul.f32 %v3598, %v3616
        %v3619 = vmul.f32 %v3599, %v3616
        %v3620 = vmul.f32 %v3600, %v3616
        %v3621 = vmul.f32 %v3601, %v3616
        %v3622 = vmul.f32 %v3602, %v3616
        %v3623 = vmul.f32 %v3603, %v3616
        %v3624 = vmul.f32 %v3604, %v3616
        %v3625 = vmul.f32 %v3605, %v3616
        %v3626 = vmul.f32 %v3606, %v3616
        %v3627 = vmul.f32 %v3607, %v3616
        %v3628 = vmul.f32 %v3608, %v3616
        %v3629 = vmul.f32 %v3609, %v3616
        %v3630 = vmul.f32 %v3610, %v3616
        %v3631 = vmul.f32 %v3611, %v3616
        %v3632 = vmul.f32 %v3612, %v3616
        %v3633 = vadd.f32 %v3580, %v3617
        %v3634 = vadd.f32 %v3581, %v3618
        %v3635 = vadd.f32 %v3582, %v3619
        %v3636 = vadd.f32 %v3583, %v3620
        %v3637 = vadd.f32 %v3584, %v3621
        %v3638 = vadd.f32 %v3585, %v3622
        %v3639 = vadd.f32 %v3586, %v3623
        %v3640 = vadd.f32 %v3587, %v3624
        %v3641 = vadd.f32 %v3588, %v3625
        %v3642 = vadd.f32 %v3589, %v3626
        %v3643 = vadd.f32 %v3590, %v3627
        %v3644 = vadd.f32 %v3591, %v3628
        %v3645 = vadd.f32 %v3592, %v3629
        %v3646 = vadd.f32 %v3593, %v3630
        %v3647 = vadd.f32 %v3594, %v3631
        %v3648 = vadd.f32 %v3595, %v3632
        %s3649 = scalar_lea.vmem [#allocation3], 512
        %v3650 = vld [vmem:[%s3649] sm:$0xff]
        %v3651 = vld [vmem:[%s3649 + $0x8] sm:$0xff]
        %v3652 = vld [vmem:[%s3649 + $0x10] sm:$0xff]
        %v3653 = vld [vmem:[%s3649 + $0x18] sm:$0xff]
        %v3654 = vld [vmem:[%s3649 + $0x20] sm:$0xff]
        %v3655 = vld [vmem:[%s3649 + $0x28] sm:$0xff]
        %v3656 = vld [vmem:[%s3649 + $0x30] sm:$0xff]
        %v3657 = vld [vmem:[%s3649 + $0x38] sm:$0xff]
        %v3658 = vld [vmem:[%s3649 + $0x40] sm:$0xff]
        %v3659 = vld [vmem:[%s3649 + $0x48] sm:$0xff]
        %v3660 = vld [vmem:[%s3649 + $0x50] sm:$0xff]
        %v3661 = vld [vmem:[%s3649 + $0x58] sm:$0xff]
        %v3662 = vld [vmem:[%s3649 + $0x60] sm:$0xff]
        %v3663 = vld [vmem:[%s3649 + $0x68] sm:$0xff]
        %v3664 = vld [vmem:[%s3649 + $0x70] sm:$0xff]
        %v3665 = vld [vmem:[%s3649 + $0x78] sm:$0xff]
        %v3666 = vlaneseq
        %v3667 = vshrl.u32 %v3666, 7
        %v3668 = vsub.s32 2, %v3667
        %v3669 = vrot.slane %v1653, %v3668
        %v3670 = vmul.f32 %v3650, %v3669
        %v3671 = vmul.f32 %v3651, %v3669
        %v3672 = vmul.f32 %v3652, %v3669
        %v3673 = vmul.f32 %v3653, %v3669
        %v3674 = vmul.f32 %v3654, %v3669
        %v3675 = vmul.f32 %v3655, %v3669
        %v3676 = vmul.f32 %v3656, %v3669
        %v3677 = vmul.f32 %v3657, %v3669
        %v3678 = vmul.f32 %v3658, %v3669
        %v3679 = vmul.f32 %v3659, %v3669
        %v3680 = vmul.f32 %v3660, %v3669
        %v3681 = vmul.f32 %v3661, %v3669
        %v3682 = vmul.f32 %v3662, %v3669
        %v3683 = vmul.f32 %v3663, %v3669
        %v3684 = vmul.f32 %v3664, %v3669
        %v3685 = vmul.f32 %v3665, %v3669
        %v3686 = vadd.f32 %v3633, %v3670
        %v3687 = vadd.f32 %v3634, %v3671
        %v3688 = vadd.f32 %v3635, %v3672
        %v3689 = vadd.f32 %v3636, %v3673
        %v3690 = vadd.f32 %v3637, %v3674
        %v3691 = vadd.f32 %v3638, %v3675
        %v3692 = vadd.f32 %v3639, %v3676
        %v3693 = vadd.f32 %v3640, %v3677
        %v3694 = vadd.f32 %v3641, %v3678
        %v3695 = vadd.f32 %v3642, %v3679
        %v3696 = vadd.f32 %v3643, %v3680
        %v3697 = vadd.f32 %v3644, %v3681
        %v3698 = vadd.f32 %v3645, %v3682
        %v3699 = vadd.f32 %v3646, %v3683
        %v3700 = vadd.f32 %v3647, %v3684
        %v3701 = vadd.f32 %v3648, %v3685
        %s3702 = scalar_lea.vmem [#allocation3], 736
        %v3703 = vld [vmem:[%s3702] sm:$0xff]
        %v3704 = vld [vmem:[%s3702 + $0x8] sm:$0xff]
        %v3705 = vld [vmem:[%s3702 + $0x10] sm:$0xff]
        %v3706 = vld [vmem:[%s3702 + $0x18] sm:$0xff]
        %v3707 = vld [vmem:[%s3702 + $0x20] sm:$0xff]
        %v3708 = vld [vmem:[%s3702 + $0x28] sm:$0xff]
        %v3709 = vld [vmem:[%s3702 + $0x30] sm:$0xff]
        %v3710 = vld [vmem:[%s3702 + $0x38] sm:$0xff]
        %v3711 = vld [vmem:[%s3702 + $0x40] sm:$0xff]
        %v3712 = vld [vmem:[%s3702 + $0x48] sm:$0xff]
        %v3713 = vld [vmem:[%s3702 + $0x50] sm:$0xff]
        %v3714 = vld [vmem:[%s3702 + $0x58] sm:$0xff]
        %v3715 = vld [vmem:[%s3702 + $0x60] sm:$0xff]
        %v3716 = vld [vmem:[%s3702 + $0x68] sm:$0xff]
        %v3717 = vld [vmem:[%s3702 + $0x70] sm:$0xff]
        %v3718 = vld [vmem:[%s3702 + $0x78] sm:$0xff]
        %v3719 = vlaneseq
        %v3720 = vshrl.u32 %v3719, 7
        %v3721 = vsub.s32 3, %v3720
        %v3722 = vrot.slane %v1653, %v3721
        %v3723 = vmul.f32 %v3703, %v3722
        %v3724 = vmul.f32 %v3704, %v3722
        %v3725 = vmul.f32 %v3705, %v3722
        %v3726 = vmul.f32 %v3706, %v3722
        %v3727 = vmul.f32 %v3707, %v3722
        %v3728 = vmul.f32 %v3708, %v3722
        %v3729 = vmul.f32 %v3709, %v3722
        %v3730 = vmul.f32 %v3710, %v3722
        %v3731 = vmul.f32 %v3711, %v3722
        %v3732 = vmul.f32 %v3712, %v3722
        %v3733 = vmul.f32 %v3713, %v3722
        %v3734 = vmul.f32 %v3714, %v3722
        %v3735 = vmul.f32 %v3715, %v3722
        %v3736 = vmul.f32 %v3716, %v3722
        %v3737 = vmul.f32 %v3717, %v3722
        %v3738 = vmul.f32 %v3718, %v3722
        %v3739 = vadd.f32 %v3686, %v3723
        %v3740 = vadd.f32 %v3687, %v3724
        %v3741 = vadd.f32 %v3688, %v3725
        %v3742 = vadd.f32 %v3689, %v3726
        %v3743 = vadd.f32 %v3690, %v3727
        %v3744 = vadd.f32 %v3691, %v3728
        %v3745 = vadd.f32 %v3692, %v3729
        %v3746 = vadd.f32 %v3693, %v3730
        %v3747 = vadd.f32 %v3694, %v3731
        %v3748 = vadd.f32 %v3695, %v3732
        %v3749 = vadd.f32 %v3696, %v3733
        %v3750 = vadd.f32 %v3697, %v3734
        %v3751 = vadd.f32 %v3698, %v3735
        %v3752 = vadd.f32 %v3699, %v3736
        %v3753 = vadd.f32 %v3700, %v3737
        %v3754 = vadd.f32 %v3701, %v3738
        %s3755 = scalar_lea.vmem [#allocation3], 960
        %v3756 = vld [vmem:[%s3755] sm:$0xff]
        %v3757 = vld [vmem:[%s3755 + $0x8] sm:$0xff]
        %v3758 = vld [vmem:[%s3755 + $0x10] sm:$0xff]
        %v3759 = vld [vmem:[%s3755 + $0x18] sm:$0xff]
        %v3760 = vld [vmem:[%s3755 + $0x20] sm:$0xff]
        %v3761 = vld [vmem:[%s3755 + $0x28] sm:$0xff]
        %v3762 = vld [vmem:[%s3755 + $0x30] sm:$0xff]
        %v3763 = vld [vmem:[%s3755 + $0x38] sm:$0xff]
        %v3764 = vld [vmem:[%s3755 + $0x40] sm:$0xff]
        %v3765 = vld [vmem:[%s3755 + $0x48] sm:$0xff]
        %v3766 = vld [vmem:[%s3755 + $0x50] sm:$0xff]
        %v3767 = vld [vmem:[%s3755 + $0x58] sm:$0xff]
        %v3768 = vld [vmem:[%s3755 + $0x60] sm:$0xff]
        %v3769 = vld [vmem:[%s3755 + $0x68] sm:$0xff]
        %v3770 = vld [vmem:[%s3755 + $0x70] sm:$0xff]
        %v3771 = vld [vmem:[%s3755 + $0x78] sm:$0xff]
        %v3772 = vlaneseq
        %v3773 = vshrl.u32 %v3772, 7
        %v3774 = vsub.s32 4, %v3773
        %v3775 = vrot.slane %v1653, %v3774
        %v3776 = vmul.f32 %v3756, %v3775
        %v3777 = vmul.f32 %v3757, %v3775
        %v3778 = vmul.f32 %v3758, %v3775
        %v3779 = vmul.f32 %v3759, %v3775
        %v3780 = vmul.f32 %v3760, %v3775
        %v3781 = vmul.f32 %v3761, %v3775
        %v3782 = vmul.f32 %v3762, %v3775
        %v3783 = vmul.f32 %v3763, %v3775
        %v3784 = vmul.f32 %v3764, %v3775
        %v3785 = vmul.f32 %v3765, %v3775
        %v3786 = vmul.f32 %v3766, %v3775
        %v3787 = vmul.f32 %v3767, %v3775
        %v3788 = vmul.f32 %v3768, %v3775
        %v3789 = vmul.f32 %v3769, %v3775
        %v3790 = vmul.f32 %v3770, %v3775
        %v3791 = vmul.f32 %v3771, %v3775
        %v3792 = vadd.f32 %v3739, %v3776
        %v3793 = vadd.f32 %v3740, %v3777
        %v3794 = vadd.f32 %v3741, %v3778
        %v3795 = vadd.f32 %v3742, %v3779
        %v3796 = vadd.f32 %v3743, %v3780
        %v3797 = vadd.f32 %v3744, %v3781
        %v3798 = vadd.f32 %v3745, %v3782
        %v3799 = vadd.f32 %v3746, %v3783
        %v3800 = vadd.f32 %v3747, %v3784
        %v3801 = vadd.f32 %v3748, %v3785
        %v3802 = vadd.f32 %v3749, %v3786
        %v3803 = vadd.f32 %v3750, %v3787
        %v3804 = vadd.f32 %v3751, %v3788
        %v3805 = vadd.f32 %v3752, %v3789
        %v3806 = vadd.f32 %v3753, %v3790
        %v3807 = vadd.f32 %v3754, %v3791
        %s3808 = scalar_lea.vmem [#allocation3], 1184
        %v3809 = vld [vmem:[%s3808] sm:$0xff]
        %v3810 = vld [vmem:[%s3808 + $0x8] sm:$0xff]
        %v3811 = vld [vmem:[%s3808 + $0x10] sm:$0xff]
        %v3812 = vld [vmem:[%s3808 + $0x18] sm:$0xff]
        %v3813 = vld [vmem:[%s3808 + $0x20] sm:$0xff]
        %v3814 = vld [vmem:[%s3808 + $0x28] sm:$0xff]
        %v3815 = vld [vmem:[%s3808 + $0x30] sm:$0xff]
        %v3816 = vld [vmem:[%s3808 + $0x38] sm:$0xff]
        %v3817 = vld [vmem:[%s3808 + $0x40] sm:$0xff]
        %v3818 = vld [vmem:[%s3808 + $0x48] sm:$0xff]
        %v3819 = vld [vmem:[%s3808 + $0x50] sm:$0xff]
        %v3820 = vld [vmem:[%s3808 + $0x58] sm:$0xff]
        %v3821 = vld [vmem:[%s3808 + $0x60] sm:$0xff]
        %v3822 = vld [vmem:[%s3808 + $0x68] sm:$0xff]
        %v3823 = vld [vmem:[%s3808 + $0x70] sm:$0xff]
        %v3824 = vld [vmem:[%s3808 + $0x78] sm:$0xff]
        %v3825 = vlaneseq
        %v3826 = vshrl.u32 %v3825, 7
        %v3827 = vsub.s32 5, %v3826
        %v3828 = vrot.slane %v1653, %v3827
        %v3829 = vmul.f32 %v3809, %v3828
        %v3830 = vmul.f32 %v3810, %v3828
        %v3831 = vmul.f32 %v3811, %v3828
        %v3832 = vmul.f32 %v3812, %v3828
        %v3833 = vmul.f32 %v3813, %v3828
        %v3834 = vmul.f32 %v3814, %v3828
        %v3835 = vmul.f32 %v3815, %v3828
        %v3836 = vmul.f32 %v3816, %v3828
        %v3837 = vmul.f32 %v3817, %v3828
        %v3838 = vmul.f32 %v3818, %v3828
        %v3839 = vmul.f32 %v3819, %v3828
        %v3840 = vmul.f32 %v3820, %v3828
        %v3841 = vmul.f32 %v3821, %v3828
        %v3842 = vmul.f32 %v3822, %v3828
        %v3843 = vmul.f32 %v3823, %v3828
        %v3844 = vmul.f32 %v3824, %v3828
        %v3845 = vadd.f32 %v3792, %v3829
        %v3846 = vadd.f32 %v3793, %v3830
        %v3847 = vadd.f32 %v3794, %v3831
        %v3848 = vadd.f32 %v3795, %v3832
        %v3849 = vadd.f32 %v3796, %v3833
        %v3850 = vadd.f32 %v3797, %v3834
        %v3851 = vadd.f32 %v3798, %v3835
        %v3852 = vadd.f32 %v3799, %v3836
        %v3853 = vadd.f32 %v3800, %v3837
        %v3854 = vadd.f32 %v3801, %v3838
        %v3855 = vadd.f32 %v3802, %v3839
        %v3856 = vadd.f32 %v3803, %v3840
        %v3857 = vadd.f32 %v3804, %v3841
        %v3858 = vadd.f32 %v3805, %v3842
        %v3859 = vadd.f32 %v3806, %v3843
        %v3860 = vadd.f32 %v3807, %v3844
        %s3861 = scalar_lea.vmem [#allocation3], 1408
        %v3862 = vld [vmem:[%s3861] sm:$0xff]
        %v3863 = vld [vmem:[%s3861 + $0x8] sm:$0xff]
        %v3864 = vld [vmem:[%s3861 + $0x10] sm:$0xff]
        %v3865 = vld [vmem:[%s3861 + $0x18] sm:$0xff]
        %v3866 = vld [vmem:[%s3861 + $0x20] sm:$0xff]
        %v3867 = vld [vmem:[%s3861 + $0x28] sm:$0xff]
        %v3868 = vld [vmem:[%s3861 + $0x30] sm:$0xff]
        %v3869 = vld [vmem:[%s3861 + $0x38] sm:$0xff]
        %v3870 = vld [vmem:[%s3861 + $0x40] sm:$0xff]
        %v3871 = vld [vmem:[%s3861 + $0x48] sm:$0xff]
        %v3872 = vld [vmem:[%s3861 + $0x50] sm:$0xff]
        %v3873 = vld [vmem:[%s3861 + $0x58] sm:$0xff]
        %v3874 = vld [vmem:[%s3861 + $0x60] sm:$0xff]
        %v3875 = vld [vmem:[%s3861 + $0x68] sm:$0xff]
        %v3876 = vld [vmem:[%s3861 + $0x70] sm:$0xff]
        %v3877 = vld [vmem:[%s3861 + $0x78] sm:$0xff]
        %v3878 = vlaneseq
        %v3879 = vshrl.u32 %v3878, 7
        %v3880 = vsub.s32 6, %v3879
        %v3881 = vrot.slane %v1653, %v3880
        %v3882 = vmul.f32 %v3862, %v3881
        %v3883 = vmul.f32 %v3863, %v3881
        %v3884 = vmul.f32 %v3864, %v3881
        %v3885 = vmul.f32 %v3865, %v3881
        %v3886 = vmul.f32 %v3866, %v3881
        %v3887 = vmul.f32 %v3867, %v3881
        %v3888 = vmul.f32 %v3868, %v3881
        %v3889 = vmul.f32 %v3869, %v3881
        %v3890 = vmul.f32 %v3870, %v3881
        %v3891 = vmul.f32 %v3871, %v3881
        %v3892 = vmul.f32 %v3872, %v3881
        %v3893 = vmul.f32 %v3873, %v3881
        %v3894 = vmul.f32 %v3874, %v3881
        %v3895 = vmul.f32 %v3875, %v3881
        %v3896 = vmul.f32 %v3876, %v3881
        %v3897 = vmul.f32 %v3877, %v3881
        %v3898 = vadd.f32 %v3845, %v3882
        %v3899 = vadd.f32 %v3846, %v3883
        %v3900 = vadd.f32 %v3847, %v3884
        %v3901 = vadd.f32 %v3848, %v3885
        %v3902 = vadd.f32 %v3849, %v3886
        %v3903 = vadd.f32 %v3850, %v3887
        %v3904 = vadd.f32 %v3851, %v3888
        %v3905 = vadd.f32 %v3852, %v3889
        %v3906 = vadd.f32 %v3853, %v3890
        %v3907 = vadd.f32 %v3854, %v3891
        %v3908 = vadd.f32 %v3855, %v3892
        %v3909 = vadd.f32 %v3856, %v3893
        %v3910 = vadd.f32 %v3857, %v3894
        %v3911 = vadd.f32 %v3858, %v3895
        %v3912 = vadd.f32 %v3859, %v3896
        %v3913 = vadd.f32 %v3860, %v3897
        %s3914 = scalar_lea.vmem [#allocation3], 80
        %v3915 = vld [vmem:[%s3914] sm:$0xff]
        %v3916 = vld [vmem:[%s3914 + $0x8] sm:$0xff]
        %v3917 = vld [vmem:[%s3914 + $0x10] sm:$0xff]
        %v3918 = vld [vmem:[%s3914 + $0x18] sm:$0xff]
        %v3919 = vld [vmem:[%s3914 + $0x20] sm:$0xff]
        %v3920 = vld [vmem:[%s3914 + $0x28] sm:$0xff]
        %v3921 = vld [vmem:[%s3914 + $0x30] sm:$0xff]
        %v3922 = vld [vmem:[%s3914 + $0x38] sm:$0xff]
        %v3923 = vld [vmem:[%s3914 + $0x40] sm:$0xff]
        %v3924 = vld [vmem:[%s3914 + $0x48] sm:$0xff]
        %v3925 = vld [vmem:[%s3914 + $0x50] sm:$0xff]
        %v3926 = vld [vmem:[%s3914 + $0x58] sm:$0xff]
        %v3927 = vld [vmem:[%s3914 + $0x60] sm:$0xff]
        %v3928 = vld [vmem:[%s3914 + $0x68] sm:$0xff]
        %v3929 = vld [vmem:[%s3914 + $0x70] sm:$0xff]
        %v3930 = vld [vmem:[%s3914 + $0x78] sm:$0xff]
        %v3931 = vlaneseq
        %v3932 = vshrl.u32 %v3931, 7
        %v3933 = vsub.s32 0, %v3932
        %v3934 = vrot.slane %v1654, %v3933
        %v3935 = vmul.f32 %v3915, %v3934
        %v3936 = vmul.f32 %v3916, %v3934
        %v3937 = vmul.f32 %v3917, %v3934
        %v3938 = vmul.f32 %v3918, %v3934
        %v3939 = vmul.f32 %v3919, %v3934
        %v3940 = vmul.f32 %v3920, %v3934
        %v3941 = vmul.f32 %v3921, %v3934
        %v3942 = vmul.f32 %v3922, %v3934
        %v3943 = vmul.f32 %v3923, %v3934
        %v3944 = vmul.f32 %v3924, %v3934
        %v3945 = vmul.f32 %v3925, %v3934
        %v3946 = vmul.f32 %v3926, %v3934
        %v3947 = vmul.f32 %v3927, %v3934
        %v3948 = vmul.f32 %v3928, %v3934
        %v3949 = vmul.f32 %v3929, %v3934
        %v3950 = vmul.f32 %v3930, %v3934
        %v3951 = vadd.f32 %v3898, %v3935
        %v3952 = vadd.f32 %v3899, %v3936
        %v3953 = vadd.f32 %v3900, %v3937
        %v3954 = vadd.f32 %v3901, %v3938
        %v3955 = vadd.f32 %v3902, %v3939
        %v3956 = vadd.f32 %v3903, %v3940
        %v3957 = vadd.f32 %v3904, %v3941
        %v3958 = vadd.f32 %v3905, %v3942
        %v3959 = vadd.f32 %v3906, %v3943
        %v3960 = vadd.f32 %v3907, %v3944
        %v3961 = vadd.f32 %v3908, %v3945
        %v3962 = vadd.f32 %v3909, %v3946
        %v3963 = vadd.f32 %v3910, %v3947
        %v3964 = vadd.f32 %v3911, %v3948
        %v3965 = vadd.f32 %v3912, %v3949
        %v3966 = vadd.f32 %v3913, %v3950
        %s3967 = scalar_lea.vmem [#allocation3], 304
        %v3968 = vld [vmem:[%s3967] sm:$0xff]
        %v3969 = vld [vmem:[%s3967 + $0x8] sm:$0xff]
        %v3970 = vld [vmem:[%s3967 + $0x10] sm:$0xff]
        %v3971 = vld [vmem:[%s3967 + $0x18] sm:$0xff]
        %v3972 = vld [vmem:[%s3967 + $0x20] sm:$0xff]
        %v3973 = vld [vmem:[%s3967 + $0x28] sm:$0xff]
        %v3974 = vld [vmem:[%s3967 + $0x30] sm:$0xff]
        %v3975 = vld [vmem:[%s3967 + $0x38] sm:$0xff]
        %v3976 = vld [vmem:[%s3967 + $0x40] sm:$0xff]
        %v3977 = vld [vmem:[%s3967 + $0x48] sm:$0xff]
        %v3978 = vld [vmem:[%s3967 + $0x50] sm:$0xff]
        %v3979 = vld [vmem:[%s3967 + $0x58] sm:$0xff]
        %v3980 = vld [vmem:[%s3967 + $0x60] sm:$0xff]
        %v3981 = vld [vmem:[%s3967 + $0x68] sm:$0xff]
        %v3982 = vld [vmem:[%s3967 + $0x70] sm:$0xff]
        %v3983 = vld [vmem:[%s3967 + $0x78] sm:$0xff]
        %v3984 = vlaneseq
        %v3985 = vshrl.u32 %v3984, 7
        %v3986 = vsub.s32 1, %v3985
        %v3987 = vrot.slane %v1654, %v3986
        %v3988 = vmul.f32 %v3968, %v3987
        %v3989 = vmul.f32 %v3969, %v3987
        %v3990 = vmul.f32 %v3970, %v3987
        %v3991 = vmul.f32 %v3971, %v3987
        %v3992 = vmul.f32 %v3972, %v3987
        %v3993 = vmul.f32 %v3973, %v3987
        %v3994 = vmul.f32 %v3974, %v3987
        %v3995 = vmul.f32 %v3975, %v3987
        %v3996 = vmul.f32 %v3976, %v3987
        %v3997 = vmul.f32 %v3977, %v3987
        %v3998 = vmul.f32 %v3978, %v3987
        %v3999 = vmul.f32 %v3979, %v3987
        %v4000 = vmul.f32 %v3980, %v3987
        %v4001 = vmul.f32 %v3981, %v3987
        %v4002 = vmul.f32 %v3982, %v3987
        %v4003 = vmul.f32 %v3983, %v3987
        %v4004 = vadd.f32 %v3951, %v3988
        %v4005 = vadd.f32 %v3952, %v3989
        %v4006 = vadd.f32 %v3953, %v3990
        %v4007 = vadd.f32 %v3954, %v3991
        %v4008 = vadd.f32 %v3955, %v3992
        %v4009 = vadd.f32 %v3956, %v3993
        %v4010 = vadd.f32 %v3957, %v3994
        %v4011 = vadd.f32 %v3958, %v3995
        %v4012 = vadd.f32 %v3959, %v3996
        %v4013 = vadd.f32 %v3960, %v3997
        %v4014 = vadd.f32 %v3961, %v3998
        %v4015 = vadd.f32 %v3962, %v3999
        %v4016 = vadd.f32 %v3963, %v4000
        %v4017 = vadd.f32 %v3964, %v4001
        %v4018 = vadd.f32 %v3965, %v4002
        %v4019 = vadd.f32 %v3966, %v4003
        %s4020 = scalar_lea.vmem [#allocation3], 528
        %v4021 = vld [vmem:[%s4020] sm:$0xff]
        %v4022 = vld [vmem:[%s4020 + $0x8] sm:$0xff]
        %v4023 = vld [vmem:[%s4020 + $0x10] sm:$0xff]
        %v4024 = vld [vmem:[%s4020 + $0x18] sm:$0xff]
        %v4025 = vld [vmem:[%s4020 + $0x20] sm:$0xff]
        %v4026 = vld [vmem:[%s4020 + $0x28] sm:$0xff]
        %v4027 = vld [vmem:[%s4020 + $0x30] sm:$0xff]
        %v4028 = vld [vmem:[%s4020 + $0x38] sm:$0xff]
        %v4029 = vld [vmem:[%s4020 + $0x40] sm:$0xff]
        %v4030 = vld [vmem:[%s4020 + $0x48] sm:$0xff]
        %v4031 = vld [vmem:[%s4020 + $0x50] sm:$0xff]
        %v4032 = vld [vmem:[%s4020 + $0x58] sm:$0xff]
        %v4033 = vld [vmem:[%s4020 + $0x60] sm:$0xff]
        %v4034 = vld [vmem:[%s4020 + $0x68] sm:$0xff]
        %v4035 = vld [vmem:[%s4020 + $0x70] sm:$0xff]
        %v4036 = vld [vmem:[%s4020 + $0x78] sm:$0xff]
        %v4037 = vlaneseq
        %v4038 = vshrl.u32 %v4037, 7
        %v4039 = vsub.s32 2, %v4038
        %v4040 = vrot.slane %v1654, %v4039
        %v4041 = vmul.f32 %v4021, %v4040
        %v4042 = vmul.f32 %v4022, %v4040
        %v4043 = vmul.f32 %v4023, %v4040
        %v4044 = vmul.f32 %v4024, %v4040
        %v4045 = vmul.f32 %v4025, %v4040
        %v4046 = vmul.f32 %v4026, %v4040
        %v4047 = vmul.f32 %v4027, %v4040
        %v4048 = vmul.f32 %v4028, %v4040
        %v4049 = vmul.f32 %v4029, %v4040
        %v4050 = vmul.f32 %v4030, %v4040
        %v4051 = vmul.f32 %v4031, %v4040
        %v4052 = vmul.f32 %v4032, %v4040
        %v4053 = vmul.f32 %v4033, %v4040
        %v4054 = vmul.f32 %v4034, %v4040
        %v4055 = vmul.f32 %v4035, %v4040
        %v4056 = vmul.f32 %v4036, %v4040
        %v4057 = vadd.f32 %v4004, %v4041
        %v4058 = vadd.f32 %v4005, %v4042
        %v4059 = vadd.f32 %v4006, %v4043
        %v4060 = vadd.f32 %v4007, %v4044
        %v4061 = vadd.f32 %v4008, %v4045
        %v4062 = vadd.f32 %v4009, %v4046
        %v4063 = vadd.f32 %v4010, %v4047
        %v4064 = vadd.f32 %v4011, %v4048
        %v4065 = vadd.f32 %v4012, %v4049
        %v4066 = vadd.f32 %v4013, %v4050
        %v4067 = vadd.f32 %v4014, %v4051
        %v4068 = vadd.f32 %v4015, %v4052
        %v4069 = vadd.f32 %v4016, %v4053
        %v4070 = vadd.f32 %v4017, %v4054
        %v4071 = vadd.f32 %v4018, %v4055
        %v4072 = vadd.f32 %v4019, %v4056
        %s4073 = scalar_lea.vmem [#allocation3], 752
        %v4074 = vld [vmem:[%s4073] sm:$0xff]
        %v4075 = vld [vmem:[%s4073 + $0x8] sm:$0xff]
        %v4076 = vld [vmem:[%s4073 + $0x10] sm:$0xff]
        %v4077 = vld [vmem:[%s4073 + $0x18] sm:$0xff]
        %v4078 = vld [vmem:[%s4073 + $0x20] sm:$0xff]
        %v4079 = vld [vmem:[%s4073 + $0x28] sm:$0xff]
        %v4080 = vld [vmem:[%s4073 + $0x30] sm:$0xff]
        %v4081 = vld [vmem:[%s4073 + $0x38] sm:$0xff]
        %v4082 = vld [vmem:[%s4073 + $0x40] sm:$0xff]
        %v4083 = vld [vmem:[%s4073 + $0x48] sm:$0xff]
        %v4084 = vld [vmem:[%s4073 + $0x50] sm:$0xff]
        %v4085 = vld [vmem:[%s4073 + $0x58] sm:$0xff]
        %v4086 = vld [vmem:[%s4073 + $0x60] sm:$0xff]
        %v4087 = vld [vmem:[%s4073 + $0x68] sm:$0xff]
        %v4088 = vld [vmem:[%s4073 + $0x70] sm:$0xff]
        %v4089 = vld [vmem:[%s4073 + $0x78] sm:$0xff]
        %v4090 = vlaneseq
        %v4091 = vshrl.u32 %v4090, 7
        %v4092 = vsub.s32 3, %v4091
        %v4093 = vrot.slane %v1654, %v4092
        %v4094 = vmul.f32 %v4074, %v4093
        %v4095 = vmul.f32 %v4075, %v4093
        %v4096 = vmul.f32 %v4076, %v4093
        %v4097 = vmul.f32 %v4077, %v4093
        %v4098 = vmul.f32 %v4078, %v4093
        %v4099 = vmul.f32 %v4079, %v4093
        %v4100 = vmul.f32 %v4080, %v4093
        %v4101 = vmul.f32 %v4081, %v4093
        %v4102 = vmul.f32 %v4082, %v4093
        %v4103 = vmul.f32 %v4083, %v4093
        %v4104 = vmul.f32 %v4084, %v4093
        %v4105 = vmul.f32 %v4085, %v4093
        %v4106 = vmul.f32 %v4086, %v4093
        %v4107 = vmul.f32 %v4087, %v4093
        %v4108 = vmul.f32 %v4088, %v4093
        %v4109 = vmul.f32 %v4089, %v4093
        %v4110 = vadd.f32 %v4057, %v4094
        %v4111 = vadd.f32 %v4058, %v4095
        %v4112 = vadd.f32 %v4059, %v4096
        %v4113 = vadd.f32 %v4060, %v4097
        %v4114 = vadd.f32 %v4061, %v4098
        %v4115 = vadd.f32 %v4062, %v4099
        %v4116 = vadd.f32 %v4063, %v4100
        %v4117 = vadd.f32 %v4064, %v4101
        %v4118 = vadd.f32 %v4065, %v4102
        %v4119 = vadd.f32 %v4066, %v4103
        %v4120 = vadd.f32 %v4067, %v4104
        %v4121 = vadd.f32 %v4068, %v4105
        %v4122 = vadd.f32 %v4069, %v4106
        %v4123 = vadd.f32 %v4070, %v4107
        %v4124 = vadd.f32 %v4071, %v4108
        %v4125 = vadd.f32 %v4072, %v4109
        %s4126 = scalar_lea.vmem [#allocation3], 976
        %v4127 = vld [vmem:[%s4126] sm:$0xff]
        %v4128 = vld [vmem:[%s4126 + $0x8] sm:$0xff]
        %v4129 = vld [vmem:[%s4126 + $0x10] sm:$0xff]
        %v4130 = vld [vmem:[%s4126 + $0x18] sm:$0xff]
        %v4131 = vld [vmem:[%s4126 + $0x20] sm:$0xff]
        %v4132 = vld [vmem:[%s4126 + $0x28] sm:$0xff]
        %v4133 = vld [vmem:[%s4126 + $0x30] sm:$0xff]
        %v4134 = vld [vmem:[%s4126 + $0x38] sm:$0xff]
        %v4135 = vld [vmem:[%s4126 + $0x40] sm:$0xff]
        %v4136 = vld [vmem:[%s4126 + $0x48] sm:$0xff]
        %v4137 = vld [vmem:[%s4126 + $0x50] sm:$0xff]
        %v4138 = vld [vmem:[%s4126 + $0x58] sm:$0xff]
        %v4139 = vld [vmem:[%s4126 + $0x60] sm:$0xff]
        %v4140 = vld [vmem:[%s4126 + $0x68] sm:$0xff]
        %v4141 = vld [vmem:[%s4126 + $0x70] sm:$0xff]
        %v4142 = vld [vmem:[%s4126 + $0x78] sm:$0xff]
        %v4143 = vlaneseq
        %v4144 = vshrl.u32 %v4143, 7
        %v4145 = vsub.s32 4, %v4144
        %v4146 = vrot.slane %v1654, %v4145
        %v4147 = vmul.f32 %v4127, %v4146
        %v4148 = vmul.f32 %v4128, %v4146
        %v4149 = vmul.f32 %v4129, %v4146
        %v4150 = vmul.f32 %v4130, %v4146
        %v4151 = vmul.f32 %v4131, %v4146
        %v4152 = vmul.f32 %v4132, %v4146
        %v4153 = vmul.f32 %v4133, %v4146
        %v4154 = vmul.f32 %v4134, %v4146
        %v4155 = vmul.f32 %v4135, %v4146
        %v4156 = vmul.f32 %v4136, %v4146
        %v4157 = vmul.f32 %v4137, %v4146
        %v4158 = vmul.f32 %v4138, %v4146
        %v4159 = vmul.f32 %v4139, %v4146
        %v4160 = vmul.f32 %v4140, %v4146
        %v4161 = vmul.f32 %v4141, %v4146
        %v4162 = vmul.f32 %v4142, %v4146
        %v4163 = vadd.f32 %v4110, %v4147
        %v4164 = vadd.f32 %v4111, %v4148
        %v4165 = vadd.f32 %v4112, %v4149
        %v4166 = vadd.f32 %v4113, %v4150
        %v4167 = vadd.f32 %v4114, %v4151
        %v4168 = vadd.f32 %v4115, %v4152
        %v4169 = vadd.f32 %v4116, %v4153
        %v4170 = vadd.f32 %v4117, %v4154
        %v4171 = vadd.f32 %v4118, %v4155
        %v4172 = vadd.f32 %v4119, %v4156
        %v4173 = vadd.f32 %v4120, %v4157
        %v4174 = vadd.f32 %v4121, %v4158
        %v4175 = vadd.f32 %v4122, %v4159
        %v4176 = vadd.f32 %v4123, %v4160
        %v4177 = vadd.f32 %v4124, %v4161
        %v4178 = vadd.f32 %v4125, %v4162
        %s4179 = scalar_lea.vmem [#allocation3], 1200
        %v4180 = vld [vmem:[%s4179] sm:$0xff]
        %v4181 = vld [vmem:[%s4179 + $0x8] sm:$0xff]
        %v4182 = vld [vmem:[%s4179 + $0x10] sm:$0xff]
        %v4183 = vld [vmem:[%s4179 + $0x18] sm:$0xff]
        %v4184 = vld [vmem:[%s4179 + $0x20] sm:$0xff]
        %v4185 = vld [vmem:[%s4179 + $0x28] sm:$0xff]
        %v4186 = vld [vmem:[%s4179 + $0x30] sm:$0xff]
        %v4187 = vld [vmem:[%s4179 + $0x38] sm:$0xff]
        %v4188 = vld [vmem:[%s4179 + $0x40] sm:$0xff]
        %v4189 = vld [vmem:[%s4179 + $0x48] sm:$0xff]
        %v4190 = vld [vmem:[%s4179 + $0x50] sm:$0xff]
        %v4191 = vld [vmem:[%s4179 + $0x58] sm:$0xff]
        %v4192 = vld [vmem:[%s4179 + $0x60] sm:$0xff]
        %v4193 = vld [vmem:[%s4179 + $0x68] sm:$0xff]
        %v4194 = vld [vmem:[%s4179 + $0x70] sm:$0xff]
        %v4195 = vld [vmem:[%s4179 + $0x78] sm:$0xff]
        %v4196 = vlaneseq
        %v4197 = vshrl.u32 %v4196, 7
        %v4198 = vsub.s32 5, %v4197
        %v4199 = vrot.slane %v1654, %v4198
        %v4200 = vmul.f32 %v4180, %v4199
        %v4201 = vmul.f32 %v4181, %v4199
        %v4202 = vmul.f32 %v4182, %v4199
        %v4203 = vmul.f32 %v4183, %v4199
        %v4204 = vmul.f32 %v4184, %v4199
        %v4205 = vmul.f32 %v4185, %v4199
        %v4206 = vmul.f32 %v4186, %v4199
        %v4207 = vmul.f32 %v4187, %v4199
        %v4208 = vmul.f32 %v4188, %v4199
        %v4209 = vmul.f32 %v4189, %v4199
        %v4210 = vmul.f32 %v4190, %v4199
        %v4211 = vmul.f32 %v4191, %v4199
        %v4212 = vmul.f32 %v4192, %v4199
        %v4213 = vmul.f32 %v4193, %v4199
        %v4214 = vmul.f32 %v4194, %v4199
        %v4215 = vmul.f32 %v4195, %v4199
        %v4216 = vadd.f32 %v4163, %v4200
        %v4217 = vadd.f32 %v4164, %v4201
        %v4218 = vadd.f32 %v4165, %v4202
        %v4219 = vadd.f32 %v4166, %v4203
        %v4220 = vadd.f32 %v4167, %v4204
        %v4221 = vadd.f32 %v4168, %v4205
        %v4222 = vadd.f32 %v4169, %v4206
        %v4223 = vadd.f32 %v4170, %v4207
        %v4224 = vadd.f32 %v4171, %v4208
        %v4225 = vadd.f32 %v4172, %v4209
        %v4226 = vadd.f32 %v4173, %v4210
        %v4227 = vadd.f32 %v4174, %v4211
        %v4228 = vadd.f32 %v4175, %v4212
        %v4229 = vadd.f32 %v4176, %v4213
        %v4230 = vadd.f32 %v4177, %v4214
        %v4231 = vadd.f32 %v4178, %v4215
        %s4232 = scalar_lea.vmem [#allocation3], 1424
        %v4233 = vld [vmem:[%s4232] sm:$0xff]
        %v4234 = vld [vmem:[%s4232 + $0x8] sm:$0xff]
        %v4235 = vld [vmem:[%s4232 + $0x10] sm:$0xff]
        %v4236 = vld [vmem:[%s4232 + $0x18] sm:$0xff]
        %v4237 = vld [vmem:[%s4232 + $0x20] sm:$0xff]
        %v4238 = vld [vmem:[%s4232 + $0x28] sm:$0xff]
        %v4239 = vld [vmem:[%s4232 + $0x30] sm:$0xff]
        %v4240 = vld [vmem:[%s4232 + $0x38] sm:$0xff]
        %v4241 = vld [vmem:[%s4232 + $0x40] sm:$0xff]
        %v4242 = vld [vmem:[%s4232 + $0x48] sm:$0xff]
        %v4243 = vld [vmem:[%s4232 + $0x50] sm:$0xff]
        %v4244 = vld [vmem:[%s4232 + $0x58] sm:$0xff]
        %v4245 = vld [vmem:[%s4232 + $0x60] sm:$0xff]
        %v4246 = vld [vmem:[%s4232 + $0x68] sm:$0xff]
        %v4247 = vld [vmem:[%s4232 + $0x70] sm:$0xff]
        %v4248 = vld [vmem:[%s4232 + $0x78] sm:$0xff]
        %v4249 = vlaneseq
        %v4250 = vshrl.u32 %v4249, 7
        %v4251 = vsub.s32 6, %v4250
        %v4252 = vrot.slane %v1654, %v4251
        %v4253 = vmul.f32 %v4233, %v4252
        %v4254 = vmul.f32 %v4234, %v4252
        %v4255 = vmul.f32 %v4235, %v4252
        %v4256 = vmul.f32 %v4236, %v4252
        %v4257 = vmul.f32 %v4237, %v4252
        %v4258 = vmul.f32 %v4238, %v4252
        %v4259 = vmul.f32 %v4239, %v4252
        %v4260 = vmul.f32 %v4240, %v4252
        %v4261 = vmul.f32 %v4241, %v4252
        %v4262 = vmul.f32 %v4242, %v4252
        %v4263 = vmul.f32 %v4243, %v4252
        %v4264 = vmul.f32 %v4244, %v4252
        %v4265 = vmul.f32 %v4245, %v4252
        %v4266 = vmul.f32 %v4246, %v4252
        %v4267 = vmul.f32 %v4247, %v4252
        %v4268 = vmul.f32 %v4248, %v4252
        %v4269 = vadd.f32 %v4216, %v4253
        %v4270 = vadd.f32 %v4217, %v4254
        %v4271 = vadd.f32 %v4218, %v4255
        %v4272 = vadd.f32 %v4219, %v4256
        %v4273 = vadd.f32 %v4220, %v4257
        %v4274 = vadd.f32 %v4221, %v4258
        %v4275 = vadd.f32 %v4222, %v4259
        %v4276 = vadd.f32 %v4223, %v4260
        %v4277 = vadd.f32 %v4224, %v4261
        %v4278 = vadd.f32 %v4225, %v4262
        %v4279 = vadd.f32 %v4226, %v4263
        %v4280 = vadd.f32 %v4227, %v4264
        %v4281 = vadd.f32 %v4228, %v4265
        %v4282 = vadd.f32 %v4229, %v4266
        %v4283 = vadd.f32 %v4230, %v4267
        %v4284 = vadd.f32 %v4231, %v4268
        %s4285 = scalar_lea.vmem [#allocation3], 96
        %v4286 = vld [vmem:[%s4285] sm:$0xff]
        %v4287 = vld [vmem:[%s4285 + $0x8] sm:$0xff]
        %v4288 = vld [vmem:[%s4285 + $0x10] sm:$0xff]
        %v4289 = vld [vmem:[%s4285 + $0x18] sm:$0xff]
        %v4290 = vld [vmem:[%s4285 + $0x20] sm:$0xff]
        %v4291 = vld [vmem:[%s4285 + $0x28] sm:$0xff]
        %v4292 = vld [vmem:[%s4285 + $0x30] sm:$0xff]
        %v4293 = vld [vmem:[%s4285 + $0x38] sm:$0xff]
        %v4294 = vld [vmem:[%s4285 + $0x40] sm:$0xff]
        %v4295 = vld [vmem:[%s4285 + $0x48] sm:$0xff]
        %v4296 = vld [vmem:[%s4285 + $0x50] sm:$0xff]
        %v4297 = vld [vmem:[%s4285 + $0x58] sm:$0xff]
        %v4298 = vld [vmem:[%s4285 + $0x60] sm:$0xff]
        %v4299 = vld [vmem:[%s4285 + $0x68] sm:$0xff]
        %v4300 = vld [vmem:[%s4285 + $0x70] sm:$0xff]
        %v4301 = vld [vmem:[%s4285 + $0x78] sm:$0xff]
        %v4302 = vlaneseq
        %v4303 = vshrl.u32 %v4302, 7
        %v4304 = vsub.s32 0, %v4303
        %v4305 = vrot.slane %v1655, %v4304
        %v4306 = vmul.f32 %v4286, %v4305
        %v4307 = vmul.f32 %v4287, %v4305
        %v4308 = vmul.f32 %v4288, %v4305
        %v4309 = vmul.f32 %v4289, %v4305
        %v4310 = vmul.f32 %v4290, %v4305
        %v4311 = vmul.f32 %v4291, %v4305
        %v4312 = vmul.f32 %v4292, %v4305
        %v4313 = vmul.f32 %v4293, %v4305
        %v4314 = vmul.f32 %v4294, %v4305
        %v4315 = vmul.f32 %v4295, %v4305
        %v4316 = vmul.f32 %v4296, %v4305
        %v4317 = vmul.f32 %v4297, %v4305
        %v4318 = vmul.f32 %v4298, %v4305
        %v4319 = vmul.f32 %v4299, %v4305
        %v4320 = vmul.f32 %v4300, %v4305
        %v4321 = vmul.f32 %v4301, %v4305
        %v4322 = vadd.f32 %v4269, %v4306
        %v4323 = vadd.f32 %v4270, %v4307
        %v4324 = vadd.f32 %v4271, %v4308
        %v4325 = vadd.f32 %v4272, %v4309
        %v4326 = vadd.f32 %v4273, %v4310
        %v4327 = vadd.f32 %v4274, %v4311
        %v4328 = vadd.f32 %v4275, %v4312
        %v4329 = vadd.f32 %v4276, %v4313
        %v4330 = vadd.f32 %v4277, %v4314
        %v4331 = vadd.f32 %v4278, %v4315
        %v4332 = vadd.f32 %v4279, %v4316
        %v4333 = vadd.f32 %v4280, %v4317
        %v4334 = vadd.f32 %v4281, %v4318
        %v4335 = vadd.f32 %v4282, %v4319
        %v4336 = vadd.f32 %v4283, %v4320
        %v4337 = vadd.f32 %v4284, %v4321
        %s4338 = scalar_lea.vmem [#allocation3], 320
        %v4339 = vld [vmem:[%s4338] sm:$0xff]
        %v4340 = vld [vmem:[%s4338 + $0x8] sm:$0xff]
        %v4341 = vld [vmem:[%s4338 + $0x10] sm:$0xff]
        %v4342 = vld [vmem:[%s4338 + $0x18] sm:$0xff]
        %v4343 = vld [vmem:[%s4338 + $0x20] sm:$0xff]
        %v4344 = vld [vmem:[%s4338 + $0x28] sm:$0xff]
        %v4345 = vld [vmem:[%s4338 + $0x30] sm:$0xff]
        %v4346 = vld [vmem:[%s4338 + $0x38] sm:$0xff]
        %v4347 = vld [vmem:[%s4338 + $0x40] sm:$0xff]
        %v4348 = vld [vmem:[%s4338 + $0x48] sm:$0xff]
        %v4349 = vld [vmem:[%s4338 + $0x50] sm:$0xff]
        %v4350 = vld [vmem:[%s4338 + $0x58] sm:$0xff]
        %v4351 = vld [vmem:[%s4338 + $0x60] sm:$0xff]
        %v4352 = vld [vmem:[%s4338 + $0x68] sm:$0xff]
        %v4353 = vld [vmem:[%s4338 + $0x70] sm:$0xff]
        %v4354 = vld [vmem:[%s4338 + $0x78] sm:$0xff]
        %v4355 = vlaneseq
        %v4356 = vshrl.u32 %v4355, 7
        %v4357 = vsub.s32 1, %v4356
        %v4358 = vrot.slane %v1655, %v4357
        %v4359 = vmul.f32 %v4339, %v4358
        %v4360 = vmul.f32 %v4340, %v4358
        %v4361 = vmul.f32 %v4341, %v4358
        %v4362 = vmul.f32 %v4342, %v4358
        %v4363 = vmul.f32 %v4343, %v4358
        %v4364 = vmul.f32 %v4344, %v4358
        %v4365 = vmul.f32 %v4345, %v4358
        %v4366 = vmul.f32 %v4346, %v4358
        %v4367 = vmul.f32 %v4347, %v4358
        %v4368 = vmul.f32 %v4348, %v4358
        %v4369 = vmul.f32 %v4349, %v4358
        %v4370 = vmul.f32 %v4350, %v4358
        %v4371 = vmul.f32 %v4351, %v4358
        %v4372 = vmul.f32 %v4352, %v4358
        %v4373 = vmul.f32 %v4353, %v4358
        %v4374 = vmul.f32 %v4354, %v4358
        %v4375 = vadd.f32 %v4322, %v4359
        %v4376 = vadd.f32 %v4323, %v4360
        %v4377 = vadd.f32 %v4324, %v4361
        %v4378 = vadd.f32 %v4325, %v4362
        %v4379 = vadd.f32 %v4326, %v4363
        %v4380 = vadd.f32 %v4327, %v4364
        %v4381 = vadd.f32 %v4328, %v4365
        %v4382 = vadd.f32 %v4329, %v4366
        %v4383 = vadd.f32 %v4330, %v4367
        %v4384 = vadd.f32 %v4331, %v4368
        %v4385 = vadd.f32 %v4332, %v4369
        %v4386 = vadd.f32 %v4333, %v4370
        %v4387 = vadd.f32 %v4334, %v4371
        %v4388 = vadd.f32 %v4335, %v4372
        %v4389 = vadd.f32 %v4336, %v4373
        %v4390 = vadd.f32 %v4337, %v4374
        %s4391 = scalar_lea.vmem [#allocation3], 544
        %v4392 = vld [vmem:[%s4391] sm:$0xff]
        %v4393 = vld [vmem:[%s4391 + $0x8] sm:$0xff]
        %v4394 = vld [vmem:[%s4391 + $0x10] sm:$0xff]
        %v4395 = vld [vmem:[%s4391 + $0x18] sm:$0xff]
        %v4396 = vld [vmem:[%s4391 + $0x20] sm:$0xff]
        %v4397 = vld [vmem:[%s4391 + $0x28] sm:$0xff]
        %v4398 = vld [vmem:[%s4391 + $0x30] sm:$0xff]
        %v4399 = vld [vmem:[%s4391 + $0x38] sm:$0xff]
        %v4400 = vld [vmem:[%s4391 + $0x40] sm:$0xff]
        %v4401 = vld [vmem:[%s4391 + $0x48] sm:$0xff]
        %v4402 = vld [vmem:[%s4391 + $0x50] sm:$0xff]
        %v4403 = vld [vmem:[%s4391 + $0x58] sm:$0xff]
        %v4404 = vld [vmem:[%s4391 + $0x60] sm:$0xff]
        %v4405 = vld [vmem:[%s4391 + $0x68] sm:$0xff]
        %v4406 = vld [vmem:[%s4391 + $0x70] sm:$0xff]
        %v4407 = vld [vmem:[%s4391 + $0x78] sm:$0xff]
        %v4408 = vlaneseq
        %v4409 = vshrl.u32 %v4408, 7
        %v4410 = vsub.s32 2, %v4409
        %v4411 = vrot.slane %v1655, %v4410
        %v4412 = vmul.f32 %v4392, %v4411
        %v4413 = vmul.f32 %v4393, %v4411
        %v4414 = vmul.f32 %v4394, %v4411
        %v4415 = vmul.f32 %v4395, %v4411
        %v4416 = vmul.f32 %v4396, %v4411
        %v4417 = vmul.f32 %v4397, %v4411
        %v4418 = vmul.f32 %v4398, %v4411
        %v4419 = vmul.f32 %v4399, %v4411
        %v4420 = vmul.f32 %v4400, %v4411
        %v4421 = vmul.f32 %v4401, %v4411
        %v4422 = vmul.f32 %v4402, %v4411
        %v4423 = vmul.f32 %v4403, %v4411
        %v4424 = vmul.f32 %v4404, %v4411
        %v4425 = vmul.f32 %v4405, %v4411
        %v4426 = vmul.f32 %v4406, %v4411
        %v4427 = vmul.f32 %v4407, %v4411
        %v4428 = vadd.f32 %v4375, %v4412
        %v4429 = vadd.f32 %v4376, %v4413
        %v4430 = vadd.f32 %v4377, %v4414
        %v4431 = vadd.f32 %v4378, %v4415
        %v4432 = vadd.f32 %v4379, %v4416
        %v4433 = vadd.f32 %v4380, %v4417
        %v4434 = vadd.f32 %v4381, %v4418
        %v4435 = vadd.f32 %v4382, %v4419
        %v4436 = vadd.f32 %v4383, %v4420
        %v4437 = vadd.f32 %v4384, %v4421
        %v4438 = vadd.f32 %v4385, %v4422
        %v4439 = vadd.f32 %v4386, %v4423
        %v4440 = vadd.f32 %v4387, %v4424
        %v4441 = vadd.f32 %v4388, %v4425
        %v4442 = vadd.f32 %v4389, %v4426
        %v4443 = vadd.f32 %v4390, %v4427
        %s4444 = scalar_lea.vmem [#allocation3], 768
        %v4445 = vld [vmem:[%s4444] sm:$0xff]
        %v4446 = vld [vmem:[%s4444 + $0x8] sm:$0xff]
        %v4447 = vld [vmem:[%s4444 + $0x10] sm:$0xff]
        %v4448 = vld [vmem:[%s4444 + $0x18] sm:$0xff]
        %v4449 = vld [vmem:[%s4444 + $0x20] sm:$0xff]
        %v4450 = vld [vmem:[%s4444 + $0x28] sm:$0xff]
        %v4451 = vld [vmem:[%s4444 + $0x30] sm:$0xff]
        %v4452 = vld [vmem:[%s4444 + $0x38] sm:$0xff]
        %v4453 = vld [vmem:[%s4444 + $0x40] sm:$0xff]
        %v4454 = vld [vmem:[%s4444 + $0x48] sm:$0xff]
        %v4455 = vld [vmem:[%s4444 + $0x50] sm:$0xff]
        %v4456 = vld [vmem:[%s4444 + $0x58] sm:$0xff]
        %v4457 = vld [vmem:[%s4444 + $0x60] sm:$0xff]
        %v4458 = vld [vmem:[%s4444 + $0x68] sm:$0xff]
        %v4459 = vld [vmem:[%s4444 + $0x70] sm:$0xff]
        %v4460 = vld [vmem:[%s4444 + $0x78] sm:$0xff]
        %v4461 = vlaneseq
        %v4462 = vshrl.u32 %v4461, 7
        %v4463 = vsub.s32 3, %v4462
        %v4464 = vrot.slane %v1655, %v4463
        %v4465 = vmul.f32 %v4445, %v4464
        %v4466 = vmul.f32 %v4446, %v4464
        %v4467 = vmul.f32 %v4447, %v4464
        %v4468 = vmul.f32 %v4448, %v4464
        %v4469 = vmul.f32 %v4449, %v4464
        %v4470 = vmul.f32 %v4450, %v4464
        %v4471 = vmul.f32 %v4451, %v4464
        %v4472 = vmul.f32 %v4452, %v4464
        %v4473 = vmul.f32 %v4453, %v4464
        %v4474 = vmul.f32 %v4454, %v4464
        %v4475 = vmul.f32 %v4455, %v4464
        %v4476 = vmul.f32 %v4456, %v4464
        %v4477 = vmul.f32 %v4457, %v4464
        %v4478 = vmul.f32 %v4458, %v4464
        %v4479 = vmul.f32 %v4459, %v4464
        %v4480 = vmul.f32 %v4460, %v4464
        %v4481 = vadd.f32 %v4428, %v4465
        %v4482 = vadd.f32 %v4429, %v4466
        %v4483 = vadd.f32 %v4430, %v4467
        %v4484 = vadd.f32 %v4431, %v4468
        %v4485 = vadd.f32 %v4432, %v4469
        %v4486 = vadd.f32 %v4433, %v4470
        %v4487 = vadd.f32 %v4434, %v4471
        %v4488 = vadd.f32 %v4435, %v4472
        %v4489 = vadd.f32 %v4436, %v4473
        %v4490 = vadd.f32 %v4437, %v4474
        %v4491 = vadd.f32 %v4438, %v4475
        %v4492 = vadd.f32 %v4439, %v4476
        %v4493 = vadd.f32 %v4440, %v4477
        %v4494 = vadd.f32 %v4441, %v4478
        %v4495 = vadd.f32 %v4442, %v4479
        %v4496 = vadd.f32 %v4443, %v4480
        %s4497 = scalar_lea.vmem [#allocation3], 992
        %v4498 = vld [vmem:[%s4497] sm:$0xff]
        %v4499 = vld [vmem:[%s4497 + $0x8] sm:$0xff]
        %v4500 = vld [vmem:[%s4497 + $0x10] sm:$0xff]
        %v4501 = vld [vmem:[%s4497 + $0x18] sm:$0xff]
        %v4502 = vld [vmem:[%s4497 + $0x20] sm:$0xff]
        %v4503 = vld [vmem:[%s4497 + $0x28] sm:$0xff]
        %v4504 = vld [vmem:[%s4497 + $0x30] sm:$0xff]
        %v4505 = vld [vmem:[%s4497 + $0x38] sm:$0xff]
        %v4506 = vld [vmem:[%s4497 + $0x40] sm:$0xff]
        %v4507 = vld [vmem:[%s4497 + $0x48] sm:$0xff]
        %v4508 = vld [vmem:[%s4497 + $0x50] sm:$0xff]
        %v4509 = vld [vmem:[%s4497 + $0x58] sm:$0xff]
        %v4510 = vld [vmem:[%s4497 + $0x60] sm:$0xff]
        %v4511 = vld [vmem:[%s4497 + $0x68] sm:$0xff]
        %v4512 = vld [vmem:[%s4497 + $0x70] sm:$0xff]
        %v4513 = vld [vmem:[%s4497 + $0x78] sm:$0xff]
        %v4514 = vlaneseq
        %v4515 = vshrl.u32 %v4514, 7
        %v4516 = vsub.s32 4, %v4515
        %v4517 = vrot.slane %v1655, %v4516
        %v4518 = vmul.f32 %v4498, %v4517
        %v4519 = vmul.f32 %v4499, %v4517
        %v4520 = vmul.f32 %v4500, %v4517
        %v4521 = vmul.f32 %v4501, %v4517
        %v4522 = vmul.f32 %v4502, %v4517
        %v4523 = vmul.f32 %v4503, %v4517
        %v4524 = vmul.f32 %v4504, %v4517
        %v4525 = vmul.f32 %v4505, %v4517
        %v4526 = vmul.f32 %v4506, %v4517
        %v4527 = vmul.f32 %v4507, %v4517
        %v4528 = vmul.f32 %v4508, %v4517
        %v4529 = vmul.f32 %v4509, %v4517
        %v4530 = vmul.f32 %v4510, %v4517
        %v4531 = vmul.f32 %v4511, %v4517
        %v4532 = vmul.f32 %v4512, %v4517
        %v4533 = vmul.f32 %v4513, %v4517
        %v4534 = vadd.f32 %v4481, %v4518
        %v4535 = vadd.f32 %v4482, %v4519
        %v4536 = vadd.f32 %v4483, %v4520
        %v4537 = vadd.f32 %v4484, %v4521
        %v4538 = vadd.f32 %v4485, %v4522
        %v4539 = vadd.f32 %v4486, %v4523
        %v4540 = vadd.f32 %v4487, %v4524
        %v4541 = vadd.f32 %v4488, %v4525
        %v4542 = vadd.f32 %v4489, %v4526
        %v4543 = vadd.f32 %v4490, %v4527
        %v4544 = vadd.f32 %v4491, %v4528
        %v4545 = vadd.f32 %v4492, %v4529
        %v4546 = vadd.f32 %v4493, %v4530
        %v4547 = vadd.f32 %v4494, %v4531
        %v4548 = vadd.f32 %v4495, %v4532
        %v4549 = vadd.f32 %v4496, %v4533
        %s4550 = scalar_lea.vmem [#allocation3], 1216
        %v4551 = vld [vmem:[%s4550] sm:$0xff]
        %v4552 = vld [vmem:[%s4550 + $0x8] sm:$0xff]
        %v4553 = vld [vmem:[%s4550 + $0x10] sm:$0xff]
        %v4554 = vld [vmem:[%s4550 + $0x18] sm:$0xff]
        %v4555 = vld [vmem:[%s4550 + $0x20] sm:$0xff]
        %v4556 = vld [vmem:[%s4550 + $0x28] sm:$0xff]
        %v4557 = vld [vmem:[%s4550 + $0x30] sm:$0xff]
        %v4558 = vld [vmem:[%s4550 + $0x38] sm:$0xff]
        %v4559 = vld [vmem:[%s4550 + $0x40] sm:$0xff]
        %v4560 = vld [vmem:[%s4550 + $0x48] sm:$0xff]
        %v4561 = vld [vmem:[%s4550 + $0x50] sm:$0xff]
        %v4562 = vld [vmem:[%s4550 + $0x58] sm:$0xff]
        %v4563 = vld [vmem:[%s4550 + $0x60] sm:$0xff]
        %v4564 = vld [vmem:[%s4550 + $0x68] sm:$0xff]
        %v4565 = vld [vmem:[%s4550 + $0x70] sm:$0xff]
        %v4566 = vld [vmem:[%s4550 + $0x78] sm:$0xff]
        %v4567 = vlaneseq
        %v4568 = vshrl.u32 %v4567, 7
        %v4569 = vsub.s32 5, %v4568
        %v4570 = vrot.slane %v1655, %v4569
        %v4571 = vmul.f32 %v4551, %v4570
        %v4572 = vmul.f32 %v4552, %v4570
        %v4573 = vmul.f32 %v4553, %v4570
        %v4574 = vmul.f32 %v4554, %v4570
        %v4575 = vmul.f32 %v4555, %v4570
        %v4576 = vmul.f32 %v4556, %v4570
        %v4577 = vmul.f32 %v4557, %v4570
        %v4578 = vmul.f32 %v4558, %v4570
        %v4579 = vmul.f32 %v4559, %v4570
        %v4580 = vmul.f32 %v4560, %v4570
        %v4581 = vmul.f32 %v4561, %v4570
        %v4582 = vmul.f32 %v4562, %v4570
        %v4583 = vmul.f32 %v4563, %v4570
        %v4584 = vmul.f32 %v4564, %v4570
        %v4585 = vmul.f32 %v4565, %v4570
        %v4586 = vmul.f32 %v4566, %v4570
        %v4587 = vadd.f32 %v4534, %v4571
        %v4588 = vadd.f32 %v4535, %v4572
        %v4589 = vadd.f32 %v4536, %v4573
        %v4590 = vadd.f32 %v4537, %v4574
        %v4591 = vadd.f32 %v4538, %v4575
        %v4592 = vadd.f32 %v4539, %v4576
        %v4593 = vadd.f32 %v4540, %v4577
        %v4594 = vadd.f32 %v4541, %v4578
        %v4595 = vadd.f32 %v4542, %v4579
        %v4596 = vadd.f32 %v4543, %v4580
        %v4597 = vadd.f32 %v4544, %v4581
        %v4598 = vadd.f32 %v4545, %v4582
        %v4599 = vadd.f32 %v4546, %v4583
        %v4600 = vadd.f32 %v4547, %v4584
        %v4601 = vadd.f32 %v4548, %v4585
        %v4602 = vadd.f32 %v4549, %v4586
        %s4603 = scalar_lea.vmem [#allocation3], 1440
        %v4604 = vld [vmem:[%s4603] sm:$0xff]
        %v4605 = vld [vmem:[%s4603 + $0x8] sm:$0xff]
        %v4606 = vld [vmem:[%s4603 + $0x10] sm:$0xff]
        %v4607 = vld [vmem:[%s4603 + $0x18] sm:$0xff]
        %v4608 = vld [vmem:[%s4603 + $0x20] sm:$0xff]
        %v4609 = vld [vmem:[%s4603 + $0x28] sm:$0xff]
        %v4610 = vld [vmem:[%s4603 + $0x30] sm:$0xff]
        %v4611 = vld [vmem:[%s4603 + $0x38] sm:$0xff]
        %v4612 = vld [vmem:[%s4603 + $0x40] sm:$0xff]
        %v4613 = vld [vmem:[%s4603 + $0x48] sm:$0xff]
        %v4614 = vld [vmem:[%s4603 + $0x50] sm:$0xff]
        %v4615 = vld [vmem:[%s4603 + $0x58] sm:$0xff]
        %v4616 = vld [vmem:[%s4603 + $0x60] sm:$0xff]
        %v4617 = vld [vmem:[%s4603 + $0x68] sm:$0xff]
        %v4618 = vld [vmem:[%s4603 + $0x70] sm:$0xff]
        %v4619 = vld [vmem:[%s4603 + $0x78] sm:$0xff]
        %v4620 = vlaneseq
        %v4621 = vshrl.u32 %v4620, 7
        %v4622 = vsub.s32 6, %v4621
        %v4623 = vrot.slane %v1655, %v4622
        %v4624 = vmul.f32 %v4604, %v4623
        %v4625 = vmul.f32 %v4605, %v4623
        %v4626 = vmul.f32 %v4606, %v4623
        %v4627 = vmul.f32 %v4607, %v4623
        %v4628 = vmul.f32 %v4608, %v4623
        %v4629 = vmul.f32 %v4609, %v4623
        %v4630 = vmul.f32 %v4610, %v4623
        %v4631 = vmul.f32 %v4611, %v4623
        %v4632 = vmul.f32 %v4612, %v4623
        %v4633 = vmul.f32 %v4613, %v4623
        %v4634 = vmul.f32 %v4614, %v4623
        %v4635 = vmul.f32 %v4615, %v4623
        %v4636 = vmul.f32 %v4616, %v4623
        %v4637 = vmul.f32 %v4617, %v4623
        %v4638 = vmul.f32 %v4618, %v4623
        %v4639 = vmul.f32 %v4619, %v4623
        %v4640 = vadd.f32 %v4587, %v4624
        %v4641 = vadd.f32 %v4588, %v4625
        %v4642 = vadd.f32 %v4589, %v4626
        %v4643 = vadd.f32 %v4590, %v4627
        %v4644 = vadd.f32 %v4591, %v4628
        %v4645 = vadd.f32 %v4592, %v4629
        %v4646 = vadd.f32 %v4593, %v4630
        %v4647 = vadd.f32 %v4594, %v4631
        %v4648 = vadd.f32 %v4595, %v4632
        %v4649 = vadd.f32 %v4596, %v4633
        %v4650 = vadd.f32 %v4597, %v4634
        %v4651 = vadd.f32 %v4598, %v4635
        %v4652 = vadd.f32 %v4599, %v4636
        %v4653 = vadd.f32 %v4600, %v4637
        %v4654 = vadd.f32 %v4601, %v4638
        %v4655 = vadd.f32 %v4602, %v4639
        %s4656 = smul.u32 %s1665, 16
        %s4657 = scalar_lea.vmem %s219, %s4656
        %v4658 = vld [vmem:[%s4657] sm:$0xff]
        %v4659 = vld [vmem:[%s4657 + $0x8] sm:$0xff]
        %v4660 = vld [vmem:[%s4657 + $0x10] sm:$0xff]
        %v4661 = vld [vmem:[%s4657 + $0x18] sm:$0xff]
        %v4662 = vld [vmem:[%s4657 + $0x20] sm:$0xff]
        %v4663 = vld [vmem:[%s4657 + $0x28] sm:$0xff]
        %v4664 = vld [vmem:[%s4657 + $0x30] sm:$0xff]
        %v4665 = vld [vmem:[%s4657 + $0x38] sm:$0xff]
        %v4666 = vld [vmem:[%s4657 + $0x40] sm:$0xff]
        %v4667 = vld [vmem:[%s4657 + $0x48] sm:$0xff]
        %v4668 = vld [vmem:[%s4657 + $0x50] sm:$0xff]
        %v4669 = vld [vmem:[%s4657 + $0x58] sm:$0xff]
        %v4670 = vld [vmem:[%s4657 + $0x60] sm:$0xff]
        %v4671 = vld [vmem:[%s4657 + $0x68] sm:$0xff]
        %v4672 = vld [vmem:[%s4657 + $0x70] sm:$0xff]
        %v4673 = vld [vmem:[%s4657 + $0x78] sm:$0xff]
        %v4674 = vadd.f32 %v4640, %v4658
        %v4675 = vadd.f32 %v4641, %v4659
        %v4676 = vadd.f32 %v4642, %v4660
        %v4677 = vadd.f32 %v4643, %v4661
        %v4678 = vadd.f32 %v4644, %v4662
        %v4679 = vadd.f32 %v4645, %v4663
        %v4680 = vadd.f32 %v4646, %v4664
        %v4681 = vadd.f32 %v4647, %v4665
        %v4682 = vadd.f32 %v4648, %v4666
        %v4683 = vadd.f32 %v4649, %v4667
        %v4684 = vadd.f32 %v4650, %v4668
        %v4685 = vadd.f32 %v4651, %v4669
        %v4686 = vadd.f32 %v4652, %v4670
        %v4687 = vadd.f32 %v4653, %v4671
        %v4688 = vadd.f32 %v4654, %v4672
        %v4689 = vadd.f32 %v4655, %v4673
        %v4691 = vlaneseq
        %v4692 = vshrl.u32 %v4691, 7
        %v4693 = vsub.s32 0, %v4692
        %v4694 = vrot.slane %v1656, %v4693
        %v4696 = vadd.f32 %v4674, %v4694
        %v4697 = vadd.f32 %v4675, %v4694
        %v4698 = vadd.f32 %v4676, %v4694
        %v4699 = vadd.f32 %v4677, %v4694
        %v4700 = vadd.f32 %v4678, %v4694
        %v4701 = vadd.f32 %v4679, %v4694
        %v4702 = vadd.f32 %v4680, %v4694
        %v4703 = vadd.f32 %v4681, %v4694
        %v4704 = vadd.f32 %v4682, %v4694
        %v4705 = vadd.f32 %v4683, %v4694
        %v4706 = vadd.f32 %v4684, %v4694
        %v4707 = vadd.f32 %v4685, %v4694
        %v4708 = vadd.f32 %v4686, %v4694
        %v4709 = vadd.f32 %v4687, %v4694
        %v4710 = vadd.f32 %v4688, %v4694
        %v4711 = vadd.f32 %v4689, %v4694
        %s4712 = scalar_lea.vmem %s224, %s4656
        %4713 = vst [vmem:[%s4712] sm:$0xff] %v4696
        %4714 = vst [vmem:[%s4712 + $0x8] sm:$0xff] %v4697
        %4715 = vst [vmem:[%s4712 + $0x10] sm:$0xff] %v4698
        %4716 = vst [vmem:[%s4712 + $0x18] sm:$0xff] %v4699
        %4717 = vst [vmem:[%s4712 + $0x20] sm:$0xff] %v4700
        %4718 = vst [vmem:[%s4712 + $0x28] sm:$0xff] %v4701
        %4719 = vst [vmem:[%s4712 + $0x30] sm:$0xff] %v4702
        %4720 = vst [vmem:[%s4712 + $0x38] sm:$0xff] %v4703
        %4721 = vst [vmem:[%s4712 + $0x40] sm:$0xff] %v4704
        %4722 = vst [vmem:[%s4712 + $0x48] sm:$0xff] %v4705
        %4723 = vst [vmem:[%s4712 + $0x50] sm:$0xff] %v4706
        %4724 = vst [vmem:[%s4712 + $0x58] sm:$0xff] %v4707
        %4725 = vst [vmem:[%s4712 + $0x60] sm:$0xff] %v4708
        %4726 = vst [vmem:[%s4712 + $0x68] sm:$0xff] %v4709
        %4727 = vst [vmem:[%s4712 + $0x70] sm:$0xff] %v4710
        %4728 = vst [vmem:[%s4712 + $0x78] sm:$0xff] %v4711
      $region52: #{_amscm_forward_impl.1} parent=39 // loop_footer
        %s1662 = sadd.s32 1, %s1658
      $region53: #{_amscm_forward_impl.1} parent=39 // loop_footer_branch
        %1657 = sbr.rel target = $region49
      $region54: #{_amscm_forward_impl.1} parent=39 // loop_exit
        _
      %p4729 = scmp.lt.s32.totalorder %s16, 1
      %s4730 = scalar_select %p4729, %s16, 1
      %s4731 = smul.addr %s4730, 32
      %s4732 = smul.addr %s4731, 8
      %s4733 = scalar_lea.vmem %s5, %s4732
      // Predicated region
      $region55: #{_amscm_forward_impl.1} parent=39 // pred_check
        %p4734 = pneg %p144
      $region56: #{_amscm_forward_impl.1} parent=39 // pred_check_branch
        %4736 = sbr.rel (%p4734) target = $region58
      $region57: #{_amscm_forward_impl.1} parent=39 // pred_region
        _
      $region58: #{_amscm_forward_impl.1} parent=39 // pred_fallthru
        _
    $region40: #{_amscm_forward_impl.1} parent=5 // pred_fallthru
      _
    %p4737 = scmp.le.s32.totalorder 2, %s11
    // Predicated region
    $region59: #{_amscm_forward_impl.1} parent=5 // pred_check
      %p4738 = pneg %p4737
    $region60: #{_amscm_forward_impl.1} parent=5 // pred_check_branch
      %4740 = sbr.rel (%p4738) target = $region62
    $region61: #{_amscm_forward_impl.1} parent=5 // pred_region
      %s4741 = ssub.s32 %s11, 2
      // Predicated region
      $region63: #{_amscm_forward_impl.1} parent=61 // pred_check
        %p4742 = pneg %p150
      $region64: #{_amscm_forward_impl.1} parent=61 // pred_check_branch
        %4744 = sbr.rel (%p4742) target = $region66
      $region65: #{_amscm_forward_impl.1} parent=61 // pred_region
        %p4745 = scmp.lt.s32.totalorder %s17, 1
        %s4746 = scalar_select %p4745, %s17, 1
        %s4747 = smul.addr %s4746, 32
        %s4748 = smul.addr %s4747, 8
        %s4749 = scalar_lea.vmem %s5, %s4748
      $region66: #{_amscm_forward_impl.1} parent=61 // pred_fallthru
        _
    $region62: #{_amscm_forward_impl.1} parent=5 // pred_fallthru
      _
  $region6: #{_amscm_forward_impl.1} parent=0 // loop_footer
    %s15 = sadd.s32 1, %s11
  $region7: #{_amscm_forward_impl.1} parent=0 // loop_footer_branch
    %10 = sbr.rel target = $region3
  $region8: #{_amscm_forward_impl.1} parent=0 // loop_exit
    _

</llo_original>
